<compile_context>
chip_gen: v7x
topology: tpu7x:2x2x1
jax: 0.10.0
libtpu: 0.0.40
codegen_flags: <defaults>
</compile_context>

<pallas_src>
import functools

import jax
import jax.numpy as jnp
from jax.experimental import pallas as pl
from jax.experimental.pallas import tpu as pltpu

_LANE = 128


def _round_up(x, m):
    return (x + m - 1) // m * m


def _vmem_capacity_bytes():
    """Physical per-core VMEM (generation-aware), with a conservative fallback."""
    try:
        info = pltpu.get_tpu_info()
        cap = int(getattr(info, "vmem_capacity_bytes", 0))
        if cap > 0:
            return cap
    except Exception:
        pass
    return 64 * 1024 * 1024  # v7x-sized fallback (safe on all generations)


# --------------------------------------------------------------------------- #
# Fused kernel: cv1 (1x1+BN+SiLU) -> bf16 halo'd VMEM scratch -> cv2 (3x3+BN+SiLU)
# --------------------------------------------------------------------------- #
def _bottleneck_fused_kernel(x_ref, w1_ref, b1_ref, w2_ref, b2_ref, o_ref,
                             ypad_ref, *, TH, H, W, add):
    # x_ref   : (H, W, C1p)          bf16  full image of this batch element
    # w1_ref  : (C1p, Cmid_p)        bf16  1x1 conv weights (BN folded)
    # b1_ref  : (1, Cmid_p)          f32
    # w2_ref  : (3, 3, Cmid_p, C2p)  bf16  3x3 conv weights, HWIO (BN folded)
    # b2_ref  : (1, C2p)             f32
    # o_ref   : (TH, W, C2p)         bf16  output row tile
    # ypad_ref: (TH+2, W+2, Cmid_p)  bf16  cv1 activation + 1-px zero halo
    Cmid_p = ypad_ref.shape[-1]
    C2p = o_ref.shape[-1]
    h = pl.program_id(1)
    row0 = pl.multiple_of(h * TH, TH)

    def cv1(x2d):  # (R, C1p) bf16 -> (R, Cmid_p) bf16 : 1x1 conv + BN + SiLU
        y = jnp.dot(x2d, w1_ref[...], preferred_element_type=jnp.float32)
        y = y + b1_ref[...]
        y = y * pl.reciprocal(1.0 + jnp.exp(-y), approx=True)   # SiLU (EUP recip)
        return y.astype(jnp.bfloat16)

    # --- SAME zero padding: only the halo border is written with zeros.
    # Left/right columns are never touched by the cv1 stores, so re-zeroing
    # them every step keeps each grid step fully self-contained (cheap:
    # 2*(TH+2)*Cmid bf16).  Top/bottom rows are zeroed only at image borders;
    # on interior tiles they are overwritten by real cv1 halo data below.
    zcol = jnp.zeros((TH + 2, 1, Cmid_p), ypad_ref.dtype)
    ypad_ref[:, 0:1, :] = zcol
    ypad_ref[:, W + 1:W + 2, :] = zcol

    @pl.when(row0 == 0)                       # top image border
    def _():
        ypad_ref[0:1, :, :] = jnp.zeros((1, W + 2, Cmid_p), ypad_ref.dtype)

    @pl.when(row0 + TH == H)                  # bottom image border
    def _():
        ypad_ref[TH + 1:TH + 2, :, :] = jnp.zeros((1, W + 2, Cmid_p),
                                                  ypad_ref.dtype)

    # --- cv1 into the bf16 scratch -------------------------------------------
    def border_cv1():
        # Core rows of this tile.
        x_core = x_ref[pl.ds(row0, TH), :, :]                   # (TH, W, C1p)
        ypad_ref[1:TH + 1, 1:W + 1, :] = cv1(
            x_core.reshape(TH * W, -1)).reshape(TH, W, Cmid_p)

        # One-row halos (skipped at image borders -> zero padding stays).
        @pl.when(row0 > 0)
        def _():
            xt = x_ref[pl.ds(row0 - 1, 1), :, :].reshape(W, -1)
            ypad_ref[0:1, 1:W + 1, :] = cv1(xt).reshape(1, W, Cmid_p)

        @pl.when(row0 + TH < H)
        def _():
            xb = x_ref[pl.ds(row0 + TH, 1), :, :].reshape(W, -1)
            ypad_ref[TH + 1:TH + 2, 1:W + 1, :] = cv1(xb).reshape(1, W, Cmid_p)

    if TH + 2 <= H:
        interior = jnp.logical_and(row0 > 0, row0 + TH < H)

        @pl.when(interior)                    # core + both halos in ONE matmul
        def _():
            xt = x_ref[pl.ds(row0 - 1, TH + 2), :, :]           # (TH+2, W, C1p)
            ypad_ref[:, 1:W + 1, :] = cv1(
                xt.reshape((TH + 2) * W, -1)).reshape(TH + 2, W, Cmid_p)

        @pl.when(jnp.logical_not(interior))
        def _():
            border_cv1()
    else:
        border_cv1()

    # --- cv2: 3x3 conv as 9 MXU matmuls straight out of the bf16 scratch;
    #     one (TH*W, C2p) f32 accumulator, input-side column slices only.
    # TODO(synk): on v6e/v7x with Cmid_p == 128, fold the 3 dy taps into the
    # contraction dim (K=384 im2col) to fill the 256-deep MXU.
    acc = jnp.zeros((TH * W, C2p), jnp.float32)
    for dy in range(3):
        for dx in range(3):
            lhs = ypad_ref[dy:dy + TH, dx:dx + W, :].reshape(TH * W, Cmid_p)
            acc = acc + jnp.dot(lhs, w2_ref[dy, dx],
                                preferred_element_type=jnp.float32)

    y = acc.reshape(TH, W, C2p) + b2_ref[...]
    y = y * pl.reciprocal(1.0 + jnp.exp(-y), approx=True)       # SiLU
    if add:                                  # static bool; C1p == C2p
        y = y + x_ref[pl.ds(row0, TH), :, :].astype(jnp.float32)
    o_ref[...] = y.astype(o_ref.dtype)


# --------------------------------------------------------------------------- #
# Wrappers
# --------------------------------------------------------------------------- #
def bottleneck_forward_nhwc(x_nhwc, params, shortcut=True):
    """Fused Bottleneck forward. Input NHWC, output NHWC bf16 (TPU layout)."""
    w1, b1, w2, b2 = params                    # w1:(C1,Cmid)  w2:(3,3,Cmid,C2)
    N, H, W, C1 = x_nhwc.shape
    Cmid, C2 = w1.shape[-1], w2.shape[-1]
    add = bool(shortcut) and (C1 == C2)

    # Lane-dense channel padding (no-op when channels already multiples of 128).
    C1p = _round_up(C1, _LANE)
    Cmdp = _round_up(Cmid, _LANE)
    C2p = _round_up(C2, _LANE)

    x = x_nhwc
    if C1p != C1:
        x = jnp.pad(x, ((0, 0), (0, 0), (0, 0), (0, C1p - C1)))
    x = x.astype(jnp.bfloat16)

    w1p = jnp.pad(w1, ((0, C1p - C1), (0, Cmdp - Cmid))).astype(jnp.bfloat16)
    b1p = jnp.pad(b1, (0, Cmdp - Cmid)).reshape(1, Cmdp).astype(jnp.float32)
    w2p = jnp.pad(w2, ((0, 0), (0, 0), (0, Cmdp - Cmid),
                       (0, C2p - C2))).astype(jnp.bfloat16)
    b2p = jnp.pad(b2, (0, C2p - C2)).reshape(1, C2p).astype(jnp.float32)

    # --- generation-aware VMEM budget & row-tile selection --------------------
    vmem_cap = _vmem_capacity_bytes()
    budget = min(vmem_cap // 2, 64 * 1024 * 1024)

    def tile_bytes(th):
        fixed = (2 * H * W * C1p * 2                       # x image, dbl-buffered bf16
                 + 2 * (C1p * Cmdp + 9 * Cmdp * C2p) * 2   # weights, dbl-buffered bf16
                 + 2 * (Cmdp + C2p) * 4)                   # biases
        per_tile = ((th + 2) * (W + 2) * Cmdp * 2          # bf16 cv1 scratch (+halo)
                    + 2 * th * W * C2p * 2                 # out tile, dbl-buffered bf16
                    + th * W * (C2p * 4 + Cmdp * 2 + C2p * 4))  # in-flight temporaries
        return fixed + per_tile

    TH = 1
    for th in (t for t in range(H, 0, -1) if H % t == 0):
        if tile_bytes(th) <= budget:
            TH = th
            break
    HT = H // TH

    est = tile_bytes(TH)
    cp_kwargs = dict(dimension_semantics=("parallel", "parallel"))
    if est > 24 * 1024 * 1024:
        # Never exceed physical VMEM (64 MiB on v7x); leave compiler headroom.
        cp_kwargs["vmem_limit_bytes"] = min(int(est * 3 // 2),
                                            vmem_cap - 8 * 1024 * 1024)

    kernel = functools.partial(_bottleneck_fused_kernel,
                               TH=TH, H=H, W=W, add=add)
    out = pl.pallas_call(
        kernel,
        out_shape=jax.ShapeDtypeStruct((N, H, W, C2p), jnp.bfloat16),
        grid_spec=pltpu.PrefetchScalarGridSpec(
            num_scalar_prefetch=0,
            grid=(N, HT),
            in_specs=[
                # Full image per batch element; stays resident across the h axis.
                # TODO(synk): for very large feature maps, switch to a haloed
                # (TH+2)-row input block (manual DMA) and pl.Buffered(1) weights
                # to shrink resident VMEM further.
                pl.BlockSpec((None, H, W, C1p), lambda n, h: (n, 0, 0, 0)),
                pl.BlockSpec((C1p, Cmdp), lambda n, h: (0, 0)),
                pl.BlockSpec((1, Cmdp), lambda n, h: (0, 0)),
                pl.BlockSpec((3, 3, Cmdp, C2p), lambda n, h: (0, 0, 0, 0)),
                pl.BlockSpec((1, C2p), lambda n, h: (0, 0)),
            ],
            out_specs=pl.BlockSpec((None, TH, W, C2p), lambda n, h: (n, h, 0, 0)),
            scratch_shapes=[pltpu.VMEM((TH + 2, W + 2, Cmdp), jnp.bfloat16)],
        ),
        compiler_params=pltpu.CompilerParams(**cp_kwargs),
    )(x, w1p, b1p, w2p, b2p)

    # TODO(synk): in a padded-channel NHWC network keep the padding and skip
    # this narrowing slice (it is an extra HBM pass when C2 % 128 != 0).
    return out[..., :C2] if C2p != C2 else out


def bottleneck_forward(x_nchw, params, shortcut=True):
    """NCHW wrapper matching the PyTorch module's layout (returns bf16)."""
    # TODO(synk): inside a full NHWC network call bottleneck_forward_nhwc
    # directly and drop these transposes (each is an extra HBM pass).
    x = jnp.transpose(x_nchw, (0, 2, 3, 1))
    out = bottleneck_forward_nhwc(x, params, shortcut)
    return jnp.transpose(out, (0, 3, 1, 2))


# --------------------------------------------------------------------------- #
# Parameter construction (deterministic, BN folded)
# --------------------------------------------------------------------------- #
def _fold_bn(w, gamma, beta, mean, var, eps=1e-3):
    # w has output channels on the LAST axis; conv has no bias (YOLO Conv).
    scale = gamma / jnp.sqrt(var + eps)
    return w * scale, beta - mean * scale


def make_params(key, c1, c2, e=0.5):
    c_ = int(c2 * e)
    ks = jax.random.split(key, 10)
    # cv1: 1x1 conv (c1 -> c_), stored as (C1, Cmid)
    w1_raw = 0.3 * jax.random.normal(ks[0], (c1, c_), jnp.float32)
    g1 = 1.0 + 0.1 * jax.random.normal(ks[1], (c_,), jnp.float32)
    b1 = 0.1 * jax.random.normal(ks[2], (c_,), jnp.float32)
    m1 = 0.1 * jax.random.normal(ks[3], (c_,), jnp.float32)
    v1 = jnp.abs(jax.random.normal(ks[4], (c_,), jnp.float32)) + 0.5
    # cv2: 3x3 conv (c_ -> c2), stored HWIO: (3, 3, Cmid, C2)
    w2_raw = 0.3 * jax.random.normal(ks[5], (3, 3, c_, c2), jnp.float32)
    g2 = 1.0 + 0.1 * jax.random.normal(ks[6], (c2,), jnp.float32)
    b2 = 0.1 * jax.random.normal(ks[7], (c2,), jnp.float32)
    m2 = 0.1 * jax.random.normal(ks[8], (c2,), jnp.float32)
    v2 = jnp.abs(jax.random.normal(ks[9], (c2,), jnp.float32)) + 0.5

    w1f, b1f = _fold_bn(w1_raw, g1, b1, m1, v1)
    w2f, b2f = _fold_bn(w2_raw, g2, b2, m2, v2)
    return (w1f, b1f, w2f, b2f)


# --------------------------------------------------------------------------- #
# Pure-JAX reference (bf16 matmul operands, f32 accumulation — mirrors kernel)
# --------------------------------------------------------------------------- #
def reference_forward(x_nchw, params, shortcut=True):
    w1, b1, w2, b2 = params
    x = jnp.transpose(x_nchw, (0, 2, 3, 1)).astype(jnp.float32)
    dn = ("NHWC", "HWIO", "NHWC")
    y = jax.lax.conv_general_dilated(
        x.astype(jnp.bfloat16), w1.reshape(1, 1, *w1.shape).astype(jnp.bfloat16),
        (1, 1), "VALID", dimension_numbers=dn,
        preferred_element_type=jnp.float32) + b1
    y = y * jax.nn.sigmoid(y)
    z = jax.lax.conv_general_dilated(
        y.astype(jnp.bfloat16), w2.astype(jnp.bfloat16), (1, 1), "SAME",
        dimension_numbers=dn, preferred_element_type=jnp.float32) + b2
    z = z * jax.nn.sigmoid(z)
    if shortcut and x.shape[-1] == z.shape[-1]:
        z = z + x.astype(jnp.bfloat16).astype(jnp.float32)
    return jnp.transpose(z, (0, 3, 1, 2))


# --------------------------------------------------------------------------- #
if __name__ == "__main__":
    key = jax.random.PRNGKey(0)
    k_x, k_p = jax.random.split(key)

    N, C1, H, W = 2, 4, 16, 16
    C2 = 4                      # c1 == c2 -> shortcut path is active
    params = make_params(k_p, C1, C2, e=0.5)
    x = jax.random.normal(k_x, (N, C1, H, W), jnp.float32)

    out = jax.block_until_ready(bottleneck_forward(x, params, shortcut=True))
    ref = jax.block_until_ready(reference_forward(x, params, shortcut=True))
    assert out.shape == (N, C2, H, W)
    assert jnp.allclose(out.astype(jnp.float32), ref, atol=3e-2, rtol=3e-2), \
        "mismatch vs reference (shortcut=True)"

    out_ns = jax.block_until_ready(bottleneck_forward(x, params, shortcut=False))
    ref_ns = jax.block_until_ready(reference_forward(x, params, shortcut=False))
    assert jnp.allclose(out_ns.astype(jnp.float32), ref_ns, atol=3e-2, rtol=3e-2), \
        "mismatch vs reference (shortcut=False)"

    print("KERNEL_OK")
</pallas_src>

<mosaic_0001>
module attributes {stable_mosaic.version = 11 : i64} {
  func.func @_bottleneck_fused_kernel(%arg0: i32, %arg1: i32, %arg2: memref<1x16x16x128xbf16, #tpu.memory_space<vmem>>, %arg3: memref<128x128xbf16, #tpu.memory_space<vmem>>, %arg4: memref<1x128xf32, #tpu.memory_space<vmem>>, %arg5: memref<3x3x128x128xbf16, #tpu.memory_space<vmem>>, %arg6: memref<1x128xf32, #tpu.memory_space<vmem>>, %arg7: memref<1x16x16x128xbf16, #tpu.memory_space<vmem>>, %arg8: memref<18x18x128xbf16, #tpu.memory_space<vmem>>) attributes {dimension_semantics = [#tpu.dimension_semantics<parallel>, #tpu.dimension_semantics<parallel>], iteration_bounds = array<i64: 2, 1>, scalar_prefetch = 0 : i64, scratch_operands = 1 : i64, tpu.core_type = #tpu.core_type<tc>, window_params = [{transform_indices = @transform_0, window_bounds = array<i64: 1, 16, 16, 128>}, {pipeline_mode = #tpu.pipeline_mode<synchronous>, transform_indices = @transform_1, window_bounds = array<i64: 128, 128>}, {pipeline_mode = #tpu.pipeline_mode<synchronous>, transform_indices = @transform_2, window_bounds = array<i64: 1, 128>}, {pipeline_mode = #tpu.pipeline_mode<synchronous>, transform_indices = @transform_3, window_bounds = array<i64: 3, 3, 128, 128>}, {pipeline_mode = #tpu.pipeline_mode<synchronous>, transform_indices = @transform_4, window_bounds = array<i64: 1, 128>}, {transform_indices = @transform_5, window_bounds = array<i64: 1, 16, 16, 128>}]} {
    %c16_i32 = arith.constant 16 : i32
    %0 = arith.muli %arg1, %c16_i32 : i32
    %1 = tpu.assume_multiple %0, 16 : i32
    %cst = arith.constant 0.000000e+00 : bf16
    %2 = vector.broadcast %cst : bf16 to vector<18x1x128xbf16>
    %c0 = arith.constant 0 : index
    %c0_0 = arith.constant 0 : index
    %c0_1 = arith.constant 0 : index
    %3 = vector.load %arg8[%c0, %c0_0, %c0_1] : memref<18x18x128xbf16, #tpu.memory_space<vmem>>, vector<18x1x128xbf16>
    tpu.vector_store %arg8[%c0, %c0_0, %c0_1], %2 {strides = array<i32>} : memref<18x18x128xbf16, #tpu.memory_space<vmem>>, vector<18x1x128xbf16>,
    %c0_2 = arith.constant 0 : index
    %c17 = arith.constant 17 : index
    %c0_3 = arith.constant 0 : index
    %4 = vector.load %arg8[%c0_2, %c17, %c0_3] : memref<18x18x128xbf16, #tpu.memory_space<vmem>>, vector<18x1x128xbf16>
    tpu.vector_store %arg8[%c0_2, %c17, %c0_3], %2 {strides = array<i32>} : memref<18x18x128xbf16, #tpu.memory_space<vmem>>, vector<18x1x128xbf16>,
    %c0_i32 = arith.constant 0 : i32
    %5 = arith.cmpi eq, %1, %c0_i32 : i32
    %6 = arith.extui %5 : i1 to i32
    %c0_i32_4 = arith.constant 0 : i32
    %7 = arith.cmpi ne, %6, %c0_i32_4 : i32
    scf.if %7 {
      %cst_108 = arith.constant 0.000000e+00 : bf16
      %114 = vector.broadcast %cst_108 : bf16 to vector<1x18x128xbf16>
      %c0_109 = arith.constant 0 : index
      %c0_110 = arith.constant 0 : index
      %c0_111 = arith.constant 0 : index
      %115 = vector.load %arg8[%c0_109, %c0_110, %c0_111] : memref<18x18x128xbf16, #tpu.memory_space<vmem>>, vector<1x18x128xbf16>
      tpu.vector_store %arg8[%c0_109, %c0_110, %c0_111], %114 {strides = array<i32>} : memref<18x18x128xbf16, #tpu.memory_space<vmem>>, vector<1x18x128xbf16>,
    } else {
    }
    %c16_i32_5 = arith.constant 16 : i32
    %8 = arith.addi %1, %c16_i32_5 : i32
    %c16_i32_6 = arith.constant 16 : i32
    %9 = arith.cmpi eq, %8, %c16_i32_6 : i32
    %10 = arith.extui %9 : i1 to i32
    %c0_i32_7 = arith.constant 0 : i32
    %11 = arith.cmpi ne, %10, %c0_i32_7 : i32
    scf.if %11 {
      %cst_108 = arith.constant 0.000000e+00 : bf16
      %114 = vector.broadcast %cst_108 : bf16 to vector<1x18x128xbf16>
      %c17_109 = arith.constant 17 : index
      %c0_110 = arith.constant 0 : index
      %c0_111 = arith.constant 0 : index
      %115 = vector.load %arg8[%c17_109, %c0_110, %c0_111] : memref<18x18x128xbf16, #tpu.memory_space<vmem>>, vector<1x18x128xbf16>
      tpu.vector_store %arg8[%c17_109, %c0_110, %c0_111], %114 {strides = array<i32>} : memref<18x18x128xbf16, #tpu.memory_space<vmem>>, vector<1x18x128xbf16>,
    } else {
    }
    %c0_8 = arith.constant 0 : index
    %12 = arith.index_cast %1 : i32 to index
    %c0_9 = arith.constant 0 : index
    %c0_10 = arith.constant 0 : index
    %13 = vector.load %arg2[%c0_8, %12, %c0_9, %c0_10] : memref<1x16x16x128xbf16, #tpu.memory_space<vmem>>, vector<1x16x16x128xbf16>
    %14 = vector.shape_cast %13 : vector<1x16x16x128xbf16> to vector<16x16x128xbf16>
    %15 = vector.shape_cast %14 : vector<16x16x128xbf16> to vector<256x128xbf16>
    %c0_11 = arith.constant 0 : index
    %c0_12 = arith.constant 0 : index
    %16 = vector.load %arg3[%c0_11, %c0_12] : memref<128x128xbf16, #tpu.memory_space<vmem>>, vector<128x128xbf16>
    %cst_13 = arith.constant dense<0.000000e+00> : vector<256x128xf32>
    %17 = tpu.matmul %15, %16, %cst_13 {dimension_numbers = #tpu.dot_dimension_numbers<[1], [0], [0], [1], [0, 0, 1, 1], [], []>} : vector<256x128xbf16>, vector<128x128xbf16>, vector<256x128xf32> -> vector<256x128xf32>
    %c0_14 = arith.constant 0 : index
    %c0_15 = arith.constant 0 : index
    %18 = vector.load %arg4[%c0_14, %c0_15] : memref<1x128xf32, #tpu.memory_space<vmem>>, vector<1x128xf32>
    %19 = vector.broadcast %18 : vector<1x128xf32> to vector<256x128xf32>
    %20 = arith.addf %17, %19 : vector<256x128xf32>
    %cst_16 = arith.constant 0.000000e+00 : f32
    %21 = vector.broadcast %cst_16 : f32 to vector<256x128xf32>
    %22 = arith.subf %21, %20 : vector<256x128xf32>
    %23 = math.exp %22 : vector<256x128xf32>
    %cst_17 = arith.constant 1.000000e+00 : f32
    %24 = vector.broadcast %cst_17 : f32 to vector<256x128xf32>
    %25 = arith.addf %24, %23 : vector<256x128xf32>
    %26 = tpu.reciprocal %25 {approx = true} : vector<256x128xf32> -> vector<256x128xf32>
    %27 = arith.mulf %20, %26 : vector<256x128xf32>
    %28 = arith.truncf %27 : vector<256x128xf32> to vector<256x128xbf16>
    %29 = vector.shape_cast %28 : vector<256x128xbf16> to vector<16x16x128xbf16>
    %c1 = arith.constant 1 : index
    %c1_18 = arith.constant 1 : index
    %c0_19 = arith.constant 0 : index
    %30 = vector.load %arg8[%c1, %c1_18, %c0_19] : memref<18x18x128xbf16, #tpu.memory_space<vmem>>, vector<16x16x128xbf16>
    tpu.vector_store %arg8[%c1, %c1_18, %c0_19], %29 {strides = array<i32>} : memref<18x18x128xbf16, #tpu.memory_space<vmem>>, vector<16x16x128xbf16>,
    %c0_i32_20 = arith.constant 0 : i32
    %31 = arith.cmpi sgt, %1, %c0_i32_20 : i32
    %32 = arith.extui %31 : i1 to i32
    %c0_i32_21 = arith.constant 0 : i32
    %33 = arith.cmpi ne, %32, %c0_i32_21 : i32
    scf.if %33 {
      %c1_i32 = arith.constant 1 : i32
      %114 = arith.subi %1, %c1_i32 : i32
      %c0_108 = arith.constant 0 : index
      %115 = arith.index_cast %114 : i32 to index
      %c0_109 = arith.constant 0 : index
      %c0_110 = arith.constant 0 : index
      %116 = vector.load %arg2[%c0_108, %115, %c0_109, %c0_110] : memref<1x16x16x128xbf16, #tpu.memory_space<vmem>>, vector<1x1x16x128xbf16>
      %117 = vector.shape_cast %116 : vector<1x1x16x128xbf16> to vector<1x16x128xbf16>
      %118 = vector.shape_cast %117 : vector<1x16x128xbf16> to vector<16x128xbf16>
      %c0_111 = arith.constant 0 : index
      %c0_112 = arith.constant 0 : index
      %119 = vector.load %arg3[%c0_111, %c0_112] : memref<128x128xbf16, #tpu.memory_space<vmem>>, vector<128x128xbf16>
      %cst_113 = arith.constant dense<0.000000e+00> : vector<16x128xf32>
      %120 = tpu.matmul %118, %119, %cst_113 {dimension_numbers = #tpu.dot_dimension_numbers<[1], [0], [0], [1], [0, 0, 1, 1], [], []>} : vector<16x128xbf16>, vector<128x128xbf16>, vector<16x128xf32> -> vector<16x128xf32>
      %c0_114 = arith.constant 0 : index
      %c0_115 = arith.constant 0 : index
      %121 = vector.load %arg4[%c0_114, %c0_115] : memref<1x128xf32, #tpu.memory_space<vmem>>, vector<1x128xf32>
      %122 = vector.broadcast %121 : vector<1x128xf32> to vector<16x128xf32>
      %123 = arith.addf %120, %122 : vector<16x128xf32>
      %cst_116 = arith.constant 0.000000e+00 : f32
      %124 = vector.broadcast %cst_116 : f32 to vector<16x128xf32>
      %125 = arith.subf %124, %123 : vector<16x128xf32>
      %126 = math.exp %125 : vector<16x128xf32>
      %cst_117 = arith.constant 1.000000e+00 : f32
      %127 = vector.broadcast %cst_117 : f32 to vector<16x128xf32>
      %128 = arith.addf %127, %126 : vector<16x128xf32>
      %129 = tpu.reciprocal %128 {approx = true} : vector<16x128xf32> -> vector<16x128xf32>
      %130 = arith.mulf %123, %129 : vector<16x128xf32>
      %131 = arith.truncf %130 : vector<16x128xf32> to vector<16x128xbf16>
      %132 = vector.shape_cast %131 : vector<16x128xbf16> to vector<1x16x128xbf16>
      %c0_118 = arith.constant 0 : index
      %c1_119 = arith.constant 1 : index
      %c0_120 = arith.constant 0 : index
      %133 = vector.load %arg8[%c0_118, %c1_119, %c0_120] : memref<18x18x128xbf16, #tpu.memory_space<vmem>>, vector<1x16x128xbf16>
      tpu.vector_store %arg8[%c0_118, %c1_119, %c0_120], %132 {strides = array<i32>} : memref<18x18x128xbf16, #tpu.memory_space<vmem>>, vector<1x16x128xbf16>,
    } else {
    }
    %c16_i32_22 = arith.constant 16 : i32
    %34 = arith.addi %1, %c16_i32_22 : i32
    %c16_i32_23 = arith.constant 16 : i32
    %35 = arith.cmpi slt, %34, %c16_i32_23 : i32
    %36 = arith.extui %35 : i1 to i32
    %c0_i32_24 = arith.constant 0 : i32
    %37 = arith.cmpi ne, %36, %c0_i32_24 : i32
    scf.if %37 {
      %c16_i32_108 = arith.constant 16 : i32
      %114 = arith.addi %1, %c16_i32_108 : i32
      %c0_109 = arith.constant 0 : index
      %115 = arith.index_cast %114 : i32 to index
      %c0_110 = arith.constant 0 : index
      %c0_111 = arith.constant 0 : index
      %116 = vector.load %arg2[%c0_109, %115, %c0_110, %c0_111] : memref<1x16x16x128xbf16, #tpu.memory_space<vmem>>, vector<1x1x16x128xbf16>
      %117 = vector.shape_cast %116 : vector<1x1x16x128xbf16> to vector<1x16x128xbf16>
      %118 = vector.shape_cast %117 : vector<1x16x128xbf16> to vector<16x128xbf16>
      %c0_112 = arith.constant 0 : index
      %c0_113 = arith.constant 0 : index
      %119 = vector.load %arg3[%c0_112, %c0_113] : memref<128x128xbf16, #tpu.memory_space<vmem>>, vector<128x128xbf16>
      %cst_114 = arith.constant dense<0.000000e+00> : vector<16x128xf32>
      %120 = tpu.matmul %118, %119, %cst_114 {dimension_numbers = #tpu.dot_dimension_numbers<[1], [0], [0], [1], [0, 0, 1, 1], [], []>} : vector<16x128xbf16>, vector<128x128xbf16>, vector<16x128xf32> -> vector<16x128xf32>
      %c0_115 = arith.constant 0 : index
      %c0_116 = arith.constant 0 : index
      %121 = vector.load %arg4[%c0_115, %c0_116] : memref<1x128xf32, #tpu.memory_space<vmem>>, vector<1x128xf32>
      %122 = vector.broadcast %121 : vector<1x128xf32> to vector<16x128xf32>
      %123 = arith.addf %120, %122 : vector<16x128xf32>
      %cst_117 = arith.constant 0.000000e+00 : f32
      %124 = vector.broadcast %cst_117 : f32 to vector<16x128xf32>
      %125 = arith.subf %124, %123 : vector<16x128xf32>
      %126 = math.exp %125 : vector<16x128xf32>
      %cst_118 = arith.constant 1.000000e+00 : f32
      %127 = vector.broadcast %cst_118 : f32 to vector<16x128xf32>
      %128 = arith.addf %127, %126 : vector<16x128xf32>
      %129 = tpu.reciprocal %128 {approx = true} : vector<16x128xf32> -> vector<16x128xf32>
      %130 = arith.mulf %123, %129 : vector<16x128xf32>
      %131 = arith.truncf %130 : vector<16x128xf32> to vector<16x128xbf16>
      %132 = vector.shape_cast %131 : vector<16x128xbf16> to vector<1x16x128xbf16>
      %c17_119 = arith.constant 17 : index
      %c1_120 = arith.constant 1 : index
      %c0_121 = arith.constant 0 : index
      %133 = vector.load %arg8[%c17_119, %c1_120, %c0_121] : memref<18x18x128xbf16, #tpu.memory_space<vmem>>, vector<1x16x128xbf16>
      tpu.vector_store %arg8[%c17_119, %c1_120, %c0_121], %132 {strides = array<i32>} : memref<18x18x128xbf16, #tpu.memory_space<vmem>>, vector<1x16x128xbf16>,
    } else {
    }
    %cst_25 = arith.constant 0.000000e+00 : f32
    %38 = vector.broadcast %cst_25 : f32 to vector<256x128xf32>
    %c0_26 = arith.constant 0 : index
    %c0_27 = arith.constant 0 : index
    %c0_28 = arith.constant 0 : index
    %39 = vector.load %arg8[%c0_26, %c0_27, %c0_28] : memref<18x18x128xbf16, #tpu.memory_space<vmem>>, vector<16x16x128xbf16>
    %40 = vector.shape_cast %39 : vector<16x16x128xbf16> to vector<256x128xbf16>
    %c0_29 = arith.constant 0 : index
    %c0_30 = arith.constant 0 : index
    %c0_31 = arith.constant 0 : index
    %c0_32 = arith.constant 0 : index
    %41 = vector.load %arg5[%c0_29, %c0_30, %c0_31, %c0_32] : memref<3x3x128x128xbf16, #tpu.memory_space<vmem>>, vector<1x1x128x128xbf16>
    %42 = vector.shape_cast %41 : vector<1x1x128x128xbf16> to vector<128x128xbf16>
    %cst_33 = arith.constant dense<0.000000e+00> : vector<256x128xf32>
    %43 = tpu.matmul %40, %42, %cst_33 {dimension_numbers = #tpu.dot_dimension_numbers<[1], [0], [0], [1], [0, 0, 1, 1], [], []>} : vector<256x128xbf16>, vector<128x128xbf16>, vector<256x128xf32> -> vector<256x128xf32>
    %44 = arith.addf %38, %43 : vector<256x128xf32>
    %c0_34 = arith.constant 0 : index
    %c1_35 = arith.constant 1 : index
    %c0_36 = arith.constant 0 : index
    %45 = vector.load %arg8[%c0_34, %c1_35, %c0_36] : memref<18x18x128xbf16, #tpu.memory_space<vmem>>, vector<16x16x128xbf16>
    %46 = vector.shape_cast %45 : vector<16x16x128xbf16> to vector<256x128xbf16>
    %c0_37 = arith.constant 0 : index
    %c1_38 = arith.constant 1 : index
    %c0_39 = arith.constant 0 : index
    %c0_40 = arith.constant 0 : index
    %47 = vector.load %arg5[%c0_37, %c1_38, %c0_39, %c0_40] : memref<3x3x128x128xbf16, #tpu.memory_space<vmem>>, vector<1x1x128x128xbf16>
    %48 = vector.shape_cast %47 : vector<1x1x128x128xbf16> to vector<128x128xbf16>
    %cst_41 = arith.constant dense<0.000000e+00> : vector<256x128xf32>
    %49 = tpu.matmul %46, %48, %cst_41 {dimension_numbers = #tpu.dot_dimension_numbers<[1], [0], [0], [1], [0, 0, 1, 1], [], []>} : vector<256x128xbf16>, vector<128x128xbf16>, vector<256x128xf32> -> vector<256x128xf32>
    %50 = arith.addf %44, %49 : vector<256x128xf32>
    %c0_42 = arith.constant 0 : index
    %c2 = arith.constant 2 : index
    %c0_43 = arith.constant 0 : index
    %51 = vector.load %arg8[%c0_42, %c2, %c0_43] : memref<18x18x128xbf16, #tpu.memory_space<vmem>>, vector<16x16x128xbf16>
    %52 = vector.shape_cast %51 : vector<16x16x128xbf16> to vector<256x128xbf16>
    %c0_44 = arith.constant 0 : index
    %c2_45 = arith.constant 2 : index
    %c0_46 = arith.constant 0 : index
    %c0_47 = arith.constant 0 : index
    %53 = vector.load %arg5[%c0_44, %c2_45, %c0_46, %c0_47] : memref<3x3x128x128xbf16, #tpu.memory_space<vmem>>, vector<1x1x128x128xbf16>
    %54 = vector.shape_cast %53 : vector<1x1x128x128xbf16> to vector<128x128xbf16>
    %cst_48 = arith.constant dense<0.000000e+00> : vector<256x128xf32>
    %55 = tpu.matmul %52, %54, %cst_48 {dimension_numbers = #tpu.dot_dimension_numbers<[1], [0], [0], [1], [0, 0, 1, 1], [], []>} : vector<256x128xbf16>, vector<128x128xbf16>, vector<256x128xf32> -> vector<256x128xf32>
    %56 = arith.addf %50, %55 : vector<256x128xf32>
    %c1_49 = arith.constant 1 : index
    %c0_50 = arith.constant 0 : index
    %c0_51 = arith.constant 0 : index
    %57 = vector.load %arg8[%c1_49, %c0_50, %c0_51] : memref<18x18x128xbf16, #tpu.memory_space<vmem>>, vector<16x16x128xbf16>
    %58 = vector.shape_cast %57 : vector<16x16x128xbf16> to vector<256x128xbf16>
    %c1_52 = arith.constant 1 : index
    %c0_53 = arith.constant 0 : index
    %c0_54 = arith.constant 0 : index
    %c0_55 = arith.constant 0 : index
    %59 = vector.load %arg5[%c1_52, %c0_53, %c0_54, %c0_55] : memref<3x3x128x128xbf16, #tpu.memory_space<vmem>>, vector<1x1x128x128xbf16>
    %60 = vector.shape_cast %59 : vector<1x1x128x128xbf16> to vector<128x128xbf16>
    %cst_56 = arith.constant dense<0.000000e+00> : vector<256x128xf32>
    %61 = tpu.matmul %58, %60, %cst_56 {dimension_numbers = #tpu.dot_dimension_numbers<[1], [0], [0], [1], [0, 0, 1, 1], [], []>} : vector<256x128xbf16>, vector<128x128xbf16>, vector<256x128xf32> -> vector<256x128xf32>
    %62 = arith.addf %56, %61 : vector<256x128xf32>
    %c1_57 = arith.constant 1 : index
    %c1_58 = arith.constant 1 : index
    %c0_59 = arith.constant 0 : index
    %63 = vector.load %arg8[%c1_57, %c1_58, %c0_59] : memref<18x18x128xbf16, #tpu.memory_space<vmem>>, vector<16x16x128xbf16>
    %64 = vector.shape_cast %63 : vector<16x16x128xbf16> to vector<256x128xbf16>
    %c1_60 = arith.constant 1 : index
    %c1_61 = arith.constant 1 : index
    %c0_62 = arith.constant 0 : index
    %c0_63 = arith.constant 0 : index
    %65 = vector.load %arg5[%c1_60, %c1_61, %c0_62, %c0_63] : memref<3x3x128x128xbf16, #tpu.memory_space<vmem>>, vector<1x1x128x128xbf16>
    %66 = vector.shape_cast %65 : vector<1x1x128x128xbf16> to vector<128x128xbf16>
    %cst_64 = arith.constant dense<0.000000e+00> : vector<256x128xf32>
    %67 = tpu.matmul %64, %66, %cst_64 {dimension_numbers = #tpu.dot_dimension_numbers<[1], [0], [0], [1], [0, 0, 1, 1], [], []>} : vector<256x128xbf16>, vector<128x128xbf16>, vector<256x128xf32> -> vector<256x128xf32>
    %68 = arith.addf %62, %67 : vector<256x128xf32>
    %c1_65 = arith.constant 1 : index
    %c2_66 = arith.constant 2 : index
    %c0_67 = arith.constant 0 : index
    %69 = vector.load %arg8[%c1_65, %c2_66, %c0_67] : memref<18x18x128xbf16, #tpu.memory_space<vmem>>, vector<16x16x128xbf16>
    %70 = vector.shape_cast %69 : vector<16x16x128xbf16> to vector<256x128xbf16>
    %c1_68 = arith.constant 1 : index
    %c2_69 = arith.constant 2 : index
    %c0_70 = arith.constant 0 : index
    %c0_71 = arith.constant 0 : index
    %71 = vector.load %arg5[%c1_68, %c2_69, %c0_70, %c0_71] : memref<3x3x128x128xbf16, #tpu.memory_space<vmem>>, vector<1x1x128x128xbf16>
    %72 = vector.shape_cast %71 : vector<1x1x128x128xbf16> to vector<128x128xbf16>
    %cst_72 = arith.constant dense<0.000000e+00> : vector<256x128xf32>
    %73 = tpu.matmul %70, %72, %cst_72 {dimension_numbers = #tpu.dot_dimension_numbers<[1], [0], [0], [1], [0, 0, 1, 1], [], []>} : vector<256x128xbf16>, vector<128x128xbf16>, vector<256x128xf32> -> vector<256x128xf32>
    %74 = arith.addf %68, %73 : vector<256x128xf32>
    %c2_73 = arith.constant 2 : index
    %c0_74 = arith.constant 0 : index
    %c0_75 = arith.constant 0 : index
    %75 = vector.load %arg8[%c2_73, %c0_74, %c0_75] : memref<18x18x128xbf16, #tpu.memory_space<vmem>>, vector<16x16x128xbf16>
    %76 = vector.shape_cast %75 : vector<16x16x128xbf16> to vector<256x128xbf16>
    %c2_76 = arith.constant 2 : index
    %c0_77 = arith.constant 0 : index
    %c0_78 = arith.constant 0 : index
    %c0_79 = arith.constant 0 : index
    %77 = vector.load %arg5[%c2_76, %c0_77, %c0_78, %c0_79] : memref<3x3x128x128xbf16, #tpu.memory_space<vmem>>, vector<1x1x128x128xbf16>
    %78 = vector.shape_cast %77 : vector<1x1x128x128xbf16> to vector<128x128xbf16>
    %cst_80 = arith.constant dense<0.000000e+00> : vector<256x128xf32>
    %79 = tpu.matmul %76, %78, %cst_80 {dimension_numbers = #tpu.dot_dimension_numbers<[1], [0], [0], [1], [0, 0, 1, 1], [], []>} : vector<256x128xbf16>, vector<128x128xbf16>, vector<256x128xf32> -> vector<256x128xf32>
    %80 = arith.addf %74, %79 : vector<256x128xf32>
    %c2_81 = arith.constant 2 : index
    %c1_82 = arith.constant 1 : index
    %c0_83 = arith.constant 0 : index
    %81 = vector.load %arg8[%c2_81, %c1_82, %c0_83] : memref<18x18x128xbf16, #tpu.memory_space<vmem>>, vector<16x16x128xbf16>
    %82 = vector.shape_cast %81 : vector<16x16x128xbf16> to vector<256x128xbf16>
    %c2_84 = arith.constant 2 : index
    %c1_85 = arith.constant 1 : index
    %c0_86 = arith.constant 0 : index
    %c0_87 = arith.constant 0 : index
    %83 = vector.load %arg5[%c2_84, %c1_85, %c0_86, %c0_87] : memref<3x3x128x128xbf16, #tpu.memory_space<vmem>>, vector<1x1x128x128xbf16>
    %84 = vector.shape_cast %83 : vector<1x1x128x128xbf16> to vector<128x128xbf16>
    %cst_88 = arith.constant dense<0.000000e+00> : vector<256x128xf32>
    %85 = tpu.matmul %82, %84, %cst_88 {dimension_numbers = #tpu.dot_dimension_numbers<[1], [0], [0], [1], [0, 0, 1, 1], [], []>} : vector<256x128xbf16>, vector<128x128xbf16>, vector<256x128xf32> -> vector<256x128xf32>
    %86 = arith.addf %80, %85 : vector<256x128xf32>
    %c2_89 = arith.constant 2 : index
    %c2_90 = arith.constant 2 : index
    %c0_91 = arith.constant 0 : index
    %87 = vector.load %arg8[%c2_89, %c2_90, %c0_91] : memref<18x18x128xbf16, #tpu.memory_space<vmem>>, vector<16x16x128xbf16>
    %88 = vector.shape_cast %87 : vector<16x16x128xbf16> to vector<256x128xbf16>
    %c2_92 = arith.constant 2 : index
    %c2_93 = arith.constant 2 : index
    %c0_94 = arith.constant 0 : index
    %c0_95 = arith.constant 0 : index
    %89 = vector.load %arg5[%c2_92, %c2_93, %c0_94, %c0_95] : memref<3x3x128x128xbf16, #tpu.memory_space<vmem>>, vector<1x1x128x128xbf16>
    %90 = vector.shape_cast %89 : vector<1x1x128x128xbf16> to vector<128x128xbf16>
    %cst_96 = arith.constant dense<0.000000e+00> : vector<256x128xf32>
    %91 = tpu.matmul %88, %90, %cst_96 {dimension_numbers = #tpu.dot_dimension_numbers<[1], [0], [0], [1], [0, 0, 1, 1], [], []>} : vector<256x128xbf16>, vector<128x128xbf16>, vector<256x128xf32> -> vector<256x128xf32>
    %92 = arith.addf %86, %91 : vector<256x128xf32>
    %93 = vector.shape_cast %92 : vector<256x128xf32> to vector<16x16x128xf32>
    %c0_97 = arith.constant 0 : index
    %c0_98 = arith.constant 0 : index
    %94 = vector.load %arg6[%c0_97, %c0_98] : memref<1x128xf32, #tpu.memory_space<vmem>>, vector<1x128xf32>
    %95 = vector.shape_cast %94 : vector<1x128xf32> to vector<1x1x128xf32>
    %96 = vector.broadcast %95 : vector<1x1x128xf32> to vector<16x16x128xf32>
    %97 = arith.addf %93, %96 : vector<16x16x128xf32>
    %cst_99 = arith.constant 0.000000e+00 : f32
    %98 = vector.broadcast %cst_99 : f32 to vector<16x16x128xf32>
    %99 = arith.subf %98, %97 : vector<16x16x128xf32>
    %100 = math.exp %99 : vector<16x16x128xf32>
    %cst_100 = arith.constant 1.000000e+00 : f32
    %101 = vector.broadcast %cst_100 : f32 to vector<16x16x128xf32>
    %102 = arith.addf %101, %100 : vector<16x16x128xf32>
    %103 = tpu.reciprocal %102 {approx = true} : vector<16x16x128xf32> -> vector<16x16x128xf32>
    %104 = arith.mulf %97, %103 : vector<16x16x128xf32>
    %c0_101 = arith.constant 0 : index
    %105 = arith.index_cast %1 : i32 to index
    %c0_102 = arith.constant 0 : index
    %c0_103 = arith.constant 0 : index
    %106 = vector.load %arg2[%c0_101, %105, %c0_102, %c0_103] : memref<1x16x16x128xbf16, #tpu.memory_space<vmem>>, vector<1x16x16x128xbf16>
    %107 = vector.shape_cast %106 : vector<1x16x16x128xbf16> to vector<16x16x128xbf16>
    %108 = arith.extf %107 : vector<16x16x128xbf16> to vector<16x16x128xf32>
    %109 = arith.addf %104, %108 : vector<16x16x128xf32>
    %110 = arith.truncf %109 : vector<16x16x128xf32> to vector<16x16x128xbf16>
    %c0_104 = arith.constant 0 : index
    %c0_105 = arith.constant 0 : index
    %c0_106 = arith.constant 0 : index
    %c0_107 = arith.constant 0 : index
    %111 = vector.load %arg7[%c0_104, %c0_105, %c0_106, %c0_107] : memref<1x16x16x128xbf16, #tpu.memory_space<vmem>>, vector<1x16x16x128xbf16>
    %112 = vector.shape_cast %111 : vector<1x16x16x128xbf16> to vector<16x16x128xbf16>
    %113 = vector.shape_cast %110 : vector<16x16x128xbf16> to vector<1x16x16x128xbf16>
    tpu.vector_store %arg7[%c0_104, %c0_105, %c0_106, %c0_107], %113 {strides = array<i32>} : memref<1x16x16x128xbf16, #tpu.memory_space<vmem>>, vector<1x16x16x128xbf16>,
    return
  }
  func.func @transform_0(%arg0: i32, %arg1: i32) -> (i32, i32, i32, i32) {
    %c0_i32 = arith.constant 0 : i32
    %c0_i32_0 = arith.constant 0 : i32
    %c0_i32_1 = arith.constant 0 : i32
    %c0_i32_2 = arith.constant 0 : i32
    return %arg0, %c0_i32, %c0_i32_0, %c0_i32_1 : i32, i32, i32, i32
  }
  func.func @transform_1(%arg0: i32, %arg1: i32) -> (i32, i32) {
    %c0_i32 = arith.constant 0 : i32
    %c0_i32_0 = arith.constant 0 : i32
    %c0_i32_1 = arith.constant 0 : i32
    return %c0_i32, %c0_i32_0 : i32, i32
  }
  func.func @transform_2(%arg0: i32, %arg1: i32) -> (i32, i32) {
    %c0_i32 = arith.constant 0 : i32
    %c0_i32_0 = arith.constant 0 : i32
    %c0_i32_1 = arith.constant 0 : i32
    return %c0_i32, %c0_i32_0 : i32, i32
  }
  func.func @transform_3(%arg0: i32, %arg1: i32) -> (i32, i32, i32, i32) {
    %c0_i32 = arith.constant 0 : i32
    %c0_i32_0 = arith.constant 0 : i32
    %c0_i32_1 = arith.constant 0 : i32
    %c0_i32_2 = arith.constant 0 : i32
    %c0_i32_3 = arith.constant 0 : i32
    return %c0_i32, %c0_i32_0, %c0_i32_1, %c0_i32_2 : i32, i32, i32, i32
  }
  func.func @transform_4(%arg0: i32, %arg1: i32) -> (i32, i32) {
    %c0_i32 = arith.constant 0 : i32
    %c0_i32_0 = arith.constant 0 : i32
    %c0_i32_1 = arith.constant 0 : i32
    return %c0_i32, %c0_i32_0 : i32, i32
  }
  func.func @transform_5(%arg0: i32, %arg1: i32) -> (i32, i32, i32, i32) {
    %c0_i32 = arith.constant 0 : i32
    %c0_i32_0 = arith.constant 0 : i32
    %c0_i32_1 = arith.constant 0 : i32
    return %arg0, %arg1, %c0_i32, %c0_i32_0 : i32, i32, i32, i32
  }
}

</mosaic_0001>

<llo_original>
// kernel: tpu_custom_call.1
$region0: #{tpu_custom_call.1}
  #allocation0 [shape = 'u32[]', space=smem, size = 0x4, offset = 0x4, fixed_abs, tag = 'smem constant byte address 0x4 - core index']
  #allocation1 [shape = 'u32[144,128]{1,0:T(1,128)}', space=vmem, size = 0x12000, scoped, tag = 'internal scratch']
  #allocation2 [shape = 'bf16[18,18,128]{2,1,0:T(8,128)(2,1)}', space=vmem, size = 0x1b000, scoped, tag = 'scratch operand']
  %s0 = inlined_call_operand.hbm [shape: bf16[2,16,16,128], index: 0, kind: input, shape index: {}]
  %s1 = inlined_call_operand.hbm [shape: bf16[128,128], index: 1, kind: input, shape index: {}]
  %s2 = inlined_call_operand.vmem [shape: f32[1,128], index: 2, kind: input, shape index: {}]
  %s3 = inlined_call_operand.hbm [shape: bf16[3,3,128,128], index: 3, kind: input, shape index: {}]
  %s4 = inlined_call_operand.vmem [shape: f32[1,128], index: 4, kind: input, shape index: {}]
  %s5 = inlined_call_operand.hbm [shape: bf16[2,16,16,128], index: 5, kind: output, shape index: {}]
  %s6 = sld [smem:[#allocation0]]
  $region81: #{tpu_custom_call.1} parent=0
    _
  %s8 = ssub.s32 1, %s6
  %s9 = scalar_select 0, %s8, %s6
  $region1: #{tpu_custom_call.1} parent=0
    #allocation3 [shape = 'u8[131072]{0}', space=vmem, size = 0x20000, scoped, tag = 'input window, operand 0']
    #allocation4 [shape = 's32[2]{0}', space=sflag, size = 0x8, scoped, tag = 'scoped memory for tpu_custom_call.1']
    #allocation5 [shape = 's32[2]{0}', space=sflag, size = 0x8, scoped, tag = 'scoped memory for tpu_custom_call.1']
    #allocation6 [shape = 'u8[32768]{0}', space=vmem, size = 0x8000, scoped, tag = 'input window, operand 1, single buffered']
    #allocation7 [shape = 's32[1]{0}', space=sflag, size = 0x4, scoped, tag = 'scoped memory for tpu_custom_call.1']
    #allocation8 [shape = 'u8[294912]{0}', space=vmem, size = 0x48000, scoped, tag = 'input window, operand 3, single buffered']
    #allocation9 [shape = 'u8[131072]{0}', space=vmem, size = 0x20000, scoped, tag = 'output window, operand 0']
    %10 = vsyncpa [#allocation4], 0
    %s11 = scalar_lea.sflag [#allocation4], 1
    %12 = vsyncpa %s11, 0
    %13 = vsyncpa [#allocation7], 0
    %14 = vsyncpa [#allocation5], 0
    %s15 = scalar_lea.sflag [#allocation5], 1
    %16 = vsyncpa %s15, 0
    loop: start=0, step=1, limit=4
    $region2: #{tpu_custom_call.1} parent=1 // loop_pre_header
      _
    $region3: #{tpu_custom_call.1} parent=1 // loop_header
      %s18 = sphi 0, %s22
      %p19 = scmp.ge.s32.totalorder %s18, 4
      %s25 = sphi 0, %s37
      %s26 = sphi 0, %s33
      %s27 = sphi 0, %s25
      %s28 = sphi 0, %s26
      %s29 = sphi 0, %s27
      %s30 = sphi 0, %s28
      %s40 = sphi 0, %s42
      %s43 = sphi 0, %s40
      %s44 = sphi 0, %s43
      %s60 = sphi 0, %s44
      %s64 = sphi 0, %s64
      %s66 = sphi 0, %s64
      %s67 = sphi 0, %s66
      %s81 = sphi 0, %s67
      %s85 = sphi 0, %s85
      %s87 = sphi 0, %s85
      %s88 = sphi 0, %s87
      %s102 = sphi 0, %s88
      %s106 = sphi 0, %s106
      %s108 = sphi 0, %s106
      %s109 = sphi 0, %s108
      %s123 = sphi 0, %s109
      %s127 = sphi 0, %s127
      %s129 = sphi 0, %s127
      %s130 = sphi 0, %s129
      %s144 = sphi 0, %s130
      %s152 = sphi 0, %s154
      %s155 = sphi 0, %s152
      %s156 = sphi 0, %s155
      %s172 = sphi 0, %s156
    $region4: #{tpu_custom_call.1} parent=1 // loop_header_branch
      %21 = sbr.rel (%p19) target = $region8
    $region5: #{tpu_custom_call.1} parent=1 // loop_body
      %s23 = ssub.s32 %s18, 1
      %s24 = ssub.s32 %s18, 2
      %s31 = sadd.s32 1, %s26
      %p32 = scmp.ge.s32.totalorder %s31, 1
      %s33 = scalar_select %p32, 0, %s31
      %s34 = sadd.s32 1, %s25
      %s35 = scalar_select %p32, %s34, %s25
      %p36 = scmp.ge.s32.totalorder %s35, 2
      %s37 = scalar_select %p36, 0, %s35
      %s38 = ssub.s32 %s25, %s37
      %p39 = scmp.eq.s32.totalorder %s38, 0
      %s41 = sadd.s32 %s40, 1
      %s42 = scalar_select %p39, %s40, %s41
      %p45 = pneg %p39
      %p46 = scmp.eq.s32.totalorder %s18, 1
      %p47 = por %p45, %p46
      %p48 = scmp.ne.s32.totalorder %s40, %s43
      %p49 = scmp.eq.s32.totalorder %s18, 0
      %p50 = por %p48, %p49
      %p51 = scmp.ne.s32.totalorder %s40, %s43
      %p52 = scmp.eq.s32.totalorder %s23, 1
      %p53 = por %p51, %p52
      %p54 = scmp.ne.s32.totalorder %s43, %s44
      %p55 = scmp.eq.s32.totalorder %s23, 0
      %p56 = por %p54, %p55
      %p57 = scmp.ne.s32.totalorder %s43, %s44
      %p58 = scmp.eq.s32.totalorder %s24, 1
      %p59 = por %p57, %p58
      %p61 = scmp.ne.s32.totalorder %s44, %s60
      %p62 = scmp.eq.s32.totalorder %s24, 0
      %p63 = por %p61, %p62
      %s65 = sadd.s32 %s64, 1
      %p68 = scmp.eq.s32.totalorder %s18, 1
      %p69 = scmp.ne.s32.totalorder %s64, %s66
      %p70 = scmp.eq.s32.totalorder %s18, 0
      %p71 = por %p69, %p70
      %p72 = scmp.ne.s32.totalorder %s64, %s66
      %p73 = scmp.eq.s32.totalorder %s23, 1
      %p74 = por %p72, %p73
      %p75 = scmp.ne.s32.totalorder %s66, %s67
      %p76 = scmp.eq.s32.totalorder %s23, 0
      %p77 = por %p75, %p76
      %p78 = scmp.ne.s32.totalorder %s66, %s67
      %p79 = scmp.eq.s32.totalorder %s24, 1
      %p80 = por %p78, %p79
      %p82 = scmp.ne.s32.totalorder %s67, %s81
      %p83 = scmp.eq.s32.totalorder %s24, 0
      %p84 = por %p82, %p83
      %s86 = sadd.s32 %s85, 1
      %p89 = scmp.eq.s32.totalorder %s18, 1
      %p90 = scmp.ne.s32.totalorder %s85, %s87
      %p91 = scmp.eq.s32.totalorder %s18, 0
      %p92 = por %p90, %p91
      %p93 = scmp.ne.s32.totalorder %s85, %s87
      %p94 = scmp.eq.s32.totalorder %s23, 1
      %p95 = por %p93, %p94
      %p96 = scmp.ne.s32.totalorder %s87, %s88
      %p97 = scmp.eq.s32.totalorder %s23, 0
      %p98 = por %p96, %p97
      %p99 = scmp.ne.s32.totalorder %s87, %s88
      %p100 = scmp.eq.s32.totalorder %s24, 1
      %p101 = por %p99, %p100
      %p103 = scmp.ne.s32.totalorder %s88, %s102
      %p104 = scmp.eq.s32.totalorder %s24, 0
      %p105 = por %p103, %p104
      %s107 = sadd.s32 %s106, 1
      %p110 = scmp.eq.s32.totalorder %s18, 1
      %p111 = scmp.ne.s32.totalorder %s106, %s108
      %p112 = scmp.eq.s32.totalorder %s18, 0
      %p113 = por %p111, %p112
      %p114 = scmp.ne.s32.totalorder %s106, %s108
      %p115 = scmp.eq.s32.totalorder %s23, 1
      %p116 = por %p114, %p115
      %p117 = scmp.ne.s32.totalorder %s108, %s109
      %p118 = scmp.eq.s32.totalorder %s23, 0
      %p119 = por %p117, %p118
      %p120 = scmp.ne.s32.totalorder %s108, %s109
      %p121 = scmp.eq.s32.totalorder %s24, 1
      %p122 = por %p120, %p121
      %p124 = scmp.ne.s32.totalorder %s109, %s123
      %p125 = scmp.eq.s32.totalorder %s24, 0
      %p126 = por %p124, %p125
      %s128 = sadd.s32 %s127, 1
      %p131 = scmp.eq.s32.totalorder %s18, 1
      %p132 = scmp.ne.s32.totalorder %s127, %s129
      %p133 = scmp.eq.s32.totalorder %s18, 0
      %p134 = por %p132, %p133
      %p135 = scmp.ne.s32.totalorder %s127, %s129
      %p136 = scmp.eq.s32.totalorder %s23, 1
      %p137 = por %p135, %p136
      %p138 = scmp.ne.s32.totalorder %s129, %s130
      %p139 = scmp.eq.s32.totalorder %s23, 0
      %p140 = por %p138, %p139
      %p141 = scmp.ne.s32.totalorder %s129, %s130
      %p142 = scmp.eq.s32.totalorder %s24, 1
      %p143 = por %p141, %p142
      %p145 = scmp.ne.s32.totalorder %s130, %s144
      %p146 = scmp.eq.s32.totalorder %s24, 0
      %p147 = por %p145, %p146
      %s148 = ssub.s32 %s25, %s37
      %s149 = ssub.s32 %s26, %s33
      %s150 = sor.u32 %s148, %s149
      %p151 = scmp.eq.s32.totalorder %s150, 0
      %s153 = sadd.s32 %s152, 1
      %s154 = scalar_select %p151, %s152, %s153
      %p157 = pneg %p151
      %p158 = scmp.eq.s32.totalorder %s18, 1
      %p159 = por %p157, %p158
      %p160 = scmp.ne.s32.totalorder %s152, %s155
      %p161 = scmp.eq.s32.totalorder %s18, 0
      %p162 = por %p160, %p161
      %p163 = scmp.ne.s32.totalorder %s152, %s155
      %p164 = scmp.eq.s32.totalorder %s23, 1
      %p165 = por %p163, %p164
      %p166 = scmp.ne.s32.totalorder %s155, %s156
      %p167 = scmp.eq.s32.totalorder %s23, 0
      %p168 = por %p166, %p167
      %p169 = scmp.ne.s32.totalorder %s155, %s156
      %p170 = scmp.eq.s32.totalorder %s24, 1
      %p171 = por %p169, %p170
      %p173 = scmp.ne.s32.totalorder %s156, %s172
      %p174 = scmp.eq.s32.totalorder %s24, 0
      %p175 = por %p173, %p174
      %p176 = scmp.le.s32.totalorder 1, %s18
      %p177 = scmp.lt.s32.totalorder %s18, 3
      %p178 = pnand %p176, %p177
      %p179 = pneg %p178
      // Predicated region
      $region9: #{tpu_custom_call.1} parent=5 // pred_check
        _
      $region10: #{tpu_custom_call.1} parent=5 // pred_check_branch
        %181 = sbr.rel (%p178) target = $region12
      $region11: #{tpu_custom_call.1} parent=5 // pred_region
        %s182 = ssub.s32 %s18, 1
        // Predicated region
        $region13: #{tpu_custom_call.1} parent=11 // pred_check
          %p183 = pneg %p77
        $region14: #{tpu_custom_call.1} parent=11 // pred_check_branch
          %185 = sbr.rel (%p183) target = $region16
        $region15: #{tpu_custom_call.1} parent=11 // pred_region
          %s187 = ssub.s32 1024, 1024
          %188 = vsyncadd [#allocation7], %s187
          %s189 = sshll.u32 [#allocation6], 4
          %s190 = int_to_ptr.vmem [resolvable:$true] %s189
          %195 = dma.hbm_to_vmem [thread:$0]  %s1, 1024, %s190, [#allocation7], 64, 64, 4
        $region16: #{tpu_custom_call.1} parent=11 // pred_fallthru
          _
        // Predicated region
        $region17: #{tpu_custom_call.1} parent=11 // pred_check
          %p196 = pneg %p98
        $region18: #{tpu_custom_call.1} parent=11 // pred_check_branch
          %198 = sbr.rel (%p196) target = $region20
        $region19: #{tpu_custom_call.1} parent=11 // pred_region
          _
        $region20: #{tpu_custom_call.1} parent=11 // pred_fallthru
          _
        // Predicated region
        $region21: #{tpu_custom_call.1} parent=11 // pred_check
          %p199 = pneg %p119
        $region22: #{tpu_custom_call.1} parent=11 // pred_check_branch
          %201 = sbr.rel (%p199) target = $region24
        $region23: #{tpu_custom_call.1} parent=11 // pred_region
          %s203 = ssub.s32 9216, 9216
          %204 = vsyncadd [#allocation7], %s203
          %s205 = sshll.u32 [#allocation8], 4
          %s206 = int_to_ptr.vmem [resolvable:$true] %s205
          %211 = dma.hbm_to_vmem [thread:$0]  %s3, 9216, %s206, [#allocation7], 64, 64, 4
        $region24: #{tpu_custom_call.1} parent=11 // pred_fallthru
          _
        // Predicated region
        $region25: #{tpu_custom_call.1} parent=11 // pred_check
          %p212 = pneg %p140
        $region26: #{tpu_custom_call.1} parent=11 // pred_check_branch
          %214 = sbr.rel (%p212) target = $region28
        $region27: #{tpu_custom_call.1} parent=11 // pred_region
          _
        $region28: #{tpu_custom_call.1} parent=11 // pred_fallthru
          _
      $region12: #{tpu_custom_call.1} parent=5 // pred_fallthru
        _
      %p215 = scmp.lt.s32.totalorder %s18, 2
      // Predicated region
      $region29: #{tpu_custom_call.1} parent=5 // pred_check
        %p216 = pneg %p215
      $region30: #{tpu_custom_call.1} parent=5 // pred_check_branch
        %218 = sbr.rel (%p216) target = $region32
      $region31: #{tpu_custom_call.1} parent=5 // pred_region
        // Predicated region
        $region33: #{tpu_custom_call.1} parent=31 // pred_check
          %p219 = pneg %p50
        $region34: #{tpu_custom_call.1} parent=31 // pred_check_branch
          %221 = sbr.rel (%p219) target = $region36
        $region35: #{tpu_custom_call.1} parent=31 // pred_region
          %s222 = sand.u32 %s40, 1
          %s223 = scalar_lea.sflag [#allocation4], %s222
          %s224 = sand.u32 %s40, 1
          %s225 = smul.addr %s224, 128
          %s226 = scalar_lea.vmem [#allocation3], %s225
          %s228 = ssub.s32 2048, 2048
          %229 = vsyncadd %s223, %s228
          %s230 = smul.addr %s25, 32
          %s231 = smul.addr %s230, 64
          %s232 = scalar_lea.hbm %s0, %s231
          %s233 = sshll.u32 %s226, 4
          %s234 = int_to_ptr.vmem [resolvable:$true] %s233
          %239 = dma.hbm_to_vmem [thread:$0]  %s232, 2048, %s234, %s223, 64, 64, 4
        $region36: #{tpu_custom_call.1} parent=31 // pred_fallthru
          _
      $region32: #{tpu_custom_call.1} parent=5 // pred_fallthru
        _
      %p240 = scmp.le.s32.totalorder 1, %s18
      %p241 = scmp.lt.s32.totalorder %s18, 3
      %p242 = pnand %p240, %p241
      %p243 = pneg %p242
      // Predicated region
      $region37: #{tpu_custom_call.1} parent=5 // pred_check
        _
      $region38: #{tpu_custom_call.1} parent=5 // pred_check_branch
        %245 = sbr.rel (%p242) target = $region40
      $region39: #{tpu_custom_call.1} parent=5 // pred_region
        %s246 = ssub.s32 %s18, 1
        %s247 = sand.u32 %s43, 1
        %s248 = scalar_lea.sflag [#allocation4], %s247
        %s249 = sand.u32 %s43, 1
        %s250 = smul.addr %s249, 128
        %s251 = scalar_lea.vmem [#allocation3], %s250
        // Predicated region
        $region41: #{tpu_custom_call.1} parent=39 // pred_check
          %p252 = pneg %p56
        $region42: #{tpu_custom_call.1} parent=39 // pred_check_branch
          %254 = sbr.rel (%p252) target = $region44
        $region43: #{tpu_custom_call.1} parent=39 // pred_region
          %255 = dma.done %s248, 2048
        $region44: #{tpu_custom_call.1} parent=39 // pred_fallthru
          _
        // Predicated region
        $region45: #{tpu_custom_call.1} parent=39 // pred_check
          %p256 = pneg %p77
        $region46: #{tpu_custom_call.1} parent=39 // pred_check_branch
          %258 = sbr.rel (%p256) target = $region48
        $region47: #{tpu_custom_call.1} parent=39 // pred_region
          %259 = dma.done [#allocation7], 1024
        $region48: #{tpu_custom_call.1} parent=39 // pred_fallthru
          _
        // Predicated region
        $region49: #{tpu_custom_call.1} parent=39 // pred_check
          %p260 = pneg %p119
        $region50: #{tpu_custom_call.1} parent=39 // pred_check_branch
          %262 = sbr.rel (%p260) target = $region52
        $region51: #{tpu_custom_call.1} parent=39 // pred_region
          %263 = dma.done [#allocation7], 9216
        $region52: #{tpu_custom_call.1} parent=39 // pred_fallthru
          _
        %s264 = sand.u32 %s43, 1
        %s265 = scalar_lea.sflag [#allocation4], %s264
        %s266 = sand.u32 %s43, 1
        %s267 = smul.addr %s266, 128
        %s268 = scalar_lea.vmem [#allocation3], %s267
        %p269 = pneg %p56
        %p270 = pneg %p53
        %p271 = pneg %p77
        %p272 = pneg %p74
        %p273 = pneg %p98
        %p274 = pneg %p95
        %p275 = pneg %p119
        %p276 = pneg %p116
        %p277 = pneg %p140
        %p278 = pneg %p137
        %p279 = pneg %p168
        %p280 = pneg %p165
        %s281 = sand.u32 %s155, 1
        %s282 = scalar_lea.sflag [#allocation5], %s281
        %s283 = sand.u32 %s155, 1
        %s284 = smul.addr %s283, 128
        %s285 = scalar_lea.vmem [#allocation9], %s284
        %s286 = smul.u32 16, %s28
        %s288 = smul.u32 %s28, 16
        %vm289 = vcmask 1040384
        %vm290 = vsmask.f32 256
        %vm291 = vmand %vm289, %vm290
        %v292 = vld [vmem:[#allocation2] sm:$0x1]
        %v293 = vsel %vm291, 0, %v292
        %294 = vst [vmem:[#allocation2] sm:$0x1] %v293
        %v295 = vld [vmem:[#allocation2 + $0xc] sm:$0x1]
        %v296 = vsel %vm291, 0, %v295
        %297 = vst [vmem:[#allocation2 + $0xc] sm:$0x1] %v296
        %v298 = vld [vmem:[#allocation2 + $0x18] sm:$0x1]
        %v299 = vsel %vm291, 0, %v298
        %300 = vst [vmem:[#allocation2 + $0x18] sm:$0x1] %v299
        %v301 = vld [vmem:[#allocation2 + $0x24] sm:$0x1]
        %v302 = vsel %vm291, 0, %v301
        %303 = vst [vmem:[#allocation2 + $0x24] sm:$0x1] %v302
        %v304 = vld [vmem:[#allocation2 + $0x30] sm:$0x1]
        %v305 = vsel %vm291, 0, %v304
        %306 = vst [vmem:[#allocation2 + $0x30] sm:$0x1] %v305
        %v307 = vld [vmem:[#allocation2 + $0x3c] sm:$0x1]
        %v308 = vsel %vm291, 0, %v307
        %309 = vst [vmem:[#allocation2 + $0x3c] sm:$0x1] %v308
        %v310 = vld [vmem:[#allocation2 + $0x48] sm:$0x1]
        %v311 = vsel %vm291, 0, %v310
        %312 = vst [vmem:[#allocation2 + $0x48] sm:$0x1] %v311
        %v313 = vld [vmem:[#allocation2 + $0x54] sm:$0x1]
        %v314 = vsel %vm291, 0, %v313
        %315 = vst [vmem:[#allocation2 + $0x54] sm:$0x1] %v314
        %v316 = vld [vmem:[#allocation2 + $0x60] sm:$0x1]
        %v317 = vsel %vm291, 0, %v316
        %318 = vst [vmem:[#allocation2 + $0x60] sm:$0x1] %v317
        %v319 = vld [vmem:[#allocation2 + $0x6c] sm:$0x1]
        %v320 = vsel %vm291, 0, %v319
        %321 = vst [vmem:[#allocation2 + $0x6c] sm:$0x1] %v320
        %v322 = vld [vmem:[#allocation2 + $0x78] sm:$0x1]
        %v323 = vsel %vm291, 0, %v322
        %324 = vst [vmem:[#allocation2 + $0x78] sm:$0x1] %v323
        %v325 = vld [vmem:[#allocation2 + $0x84] sm:$0x1]
        %v326 = vsel %vm291, 0, %v325
        %327 = vst [vmem:[#allocation2 + $0x84] sm:$0x1] %v326
        %v328 = vld [vmem:[#allocation2 + $0x90] sm:$0x1]
        %v329 = vsel %vm291, 0, %v328
        %330 = vst [vmem:[#allocation2 + $0x90] sm:$0x1] %v329
        %v331 = vld [vmem:[#allocation2 + $0x9c] sm:$0x1]
        %v332 = vsel %vm291, 0, %v331
        %333 = vst [vmem:[#allocation2 + $0x9c] sm:$0x1] %v332
        %v334 = vld [vmem:[#allocation2 + $0xa8] sm:$0x1]
        %v335 = vsel %vm291, 0, %v334
        %336 = vst [vmem:[#allocation2 + $0xa8] sm:$0x1] %v335
        %v337 = vld [vmem:[#allocation2 + $0xb4] sm:$0x1]
        %v338 = vsel %vm291, 0, %v337
        %339 = vst [vmem:[#allocation2 + $0xb4] sm:$0x1] %v338
        %v340 = vld [vmem:[#allocation2 + $0xc0] sm:$0x1]
        %v341 = vsel %vm291, 0, %v340
        %342 = vst [vmem:[#allocation2 + $0xc0] sm:$0x1] %v341
        %v343 = vld [vmem:[#allocation2 + $0xcc] sm:$0x1]
        %v344 = vsel %vm291, 0, %v343
        %345 = vst [vmem:[#allocation2 + $0xcc] sm:$0x1] %v344
        %vm346 = vsmask.f32 7938
        %vm347 = vmand %vm289, %vm346
        %v348 = vld [vmem:[#allocation2 + $0x8] sm:$0x1]
        %v349 = vsel %vm347, 0, %v348
        %350 = vst [vmem:[#allocation2 + $0x8] sm:$0x1] %v349
        %v351 = vld [vmem:[#allocation2 + $0x14] sm:$0x1]
        %v352 = vsel %vm347, 0, %v351
        %353 = vst [vmem:[#allocation2 + $0x14] sm:$0x1] %v352
        %v354 = vld [vmem:[#allocation2 + $0x20] sm:$0x1]
        %v355 = vsel %vm347, 0, %v354
        %356 = vst [vmem:[#allocation2 + $0x20] sm:$0x1] %v355
        %v357 = vld [vmem:[#allocation2 + $0x2c] sm:$0x1]
        %v358 = vsel %vm347, 0, %v357
        %359 = vst [vmem:[#allocation2 + $0x2c] sm:$0x1] %v358
        %v360 = vld [vmem:[#allocation2 + $0x38] sm:$0x1]
        %v361 = vsel %vm347, 0, %v360
        %362 = vst [vmem:[#allocation2 + $0x38] sm:$0x1] %v361
        %v363 = vld [vmem:[#allocation2 + $0x44] sm:$0x1]
        %v364 = vsel %vm347, 0, %v363
        %365 = vst [vmem:[#allocation2 + $0x44] sm:$0x1] %v364
        %v366 = vld [vmem:[#allocation2 + $0x50] sm:$0x1]
        %v367 = vsel %vm347, 0, %v366
        %368 = vst [vmem:[#allocation2 + $0x50] sm:$0x1] %v367
        %v369 = vld [vmem:[#allocation2 + $0x5c] sm:$0x1]
        %v370 = vsel %vm347, 0, %v369
        %371 = vst [vmem:[#allocation2 + $0x5c] sm:$0x1] %v370
        %v372 = vld [vmem:[#allocation2 + $0x68] sm:$0x1]
        %v373 = vsel %vm347, 0, %v372
        %374 = vst [vmem:[#allocation2 + $0x68] sm:$0x1] %v373
        %v375 = vld [vmem:[#allocation2 + $0x74] sm:$0x1]
        %v376 = vsel %vm347, 0, %v375
        %377 = vst [vmem:[#allocation2 + $0x74] sm:$0x1] %v376
        %v378 = vld [vmem:[#allocation2 + $0x80] sm:$0x1]
        %v379 = vsel %vm347, 0, %v378
        %380 = vst [vmem:[#allocation2 + $0x80] sm:$0x1] %v379
        %v381 = vld [vmem:[#allocation2 + $0x8c] sm:$0x1]
        %v382 = vsel %vm347, 0, %v381
        %383 = vst [vmem:[#allocation2 + $0x8c] sm:$0x1] %v382
        %v384 = vld [vmem:[#allocation2 + $0x98] sm:$0x1]
        %v385 = vsel %vm347, 0, %v384
        %386 = vst [vmem:[#allocation2 + $0x98] sm:$0x1] %v385
        %v387 = vld [vmem:[#allocation2 + $0xa4] sm:$0x1]
        %v388 = vsel %vm347, 0, %v387
        %389 = vst [vmem:[#allocation2 + $0xa4] sm:$0x1] %v388
        %v390 = vld [vmem:[#allocation2 + $0xb0] sm:$0x1]
        %v391 = vsel %vm347, 0, %v390
        %392 = vst [vmem:[#allocation2 + $0xb0] sm:$0x1] %v391
        %v393 = vld [vmem:[#allocation2 + $0xbc] sm:$0x1]
        %v394 = vsel %vm347, 0, %v393
        %395 = vst [vmem:[#allocation2 + $0xbc] sm:$0x1] %v394
        %v396 = vld [vmem:[#allocation2 + $0xc8] sm:$0x1]
        %v397 = vsel %vm347, 0, %v396
        %398 = vst [vmem:[#allocation2 + $0xc8] sm:$0x1] %v397
        %v399 = vld [vmem:[#allocation2 + $0xd4] sm:$0x1]
        %v400 = vsel %vm347, 0, %v399
        %401 = vst [vmem:[#allocation2 + $0xd4] sm:$0x1] %v400
        %p402 = scmp.eq.s32.totalorder %s288, 0
        // Predicated region
        $region53: #{tpu_custom_call.1} parent=39 // pred_check
          %p403 = pneg %p402
        $region54: #{tpu_custom_call.1} parent=39 // pred_check_branch
          %405 = sbr.rel (%p403) target = $region56
        $region55: #{tpu_custom_call.1} parent=39 // pred_region
          %406 = vst [vmem:[#allocation2] sm:$0xf] 0
          %407 = vst [vmem:[#allocation2 + $0x4] sm:$0xf] 0
          %408 = vst [vmem:[#allocation2 + $0x8] sm:$0x1] 0
        $region56: #{tpu_custom_call.1} parent=39 // pred_fallthru
          _
        %s409 = sadd.s32 %s288, 16
        %p410 = scmp.eq.s32.totalorder %s409, 16
        // Predicated region
        $region57: #{tpu_custom_call.1} parent=39 // pred_check
          %p411 = pneg %p410
        $region58: #{tpu_custom_call.1} parent=39 // pred_check_branch
          %413 = sbr.rel (%p411) target = $region60
        $region59: #{tpu_custom_call.1} parent=39 // pred_region
          %s414 = scalar_lea.vmem [#allocation2], 204
          %415 = vst [vmem:[%s414] sm:$0xf] 0
          %416 = vst [vmem:[%s414 + $0x4] sm:$0xf] 0
          %417 = vst [vmem:[%s414 + $0x8] sm:$0x1] 0
        $region60: #{tpu_custom_call.1} parent=39 // pred_fallthru
          _
        %s418 = smul.u32 %s288, 2
        %s419 = smul.addr %s418, 4
        %s420 = scalar_lea.vmem %s251, %s419 [#allocation3]
        %v421 = vld [vmem:[%s420] sm:$0xf]
        %v422 = vld [vmem:[%s420 + $0x4] sm:$0xf]
        %v423 = vld [vmem:[%s420 + $0x8] sm:$0xf]
        %v424 = vld [vmem:[%s420 + $0xc] sm:$0xf]
        %v425 = vld [vmem:[%s420 + $0x10] sm:$0xf]
        %v426 = vld [vmem:[%s420 + $0x14] sm:$0xf]
        %v427 = vld [vmem:[%s420 + $0x18] sm:$0xf]
        %v428 = vld [vmem:[%s420 + $0x1c] sm:$0xf]
        %v429 = vld [vmem:[%s420 + $0x20] sm:$0xf]
        %v430 = vld [vmem:[%s420 + $0x24] sm:$0xf]
        %v431 = vld [vmem:[%s420 + $0x28] sm:$0xf]
        %v432 = vld [vmem:[%s420 + $0x2c] sm:$0xf]
        %v433 = vld [vmem:[%s420 + $0x30] sm:$0xf]
        %v434 = vld [vmem:[%s420 + $0x34] sm:$0xf]
        %v435 = vld [vmem:[%s420 + $0x38] sm:$0xf]
        %v436 = vld [vmem:[%s420 + $0x3c] sm:$0xf]
        %v437 = vld [vmem:[%s420 + $0x40] sm:$0xf]
        %v438 = vld [vmem:[%s420 + $0x44] sm:$0xf]
        %v439 = vld [vmem:[%s420 + $0x48] sm:$0xf]
        %v440 = vld [vmem:[%s420 + $0x4c] sm:$0xf]
        %v441 = vld [vmem:[%s420 + $0x50] sm:$0xf]
        %v442 = vld [vmem:[%s420 + $0x54] sm:$0xf]
        %v443 = vld [vmem:[%s420 + $0x58] sm:$0xf]
        %v444 = vld [vmem:[%s420 + $0x5c] sm:$0xf]
        %v445 = vld [vmem:[%s420 + $0x60] sm:$0xf]
        %v446 = vld [vmem:[%s420 + $0x64] sm:$0xf]
        %v447 = vld [vmem:[%s420 + $0x68] sm:$0xf]
        %v448 = vld [vmem:[%s420 + $0x6c] sm:$0xf]
        %v449 = vld [vmem:[%s420 + $0x70] sm:$0xf]
        %v450 = vld [vmem:[%s420 + $0x74] sm:$0xf]
        %v451 = vld [vmem:[%s420 + $0x78] sm:$0xf]
        %v452 = vld [vmem:[%s420 + $0x7c] sm:$0xf]
        %v453 = vld [vmem:[#allocation6] sm:$0xf]
        %v454 = vld [vmem:[#allocation6 + $0x4] sm:$0xf]
        %v455 = vld [vmem:[#allocation6 + $0x8] sm:$0xf]
        %v456 = vld [vmem:[#allocation6 + $0xc] sm:$0xf]
        %v457 = vld [vmem:[#allocation6 + $0x10] sm:$0xf]
        %v458 = vld [vmem:[#allocation6 + $0x14] sm:$0xf]
        %v459 = vld [vmem:[#allocation6 + $0x18] sm:$0xf]
        %v460 = vld [vmem:[#allocation6 + $0x1c] sm:$0xf]
        %v461 = vld [vmem:[#allocation6 + $0x20] sm:$0xf]
        %v462 = vld [vmem:[#allocation6 + $0x24] sm:$0xf]
        %v463 = vld [vmem:[#allocation6 + $0x28] sm:$0xf]
        %v464 = vld [vmem:[#allocation6 + $0x2c] sm:$0xf]
        %v465 = vld [vmem:[#allocation6 + $0x30] sm:$0xf]
        %v466 = vld [vmem:[#allocation6 + $0x34] sm:$0xf]
        %v467 = vld [vmem:[#allocation6 + $0x38] sm:$0xf]
        %v468 = vld [vmem:[#allocation6 + $0x3c] sm:$0xf]
        %v469 = vld [vmem:[%s2] sm:$0x1]
        %v471 = vlaneseq
        %v472 = vshrl.u32 %v471, 7
        %v473 = vsub.s32 0, %v472
        %v474 = vrot.slane %v469, %v473
        %v508 = vunpack.c.l.b16 %v421
        %v509 = vunpack.c.l.b16 %v422
        %v510 = vunpack.c.l.b16 %v423
        %v511 = vunpack.c.l.b16 %v424
        %v512 = vunpack.c.l.b16 %v425
        %v513 = vunpack.c.l.b16 %v426
        %v514 = vunpack.c.l.b16 %v427
        %v515 = vunpack.c.l.b16 %v428
        %v516 = vunpack.c.l.b16 %v429
        %v517 = vunpack.c.l.b16 %v430
        %v518 = vunpack.c.l.b16 %v431
        %v519 = vunpack.c.l.b16 %v432
        %v520 = vunpack.c.l.b16 %v433
        %v521 = vunpack.c.l.b16 %v434
        %v522 = vunpack.c.l.b16 %v435
        %v523 = vunpack.c.l.b16 %v436
        %v524 = vunpack.c.l.b16 %v437
        %v525 = vunpack.c.l.b16 %v438
        %v526 = vunpack.c.l.b16 %v439
        %v527 = vunpack.c.l.b16 %v440
        %v528 = vunpack.c.l.b16 %v441
        %v529 = vunpack.c.l.b16 %v442
        %v530 = vunpack.c.l.b16 %v443
        %v531 = vunpack.c.l.b16 %v444
        %v532 = vunpack.c.l.b16 %v445
        %v533 = vunpack.c.l.b16 %v446
        %v534 = vunpack.c.l.b16 %v447
        %v535 = vunpack.c.l.b16 %v448
        %v536 = vunpack.c.l.b16 %v449
        %v537 = vunpack.c.l.b16 %v450
        %v538 = vunpack.c.l.b16 %v451
        %v539 = vunpack.c.l.b16 %v452
        %v540 = vpack.c.b16 %v509, %v508
        %v541 = vpack.c.b16 %v511, %v510
        %v542 = vpack.c.b16 %v513, %v512
        %v543 = vpack.c.b16 %v515, %v514
        %v544 = vpack.c.b16 %v517, %v516
        %v545 = vpack.c.b16 %v519, %v518
        %v546 = vpack.c.b16 %v521, %v520
        %v547 = vpack.c.b16 %v523, %v522
        %v548 = vpack.c.b16 %v525, %v524
        %v549 = vpack.c.b16 %v527, %v526
        %v550 = vpack.c.b16 %v529, %v528
        %v551 = vpack.c.b16 %v531, %v530
        %v552 = vpack.c.b16 %v533, %v532
        %v553 = vpack.c.b16 %v535, %v534
        %v554 = vpack.c.b16 %v537, %v536
        %v555 = vpack.c.b16 %v539, %v538
        %v588 = vunpack.c.l.b16 %v453
        %v589 = vunpack.c.l.b16 %v454
        %v590 = vunpack.c.l.b16 %v455
        %v591 = vunpack.c.l.b16 %v456
        %v592 = vunpack.c.l.b16 %v457
        %v593 = vunpack.c.l.b16 %v458
        %v594 = vunpack.c.l.b16 %v459
        %v595 = vunpack.c.l.b16 %v460
        %v596 = vunpack.c.l.b16 %v461
        %v597 = vunpack.c.l.b16 %v462
        %v598 = vunpack.c.l.b16 %v463
        %v599 = vunpack.c.l.b16 %v464
        %v600 = vunpack.c.l.b16 %v465
        %v601 = vunpack.c.l.b16 %v466
        %v602 = vunpack.c.l.b16 %v467
        %v603 = vunpack.c.l.b16 %v468
        %v604 = vpack.c.b16 %v589, %v588
        %v605 = vpack.c.b16 %v591, %v590
        %v606 = vpack.c.b16 %v593, %v592
        %v607 = vpack.c.b16 %v595, %v594
        %v608 = vpack.c.b16 %v597, %v596
        %v609 = vpack.c.b16 %v599, %v598
        %v610 = vpack.c.b16 %v601, %v600
        %v611 = vpack.c.b16 %v603, %v602
        %620 = vmatprep.subr.bf16.mxu0 0
        %621 = vmatpush1.bf16.msra.mxu0 %v604
        %622 = vmatprep.subr.bf16.mxu0 0
        %623 = vmatpush1.bf16.msra.mxu0 %v605
        %624 = vmatprep.subr.bf16.mxu0 0
        %625 = vmatpush1.bf16.msra.mxu0 %v606
        %626 = vmatprep.subr.bf16.mxu0 0
        %627 = vmatpush1.bf16.msra.mxu0 %v607
        %628 = vmatprep.subr.bf16.mxu0 0
        %629 = vmatpush1.bf16.msra.mxu0 %v608
        %630 = vmatprep.subr.bf16.mxu0 0
        %631 = vmatpush1.bf16.msra.mxu0 %v609
        %632 = vmatprep.subr.bf16.mxu0 0
        %633 = vmatpush1.bf16.msra.mxu0 %v610
        %634 = vmatprep.subr.bf16.mxu0 0
        %635 = vmatpush1.bf16.msra.mxu0 %v611
        %636 = vmatprep.subr.bf16.mxu0 0
        %637 = vmatpush1.bf16.msra.mxu0 0
        %638 = vmatprep.subr.bf16.mxu0 0
        %639 = vmatpush1.bf16.msra.mxu0 0
        %640 = vmatprep.subr.bf16.mxu0 0
        %641 = vmatpush1.bf16.msra.mxu0 0
        %642 = vmatprep.subr.bf16.mxu0 0
        %643 = vmatpush1.bf16.msra.mxu0 0
        %644 = vmatprep.subr.bf16.mxu0 0
        %645 = vmatpush1.bf16.msra.mxu0 0
        %646 = vmatprep.subr.bf16.mxu0 0
        %647 = vmatpush1.bf16.msra.mxu0 0
        %648 = vmatprep.subr.bf16.mxu0 0
        %649 = vmatpush1.bf16.msra.mxu0 0
        %650 = vmatprep.subr.bf16.mxu0 0
        %651 = vmatpush1.bf16.msra.mxu0 0
        %652 = vmatprep.mubr.bf16.mxu0 0
        %653 = vmatmul.mubr.bf16.gmra.mrb[0].mxu0 %v540
        %v654 = vpop.f32.mrb[0].mxu0
        %v655 = vadd.f32 %v474, %v654
        %v656 = vpop.f32.mrb[0].mxu0
        %v657 = vpop.f32.mrb[0].mxu0
        %v658 = vadd.f32 %v474, %v657
        %v659 = vpop.f32.mrb[0].mxu0
        %660 = vmatprep.mubr.bf16.mxu0 0
        %661 = vmatmul.mubr.bf16.gmra.mrb[0].mxu0 %v541
        %v662 = vpop.f32.mrb[0].mxu0
        %v663 = vadd.f32 %v474, %v662
        %v664 = vpop.f32.mrb[0].mxu0
        %v665 = vpop.f32.mrb[0].mxu0
        %v666 = vadd.f32 %v474, %v665
        %v667 = vpop.f32.mrb[0].mxu0
        %668 = vmatprep.mubr.bf16.mxu0 0
        %669 = vmatmul.mubr.bf16.gmra.mrb[0].mxu0 %v542
        %v670 = vpop.f32.mrb[0].mxu0
        %v671 = vadd.f32 %v474, %v670
        %v672 = vpop.f32.mrb[0].mxu0
        %v673 = vpop.f32.mrb[0].mxu0
        %v674 = vadd.f32 %v474, %v673
        %v675 = vpop.f32.mrb[0].mxu0
        %676 = vmatprep.mubr.bf16.mxu0 0
        %677 = vmatmul.mubr.bf16.gmra.mrb[0].mxu0 %v543
        %v678 = vpop.f32.mrb[0].mxu0
        %v679 = vadd.f32 %v474, %v678
        %v680 = vpop.f32.mrb[0].mxu0
        %v681 = vpop.f32.mrb[0].mxu0
        %v682 = vadd.f32 %v474, %v681
        %v683 = vpop.f32.mrb[0].mxu0
        %684 = vmatprep.mubr.bf16.mxu0 0
        %685 = vmatmul.mubr.bf16.gmra.mrb[0].mxu0 %v544
        %v686 = vpop.f32.mrb[0].mxu0
        %v687 = vadd.f32 %v474, %v686
        %v688 = vpop.f32.mrb[0].mxu0
        %v689 = vpop.f32.mrb[0].mxu0
        %v690 = vadd.f32 %v474, %v689
        %v691 = vpop.f32.mrb[0].mxu0
        %692 = vmatprep.mubr.bf16.mxu0 0
        %693 = vmatmul.mubr.bf16.gmra.mrb[0].mxu0 %v545
        %v694 = vpop.f32.mrb[0].mxu0
        %v695 = vadd.f32 %v474, %v694
        %v696 = vpop.f32.mrb[0].mxu0
        %v697 = vpop.f32.mrb[0].mxu0
        %v698 = vadd.f32 %v474, %v697
        %v699 = vpop.f32.mrb[0].mxu0
        %700 = vmatprep.mubr.bf16.mxu0 0
        %701 = vmatmul.mubr.bf16.gmra.mrb[0].mxu0 %v546
        %v702 = vpop.f32.mrb[0].mxu0
        %v703 = vadd.f32 %v474, %v702
        %v704 = vpop.f32.mrb[0].mxu0
        %v705 = vpop.f32.mrb[0].mxu0
        %v706 = vadd.f32 %v474, %v705
        %v707 = vpop.f32.mrb[0].mxu0
        %708 = vmatprep.mubr.bf16.mxu0 0
        %709 = vmatmul.mubr.bf16.gmra.mrb[0].mxu0 %v547
        %v710 = vpop.f32.mrb[0].mxu0
        %v711 = vadd.f32 %v474, %v710
        %v712 = vpop.f32.mrb[0].mxu0
        %v713 = vpop.f32.mrb[0].mxu0
        %v714 = vadd.f32 %v474, %v713
        %v715 = vpop.f32.mrb[0].mxu0
        %716 = vmatprep.mubr.bf16.mxu0 0
        %717 = vmatmul.mubr.bf16.gmra.mrb[0].mxu0 %v548
        %v718 = vpop.f32.mrb[0].mxu0
        %v719 = vadd.f32 %v474, %v718
        %v720 = vpop.f32.mrb[0].mxu0
        %v721 = vpop.f32.mrb[0].mxu0
        %v722 = vadd.f32 %v474, %v721
        %v723 = vpop.f32.mrb[0].mxu0
        %724 = vmatprep.mubr.bf16.mxu0 0
        %725 = vmatmul.mubr.bf16.gmra.mrb[0].mxu0 %v549
        %v726 = vpop.f32.mrb[0].mxu0
        %v727 = vadd.f32 %v474, %v726
        %v728 = vpop.f32.mrb[0].mxu0
        %v729 = vpop.f32.mrb[0].mxu0
        %v730 = vadd.f32 %v474, %v729
        %v731 = vpop.f32.mrb[0].mxu0
        %732 = vmatprep.mubr.bf16.mxu0 0
        %733 = vmatmul.mubr.bf16.gmra.mrb[0].mxu0 %v550
        %v734 = vpop.f32.mrb[0].mxu0
        %v735 = vadd.f32 %v474, %v734
        %v736 = vpop.f32.mrb[0].mxu0
        %v737 = vpop.f32.mrb[0].mxu0
        %v738 = vadd.f32 %v474, %v737
        %v739 = vpop.f32.mrb[0].mxu0
        %740 = vmatprep.mubr.bf16.mxu0 0
        %741 = vmatmul.mubr.bf16.gmra.mrb[0].mxu0 %v551
        %v742 = vpop.f32.mrb[0].mxu0
        %v743 = vadd.f32 %v474, %v742
        %v744 = vpop.f32.mrb[0].mxu0
        %v745 = vpop.f32.mrb[0].mxu0
        %v746 = vadd.f32 %v474, %v745
        %v747 = vpop.f32.mrb[0].mxu0
        %748 = vmatprep.mubr.bf16.mxu0 0
        %749 = vmatmul.mubr.bf16.gmra.mrb[0].mxu0 %v552
        %v750 = vpop.f32.mrb[0].mxu0
        %v751 = vadd.f32 %v474, %v750
        %v752 = vpop.f32.mrb[0].mxu0
        %v753 = vpop.f32.mrb[0].mxu0
        %v754 = vadd.f32 %v474, %v753
        %v755 = vpop.f32.mrb[0].mxu0
        %756 = vmatprep.mubr.bf16.mxu0 0
        %757 = vmatmul.mubr.bf16.gmra.mrb[0].mxu0 %v553
        %v758 = vpop.f32.mrb[0].mxu0
        %v759 = vadd.f32 %v474, %v758
        %v760 = vpop.f32.mrb[0].mxu0
        %v761 = vpop.f32.mrb[0].mxu0
        %v762 = vadd.f32 %v474, %v761
        %v763 = vpop.f32.mrb[0].mxu0
        %764 = vmatprep.mubr.bf16.mxu0 0
        %765 = vmatmul.mubr.bf16.gmra.mrb[0].mxu0 %v554
        %v766 = vpop.f32.mrb[0].mxu0
        %v767 = vadd.f32 %v474, %v766
        %v768 = vpop.f32.mrb[0].mxu0
        %v769 = vpop.f32.mrb[0].mxu0
        %v770 = vadd.f32 %v474, %v769
        %v771 = vpop.f32.mrb[0].mxu0
        %772 = vmatprep.mubr.bf16.mxu0 0
        %773 = vmatmul.mubr.bf16.gmra.mrb[0].mxu0 %v555
        %v774 = vpop.f32.mrb[0].mxu0
        %v775 = vadd.f32 %v474, %v774
        %v776 = vpop.f32.mrb[0].mxu0
        %v777 = vpop.f32.mrb[0].mxu0
        %v778 = vadd.f32 %v474, %v777
        %v779 = vpop.f32.mrb[0].mxu0
        %780 = vdwg.mxu0
        %v781 = vsub.f32 0.0, %v655
        %v782 = vsub.f32 0.0, %v658
        %v783 = vsub.f32 0.0, %v663
        %v784 = vsub.f32 0.0, %v666
        %v785 = vsub.f32 0.0, %v671
        %v786 = vsub.f32 0.0, %v674
        %v787 = vsub.f32 0.0, %v679
        %v788 = vsub.f32 0.0, %v682
        %v789 = vsub.f32 0.0, %v687
        %v790 = vsub.f32 0.0, %v690
        %v791 = vsub.f32 0.0, %v695
        %v792 = vsub.f32 0.0, %v698
        %v793 = vsub.f32 0.0, %v703
        %v794 = vsub.f32 0.0, %v706
        %v795 = vsub.f32 0.0, %v711
        %v796 = vsub.f32 0.0, %v714
        %v797 = vsub.f32 0.0, %v719
        %v798 = vsub.f32 0.0, %v722
        %v799 = vsub.f32 0.0, %v727
        %v800 = vsub.f32 0.0, %v730
        %v801 = vsub.f32 0.0, %v735
        %v802 = vsub.f32 0.0, %v738
        %v803 = vsub.f32 0.0, %v743
        %v804 = vsub.f32 0.0, %v746
        %v805 = vsub.f32 0.0, %v751
        %v806 = vsub.f32 0.0, %v754
        %v807 = vsub.f32 0.0, %v759
        %v808 = vsub.f32 0.0, %v762
        %v809 = vsub.f32 0.0, %v767
        %v810 = vsub.f32 0.0, %v770
        %v811 = vsub.f32 0.0, %v775
        %v812 = vsub.f32 0.0, %v778
        %v813 = vmul.f32 %v781, 1.442695
        %v814 = vpow.pop %v813
        %v815 = vmul.f32 %v782, 1.442695
        %v816 = vpow.pop %v815
        %v817 = vmul.f32 %v783, 1.442695
        %v818 = vpow.pop %v817
        %v819 = vmul.f32 %v784, 1.442695
        %v820 = vpow.pop %v819
        %v821 = vmul.f32 %v785, 1.442695
        %v822 = vpow.pop %v821
        %v823 = vmul.f32 %v786, 1.442695
        %v824 = vpow.pop %v823
        %v825 = vmul.f32 %v787, 1.442695
        %v826 = vpow.pop %v825
        %v827 = vmul.f32 %v788, 1.442695
        %v828 = vpow.pop %v827
        %v829 = vmul.f32 %v789, 1.442695
        %v830 = vpow.pop %v829
        %v831 = vmul.f32 %v790, 1.442695
        %v832 = vpow.pop %v831
        %v833 = vmul.f32 %v791, 1.442695
        %v834 = vpow.pop %v833
        %v835 = vmul.f32 %v792, 1.442695
        %v836 = vpow.pop %v835
        %v837 = vmul.f32 %v793, 1.442695
        %v838 = vpow.pop %v837
        %v839 = vmul.f32 %v794, 1.442695
        %v840 = vpow.pop %v839
        %v841 = vmul.f32 %v795, 1.442695
        %v842 = vpow.pop %v841
        %v843 = vmul.f32 %v796, 1.442695
        %v844 = vpow.pop %v843
        %v845 = vmul.f32 %v797, 1.442695
        %v846 = vpow.pop %v845
        %v847 = vmul.f32 %v798, 1.442695
        %v848 = vpow.pop %v847
        %v849 = vmul.f32 %v799, 1.442695
        %v850 = vpow.pop %v849
        %v851 = vmul.f32 %v800, 1.442695
        %v852 = vpow.pop %v851
        %v853 = vmul.f32 %v801, 1.442695
        %v854 = vpow.pop %v853
        %v855 = vmul.f32 %v802, 1.442695
        %v856 = vpow.pop %v855
        %v857 = vmul.f32 %v803, 1.442695
        %v858 = vpow.pop %v857
        %v859 = vmul.f32 %v804, 1.442695
        %v860 = vpow.pop %v859
        %v861 = vmul.f32 %v805, 1.442695
        %v862 = vpow.pop %v861
        %v863 = vmul.f32 %v806, 1.442695
        %v864 = vpow.pop %v863
        %v865 = vmul.f32 %v807, 1.442695
        %v866 = vpow.pop %v865
        %v867 = vmul.f32 %v808, 1.442695
        %v868 = vpow.pop %v867
        %v869 = vmul.f32 %v809, 1.442695
        %v870 = vpow.pop %v869
        %v871 = vmul.f32 %v810, 1.442695
        %v872 = vpow.pop %v871
        %v873 = vmul.f32 %v811, 1.442695
        %v874 = vpow.pop %v873
        %v875 = vmul.f32 %v812, 1.442695
        %v876 = vpow.pop %v875
        %v877 = vadd.f32 %v814, 1.0
        %v878 = vadd.f32 %v816, 1.0
        %v879 = vadd.f32 %v818, 1.0
        %v880 = vadd.f32 %v820, 1.0
        %v881 = vadd.f32 %v822, 1.0
        %v882 = vadd.f32 %v824, 1.0
        %v883 = vadd.f32 %v826, 1.0
        %v884 = vadd.f32 %v828, 1.0
        %v885 = vadd.f32 %v830, 1.0
        %v886 = vadd.f32 %v832, 1.0
        %v887 = vadd.f32 %v834, 1.0
        %v888 = vadd.f32 %v836, 1.0
        %v889 = vadd.f32 %v838, 1.0
        %v890 = vadd.f32 %v840, 1.0
        %v891 = vadd.f32 %v842, 1.0
        %v892 = vadd.f32 %v844, 1.0
        %v893 = vadd.f32 %v846, 1.0
        %v894 = vadd.f32 %v848, 1.0
        %v895 = vadd.f32 %v850, 1.0
        %v896 = vadd.f32 %v852, 1.0
        %v897 = vadd.f32 %v854, 1.0
        %v898 = vadd.f32 %v856, 1.0
        %v899 = vadd.f32 %v858, 1.0
        %v900 = vadd.f32 %v860, 1.0
        %v901 = vadd.f32 %v862, 1.0
        %v902 = vadd.f32 %v864, 1.0
        %v903 = vadd.f32 %v866, 1.0
        %v904 = vadd.f32 %v868, 1.0
        %v905 = vadd.f32 %v870, 1.0
        %v906 = vadd.f32 %v872, 1.0
        %v907 = vadd.f32 %v874, 1.0
        %v908 = vadd.f32 %v876, 1.0
        %v909 = vrcp.pop %v877
        %v910 = vrcp.pop %v878
        %v911 = vrcp.pop %v879
        %v912 = vrcp.pop %v880
        %v913 = vrcp.pop %v881
        %v914 = vrcp.pop %v882
        %v915 = vrcp.pop %v883
        %v916 = vrcp.pop %v884
        %v917 = vrcp.pop %v885
        %v918 = vrcp.pop %v886
        %v919 = vrcp.pop %v887
        %v920 = vrcp.pop %v888
        %v921 = vrcp.pop %v889
        %v922 = vrcp.pop %v890
        %v923 = vrcp.pop %v891
        %v924 = vrcp.pop %v892
        %v925 = vrcp.pop %v893
        %v926 = vrcp.pop %v894
        %v927 = vrcp.pop %v895
        %v928 = vrcp.pop %v896
        %v929 = vrcp.pop %v897
        %v930 = vrcp.pop %v898
        %v931 = vrcp.pop %v899
        %v932 = vrcp.pop %v900
        %v933 = vrcp.pop %v901
        %v934 = vrcp.pop %v902
        %v935 = vrcp.pop %v903
        %v936 = vrcp.pop %v904
        %v937 = vrcp.pop %v905
        %v938 = vrcp.pop %v906
        %v939 = vrcp.pop %v907
        %v940 = vrcp.pop %v908
        %v941 = vmul.f32 %v655, %v909
        %v942 = vmul.f32 %v658, %v910
        %v943 = vmul.f32 %v663, %v911
        %v944 = vmul.f32 %v666, %v912
        %v945 = vmul.f32 %v671, %v913
        %v946 = vmul.f32 %v674, %v914
        %v947 = vmul.f32 %v679, %v915
        %v948 = vmul.f32 %v682, %v916
        %v949 = vmul.f32 %v687, %v917
        %v950 = vmul.f32 %v690, %v918
        %v951 = vmul.f32 %v695, %v919
        %v952 = vmul.f32 %v698, %v920
        %v953 = vmul.f32 %v703, %v921
        %v954 = vmul.f32 %v706, %v922
        %v955 = vmul.f32 %v711, %v923
        %v956 = vmul.f32 %v714, %v924
        %v957 = vmul.f32 %v719, %v925
        %v958 = vmul.f32 %v722, %v926
        %v959 = vmul.f32 %v727, %v927
        %v960 = vmul.f32 %v730, %v928
        %v961 = vmul.f32 %v735, %v929
        %v962 = vmul.f32 %v738, %v930
        %v963 = vmul.f32 %v743, %v931
        %v964 = vmul.f32 %v746, %v932
        %v965 = vmul.f32 %v751, %v933
        %v966 = vmul.f32 %v754, %v934
        %v967 = vmul.f32 %v759, %v935
        %v968 = vmul.f32 %v762, %v936
        %v969 = vmul.f32 %v767, %v937
        %v970 = vmul.f32 %v770, %v938
        %v971 = vmul.f32 %v775, %v939
        %v972 = vmul.f32 %v778, %v940
        %v973 = vpack.c.bf16 %v942, %v941
        %v974 = vpack.c.bf16 %v944, %v943
        %v975 = vpack.c.bf16 %v946, %v945
        %v976 = vpack.c.bf16 %v948, %v947
        %v977 = vpack.c.bf16 %v950, %v949
        %v978 = vpack.c.bf16 %v952, %v951
        %v979 = vpack.c.bf16 %v954, %v953
        %v980 = vpack.c.bf16 %v956, %v955
        %v981 = vpack.c.bf16 %v958, %v957
        %v982 = vpack.c.bf16 %v960, %v959
        %v983 = vpack.c.bf16 %v962, %v961
        %v984 = vpack.c.bf16 %v964, %v963
        %v985 = vpack.c.bf16 %v966, %v965
        %v986 = vpack.c.bf16 %v968, %v967
        %v987 = vpack.c.bf16 %v970, %v969
        %v988 = vpack.c.bf16 %v972, %v971
        %v1005 = vunpack.c.l.b16 %v973
        %v1006 = vunpack.c.h.b16 %v973
        %v1007 = vunpack.c.l.b16 %v974
        %v1008 = vunpack.c.h.b16 %v974
        %v1009 = vunpack.c.l.b16 %v975
        %v1010 = vunpack.c.h.b16 %v975
        %v1011 = vunpack.c.l.b16 %v976
        %v1012 = vunpack.c.h.b16 %v976
        %v1013 = vunpack.c.l.b16 %v977
        %v1014 = vunpack.c.h.b16 %v977
        %v1015 = vunpack.c.l.b16 %v978
        %v1016 = vunpack.c.h.b16 %v978
        %v1017 = vunpack.c.l.b16 %v979
        %v1018 = vunpack.c.h.b16 %v979
        %v1019 = vunpack.c.l.b16 %v980
        %v1020 = vunpack.c.h.b16 %v980
        %v1021 = vunpack.c.l.b16 %v981
        %v1022 = vunpack.c.h.b16 %v981
        %v1023 = vunpack.c.l.b16 %v982
        %v1024 = vunpack.c.h.b16 %v982
        %v1025 = vunpack.c.l.b16 %v983
        %v1026 = vunpack.c.h.b16 %v983
        %v1027 = vunpack.c.l.b16 %v984
        %v1028 = vunpack.c.h.b16 %v984
        %v1029 = vunpack.c.l.b16 %v985
        %v1030 = vunpack.c.h.b16 %v985
        %v1031 = vunpack.c.l.b16 %v986
        %v1032 = vunpack.c.h.b16 %v986
        %v1033 = vunpack.c.l.b16 %v987
        %v1034 = vunpack.c.h.b16 %v987
        %v1035 = vunpack.c.l.b16 %v988
        %v1036 = vunpack.c.h.b16 %v988
        %v1037 = vpack.c.b16 %v1005, %v1005
        %v1038 = vpack.c.b16 %v1006, %v1006
        %v1039 = vpack.c.b16 %v1007, %v1007
        %v1040 = vpack.c.b16 %v1008, %v1008
        %v1041 = vpack.c.b16 %v1009, %v1009
        %v1042 = vpack.c.b16 %v1010, %v1010
        %v1043 = vpack.c.b16 %v1011, %v1011
        %v1044 = vpack.c.b16 %v1012, %v1012
        %v1045 = vpack.c.b16 %v1013, %v1013
        %v1046 = vpack.c.b16 %v1014, %v1014
        %v1047 = vpack.c.b16 %v1015, %v1015
        %v1048 = vpack.c.b16 %v1016, %v1016
        %v1049 = vpack.c.b16 %v1017, %v1017
        %v1050 = vpack.c.b16 %v1018, %v1018
        %v1051 = vpack.c.b16 %v1019, %v1019
        %v1052 = vpack.c.b16 %v1020, %v1020
        %v1053 = vpack.c.b16 %v1021, %v1021
        %v1054 = vpack.c.b16 %v1022, %v1022
        %v1055 = vpack.c.b16 %v1023, %v1023
        %v1056 = vpack.c.b16 %v1024, %v1024
        %v1057 = vpack.c.b16 %v1025, %v1025
        %v1058 = vpack.c.b16 %v1026, %v1026
        %v1059 = vpack.c.b16 %v1027, %v1027
        %v1060 = vpack.c.b16 %v1028, %v1028
        %v1061 = vpack.c.b16 %v1029, %v1029
        %v1062 = vpack.c.b16 %v1030, %v1030
        %v1063 = vpack.c.b16 %v1031, %v1031
        %v1064 = vpack.c.b16 %v1032, %v1032
        %v1065 = vpack.c.b16 %v1033, %v1033
        %v1066 = vpack.c.b16 %v1034, %v1034
        %v1067 = vpack.c.b16 %v1035, %v1035
        %v1068 = vpack.c.b16 %v1036, %v1036
        %vm1069 = vsmask.f32 4368
        %vm1070 = vmor %vm290, %vm1069
        %v1072 = vshrl.u32 %v1037, 16
        %v1074 = vrot.slane %v1072, 7
        %v1075 = vshll.u32 %v1037, 16
        %v1077 = vor.u32 %v1074, %v1075
        %v1078 = vrot.slane %v1074, 4
        %v1080 = vshrl.u32 %v1038, 16
        %v1082 = vrot.slane %v1080, 7
        %v1083 = vshll.u32 %v1038, 16
        %v1085 = vor.u32 %v1082, %v1083
        %v1086 = vsel %vm1070, %v1078, %v1085
        %v1087 = vrot.slane %v1082, 4
        %v1089 = vshrl.u32 %v1039, 16
        %v1091 = vrot.slane %v1089, 7
        %v1092 = vshll.u32 %v1039, 16
        %v1094 = vor.u32 %v1091, %v1092
        %v1095 = vrot.slane %v1091, 4
        %v1097 = vshrl.u32 %v1040, 16
        %v1099 = vrot.slane %v1097, 7
        %v1100 = vshll.u32 %v1040, 16
        %v1102 = vor.u32 %v1099, %v1100
        %v1103 = vsel %vm1070, %v1095, %v1102
        %v1104 = vrot.slane %v1099, 4
        %v1106 = vshrl.u32 %v1041, 16
        %v1108 = vrot.slane %v1106, 7
        %v1109 = vshll.u32 %v1041, 16
        %v1111 = vor.u32 %v1108, %v1109
        %v1112 = vrot.slane %v1108, 4
        %v1114 = vshrl.u32 %v1042, 16
        %v1116 = vrot.slane %v1114, 7
        %v1117 = vshll.u32 %v1042, 16
        %v1119 = vor.u32 %v1116, %v1117
        %v1120 = vsel %vm1070, %v1112, %v1119
        %v1121 = vrot.slane %v1116, 4
        %v1123 = vshrl.u32 %v1043, 16
        %v1125 = vrot.slane %v1123, 7
        %v1126 = vshll.u32 %v1043, 16
        %v1128 = vor.u32 %v1125, %v1126
        %v1129 = vrot.slane %v1125, 4
        %v1131 = vshrl.u32 %v1044, 16
        %v1133 = vrot.slane %v1131, 7
        %v1134 = vshll.u32 %v1044, 16
        %v1136 = vor.u32 %v1133, %v1134
        %v1137 = vsel %vm1070, %v1129, %v1136
        %v1138 = vrot.slane %v1133, 4
        %v1140 = vshrl.u32 %v1045, 16
        %v1142 = vrot.slane %v1140, 7
        %v1143 = vshll.u32 %v1045, 16
        %v1145 = vor.u32 %v1142, %v1143
        %v1146 = vrot.slane %v1142, 4
        %v1148 = vshrl.u32 %v1046, 16
        %v1150 = vrot.slane %v1148, 7
        %v1151 = vshll.u32 %v1046, 16
        %v1153 = vor.u32 %v1150, %v1151
        %v1154 = vsel %vm1070, %v1146, %v1153
        %v1155 = vrot.slane %v1150, 4
        %v1157 = vshrl.u32 %v1047, 16
        %v1159 = vrot.slane %v1157, 7
        %v1160 = vshll.u32 %v1047, 16
        %v1162 = vor.u32 %v1159, %v1160
        %v1163 = vrot.slane %v1159, 4
        %v1165 = vshrl.u32 %v1048, 16
        %v1167 = vrot.slane %v1165, 7
        %v1168 = vshll.u32 %v1048, 16
        %v1170 = vor.u32 %v1167, %v1168
        %v1171 = vsel %vm1070, %v1163, %v1170
        %v1172 = vrot.slane %v1167, 4
        %v1174 = vshrl.u32 %v1049, 16
        %v1176 = vrot.slane %v1174, 7
        %v1177 = vshll.u32 %v1049, 16
        %v1179 = vor.u32 %v1176, %v1177
        %v1180 = vrot.slane %v1176, 4
        %v1182 = vshrl.u32 %v1050, 16
        %v1184 = vrot.slane %v1182, 7
        %v1185 = vshll.u32 %v1050, 16
        %v1187 = vor.u32 %v1184, %v1185
        %v1188 = vsel %vm1070, %v1180, %v1187
        %v1189 = vrot.slane %v1184, 4
        %v1191 = vshrl.u32 %v1051, 16
        %v1193 = vrot.slane %v1191, 7
        %v1194 = vshll.u32 %v1051, 16
        %v1196 = vor.u32 %v1193, %v1194
        %v1197 = vrot.slane %v1193, 4
        %v1199 = vshrl.u32 %v1052, 16
        %v1201 = vrot.slane %v1199, 7
        %v1202 = vshll.u32 %v1052, 16
        %v1204 = vor.u32 %v1201, %v1202
        %v1205 = vsel %vm1070, %v1197, %v1204
        %v1206 = vrot.slane %v1201, 4
        %v1208 = vshrl.u32 %v1053, 16
        %v1210 = vrot.slane %v1208, 7
        %v1211 = vshll.u32 %v1053, 16
        %v1213 = vor.u32 %v1210, %v1211
        %v1214 = vrot.slane %v1210, 4
        %v1216 = vshrl.u32 %v1054, 16
        %v1218 = vrot.slane %v1216, 7
        %v1219 = vshll.u32 %v1054, 16
        %v1221 = vor.u32 %v1218, %v1219
        %v1222 = vsel %vm1070, %v1214, %v1221
        %v1223 = vrot.slane %v1218, 4
        %v1225 = vshrl.u32 %v1055, 16
        %v1227 = vrot.slane %v1225, 7
        %v1228 = vshll.u32 %v1055, 16
        %v1230 = vor.u32 %v1227, %v1228
        %v1231 = vrot.slane %v1227, 4
        %v1233 = vshrl.u32 %v1056, 16
        %v1235 = vrot.slane %v1233, 7
        %v1236 = vshll.u32 %v1056, 16
        %v1238 = vor.u32 %v1235, %v1236
        %v1239 = vsel %vm1070, %v1231, %v1238
        %v1240 = vrot.slane %v1235, 4
        %v1242 = vshrl.u32 %v1057, 16
        %v1244 = vrot.slane %v1242, 7
        %v1245 = vshll.u32 %v1057, 16
        %v1247 = vor.u32 %v1244, %v1245
        %v1248 = vrot.slane %v1244, 4
        %v1250 = vshrl.u32 %v1058, 16
        %v1252 = vrot.slane %v1250, 7
        %v1253 = vshll.u32 %v1058, 16
        %v1255 = vor.u32 %v1252, %v1253
        %v1256 = vsel %vm1070, %v1248, %v1255
        %v1257 = vrot.slane %v1252, 4
        %v1259 = vshrl.u32 %v1059, 16
        %v1261 = vrot.slane %v1259, 7
        %v1262 = vshll.u32 %v1059, 16
        %v1264 = vor.u32 %v1261, %v1262
        %v1265 = vrot.slane %v1261, 4
        %v1267 = vshrl.u32 %v1060, 16
        %v1269 = vrot.slane %v1267, 7
        %v1270 = vshll.u32 %v1060, 16
        %v1272 = vor.u32 %v1269, %v1270
        %v1273 = vsel %vm1070, %v1265, %v1272
        %v1274 = vrot.slane %v1269, 4
        %v1276 = vshrl.u32 %v1061, 16
        %v1278 = vrot.slane %v1276, 7
        %v1279 = vshll.u32 %v1061, 16
        %v1281 = vor.u32 %v1278, %v1279
        %v1282 = vrot.slane %v1278, 4
        %v1284 = vshrl.u32 %v1062, 16
        %v1286 = vrot.slane %v1284, 7
        %v1287 = vshll.u32 %v1062, 16
        %v1289 = vor.u32 %v1286, %v1287
        %v1290 = vsel %vm1070, %v1282, %v1289
        %v1291 = vrot.slane %v1286, 4
        %v1293 = vshrl.u32 %v1063, 16
        %v1295 = vrot.slane %v1293, 7
        %v1296 = vshll.u32 %v1063, 16
        %v1298 = vor.u32 %v1295, %v1296
        %v1299 = vrot.slane %v1295, 4
        %v1301 = vshrl.u32 %v1064, 16
        %v1303 = vrot.slane %v1301, 7
        %v1304 = vshll.u32 %v1064, 16
        %v1306 = vor.u32 %v1303, %v1304
        %v1307 = vsel %vm1070, %v1299, %v1306
        %v1308 = vrot.slane %v1303, 4
        %v1310 = vshrl.u32 %v1065, 16
        %v1312 = vrot.slane %v1310, 7
        %v1313 = vshll.u32 %v1065, 16
        %v1315 = vor.u32 %v1312, %v1313
        %v1316 = vrot.slane %v1312, 4
        %v1318 = vshrl.u32 %v1066, 16
        %v1320 = vrot.slane %v1318, 7
        %v1321 = vshll.u32 %v1066, 16
        %v1323 = vor.u32 %v1320, %v1321
        %v1324 = vsel %vm1070, %v1316, %v1323
        %v1325 = vrot.slane %v1320, 4
        %v1327 = vshrl.u32 %v1067, 16
        %v1329 = vrot.slane %v1327, 7
        %v1330 = vshll.u32 %v1067, 16
        %v1332 = vor.u32 %v1329, %v1330
        %v1333 = vrot.slane %v1329, 4
        %v1335 = vshrl.u32 %v1068, 16
        %v1337 = vrot.slane %v1335, 7
        %v1338 = vshll.u32 %v1068, 16
        %v1340 = vor.u32 %v1337, %v1338
        %v1341 = vsel %vm1070, %v1333, %v1340
        %v1342 = vrot.slane %v1337, 4
        %s1391 = scalar_lea.vmem [#allocation2], 12
        %vm1392 = vcmask 1043456
        %vm1393 = vmand %vm1392, %vm346
        %v1394 = vld [vmem:[%s1391] sm:$0xf]
        %v1395 = vsel %vm1393, %v1077, %v1394
        %1396 = vst [vmem:[%s1391] sm:$0xf] %v1395
        %1397 = vst [vmem:[%s1391 + $0x4] sm:$0xf] %v1086
        %v1398 = vld [vmem:[%s1391 + $0x8] sm:$0x1]
        %v1399 = vsel %vm291, %v1087, %v1398
        %1400 = vst [vmem:[%s1391 + $0x8] sm:$0x1] %v1399
        %v1401 = vld [vmem:[%s1391 + $0xc] sm:$0xf]
        %v1402 = vsel %vm1393, %v1094, %v1401
        %1403 = vst [vmem:[%s1391 + $0xc] sm:$0xf] %v1402
        %1404 = vst [vmem:[%s1391 + $0x10] sm:$0xf] %v1103
        %v1405 = vld [vmem:[%s1391 + $0x14] sm:$0x1]
        %v1406 = vsel %vm291, %v1104, %v1405
        %1407 = vst [vmem:[%s1391 + $0x14] sm:$0x1] %v1406
        %v1408 = vld [vmem:[%s1391 + $0x18] sm:$0xf]
        %v1409 = vsel %vm1393, %v1111, %v1408
        %1410 = vst [vmem:[%s1391 + $0x18] sm:$0xf] %v1409
        %1411 = vst [vmem:[%s1391 + $0x1c] sm:$0xf] %v1120
        %v1412 = vld [vmem:[%s1391 + $0x20] sm:$0x1]
        %v1413 = vsel %vm291, %v1121, %v1412
        %1414 = vst [vmem:[%s1391 + $0x20] sm:$0x1] %v1413
        %v1415 = vld [vmem:[%s1391 + $0x24] sm:$0xf]
        %v1416 = vsel %vm1393, %v1128, %v1415
        %1417 = vst [vmem:[%s1391 + $0x24] sm:$0xf] %v1416
        %1418 = vst [vmem:[%s1391 + $0x28] sm:$0xf] %v1137
        %v1419 = vld [vmem:[%s1391 + $0x2c] sm:$0x1]
        %v1420 = vsel %vm291, %v1138, %v1419
        %1421 = vst [vmem:[%s1391 + $0x2c] sm:$0x1] %v1420
        %v1422 = vld [vmem:[%s1391 + $0x30] sm:$0xf]
        %v1423 = vsel %vm1393, %v1145, %v1422
        %1424 = vst [vmem:[%s1391 + $0x30] sm:$0xf] %v1423
        %1425 = vst [vmem:[%s1391 + $0x34] sm:$0xf] %v1154
        %v1426 = vld [vmem:[%s1391 + $0x38] sm:$0x1]
        %v1427 = vsel %vm291, %v1155, %v1426
        %1428 = vst [vmem:[%s1391 + $0x38] sm:$0x1] %v1427
        %v1429 = vld [vmem:[%s1391 + $0x3c] sm:$0xf]
        %v1430 = vsel %vm1393, %v1162, %v1429
        %1431 = vst [vmem:[%s1391 + $0x3c] sm:$0xf] %v1430
        %1432 = vst [vmem:[%s1391 + $0x40] sm:$0xf] %v1171
        %v1433 = vld [vmem:[%s1391 + $0x44] sm:$0x1]
        %v1434 = vsel %vm291, %v1172, %v1433
        %1435 = vst [vmem:[%s1391 + $0x44] sm:$0x1] %v1434
        %v1436 = vld [vmem:[%s1391 + $0x48] sm:$0xf]
        %v1437 = vsel %vm1393, %v1179, %v1436
        %1438 = vst [vmem:[%s1391 + $0x48] sm:$0xf] %v1437
        %1439 = vst [vmem:[%s1391 + $0x4c] sm:$0xf] %v1188
        %v1440 = vld [vmem:[%s1391 + $0x50] sm:$0x1]
        %v1441 = vsel %vm291, %v1189, %v1440
        %1442 = vst [vmem:[%s1391 + $0x50] sm:$0x1] %v1441
        %v1443 = vld [vmem:[%s1391 + $0x54] sm:$0xf]
        %v1444 = vsel %vm1393, %v1196, %v1443
        %1445 = vst [vmem:[%s1391 + $0x54] sm:$0xf] %v1444
        %1446 = vst [vmem:[%s1391 + $0x58] sm:$0xf] %v1205
        %v1447 = vld [vmem:[%s1391 + $0x5c] sm:$0x1]
        %v1448 = vsel %vm291, %v1206, %v1447
        %1449 = vst [vmem:[%s1391 + $0x5c] sm:$0x1] %v1448
        %v1450 = vld [vmem:[%s1391 + $0x60] sm:$0xf]
        %v1451 = vsel %vm1393, %v1213, %v1450
        %1452 = vst [vmem:[%s1391 + $0x60] sm:$0xf] %v1451
        %1453 = vst [vmem:[%s1391 + $0x64] sm:$0xf] %v1222
        %v1454 = vld [vmem:[%s1391 + $0x68] sm:$0x1]
        %v1455 = vsel %vm291, %v1223, %v1454
        %1456 = vst [vmem:[%s1391 + $0x68] sm:$0x1] %v1455
        %v1457 = vld [vmem:[%s1391 + $0x6c] sm:$0xf]
        %v1458 = vsel %vm1393, %v1230, %v1457
        %1459 = vst [vmem:[%s1391 + $0x6c] sm:$0xf] %v1458
        %1460 = vst [vmem:[%s1391 + $0x70] sm:$0xf] %v1239
        %v1461 = vld [vmem:[%s1391 + $0x74] sm:$0x1]
        %v1462 = vsel %vm291, %v1240, %v1461
        %1463 = vst [vmem:[%s1391 + $0x74] sm:$0x1] %v1462
        %v1464 = vld [vmem:[%s1391 + $0x78] sm:$0xf]
        %v1465 = vsel %vm1393, %v1247, %v1464
        %1466 = vst [vmem:[%s1391 + $0x78] sm:$0xf] %v1465
        %1467 = vst [vmem:[%s1391 + $0x7c] sm:$0xf] %v1256
        %v1468 = vld [vmem:[%s1391 + $0x80] sm:$0x1]
        %v1469 = vsel %vm291, %v1257, %v1468
        %1470 = vst [vmem:[%s1391 + $0x80] sm:$0x1] %v1469
        %v1471 = vld [vmem:[%s1391 + $0x84] sm:$0xf]
        %v1472 = vsel %vm1393, %v1264, %v1471
        %1473 = vst [vmem:[%s1391 + $0x84] sm:$0xf] %v1472
        %1474 = vst [vmem:[%s1391 + $0x88] sm:$0xf] %v1273
        %v1475 = vld [vmem:[%s1391 + $0x8c] sm:$0x1]
        %v1476 = vsel %vm291, %v1274, %v1475
        %1477 = vst [vmem:[%s1391 + $0x8c] sm:$0x1] %v1476
        %v1478 = vld [vmem:[%s1391 + $0x90] sm:$0xf]
        %v1479 = vsel %vm1393, %v1281, %v1478
        %1480 = vst [vmem:[%s1391 + $0x90] sm:$0xf] %v1479
        %1481 = vst [vmem:[%s1391 + $0x94] sm:$0xf] %v1290
        %v1482 = vld [vmem:[%s1391 + $0x98] sm:$0x1]
        %v1483 = vsel %vm291, %v1291, %v1482
        %1484 = vst [vmem:[%s1391 + $0x98] sm:$0x1] %v1483
        %v1485 = vld [vmem:[%s1391 + $0x9c] sm:$0xf]
        %v1486 = vsel %vm1393, %v1298, %v1485
        %1487 = vst [vmem:[%s1391 + $0x9c] sm:$0xf] %v1486
        %1488 = vst [vmem:[%s1391 + $0xa0] sm:$0xf] %v1307
        %v1489 = vld [vmem:[%s1391 + $0xa4] sm:$0x1]
        %v1490 = vsel %vm291, %v1308, %v1489
        %1491 = vst [vmem:[%s1391 + $0xa4] sm:$0x1] %v1490
        %v1492 = vld [vmem:[%s1391 + $0xa8] sm:$0xf]
        %v1493 = vsel %vm1393, %v1315, %v1492
        %1494 = vst [vmem:[%s1391 + $0xa8] sm:$0xf] %v1493
        %1495 = vst [vmem:[%s1391 + $0xac] sm:$0xf] %v1324
        %v1496 = vld [vmem:[%s1391 + $0xb0] sm:$0x1]
        %v1497 = vsel %vm291, %v1325, %v1496
        %1498 = vst [vmem:[%s1391 + $0xb0] sm:$0x1] %v1497
        %v1499 = vld [vmem:[%s1391 + $0xb4] sm:$0xf]
        %v1500 = vsel %vm1393, %v1332, %v1499
        %1501 = vst [vmem:[%s1391 + $0xb4] sm:$0xf] %v1500
        %1502 = vst [vmem:[%s1391 + $0xb8] sm:$0xf] %v1341
        %v1503 = vld [vmem:[%s1391 + $0xbc] sm:$0x1]
        %v1504 = vsel %vm291, %v1342, %v1503
        %1505 = vst [vmem:[%s1391 + $0xbc] sm:$0x1] %v1504
        %p1506 = scmp.gt.s32.totalorder %s288, 0
        // Predicated region
        $region61: #{tpu_custom_call.1} parent=39 // pred_check
          %p1507 = pneg %p1506
        $region62: #{tpu_custom_call.1} parent=39 // pred_check_branch
          %1509 = sbr.rel (%p1507) target = $region64
        $region63: #{tpu_custom_call.1} parent=39 // pred_region
          %s1510 = ssub.s32 %s288, 1
          %s1511 = smul.u32 %s1510, 2
          %s1512 = smul.addr %s1511, 4
          %s1513 = scalar_lea.vmem %s251, %s1512 [#allocation3]
          %v1514 = vld [vmem:[%s1513] sm:$0xf]
          %v1515 = vld [vmem:[%s1513 + $0x4] sm:$0xf]
          %v1516 = vld [vmem:[#allocation6] sm:$0xf]
          %v1517 = vld [vmem:[#allocation6 + $0x4] sm:$0xf]
          %v1518 = vld [vmem:[#allocation6 + $0x8] sm:$0xf]
          %v1519 = vld [vmem:[#allocation6 + $0xc] sm:$0xf]
          %v1520 = vld [vmem:[#allocation6 + $0x10] sm:$0xf]
          %v1521 = vld [vmem:[#allocation6 + $0x14] sm:$0xf]
          %v1522 = vld [vmem:[#allocation6 + $0x18] sm:$0xf]
          %v1523 = vld [vmem:[#allocation6 + $0x1c] sm:$0xf]
          %v1524 = vld [vmem:[#allocation6 + $0x20] sm:$0xf]
          %v1525 = vld [vmem:[#allocation6 + $0x24] sm:$0xf]
          %v1526 = vld [vmem:[#allocation6 + $0x28] sm:$0xf]
          %v1527 = vld [vmem:[#allocation6 + $0x2c] sm:$0xf]
          %v1528 = vld [vmem:[#allocation6 + $0x30] sm:$0xf]
          %v1529 = vld [vmem:[#allocation6 + $0x34] sm:$0xf]
          %v1530 = vld [vmem:[#allocation6 + $0x38] sm:$0xf]
          %v1531 = vld [vmem:[#allocation6 + $0x3c] sm:$0xf]
          %v1532 = vld [vmem:[%s2] sm:$0x1]
          %v1534 = vlaneseq
          %v1535 = vshrl.u32 %v1534, 7
          %v1536 = vsub.s32 0, %v1535
          %v1537 = vrot.slane %v1532, %v1536
          %v1541 = vunpack.c.l.b16 %v1514
          %v1542 = vunpack.c.l.b16 %v1515
          %v1543 = vpack.c.b16 %v1542, %v1541
          %v1561 = vunpack.c.l.b16 %v1516
          %v1562 = vunpack.c.l.b16 %v1517
          %v1563 = vunpack.c.l.b16 %v1518
          %v1564 = vunpack.c.l.b16 %v1519
          %v1565 = vunpack.c.l.b16 %v1520
          %v1566 = vunpack.c.l.b16 %v1521
          %v1567 = vunpack.c.l.b16 %v1522
          %v1568 = vunpack.c.l.b16 %v1523
          %v1569 = vunpack.c.l.b16 %v1524
          %v1570 = vunpack.c.l.b16 %v1525
          %v1571 = vunpack.c.l.b16 %v1526
          %v1572 = vunpack.c.l.b16 %v1527
          %v1573 = vunpack.c.l.b16 %v1528
          %v1574 = vunpack.c.l.b16 %v1529
          %v1575 = vunpack.c.l.b16 %v1530
          %v1576 = vunpack.c.l.b16 %v1531
          %v1577 = vpack.c.b16 %v1562, %v1561
          %v1578 = vpack.c.b16 %v1564, %v1563
          %v1579 = vpack.c.b16 %v1566, %v1565
          %v1580 = vpack.c.b16 %v1568, %v1567
          %v1581 = vpack.c.b16 %v1570, %v1569
          %v1582 = vpack.c.b16 %v1572, %v1571
          %v1583 = vpack.c.b16 %v1574, %v1573
          %v1584 = vpack.c.b16 %v1576, %v1575
          %1593 = vmatprep.subr.bf16.mxu0 0
          %1594 = vmatpush1.bf16.msra.mxu0 %v1577
          %1595 = vmatprep.subr.bf16.mxu0 0
          %1596 = vmatpush1.bf16.msra.mxu0 %v1578
          %1597 = vmatprep.subr.bf16.mxu0 0
          %1598 = vmatpush1.bf16.msra.mxu0 %v1579
          %1599 = vmatprep.subr.bf16.mxu0 0
          %1600 = vmatpush1.bf16.msra.mxu0 %v1580
          %1601 = vmatprep.subr.bf16.mxu0 0
          %1602 = vmatpush1.bf16.msra.mxu0 %v1581
          %1603 = vmatprep.subr.bf16.mxu0 0
          %1604 = vmatpush1.bf16.msra.mxu0 %v1582
          %1605 = vmatprep.subr.bf16.mxu0 0
          %1606 = vmatpush1.bf16.msra.mxu0 %v1583
          %1607 = vmatprep.subr.bf16.mxu0 0
          %1608 = vmatpush1.bf16.msra.mxu0 %v1584
          %1609 = vmatprep.subr.bf16.mxu0 0
          %1610 = vmatpush1.bf16.msra.mxu0 0
          %1611 = vmatprep.subr.bf16.mxu0 0
          %1612 = vmatpush1.bf16.msra.mxu0 0
          %1613 = vmatprep.subr.bf16.mxu0 0
          %1614 = vmatpush1.bf16.msra.mxu0 0
          %1615 = vmatprep.subr.bf16.mxu0 0
          %1616 = vmatpush1.bf16.msra.mxu0 0
          %1617 = vmatprep.subr.bf16.mxu0 0
          %1618 = vmatpush1.bf16.msra.mxu0 0
          %1619 = vmatprep.subr.bf16.mxu0 0
          %1620 = vmatpush1.bf16.msra.mxu0 0
          %1621 = vmatprep.subr.bf16.mxu0 0
          %1622 = vmatpush1.bf16.msra.mxu0 0
          %1623 = vmatprep.subr.bf16.mxu0 0
          %1624 = vmatpush1.bf16.msra.mxu0 0
          %1625 = vmatprep.mubr.bf16.mxu0 0
          %1626 = vmatmul.mubr.bf16.gmra.mrb[0].mxu0 %v1543
          %v1627 = vpop.f32.mrb[0].mxu0
          %v1628 = vadd.f32 %v1537, %v1627
          %v1629 = vpop.f32.mrb[0].mxu0
          %v1630 = vpop.f32.mrb[0].mxu0
          %v1631 = vadd.f32 %v1537, %v1630
          %v1632 = vpop.f32.mrb[0].mxu0
          %1633 = vdwg.mxu0
          %v1634 = vsub.f32 0.0, %v1628
          %v1635 = vsub.f32 0.0, %v1631
          %v1636 = vmul.f32 %v1634, 1.442695
          %v1637 = vpow.pop %v1636
          %v1638 = vmul.f32 %v1635, 1.442695
          %v1639 = vpow.pop %v1638
          %v1640 = vadd.f32 %v1637, 1.0
          %v1641 = vadd.f32 %v1639, 1.0
          %v1642 = vrcp.pop %v1640
          %v1643 = vrcp.pop %v1641
          %v1644 = vmul.f32 %v1628, %v1642
          %v1645 = vmul.f32 %v1631, %v1643
          %v1646 = vpack.c.bf16 %v1645, %v1644
          %v1648 = vunpack.c.l.b16 %v1646
          %v1649 = vunpack.c.h.b16 %v1646
          %v1650 = vpack.c.b16 %v1648, %v1648
          %v1651 = vpack.c.b16 %v1649, %v1649
          %v1653 = vshrl.u32 %v1650, 16
          %v1655 = vrot.slane %v1653, 7
          %v1656 = vshll.u32 %v1650, 16
          %v1658 = vor.u32 %v1655, %v1656
          %v1659 = vrot.slane %v1655, 4
          %v1661 = vshrl.u32 %v1651, 16
          %v1663 = vrot.slane %v1661, 7
          %v1664 = vshll.u32 %v1651, 16
          %v1666 = vor.u32 %v1663, %v1664
          %v1667 = vsel %vm1070, %v1659, %v1666
          %v1668 = vrot.slane %v1663, 4
          %v1672 = vld [vmem:[#allocation2] sm:$0xf]
          %v1673 = vsel %vm1393, %v1658, %v1672
          %1674 = vst [vmem:[#allocation2] sm:$0xf] %v1673
          %1675 = vst [vmem:[#allocation2 + $0x4] sm:$0xf] %v1667
          %v1676 = vld [vmem:[#allocation2 + $0x8] sm:$0x1]
          %v1677 = vsel %vm291, %v1668, %v1676
          %1678 = vst [vmem:[#allocation2 + $0x8] sm:$0x1] %v1677
        $region64: #{tpu_custom_call.1} parent=39 // pred_fallthru
          _
        %p1679 = scmp.lt.s32.totalorder %s409, 16
        // Predicated region
        $region65: #{tpu_custom_call.1} parent=39 // pred_check
          %p1680 = pneg %p1679
        $region66: #{tpu_custom_call.1} parent=39 // pred_check_branch
          %1682 = sbr.rel (%p1680) target = $region68
        $region67: #{tpu_custom_call.1} parent=39 // pred_region
          %s1683 = smul.u32 %s409, 2
          %s1684 = smul.addr %s1683, 4
          %s1685 = scalar_lea.vmem %s251, %s1684 [#allocation3]
          %v1686 = vld [vmem:[%s1685] sm:$0xf]
          %v1687 = vld [vmem:[%s1685 + $0x4] sm:$0xf]
          %v1688 = vld [vmem:[#allocation6] sm:$0xf]
          %v1689 = vld [vmem:[#allocation6 + $0x4] sm:$0xf]
          %v1690 = vld [vmem:[#allocation6 + $0x8] sm:$0xf]
          %v1691 = vld [vmem:[#allocation6 + $0xc] sm:$0xf]
          %v1692 = vld [vmem:[#allocation6 + $0x10] sm:$0xf]
          %v1693 = vld [vmem:[#allocation6 + $0x14] sm:$0xf]
          %v1694 = vld [vmem:[#allocation6 + $0x18] sm:$0xf]
          %v1695 = vld [vmem:[#allocation6 + $0x1c] sm:$0xf]
          %v1696 = vld [vmem:[#allocation6 + $0x20] sm:$0xf]
          %v1697 = vld [vmem:[#allocation6 + $0x24] sm:$0xf]
          %v1698 = vld [vmem:[#allocation6 + $0x28] sm:$0xf]
          %v1699 = vld [vmem:[#allocation6 + $0x2c] sm:$0xf]
          %v1700 = vld [vmem:[#allocation6 + $0x30] sm:$0xf]
          %v1701 = vld [vmem:[#allocation6 + $0x34] sm:$0xf]
          %v1702 = vld [vmem:[#allocation6 + $0x38] sm:$0xf]
          %v1703 = vld [vmem:[#allocation6 + $0x3c] sm:$0xf]
          %v1704 = vld [vmem:[%s2] sm:$0x1]
          %v1706 = vlaneseq
          %v1707 = vshrl.u32 %v1706, 7
          %v1708 = vsub.s32 0, %v1707
          %v1709 = vrot.slane %v1704, %v1708
          %v1713 = vunpack.c.l.b16 %v1686
          %v1714 = vunpack.c.l.b16 %v1687
          %v1715 = vpack.c.b16 %v1714, %v1713
          %v1733 = vunpack.c.l.b16 %v1688
          %v1734 = vunpack.c.l.b16 %v1689
          %v1735 = vunpack.c.l.b16 %v1690
          %v1736 = vunpack.c.l.b16 %v1691
          %v1737 = vunpack.c.l.b16 %v1692
          %v1738 = vunpack.c.l.b16 %v1693
          %v1739 = vunpack.c.l.b16 %v1694
          %v1740 = vunpack.c.l.b16 %v1695
          %v1741 = vunpack.c.l.b16 %v1696
          %v1742 = vunpack.c.l.b16 %v1697
          %v1743 = vunpack.c.l.b16 %v1698
          %v1744 = vunpack.c.l.b16 %v1699
          %v1745 = vunpack.c.l.b16 %v1700
          %v1746 = vunpack.c.l.b16 %v1701
          %v1747 = vunpack.c.l.b16 %v1702
          %v1748 = vunpack.c.l.b16 %v1703
          %v1749 = vpack.c.b16 %v1734, %v1733
          %v1750 = vpack.c.b16 %v1736, %v1735
          %v1751 = vpack.c.b16 %v1738, %v1737
          %v1752 = vpack.c.b16 %v1740, %v1739
          %v1753 = vpack.c.b16 %v1742, %v1741
          %v1754 = vpack.c.b16 %v1744, %v1743
          %v1755 = vpack.c.b16 %v1746, %v1745
          %v1756 = vpack.c.b16 %v1748, %v1747
          %1765 = vmatprep.subr.bf16.mxu0 0
          %1766 = vmatpush1.bf16.msra.mxu0 %v1749
          %1767 = vmatprep.subr.bf16.mxu0 0
          %1768 = vmatpush1.bf16.msra.mxu0 %v1750
          %1769 = vmatprep.subr.bf16.mxu0 0
          %1770 = vmatpush1.bf16.msra.mxu0 %v1751
          %1771 = vmatprep.subr.bf16.mxu0 0
          %1772 = vmatpush1.bf16.msra.mxu0 %v1752
          %1773 = vmatprep.subr.bf16.mxu0 0
          %1774 = vmatpush1.bf16.msra.mxu0 %v1753
          %1775 = vmatprep.subr.bf16.mxu0 0
          %1776 = vmatpush1.bf16.msra.mxu0 %v1754
          %1777 = vmatprep.subr.bf16.mxu0 0
          %1778 = vmatpush1.bf16.msra.mxu0 %v1755
          %1779 = vmatprep.subr.bf16.mxu0 0
          %1780 = vmatpush1.bf16.msra.mxu0 %v1756
          %1781 = vmatprep.subr.bf16.mxu0 0
          %1782 = vmatpush1.bf16.msra.mxu0 0
          %1783 = vmatprep.subr.bf16.mxu0 0
          %1784 = vmatpush1.bf16.msra.mxu0 0
          %1785 = vmatprep.subr.bf16.mxu0 0
          %1786 = vmatpush1.bf16.msra.mxu0 0
          %1787 = vmatprep.subr.bf16.mxu0 0
          %1788 = vmatpush1.bf16.msra.mxu0 0
          %1789 = vmatprep.subr.bf16.mxu0 0
          %1790 = vmatpush1.bf16.msra.mxu0 0
          %1791 = vmatprep.subr.bf16.mxu0 0
          %1792 = vmatpush1.bf16.msra.mxu0 0
          %1793 = vmatprep.subr.bf16.mxu0 0
          %1794 = vmatpush1.bf16.msra.mxu0 0
          %1795 = vmatprep.subr.bf16.mxu0 0
          %1796 = vmatpush1.bf16.msra.mxu0 0
          %1797 = vmatprep.mubr.bf16.mxu0 0
          %1798 = vmatmul.mubr.bf16.gmra.mrb[0].mxu0 %v1715
          %v1799 = vpop.f32.mrb[0].mxu0
          %v1800 = vadd.f32 %v1709, %v1799
          %v1801 = vpop.f32.mrb[0].mxu0
          %v1802 = vpop.f32.mrb[0].mxu0
          %v1803 = vadd.f32 %v1709, %v1802
          %v1804 = vpop.f32.mrb[0].mxu0
          %1805 = vdwg.mxu0
          %v1806 = vsub.f32 0.0, %v1800
          %v1807 = vsub.f32 0.0, %v1803
          %v1808 = vmul.f32 %v1806, 1.442695
          %v1809 = vpow.pop %v1808
          %v1810 = vmul.f32 %v1807, 1.442695
          %v1811 = vpow.pop %v1810
          %v1812 = vadd.f32 %v1809, 1.0
          %v1813 = vadd.f32 %v1811, 1.0
          %v1814 = vrcp.pop %v1812
          %v1815 = vrcp.pop %v1813
          %v1816 = vmul.f32 %v1800, %v1814
          %v1817 = vmul.f32 %v1803, %v1815
          %v1818 = vpack.c.bf16 %v1817, %v1816
          %v1820 = vunpack.c.l.b16 %v1818
          %v1821 = vunpack.c.h.b16 %v1818
          %v1822 = vpack.c.b16 %v1820, %v1820
          %v1823 = vpack.c.b16 %v1821, %v1821
          %v1825 = vshrl.u32 %v1822, 16
          %v1827 = vrot.slane %v1825, 7
          %v1828 = vshll.u32 %v1822, 16
          %v1830 = vor.u32 %v1827, %v1828
          %v1831 = vrot.slane %v1827, 4
          %v1833 = vshrl.u32 %v1823, 16
          %v1835 = vrot.slane %v1833, 7
          %v1836 = vshll.u32 %v1823, 16
          %v1838 = vor.u32 %v1835, %v1836
          %v1839 = vsel %vm1070, %v1831, %v1838
          %v1840 = vrot.slane %v1835, 4
          %s1844 = scalar_lea.vmem [#allocation2], 204
          %v1845 = vld [vmem:[%s1844] sm:$0xf]
          %v1846 = vsel %vm1393, %v1830, %v1845
          %1847 = vst [vmem:[%s1844] sm:$0xf] %v1846
          %1848 = vst [vmem:[%s1844 + $0x4] sm:$0xf] %v1839
          %v1849 = vld [vmem:[%s1844 + $0x8] sm:$0x1]
          %v1850 = vsel %vm291, %v1840, %v1849
          %1851 = vst [vmem:[%s1844 + $0x8] sm:$0x1] %v1850
        $region68: #{tpu_custom_call.1} parent=39 // pred_fallthru
          _
        %v1852 = vld [vmem:[#allocation2] sm:$0xf]
        %v1853 = vld [vmem:[#allocation2 + $0x4] sm:$0xf]
        %v1854 = vld [vmem:[#allocation2 + $0xc] sm:$0xf]
        %v1855 = vld [vmem:[#allocation2 + $0x10] sm:$0xf]
        %v1856 = vld [vmem:[#allocation2 + $0x18] sm:$0xf]
        %v1857 = vld [vmem:[#allocation2 + $0x1c] sm:$0xf]
        %v1858 = vld [vmem:[#allocation2 + $0x24] sm:$0xf]
        %v1859 = vld [vmem:[#allocation2 + $0x28] sm:$0xf]
        %v1860 = vld [vmem:[#allocation2 + $0x30] sm:$0xf]
        %v1861 = vld [vmem:[#allocation2 + $0x34] sm:$0xf]
        %v1862 = vld [vmem:[#allocation2 + $0x3c] sm:$0xf]
        %v1863 = vld [vmem:[#allocation2 + $0x40] sm:$0xf]
        %v1864 = vld [vmem:[#allocation2 + $0x48] sm:$0xf]
        %v1865 = vld [vmem:[#allocation2 + $0x4c] sm:$0xf]
        %v1866 = vld [vmem:[#allocation2 + $0x54] sm:$0xf]
        %v1867 = vld [vmem:[#allocation2 + $0x58] sm:$0xf]
        %v1868 = vld [vmem:[#allocation2 + $0x60] sm:$0xf]
        %v1869 = vld [vmem:[#allocation2 + $0x64] sm:$0xf]
        %v1870 = vld [vmem:[#allocation2 + $0x6c] sm:$0xf]
        %v1871 = vld [vmem:[#allocation2 + $0x70] sm:$0xf]
        %v1872 = vld [vmem:[#allocation2 + $0x78] sm:$0xf]
        %v1873 = vld [vmem:[#allocation2 + $0x7c] sm:$0xf]
        %v1874 = vld [vmem:[#allocation2 + $0x84] sm:$0xf]
        %v1875 = vld [vmem:[#allocation2 + $0x88] sm:$0xf]
        %v1876 = vld [vmem:[#allocation2 + $0x90] sm:$0xf]
        %v1877 = vld [vmem:[#allocation2 + $0x94] sm:$0xf]
        %v1878 = vld [vmem:[#allocation2 + $0x9c] sm:$0xf]
        %v1879 = vld [vmem:[#allocation2 + $0xa0] sm:$0xf]
        %v1880 = vld [vmem:[#allocation2 + $0xa8] sm:$0xf]
        %v1881 = vld [vmem:[#allocation2 + $0xac] sm:$0xf]
        %v1882 = vld [vmem:[#allocation2 + $0xb4] sm:$0xf]
        %v1883 = vld [vmem:[#allocation2 + $0xb8] sm:$0xf]
        %v1884 = vld [vmem:[#allocation8] sm:$0xf]
        %v1885 = vld [vmem:[#allocation8 + $0x4] sm:$0xf]
        %v1886 = vld [vmem:[#allocation8 + $0x8] sm:$0xf]
        %v1887 = vld [vmem:[#allocation8 + $0xc] sm:$0xf]
        %v1888 = vld [vmem:[#allocation8 + $0x10] sm:$0xf]
        %v1889 = vld [vmem:[#allocation8 + $0x14] sm:$0xf]
        %v1890 = vld [vmem:[#allocation8 + $0x18] sm:$0xf]
        %v1891 = vld [vmem:[#allocation8 + $0x1c] sm:$0xf]
        %v1892 = vld [vmem:[#allocation8 + $0x20] sm:$0xf]
        %v1893 = vld [vmem:[#allocation8 + $0x24] sm:$0xf]
        %v1894 = vld [vmem:[#allocation8 + $0x28] sm:$0xf]
        %v1895 = vld [vmem:[#allocation8 + $0x2c] sm:$0xf]
        %v1896 = vld [vmem:[#allocation8 + $0x30] sm:$0xf]
        %v1897 = vld [vmem:[#allocation8 + $0x34] sm:$0xf]
        %v1898 = vld [vmem:[#allocation8 + $0x38] sm:$0xf]
        %v1899 = vld [vmem:[#allocation8 + $0x3c] sm:$0xf]
        %v1900 = vld [vmem:[#allocation2 + $0x8] sm:$0x1]
        %v1901 = vld [vmem:[#allocation2 + $0x14] sm:$0x1]
        %v1902 = vld [vmem:[#allocation2 + $0x20] sm:$0x1]
        %v1903 = vld [vmem:[#allocation2 + $0x2c] sm:$0x1]
        %v1904 = vld [vmem:[#allocation2 + $0x38] sm:$0x1]
        %v1905 = vld [vmem:[#allocation2 + $0x44] sm:$0x1]
        %v1906 = vld [vmem:[#allocation2 + $0x50] sm:$0x1]
        %v1907 = vld [vmem:[#allocation2 + $0x5c] sm:$0x1]
        %v1908 = vld [vmem:[#allocation2 + $0x68] sm:$0x1]
        %v1909 = vld [vmem:[#allocation2 + $0x74] sm:$0x1]
        %v1910 = vld [vmem:[#allocation2 + $0x80] sm:$0x1]
        %v1911 = vld [vmem:[#allocation2 + $0x8c] sm:$0x1]
        %v1912 = vld [vmem:[#allocation2 + $0x98] sm:$0x1]
        %v1913 = vld [vmem:[#allocation2 + $0xa4] sm:$0x1]
        %v1914 = vld [vmem:[#allocation2 + $0xb0] sm:$0x1]
        %v1915 = vld [vmem:[#allocation2 + $0xbc] sm:$0x1]
        %vm1916 = vsmask.f32 3328
        %vm1917 = vsmask.f32 7440
        %vm1918 = vmor %vm1916, %vm1917
        %v1920 = vshrl.u32 %v1852, 16
        %v1922 = vrot.slane %v1920, 4
        %v1923 = vshll.u32 %v1852, 16
        %v1925 = vrot.slane %v1923, 5
        %v1926 = vor.u32 %v1922, %v1925
        %v1927 = vrot.slane %v1926, 4
        %v1929 = vshll.u32 %v1853, 16
        %v1931 = vrot.slane %v1929, 5
        %v1932 = vsel %vm1918, %v1927, %v1931
        %v1933 = vshrl.u32 %v1853, 16
        %v1935 = vrot.slane %v1933, 4
        %v1936 = vor.u32 %v1935, %v1931
        %v1937 = vrot.slane %v1936, 4
        %v1939 = vshll.u32 %v1900, 16
        %v1941 = vrot.slane %v1939, 5
        %v1942 = vsel %vm1918, %v1937, %v1941
        %v1944 = vshrl.u32 %v1854, 16
        %v1946 = vrot.slane %v1944, 4
        %v1947 = vshll.u32 %v1854, 16
        %v1949 = vrot.slane %v1947, 5
        %v1950 = vor.u32 %v1946, %v1949
        %v1951 = vrot.slane %v1950, 4
        %v1953 = vshll.u32 %v1855, 16
        %v1955 = vrot.slane %v1953, 5
        %v1956 = vsel %vm1918, %v1951, %v1955
        %v1957 = vshrl.u32 %v1855, 16
        %v1959 = vrot.slane %v1957, 4
        %v1960 = vor.u32 %v1959, %v1955
        %v1961 = vrot.slane %v1960, 4
        %v1963 = vshll.u32 %v1901, 16
        %v1965 = vrot.slane %v1963, 5
        %v1966 = vsel %vm1918, %v1961, %v1965
        %v1968 = vshrl.u32 %v1856, 16
        %v1970 = vrot.slane %v1968, 4
        %v1971 = vshll.u32 %v1856, 16
        %v1973 = vrot.slane %v1971, 5
        %v1974 = vor.u32 %v1970, %v1973
        %v1975 = vrot.slane %v1974, 4
        %v1977 = vshll.u32 %v1857, 16
        %v1979 = vrot.slane %v1977, 5
        %v1980 = vsel %vm1918, %v1975, %v1979
        %v1981 = vshrl.u32 %v1857, 16
        %v1983 = vrot.slane %v1981, 4
        %v1984 = vor.u32 %v1983, %v1979
        %v1985 = vrot.slane %v1984, 4
        %v1987 = vshll.u32 %v1902, 16
        %v1989 = vrot.slane %v1987, 5
        %v1990 = vsel %vm1918, %v1985, %v1989
        %v1992 = vshrl.u32 %v1858, 16
        %v1994 = vrot.slane %v1992, 4
        %v1995 = vshll.u32 %v1858, 16
        %v1997 = vrot.slane %v1995, 5
        %v1998 = vor.u32 %v1994, %v1997
        %v1999 = vrot.slane %v1998, 4
        %v2001 = vshll.u32 %v1859, 16
        %v2003 = vrot.slane %v2001, 5
        %v2004 = vsel %vm1918, %v1999, %v2003
        %v2005 = vshrl.u32 %v1859, 16
        %v2007 = vrot.slane %v2005, 4
        %v2008 = vor.u32 %v2007, %v2003
        %v2009 = vrot.slane %v2008, 4
        %v2011 = vshll.u32 %v1903, 16
        %v2013 = vrot.slane %v2011, 5
        %v2014 = vsel %vm1918, %v2009, %v2013
        %v2016 = vshrl.u32 %v1860, 16
        %v2018 = vrot.slane %v2016, 4
        %v2019 = vshll.u32 %v1860, 16
        %v2021 = vrot.slane %v2019, 5
        %v2022 = vor.u32 %v2018, %v2021
        %v2023 = vrot.slane %v2022, 4
        %v2025 = vshll.u32 %v1861, 16
        %v2027 = vrot.slane %v2025, 5
        %v2028 = vsel %vm1918, %v2023, %v2027
        %v2029 = vshrl.u32 %v1861, 16
        %v2031 = vrot.slane %v2029, 4
        %v2032 = vor.u32 %v2031, %v2027
        %v2033 = vrot.slane %v2032, 4
        %v2035 = vshll.u32 %v1904, 16
        %v2037 = vrot.slane %v2035, 5
        %v2038 = vsel %vm1918, %v2033, %v2037
        %v2040 = vshrl.u32 %v1862, 16
        %v2042 = vrot.slane %v2040, 4
        %v2043 = vshll.u32 %v1862, 16
        %v2045 = vrot.slane %v2043, 5
        %v2046 = vor.u32 %v2042, %v2045
        %v2047 = vrot.slane %v2046, 4
        %v2049 = vshll.u32 %v1863, 16
        %v2051 = vrot.slane %v2049, 5
        %v2052 = vsel %vm1918, %v2047, %v2051
        %v2053 = vshrl.u32 %v1863, 16
        %v2055 = vrot.slane %v2053, 4
        %v2056 = vor.u32 %v2055, %v2051
        %v2057 = vrot.slane %v2056, 4
        %v2059 = vshll.u32 %v1905, 16
        %v2061 = vrot.slane %v2059, 5
        %v2062 = vsel %vm1918, %v2057, %v2061
        %v2064 = vshrl.u32 %v1864, 16
        %v2066 = vrot.slane %v2064, 4
        %v2067 = vshll.u32 %v1864, 16
        %v2069 = vrot.slane %v2067, 5
        %v2070 = vor.u32 %v2066, %v2069
        %v2071 = vrot.slane %v2070, 4
        %v2073 = vshll.u32 %v1865, 16
        %v2075 = vrot.slane %v2073, 5
        %v2076 = vsel %vm1918, %v2071, %v2075
        %v2077 = vshrl.u32 %v1865, 16
        %v2079 = vrot.slane %v2077, 4
        %v2080 = vor.u32 %v2079, %v2075
        %v2081 = vrot.slane %v2080, 4
        %v2083 = vshll.u32 %v1906, 16
        %v2085 = vrot.slane %v2083, 5
        %v2086 = vsel %vm1918, %v2081, %v2085
        %v2088 = vshrl.u32 %v1866, 16
        %v2090 = vrot.slane %v2088, 4
        %v2091 = vshll.u32 %v1866, 16
        %v2093 = vrot.slane %v2091, 5
        %v2094 = vor.u32 %v2090, %v2093
        %v2095 = vrot.slane %v2094, 4
        %v2097 = vshll.u32 %v1867, 16
        %v2099 = vrot.slane %v2097, 5
        %v2100 = vsel %vm1918, %v2095, %v2099
        %v2101 = vshrl.u32 %v1867, 16
        %v2103 = vrot.slane %v2101, 4
        %v2104 = vor.u32 %v2103, %v2099
        %v2105 = vrot.slane %v2104, 4
        %v2107 = vshll.u32 %v1907, 16
        %v2109 = vrot.slane %v2107, 5
        %v2110 = vsel %vm1918, %v2105, %v2109
        %v2112 = vshrl.u32 %v1868, 16
        %v2114 = vrot.slane %v2112, 4
        %v2115 = vshll.u32 %v1868, 16
        %v2117 = vrot.slane %v2115, 5
        %v2118 = vor.u32 %v2114, %v2117
        %v2119 = vrot.slane %v2118, 4
        %v2121 = vshll.u32 %v1869, 16
        %v2123 = vrot.slane %v2121, 5
        %v2124 = vsel %vm1918, %v2119, %v2123
        %v2125 = vshrl.u32 %v1869, 16
        %v2127 = vrot.slane %v2125, 4
        %v2128 = vor.u32 %v2127, %v2123
        %v2129 = vrot.slane %v2128, 4
        %v2131 = vshll.u32 %v1908, 16
        %v2133 = vrot.slane %v2131, 5
        %v2134 = vsel %vm1918, %v2129, %v2133
        %v2136 = vshrl.u32 %v1870, 16
        %v2138 = vrot.slane %v2136, 4
        %v2139 = vshll.u32 %v1870, 16
        %v2141 = vrot.slane %v2139, 5
        %v2142 = vor.u32 %v2138, %v2141
        %v2143 = vrot.slane %v2142, 4
        %v2145 = vshll.u32 %v1871, 16
        %v2147 = vrot.slane %v2145, 5
        %v2148 = vsel %vm1918, %v2143, %v2147
        %v2149 = vshrl.u32 %v1871, 16
        %v2151 = vrot.slane %v2149, 4
        %v2152 = vor.u32 %v2151, %v2147
        %v2153 = vrot.slane %v2152, 4
        %v2155 = vshll.u32 %v1909, 16
        %v2157 = vrot.slane %v2155, 5
        %v2158 = vsel %vm1918, %v2153, %v2157
        %v2160 = vshrl.u32 %v1872, 16
        %v2162 = vrot.slane %v2160, 4
        %v2163 = vshll.u32 %v1872, 16
        %v2165 = vrot.slane %v2163, 5
        %v2166 = vor.u32 %v2162, %v2165
        %v2167 = vrot.slane %v2166, 4
        %v2169 = vshll.u32 %v1873, 16
        %v2171 = vrot.slane %v2169, 5
        %v2172 = vsel %vm1918, %v2167, %v2171
        %v2173 = vshrl.u32 %v1873, 16
        %v2175 = vrot.slane %v2173, 4
        %v2176 = vor.u32 %v2175, %v2171
        %v2177 = vrot.slane %v2176, 4
        %v2179 = vshll.u32 %v1910, 16
        %v2181 = vrot.slane %v2179, 5
        %v2182 = vsel %vm1918, %v2177, %v2181
        %v2184 = vshrl.u32 %v1874, 16
        %v2186 = vrot.slane %v2184, 4
        %v2187 = vshll.u32 %v1874, 16
        %v2189 = vrot.slane %v2187, 5
        %v2190 = vor.u32 %v2186, %v2189
        %v2191 = vrot.slane %v2190, 4
        %v2193 = vshll.u32 %v1875, 16
        %v2195 = vrot.slane %v2193, 5
        %v2196 = vsel %vm1918, %v2191, %v2195
        %v2197 = vshrl.u32 %v1875, 16
        %v2199 = vrot.slane %v2197, 4
        %v2200 = vor.u32 %v2199, %v2195
        %v2201 = vrot.slane %v2200, 4
        %v2203 = vshll.u32 %v1911, 16
        %v2205 = vrot.slane %v2203, 5
        %v2206 = vsel %vm1918, %v2201, %v2205
        %v2208 = vshrl.u32 %v1876, 16
        %v2210 = vrot.slane %v2208, 4
        %v2211 = vshll.u32 %v1876, 16
        %v2213 = vrot.slane %v2211, 5
        %v2214 = vor.u32 %v2210, %v2213
        %v2215 = vrot.slane %v2214, 4
        %v2217 = vshll.u32 %v1877, 16
        %v2219 = vrot.slane %v2217, 5
        %v2220 = vsel %vm1918, %v2215, %v2219
        %v2221 = vshrl.u32 %v1877, 16
        %v2223 = vrot.slane %v2221, 4
        %v2224 = vor.u32 %v2223, %v2219
        %v2225 = vrot.slane %v2224, 4
        %v2227 = vshll.u32 %v1912, 16
        %v2229 = vrot.slane %v2227, 5
        %v2230 = vsel %vm1918, %v2225, %v2229
        %v2232 = vshrl.u32 %v1878, 16
        %v2234 = vrot.slane %v2232, 4
        %v2235 = vshll.u32 %v1878, 16
        %v2237 = vrot.slane %v2235, 5
        %v2238 = vor.u32 %v2234, %v2237
        %v2239 = vrot.slane %v2238, 4
        %v2241 = vshll.u32 %v1879, 16
        %v2243 = vrot.slane %v2241, 5
        %v2244 = vsel %vm1918, %v2239, %v2243
        %v2245 = vshrl.u32 %v1879, 16
        %v2247 = vrot.slane %v2245, 4
        %v2248 = vor.u32 %v2247, %v2243
        %v2249 = vrot.slane %v2248, 4
        %v2251 = vshll.u32 %v1913, 16
        %v2253 = vrot.slane %v2251, 5
        %v2254 = vsel %vm1918, %v2249, %v2253
        %v2256 = vshrl.u32 %v1880, 16
        %v2258 = vrot.slane %v2256, 4
        %v2259 = vshll.u32 %v1880, 16
        %v2261 = vrot.slane %v2259, 5
        %v2262 = vor.u32 %v2258, %v2261
        %v2263 = vrot.slane %v2262, 4
        %v2265 = vshll.u32 %v1881, 16
        %v2267 = vrot.slane %v2265, 5
        %v2268 = vsel %vm1918, %v2263, %v2267
        %v2269 = vshrl.u32 %v1881, 16
        %v2271 = vrot.slane %v2269, 4
        %v2272 = vor.u32 %v2271, %v2267
        %v2273 = vrot.slane %v2272, 4
        %v2275 = vshll.u32 %v1914, 16
        %v2277 = vrot.slane %v2275, 5
        %v2278 = vsel %vm1918, %v2273, %v2277
        %v2280 = vshrl.u32 %v1882, 16
        %v2282 = vrot.slane %v2280, 4
        %v2283 = vshll.u32 %v1882, 16
        %v2285 = vrot.slane %v2283, 5
        %v2286 = vor.u32 %v2282, %v2285
        %v2287 = vrot.slane %v2286, 4
        %v2289 = vshll.u32 %v1883, 16
        %v2291 = vrot.slane %v2289, 5
        %v2292 = vsel %vm1918, %v2287, %v2291
        %v2293 = vshrl.u32 %v1883, 16
        %v2295 = vrot.slane %v2293, 4
        %v2296 = vor.u32 %v2295, %v2291
        %v2297 = vrot.slane %v2296, 4
        %v2299 = vshll.u32 %v1915, 16
        %v2301 = vrot.slane %v2299, 5
        %v2302 = vsel %vm1918, %v2297, %v2301
        %s2303 = scalar_lea.vmem [#allocation8], 64
        %v2304 = vld [vmem:[%s2303] sm:$0xf]
        %v2305 = vld [vmem:[%s2303 + $0x4] sm:$0xf]
        %v2306 = vld [vmem:[%s2303 + $0x8] sm:$0xf]
        %v2307 = vld [vmem:[%s2303 + $0xc] sm:$0xf]
        %v2308 = vld [vmem:[%s2303 + $0x10] sm:$0xf]
        %v2309 = vld [vmem:[%s2303 + $0x14] sm:$0xf]
        %v2310 = vld [vmem:[%s2303 + $0x18] sm:$0xf]
        %v2311 = vld [vmem:[%s2303 + $0x1c] sm:$0xf]
        %v2312 = vld [vmem:[%s2303 + $0x20] sm:$0xf]
        %v2313 = vld [vmem:[%s2303 + $0x24] sm:$0xf]
        %v2314 = vld [vmem:[%s2303 + $0x28] sm:$0xf]
        %v2315 = vld [vmem:[%s2303 + $0x2c] sm:$0xf]
        %v2316 = vld [vmem:[%s2303 + $0x30] sm:$0xf]
        %v2317 = vld [vmem:[%s2303 + $0x34] sm:$0xf]
        %v2318 = vld [vmem:[%s2303 + $0x38] sm:$0xf]
        %v2319 = vld [vmem:[%s2303 + $0x3c] sm:$0xf]
        %v2320 = vunpack.c.l.b16 %v1932
        %v2321 = vunpack.c.l.b16 %v1942
        %v2322 = vunpack.c.l.b16 %v1956
        %v2323 = vunpack.c.l.b16 %v1966
        %v2324 = vunpack.c.l.b16 %v1980
        %v2325 = vunpack.c.l.b16 %v1990
        %v2326 = vunpack.c.l.b16 %v2004
        %v2327 = vunpack.c.l.b16 %v2014
        %v2328 = vunpack.c.l.b16 %v2028
        %v2329 = vunpack.c.l.b16 %v2038
        %v2330 = vunpack.c.l.b16 %v2052
        %v2331 = vunpack.c.l.b16 %v2062
        %v2332 = vunpack.c.l.b16 %v2076
        %v2333 = vunpack.c.l.b16 %v2086
        %v2334 = vunpack.c.l.b16 %v2100
        %v2335 = vunpack.c.l.b16 %v2110
        %v2336 = vunpack.c.l.b16 %v2124
        %v2337 = vunpack.c.l.b16 %v2134
        %v2338 = vunpack.c.l.b16 %v2148
        %v2339 = vunpack.c.l.b16 %v2158
        %v2340 = vunpack.c.l.b16 %v2172
        %v2341 = vunpack.c.l.b16 %v2182
        %v2342 = vunpack.c.l.b16 %v2196
        %v2343 = vunpack.c.l.b16 %v2206
        %v2344 = vunpack.c.l.b16 %v2220
        %v2345 = vunpack.c.l.b16 %v2230
        %v2346 = vunpack.c.l.b16 %v2244
        %v2347 = vunpack.c.l.b16 %v2254
        %v2348 = vunpack.c.l.b16 %v2268
        %v2349 = vunpack.c.l.b16 %v2278
        %v2350 = vunpack.c.l.b16 %v2292
        %v2351 = vunpack.c.l.b16 %v2302
        %v2352 = vpack.c.b16 %v2321, %v2320
        %v2353 = vpack.c.b16 %v2323, %v2322
        %v2354 = vpack.c.b16 %v2325, %v2324
        %v2355 = vpack.c.b16 %v2327, %v2326
        %v2356 = vpack.c.b16 %v2329, %v2328
        %v2357 = vpack.c.b16 %v2331, %v2330
        %v2358 = vpack.c.b16 %v2333, %v2332
        %v2359 = vpack.c.b16 %v2335, %v2334
        %v2360 = vpack.c.b16 %v2337, %v2336
        %v2361 = vpack.c.b16 %v2339, %v2338
        %v2362 = vpack.c.b16 %v2341, %v2340
        %v2363 = vpack.c.b16 %v2343, %v2342
        %v2364 = vpack.c.b16 %v2345, %v2344
        %v2365 = vpack.c.b16 %v2347, %v2346
        %v2366 = vpack.c.b16 %v2349, %v2348
        %v2367 = vpack.c.b16 %v2351, %v2350
        %v2400 = vunpack.c.l.b16 %v2304
        %v2401 = vunpack.c.l.b16 %v2305
        %v2402 = vunpack.c.l.b16 %v2306
        %v2403 = vunpack.c.l.b16 %v2307
        %v2404 = vunpack.c.l.b16 %v2308
        %v2405 = vunpack.c.l.b16 %v2309
        %v2406 = vunpack.c.l.b16 %v2310
        %v2407 = vunpack.c.l.b16 %v2311
        %v2408 = vunpack.c.l.b16 %v2312
        %v2409 = vunpack.c.l.b16 %v2313
        %v2410 = vunpack.c.l.b16 %v2314
        %v2411 = vunpack.c.l.b16 %v2315
        %v2412 = vunpack.c.l.b16 %v2316
        %v2413 = vunpack.c.l.b16 %v2317
        %v2414 = vunpack.c.l.b16 %v2318
        %v2415 = vunpack.c.l.b16 %v2319
        %v2416 = vpack.c.b16 %v2401, %v2400
        %v2417 = vpack.c.b16 %v2403, %v2402
        %v2418 = vpack.c.b16 %v2405, %v2404
        %v2419 = vpack.c.b16 %v2407, %v2406
        %v2420 = vpack.c.b16 %v2409, %v2408
        %v2421 = vpack.c.b16 %v2411, %v2410
        %v2422 = vpack.c.b16 %v2413, %v2412
        %v2423 = vpack.c.b16 %v2415, %v2414
        %2432 = vmatprep.subr.bf16.mxu0 0
        %2433 = vmatpush1.bf16.msra.mxu0 %v2416
        %2434 = vmatprep.subr.bf16.mxu0 0
        %2435 = vmatpush1.bf16.msra.mxu0 %v2417
        %2436 = vmatprep.subr.bf16.mxu0 0
        %2437 = vmatpush1.bf16.msra.mxu0 %v2418
        %2438 = vmatprep.subr.bf16.mxu0 0
        %2439 = vmatpush1.bf16.msra.mxu0 %v2419
        %2440 = vmatprep.subr.bf16.mxu0 0
        %2441 = vmatpush1.bf16.msra.mxu0 %v2420
        %2442 = vmatprep.subr.bf16.mxu0 0
        %2443 = vmatpush1.bf16.msra.mxu0 %v2421
        %2444 = vmatprep.subr.bf16.mxu0 0
        %2445 = vmatpush1.bf16.msra.mxu0 %v2422
        %2446 = vmatprep.subr.bf16.mxu0 0
        %2447 = vmatpush1.bf16.msra.mxu0 %v2423
        %2448 = vmatprep.subr.bf16.mxu0 0
        %2449 = vmatpush1.bf16.msra.mxu0 0
        %2450 = vmatprep.subr.bf16.mxu0 0
        %2451 = vmatpush1.bf16.msra.mxu0 0
        %2452 = vmatprep.subr.bf16.mxu0 0
        %2453 = vmatpush1.bf16.msra.mxu0 0
        %2454 = vmatprep.subr.bf16.mxu0 0
        %2455 = vmatpush1.bf16.msra.mxu0 0
        %2456 = vmatprep.subr.bf16.mxu0 0
        %2457 = vmatpush1.bf16.msra.mxu0 0
        %2458 = vmatprep.subr.bf16.mxu0 0
        %2459 = vmatpush1.bf16.msra.mxu0 0
        %2460 = vmatprep.subr.bf16.mxu0 0
        %2461 = vmatpush1.bf16.msra.mxu0 0
        %2462 = vmatprep.subr.bf16.mxu0 0
        %2463 = vmatpush1.bf16.msra.mxu0 0
        %2464 = vmatprep.mubr.bf16.mxu0 0
        %2465 = vmatmul.mubr.bf16.gmra.mrb[0].mxu0 %v2352
        %v2466 = vpop.f32.mrb[0].mxu0
        %v2467 = vadd.f32 0.0, %v2466
        %v2468 = vpop.f32.mrb[0].mxu0
        %v2469 = vpop.f32.mrb[0].mxu0
        %v2470 = vadd.f32 0.0, %v2469
        %v2471 = vpop.f32.mrb[0].mxu0
        %2472 = vmatprep.mubr.bf16.mxu0 0
        %2473 = vmatmul.mubr.bf16.gmra.mrb[0].mxu0 %v2353
        %v2474 = vpop.f32.mrb[0].mxu0
        %v2475 = vadd.f32 0.0, %v2474
        %v2476 = vpop.f32.mrb[0].mxu0
        %v2477 = vpop.f32.mrb[0].mxu0
        %v2478 = vadd.f32 0.0, %v2477
        %v2479 = vpop.f32.mrb[0].mxu0
        %2480 = vmatprep.mubr.bf16.mxu0 0
        %2481 = vmatmul.mubr.bf16.gmra.mrb[0].mxu0 %v2354
        %v2482 = vpop.f32.mrb[0].mxu0
        %v2483 = vadd.f32 0.0, %v2482
        %v2484 = vpop.f32.mrb[0].mxu0
        %v2485 = vpop.f32.mrb[0].mxu0
        %v2486 = vadd.f32 0.0, %v2485
        %v2487 = vpop.f32.mrb[0].mxu0
        %2488 = vmatprep.mubr.bf16.mxu0 0
        %2489 = vmatmul.mubr.bf16.gmra.mrb[0].mxu0 %v2355
        %v2490 = vpop.f32.mrb[0].mxu0
        %v2491 = vadd.f32 0.0, %v2490
        %v2492 = vpop.f32.mrb[0].mxu0
        %v2493 = vpop.f32.mrb[0].mxu0
        %v2494 = vadd.f32 0.0, %v2493
        %v2495 = vpop.f32.mrb[0].mxu0
        %2496 = vmatprep.mubr.bf16.mxu0 0
        %2497 = vmatmul.mubr.bf16.gmra.mrb[0].mxu0 %v2356
        %v2498 = vpop.f32.mrb[0].mxu0
        %v2499 = vadd.f32 0.0, %v2498
        %v2500 = vpop.f32.mrb[0].mxu0
        %v2501 = vpop.f32.mrb[0].mxu0
        %v2502 = vadd.f32 0.0, %v2501
        %v2503 = vpop.f32.mrb[0].mxu0
        %2504 = vmatprep.mubr.bf16.mxu0 0
        %2505 = vmatmul.mubr.bf16.gmra.mrb[0].mxu0 %v2357
        %v2506 = vpop.f32.mrb[0].mxu0
        %v2507 = vadd.f32 0.0, %v2506
        %v2508 = vpop.f32.mrb[0].mxu0
        %v2509 = vpop.f32.mrb[0].mxu0
        %v2510 = vadd.f32 0.0, %v2509
        %v2511 = vpop.f32.mrb[0].mxu0
        %2512 = vmatprep.mubr.bf16.mxu0 0
        %2513 = vmatmul.mubr.bf16.gmra.mrb[0].mxu0 %v2358
        %v2514 = vpop.f32.mrb[0].mxu0
        %v2515 = vadd.f32 0.0, %v2514
        %v2516 = vpop.f32.mrb[0].mxu0
        %v2517 = vpop.f32.mrb[0].mxu0
        %v2518 = vadd.f32 0.0, %v2517
        %v2519 = vpop.f32.mrb[0].mxu0
        %2520 = vmatprep.mubr.bf16.mxu0 0
        %2521 = vmatmul.mubr.bf16.gmra.mrb[0].mxu0 %v2359
        %v2522 = vpop.f32.mrb[0].mxu0
        %v2523 = vadd.f32 0.0, %v2522
        %v2524 = vpop.f32.mrb[0].mxu0
        %v2525 = vpop.f32.mrb[0].mxu0
        %v2526 = vadd.f32 0.0, %v2525
        %v2527 = vpop.f32.mrb[0].mxu0
        %2528 = vmatprep.mubr.bf16.mxu0 0
        %2529 = vmatmul.mubr.bf16.gmra.mrb[0].mxu0 %v2360
        %v2530 = vpop.f32.mrb[0].mxu0
        %v2531 = vadd.f32 0.0, %v2530
        %v2532 = vpop.f32.mrb[0].mxu0
        %v2533 = vpop.f32.mrb[0].mxu0
        %v2534 = vadd.f32 0.0, %v2533
        %v2535 = vpop.f32.mrb[0].mxu0
        %2536 = vmatprep.mubr.bf16.mxu0 0
        %2537 = vmatmul.mubr.bf16.gmra.mrb[0].mxu0 %v2361
        %v2538 = vpop.f32.mrb[0].mxu0
        %v2539 = vadd.f32 0.0, %v2538
        %v2540 = vpop.f32.mrb[0].mxu0
        %v2541 = vpop.f32.mrb[0].mxu0
        %v2542 = vadd.f32 0.0, %v2541
        %v2543 = vpop.f32.mrb[0].mxu0
        %2544 = vmatprep.mubr.bf16.mxu0 0
        %2545 = vmatmul.mubr.bf16.gmra.mrb[0].mxu0 %v2362
        %v2546 = vpop.f32.mrb[0].mxu0
        %v2547 = vadd.f32 0.0, %v2546
        %v2548 = vpop.f32.mrb[0].mxu0
        %v2549 = vpop.f32.mrb[0].mxu0
        %v2550 = vadd.f32 0.0, %v2549
        %v2551 = vpop.f32.mrb[0].mxu0
        %2552 = vmatprep.mubr.bf16.mxu0 0
        %2553 = vmatmul.mubr.bf16.gmra.mrb[0].mxu0 %v2363
        %v2554 = vpop.f32.mrb[0].mxu0
        %v2555 = vadd.f32 0.0, %v2554
        %v2556 = vpop.f32.mrb[0].mxu0
        %v2557 = vpop.f32.mrb[0].mxu0
        %v2558 = vadd.f32 0.0, %v2557
        %v2559 = vpop.f32.mrb[0].mxu0
        %2560 = vmatprep.mubr.bf16.mxu0 0
        %2561 = vmatmul.mubr.bf16.gmra.mrb[0].mxu0 %v2364
        %v2562 = vpop.f32.mrb[0].mxu0
        %v2563 = vadd.f32 0.0, %v2562
        %v2564 = vpop.f32.mrb[0].mxu0
        %v2565 = vpop.f32.mrb[0].mxu0
        %v2566 = vadd.f32 0.0, %v2565
        %v2567 = vpop.f32.mrb[0].mxu0
        %2568 = vmatprep.mubr.bf16.mxu0 0
        %2569 = vmatmul.mubr.bf16.gmra.mrb[0].mxu0 %v2365
        %v2570 = vpop.f32.mrb[0].mxu0
        %v2571 = vadd.f32 0.0, %v2570
        %v2572 = vpop.f32.mrb[0].mxu0
        %v2573 = vpop.f32.mrb[0].mxu0
        %v2574 = vadd.f32 0.0, %v2573
        %v2575 = vpop.f32.mrb[0].mxu0
        %2576 = vmatprep.mubr.bf16.mxu0 0
        %2577 = vmatmul.mubr.bf16.gmra.mrb[0].mxu0 %v2366
        %v2578 = vpop.f32.mrb[0].mxu0
        %v2579 = vadd.f32 0.0, %v2578
        %v2580 = vpop.f32.mrb[0].mxu0
        %v2581 = vpop.f32.mrb[0].mxu0
        %v2582 = vadd.f32 0.0, %v2581
        %v2583 = vpop.f32.mrb[0].mxu0
        %2584 = vmatprep.mubr.bf16.mxu0 0
        %2585 = vmatmul.mubr.bf16.gmra.mrb[0].mxu0 %v2367
        %v2586 = vpop.f32.mrb[0].mxu0
        %v2587 = vadd.f32 0.0, %v2586
        %v2588 = vpop.f32.mrb[0].mxu0
        %v2589 = vpop.f32.mrb[0].mxu0
        %v2590 = vadd.f32 0.0, %v2589
        %v2591 = vpop.f32.mrb[0].mxu0
        %2592 = vdwg.mxu0
        %v2625 = vunpack.c.l.b16 %v1852
        %v2626 = vunpack.c.l.b16 %v1853
        %v2627 = vunpack.c.l.b16 %v1854
        %v2628 = vunpack.c.l.b16 %v1855
        %v2629 = vunpack.c.l.b16 %v1856
        %v2630 = vunpack.c.l.b16 %v1857
        %v2631 = vunpack.c.l.b16 %v1858
        %v2632 = vunpack.c.l.b16 %v1859
        %v2633 = vunpack.c.l.b16 %v1860
        %v2634 = vunpack.c.l.b16 %v1861
        %v2635 = vunpack.c.l.b16 %v1862
        %v2636 = vunpack.c.l.b16 %v1863
        %v2637 = vunpack.c.l.b16 %v1864
        %v2638 = vunpack.c.l.b16 %v1865
        %v2639 = vunpack.c.l.b16 %v1866
        %v2640 = vunpack.c.l.b16 %v1867
        %v2641 = vunpack.c.l.b16 %v1868
        %v2642 = vunpack.c.l.b16 %v1869
        %v2643 = vunpack.c.l.b16 %v1870
        %v2644 = vunpack.c.l.b16 %v1871
        %v2645 = vunpack.c.l.b16 %v1872
        %v2646 = vunpack.c.l.b16 %v1873
        %v2647 = vunpack.c.l.b16 %v1874
        %v2648 = vunpack.c.l.b16 %v1875
        %v2649 = vunpack.c.l.b16 %v1876
        %v2650 = vunpack.c.l.b16 %v1877
        %v2651 = vunpack.c.l.b16 %v1878
        %v2652 = vunpack.c.l.b16 %v1879
        %v2653 = vunpack.c.l.b16 %v1880
        %v2654 = vunpack.c.l.b16 %v1881
        %v2655 = vunpack.c.l.b16 %v1882
        %v2656 = vunpack.c.l.b16 %v1883
        %v2657 = vpack.c.b16 %v2626, %v2625
        %v2658 = vpack.c.b16 %v2628, %v2627
        %v2659 = vpack.c.b16 %v2630, %v2629
        %v2660 = vpack.c.b16 %v2632, %v2631
        %v2661 = vpack.c.b16 %v2634, %v2633
        %v2662 = vpack.c.b16 %v2636, %v2635
        %v2663 = vpack.c.b16 %v2638, %v2637
        %v2664 = vpack.c.b16 %v2640, %v2639
        %v2665 = vpack.c.b16 %v2642, %v2641
        %v2666 = vpack.c.b16 %v2644, %v2643
        %v2667 = vpack.c.b16 %v2646, %v2645
        %v2668 = vpack.c.b16 %v2648, %v2647
        %v2669 = vpack.c.b16 %v2650, %v2649
        %v2670 = vpack.c.b16 %v2652, %v2651
        %v2671 = vpack.c.b16 %v2654, %v2653
        %v2672 = vpack.c.b16 %v2656, %v2655
        %v2705 = vunpack.c.l.b16 %v1884
        %v2706 = vunpack.c.l.b16 %v1885
        %v2707 = vunpack.c.l.b16 %v1886
        %v2708 = vunpack.c.l.b16 %v1887
        %v2709 = vunpack.c.l.b16 %v1888
        %v2710 = vunpack.c.l.b16 %v1889
        %v2711 = vunpack.c.l.b16 %v1890
        %v2712 = vunpack.c.l.b16 %v1891
        %v2713 = vunpack.c.l.b16 %v1892
        %v2714 = vunpack.c.l.b16 %v1893
        %v2715 = vunpack.c.l.b16 %v1894
        %v2716 = vunpack.c.l.b16 %v1895
        %v2717 = vunpack.c.l.b16 %v1896
        %v2718 = vunpack.c.l.b16 %v1897
        %v2719 = vunpack.c.l.b16 %v1898
        %v2720 = vunpack.c.l.b16 %v1899
        %v2721 = vpack.c.b16 %v2706, %v2705
        %v2722 = vpack.c.b16 %v2708, %v2707
        %v2723 = vpack.c.b16 %v2710, %v2709
        %v2724 = vpack.c.b16 %v2712, %v2711
        %v2725 = vpack.c.b16 %v2714, %v2713
        %v2726 = vpack.c.b16 %v2716, %v2715
        %v2727 = vpack.c.b16 %v2718, %v2717
        %v2728 = vpack.c.b16 %v2720, %v2719
        %2737 = vmatprep.subr.bf16.mxu0 0
        %2738 = vmatpush1.bf16.msra.mxu0 %v2721
        %2739 = vmatprep.subr.bf16.mxu0 0
        %2740 = vmatpush1.bf16.msra.mxu0 %v2722
        %2741 = vmatprep.subr.bf16.mxu0 0
        %2742 = vmatpush1.bf16.msra.mxu0 %v2723
        %2743 = vmatprep.subr.bf16.mxu0 0
        %2744 = vmatpush1.bf16.msra.mxu0 %v2724
        %2745 = vmatprep.subr.bf16.mxu0 0
        %2746 = vmatpush1.bf16.msra.mxu0 %v2725
        %2747 = vmatprep.subr.bf16.mxu0 0
        %2748 = vmatpush1.bf16.msra.mxu0 %v2726
        %2749 = vmatprep.subr.bf16.mxu0 0
        %2750 = vmatpush1.bf16.msra.mxu0 %v2727
        %2751 = vmatprep.subr.bf16.mxu0 0
        %2752 = vmatpush1.bf16.msra.mxu0 %v2728
        %2753 = vmatprep.subr.bf16.mxu0 0
        %2754 = vmatpush1.bf16.msra.mxu0 0
        %2755 = vmatprep.subr.bf16.mxu0 0
        %2756 = vmatpush1.bf16.msra.mxu0 0
        %2757 = vmatprep.subr.bf16.mxu0 0
        %2758 = vmatpush1.bf16.msra.mxu0 0
        %2759 = vmatprep.subr.bf16.mxu0 0
        %2760 = vmatpush1.bf16.msra.mxu0 0
        %2761 = vmatprep.subr.bf16.mxu0 0
        %2762 = vmatpush1.bf16.msra.mxu0 0
        %2763 = vmatprep.subr.bf16.mxu0 0
        %2764 = vmatpush1.bf16.msra.mxu0 0
        %2765 = vmatprep.subr.bf16.mxu0 0
        %2766 = vmatpush1.bf16.msra.mxu0 0
        %2767 = vmatprep.subr.bf16.mxu0 0
        %2768 = vmatpush1.bf16.msra.mxu0 0
        %2769 = vmatprep.mubr.bf16.mxu0 0
        %2770 = vmatmul.mubr.bf16.gmra.mrb[0].mxu0 %v2657
        %v2771 = vpop.f32.mrb[0].mxu0
        %v2772 = vadd.f32 %v2467, %v2771
        %v2773 = vpop.f32.mrb[0].mxu0
        %v2774 = vpop.f32.mrb[0].mxu0
        %v2775 = vadd.f32 %v2470, %v2774
        %v2776 = vpop.f32.mrb[0].mxu0
        %2777 = vmatprep.mubr.bf16.mxu0 0
        %2778 = vmatmul.mubr.bf16.gmra.mrb[0].mxu0 %v2658
        %v2779 = vpop.f32.mrb[0].mxu0
        %v2780 = vadd.f32 %v2475, %v2779
        %v2781 = vpop.f32.mrb[0].mxu0
        %v2782 = vpop.f32.mrb[0].mxu0
        %v2783 = vadd.f32 %v2478, %v2782
        %v2784 = vpop.f32.mrb[0].mxu0
        %2785 = vmatprep.mubr.bf16.mxu0 0
        %2786 = vmatmul.mubr.bf16.gmra.mrb[0].mxu0 %v2659
        %v2787 = vpop.f32.mrb[0].mxu0
        %v2788 = vadd.f32 %v2483, %v2787
        %v2789 = vpop.f32.mrb[0].mxu0
        %v2790 = vpop.f32.mrb[0].mxu0
        %v2791 = vadd.f32 %v2486, %v2790
        %v2792 = vpop.f32.mrb[0].mxu0
        %2793 = vmatprep.mubr.bf16.mxu0 0
        %2794 = vmatmul.mubr.bf16.gmra.mrb[0].mxu0 %v2660
        %v2795 = vpop.f32.mrb[0].mxu0
        %v2796 = vadd.f32 %v2491, %v2795
        %v2797 = vpop.f32.mrb[0].mxu0
        %v2798 = vpop.f32.mrb[0].mxu0
        %v2799 = vadd.f32 %v2494, %v2798
        %v2800 = vpop.f32.mrb[0].mxu0
        %2801 = vmatprep.mubr.bf16.mxu0 0
        %2802 = vmatmul.mubr.bf16.gmra.mrb[0].mxu0 %v2661
        %v2803 = vpop.f32.mrb[0].mxu0
        %v2804 = vadd.f32 %v2499, %v2803
        %v2805 = vpop.f32.mrb[0].mxu0
        %v2806 = vpop.f32.mrb[0].mxu0
        %v2807 = vadd.f32 %v2502, %v2806
        %v2808 = vpop.f32.mrb[0].mxu0
        %2809 = vmatprep.mubr.bf16.mxu0 0
        %2810 = vmatmul.mubr.bf16.gmra.mrb[0].mxu0 %v2662
        %v2811 = vpop.f32.mrb[0].mxu0
        %v2812 = vadd.f32 %v2507, %v2811
        %v2813 = vpop.f32.mrb[0].mxu0
        %v2814 = vpop.f32.mrb[0].mxu0
        %v2815 = vadd.f32 %v2510, %v2814
        %v2816 = vpop.f32.mrb[0].mxu0
        %2817 = vmatprep.mubr.bf16.mxu0 0
        %2818 = vmatmul.mubr.bf16.gmra.mrb[0].mxu0 %v2663
        %v2819 = vpop.f32.mrb[0].mxu0
        %v2820 = vadd.f32 %v2515, %v2819
        %v2821 = vpop.f32.mrb[0].mxu0
        %v2822 = vpop.f32.mrb[0].mxu0
        %v2823 = vadd.f32 %v2518, %v2822
        %v2824 = vpop.f32.mrb[0].mxu0
        %2825 = vmatprep.mubr.bf16.mxu0 0
        %2826 = vmatmul.mubr.bf16.gmra.mrb[0].mxu0 %v2664
        %v2827 = vpop.f32.mrb[0].mxu0
        %v2828 = vadd.f32 %v2523, %v2827
        %v2829 = vpop.f32.mrb[0].mxu0
        %v2830 = vpop.f32.mrb[0].mxu0
        %v2831 = vadd.f32 %v2526, %v2830
        %v2832 = vpop.f32.mrb[0].mxu0
        %2833 = vmatprep.mubr.bf16.mxu0 0
        %2834 = vmatmul.mubr.bf16.gmra.mrb[0].mxu0 %v2665
        %v2835 = vpop.f32.mrb[0].mxu0
        %v2836 = vadd.f32 %v2531, %v2835
        %v2837 = vpop.f32.mrb[0].mxu0
        %v2838 = vpop.f32.mrb[0].mxu0
        %v2839 = vadd.f32 %v2534, %v2838
        %v2840 = vpop.f32.mrb[0].mxu0
        %2841 = vmatprep.mubr.bf16.mxu0 0
        %2842 = vmatmul.mubr.bf16.gmra.mrb[0].mxu0 %v2666
        %v2843 = vpop.f32.mrb[0].mxu0
        %v2844 = vadd.f32 %v2539, %v2843
        %v2845 = vpop.f32.mrb[0].mxu0
        %v2846 = vpop.f32.mrb[0].mxu0
        %v2847 = vadd.f32 %v2542, %v2846
        %v2848 = vpop.f32.mrb[0].mxu0
        %2849 = vmatprep.mubr.bf16.mxu0 0
        %2850 = vmatmul.mubr.bf16.gmra.mrb[0].mxu0 %v2667
        %v2851 = vpop.f32.mrb[0].mxu0
        %v2852 = vadd.f32 %v2547, %v2851
        %v2853 = vpop.f32.mrb[0].mxu0
        %v2854 = vpop.f32.mrb[0].mxu0
        %v2855 = vadd.f32 %v2550, %v2854
        %v2856 = vpop.f32.mrb[0].mxu0
        %2857 = vmatprep.mubr.bf16.mxu0 0
        %2858 = vmatmul.mubr.bf16.gmra.mrb[0].mxu0 %v2668
        %v2859 = vpop.f32.mrb[0].mxu0
        %v2860 = vadd.f32 %v2555, %v2859
        %v2861 = vpop.f32.mrb[0].mxu0
        %v2862 = vpop.f32.mrb[0].mxu0
        %v2863 = vadd.f32 %v2558, %v2862
        %v2864 = vpop.f32.mrb[0].mxu0
        %2865 = vmatprep.mubr.bf16.mxu0 0
        %2866 = vmatmul.mubr.bf16.gmra.mrb[0].mxu0 %v2669
        %v2867 = vpop.f32.mrb[0].mxu0
        %v2868 = vadd.f32 %v2563, %v2867
        %v2869 = vpop.f32.mrb[0].mxu0
        %v2870 = vpop.f32.mrb[0].mxu0
        %v2871 = vadd.f32 %v2566, %v2870
        %v2872 = vpop.f32.mrb[0].mxu0
        %2873 = vmatprep.mubr.bf16.mxu0 0
        %2874 = vmatmul.mubr.bf16.gmra.mrb[0].mxu0 %v2670
        %v2875 = vpop.f32.mrb[0].mxu0
        %v2876 = vadd.f32 %v2571, %v2875
        %v2877 = vpop.f32.mrb[0].mxu0
        %v2878 = vpop.f32.mrb[0].mxu0
        %v2879 = vadd.f32 %v2574, %v2878
        %v2880 = vpop.f32.mrb[0].mxu0
        %2881 = vmatprep.mubr.bf16.mxu0 0
        %2882 = vmatmul.mubr.bf16.gmra.mrb[0].mxu0 %v2671
        %v2883 = vpop.f32.mrb[0].mxu0
        %v2884 = vadd.f32 %v2579, %v2883
        %v2885 = vpop.f32.mrb[0].mxu0
        %v2886 = vpop.f32.mrb[0].mxu0
        %v2887 = vadd.f32 %v2582, %v2886
        %v2888 = vpop.f32.mrb[0].mxu0
        %2889 = vmatprep.mubr.bf16.mxu0 0
        %2890 = vmatmul.mubr.bf16.gmra.mrb[0].mxu0 %v2672
        %v2891 = vpop.f32.mrb[0].mxu0
        %v2892 = vadd.f32 %v2587, %v2891
        %v2893 = vpop.f32.mrb[0].mxu0
        %v2894 = vpop.f32.mrb[0].mxu0
        %v2895 = vadd.f32 %v2590, %v2894
        %v2896 = vpop.f32.mrb[0].mxu0
        %2897 = vdwg.mxu0
        %v2898 = vld [vmem:[#allocation2] sm:$0xe]
        %v2899 = vld [vmem:[#allocation2 + $0xc] sm:$0xe]
        %v2900 = vld [vmem:[#allocation2 + $0x18] sm:$0xe]
        %v2901 = vld [vmem:[#allocation2 + $0x24] sm:$0xe]
        %v2902 = vld [vmem:[#allocation2 + $0x30] sm:$0xe]
        %v2903 = vld [vmem:[#allocation2 + $0x3c] sm:$0xe]
        %v2904 = vld [vmem:[#allocation2 + $0x48] sm:$0xe]
        %v2905 = vld [vmem:[#allocation2 + $0x54] sm:$0xe]
        %v2906 = vld [vmem:[#allocation2 + $0x60] sm:$0xe]
        %v2907 = vld [vmem:[#allocation2 + $0x6c] sm:$0xe]
        %v2908 = vld [vmem:[#allocation2 + $0x78] sm:$0xe]
        %v2909 = vld [vmem:[#allocation2 + $0x84] sm:$0xe]
        %v2910 = vld [vmem:[#allocation2 + $0x90] sm:$0xe]
        %v2911 = vld [vmem:[#allocation2 + $0x9c] sm:$0xe]
        %v2912 = vld [vmem:[#allocation2 + $0xa8] sm:$0xe]
        %v2913 = vld [vmem:[#allocation2 + $0xb4] sm:$0xe]
        %vm2946 = vcmask 1042432
        %vm2947 = vcmask 1046532
        %vm2948 = vmor %vm2946, %vm2947
        %v2949 = vrot.slane %v2898, 5
        %v2950 = vrot.slane %v2949, 4
        %v2951 = vrot.slane %v1853, 5
        %v2952 = vsel %vm2948, %v2950, %v2951
        %v2953 = vrot.slane %v2951, 4
        %v2954 = vrot.slane %v1900, 5
        %v2955 = vsel %vm2948, %v2953, %v2954
        %v2956 = vrot.slane %v2899, 5
        %v2957 = vrot.slane %v2956, 4
        %v2958 = vrot.slane %v1855, 5
        %v2959 = vsel %vm2948, %v2957, %v2958
        %v2960 = vrot.slane %v2958, 4
        %v2961 = vrot.slane %v1901, 5
        %v2962 = vsel %vm2948, %v2960, %v2961
        %v2963 = vrot.slane %v2900, 5
        %v2964 = vrot.slane %v2963, 4
        %v2965 = vrot.slane %v1857, 5
        %v2966 = vsel %vm2948, %v2964, %v2965
        %v2967 = vrot.slane %v2965, 4
        %v2968 = vrot.slane %v1902, 5
        %v2969 = vsel %vm2948, %v2967, %v2968
        %v2970 = vrot.slane %v2901, 5
        %v2971 = vrot.slane %v2970, 4
        %v2972 = vrot.slane %v1859, 5
        %v2973 = vsel %vm2948, %v2971, %v2972
        %v2974 = vrot.slane %v2972, 4
        %v2975 = vrot.slane %v1903, 5
        %v2976 = vsel %vm2948, %v2974, %v2975
        %v2977 = vrot.slane %v2902, 5
        %v2978 = vrot.slane %v2977, 4
        %v2979 = vrot.slane %v1861, 5
        %v2980 = vsel %vm2948, %v2978, %v2979
        %v2981 = vrot.slane %v2979, 4
        %v2982 = vrot.slane %v1904, 5
        %v2983 = vsel %vm2948, %v2981, %v2982
        %v2984 = vrot.slane %v2903, 5
        %v2985 = vrot.slane %v2984, 4
        %v2986 = vrot.slane %v1863, 5
        %v2987 = vsel %vm2948, %v2985, %v2986
        %v2988 = vrot.slane %v2986, 4
        %v2989 = vrot.slane %v1905, 5
        %v2990 = vsel %vm2948, %v2988, %v2989
        %v2991 = vrot.slane %v2904, 5
        %v2992 = vrot.slane %v2991, 4
        %v2993 = vrot.slane %v1865, 5
        %v2994 = vsel %vm2948, %v2992, %v2993
        %v2995 = vrot.slane %v2993, 4
        %v2996 = vrot.slane %v1906, 5
        %v2997 = vsel %vm2948, %v2995, %v2996
        %v2998 = vrot.slane %v2905, 5
        %v2999 = vrot.slane %v2998, 4
        %v3000 = vrot.slane %v1867, 5
        %v3001 = vsel %vm2948, %v2999, %v3000
        %v3002 = vrot.slane %v3000, 4
        %v3003 = vrot.slane %v1907, 5
        %v3004 = vsel %vm2948, %v3002, %v3003
        %v3005 = vrot.slane %v2906, 5
        %v3006 = vrot.slane %v3005, 4
        %v3007 = vrot.slane %v1869, 5
        %v3008 = vsel %vm2948, %v3006, %v3007
        %v3009 = vrot.slane %v3007, 4
        %v3010 = vrot.slane %v1908, 5
        %v3011 = vsel %vm2948, %v3009, %v3010
        %v3012 = vrot.slane %v2907, 5
        %v3013 = vrot.slane %v3012, 4
        %v3014 = vrot.slane %v1871, 5
        %v3015 = vsel %vm2948, %v3013, %v3014
        %v3016 = vrot.slane %v3014, 4
        %v3017 = vrot.slane %v1909, 5
        %v3018 = vsel %vm2948, %v3016, %v3017
        %v3019 = vrot.slane %v2908, 5
        %v3020 = vrot.slane %v3019, 4
        %v3021 = vrot.slane %v1873, 5
        %v3022 = vsel %vm2948, %v3020, %v3021
        %v3023 = vrot.slane %v3021, 4
        %v3024 = vrot.slane %v1910, 5
        %v3025 = vsel %vm2948, %v3023, %v3024
        %v3026 = vrot.slane %v2909, 5
        %v3027 = vrot.slane %v3026, 4
        %v3028 = vrot.slane %v1875, 5
        %v3029 = vsel %vm2948, %v3027, %v3028
        %v3030 = vrot.slane %v3028, 4
        %v3031 = vrot.slane %v1911, 5
        %v3032 = vsel %vm2948, %v3030, %v3031
        %v3033 = vrot.slane %v2910, 5
        %v3034 = vrot.slane %v3033, 4
        %v3035 = vrot.slane %v1877, 5
        %v3036 = vsel %vm2948, %v3034, %v3035
        %v3037 = vrot.slane %v3035, 4
        %v3038 = vrot.slane %v1912, 5
        %v3039 = vsel %vm2948, %v3037, %v3038
        %v3040 = vrot.slane %v2911, 5
        %v3041 = vrot.slane %v3040, 4
        %v3042 = vrot.slane %v1879, 5
        %v3043 = vsel %vm2948, %v3041, %v3042
        %v3044 = vrot.slane %v3042, 4
        %v3045 = vrot.slane %v1913, 5
        %v3046 = vsel %vm2948, %v3044, %v3045
        %v3047 = vrot.slane %v2912, 5
        %v3048 = vrot.slane %v3047, 4
        %v3049 = vrot.slane %v1881, 5
        %v3050 = vsel %vm2948, %v3048, %v3049
        %v3051 = vrot.slane %v3049, 4
        %v3052 = vrot.slane %v1914, 5
        %v3053 = vsel %vm2948, %v3051, %v3052
        %v3054 = vrot.slane %v2913, 5
        %v3055 = vrot.slane %v3054, 4
        %v3056 = vrot.slane %v1883, 5
        %v3057 = vsel %vm2948, %v3055, %v3056
        %v3058 = vrot.slane %v3056, 4
        %v3059 = vrot.slane %v1915, 5
        %v3060 = vsel %vm2948, %v3058, %v3059
        %s3061 = scalar_lea.vmem [#allocation8], 128
        %v3062 = vld [vmem:[%s3061] sm:$0xf]
        %v3063 = vld [vmem:[%s3061 + $0x4] sm:$0xf]
        %v3064 = vld [vmem:[%s3061 + $0x8] sm:$0xf]
        %v3065 = vld [vmem:[%s3061 + $0xc] sm:$0xf]
        %v3066 = vld [vmem:[%s3061 + $0x10] sm:$0xf]
        %v3067 = vld [vmem:[%s3061 + $0x14] sm:$0xf]
        %v3068 = vld [vmem:[%s3061 + $0x18] sm:$0xf]
        %v3069 = vld [vmem:[%s3061 + $0x1c] sm:$0xf]
        %v3070 = vld [vmem:[%s3061 + $0x20] sm:$0xf]
        %v3071 = vld [vmem:[%s3061 + $0x24] sm:$0xf]
        %v3072 = vld [vmem:[%s3061 + $0x28] sm:$0xf]
        %v3073 = vld [vmem:[%s3061 + $0x2c] sm:$0xf]
        %v3074 = vld [vmem:[%s3061 + $0x30] sm:$0xf]
        %v3075 = vld [vmem:[%s3061 + $0x34] sm:$0xf]
        %v3076 = vld [vmem:[%s3061 + $0x38] sm:$0xf]
        %v3077 = vld [vmem:[%s3061 + $0x3c] sm:$0xf]
        %v3078 = vunpack.c.l.b16 %v2952
        %v3079 = vunpack.c.l.b16 %v2955
        %v3080 = vunpack.c.l.b16 %v2959
        %v3081 = vunpack.c.l.b16 %v2962
        %v3082 = vunpack.c.l.b16 %v2966
        %v3083 = vunpack.c.l.b16 %v2969
        %v3084 = vunpack.c.l.b16 %v2973
        %v3085 = vunpack.c.l.b16 %v2976
        %v3086 = vunpack.c.l.b16 %v2980
        %v3087 = vunpack.c.l.b16 %v2983
        %v3088 = vunpack.c.l.b16 %v2987
        %v3089 = vunpack.c.l.b16 %v2990
        %v3090 = vunpack.c.l.b16 %v2994
        %v3091 = vunpack.c.l.b16 %v2997
        %v3092 = vunpack.c.l.b16 %v3001
        %v3093 = vunpack.c.l.b16 %v3004
        %v3094 = vunpack.c.l.b16 %v3008
        %v3095 = vunpack.c.l.b16 %v3011
        %v3096 = vunpack.c.l.b16 %v3015
        %v3097 = vunpack.c.l.b16 %v3018
        %v3098 = vunpack.c.l.b16 %v3022
        %v3099 = vunpack.c.l.b16 %v3025
        %v3100 = vunpack.c.l.b16 %v3029
        %v3101 = vunpack.c.l.b16 %v3032
        %v3102 = vunpack.c.l.b16 %v3036
        %v3103 = vunpack.c.l.b16 %v3039
        %v3104 = vunpack.c.l.b16 %v3043
        %v3105 = vunpack.c.l.b16 %v3046
        %v3106 = vunpack.c.l.b16 %v3050
        %v3107 = vunpack.c.l.b16 %v3053
        %v3108 = vunpack.c.l.b16 %v3057
        %v3109 = vunpack.c.l.b16 %v3060
        %v3110 = vpack.c.b16 %v3079, %v3078
        %v3111 = vpack.c.b16 %v3081, %v3080
        %v3112 = vpack.c.b16 %v3083, %v3082
        %v3113 = vpack.c.b16 %v3085, %v3084
        %v3114 = vpack.c.b16 %v3087, %v3086
        %v3115 = vpack.c.b16 %v3089, %v3088
        %v3116 = vpack.c.b16 %v3091, %v3090
        %v3117 = vpack.c.b16 %v3093, %v3092
        %v3118 = vpack.c.b16 %v3095, %v3094
        %v3119 = vpack.c.b16 %v3097, %v3096
        %v3120 = vpack.c.b16 %v3099, %v3098
        %v3121 = vpack.c.b16 %v3101, %v3100
        %v3122 = vpack.c.b16 %v3103, %v3102
        %v3123 = vpack.c.b16 %v3105, %v3104
        %v3124 = vpack.c.b16 %v3107, %v3106
        %v3125 = vpack.c.b16 %v3109, %v3108
        %v3158 = vunpack.c.l.b16 %v3062
        %v3159 = vunpack.c.l.b16 %v3063
        %v3160 = vunpack.c.l.b16 %v3064
        %v3161 = vunpack.c.l.b16 %v3065
        %v3162 = vunpack.c.l.b16 %v3066
        %v3163 = vunpack.c.l.b16 %v3067
        %v3164 = vunpack.c.l.b16 %v3068
        %v3165 = vunpack.c.l.b16 %v3069
        %v3166 = vunpack.c.l.b16 %v3070
        %v3167 = vunpack.c.l.b16 %v3071
        %v3168 = vunpack.c.l.b16 %v3072
        %v3169 = vunpack.c.l.b16 %v3073
        %v3170 = vunpack.c.l.b16 %v3074
        %v3171 = vunpack.c.l.b16 %v3075
        %v3172 = vunpack.c.l.b16 %v3076
        %v3173 = vunpack.c.l.b16 %v3077
        %v3174 = vpack.c.b16 %v3159, %v3158
        %v3175 = vpack.c.b16 %v3161, %v3160
        %v3176 = vpack.c.b16 %v3163, %v3162
        %v3177 = vpack.c.b16 %v3165, %v3164
        %v3178 = vpack.c.b16 %v3167, %v3166
        %v3179 = vpack.c.b16 %v3169, %v3168
        %v3180 = vpack.c.b16 %v3171, %v3170
        %v3181 = vpack.c.b16 %v3173, %v3172
        %3190 = vmatprep.subr.bf16.mxu0 0
        %3191 = vmatpush1.bf16.msra.mxu0 %v3174
        %3192 = vmatprep.subr.bf16.mxu0 0
        %3193 = vmatpush1.bf16.msra.mxu0 %v3175
        %3194 = vmatprep.subr.bf16.mxu0 0
        %3195 = vmatpush1.bf16.msra.mxu0 %v3176
        %3196 = vmatprep.subr.bf16.mxu0 0
        %3197 = vmatpush1.bf16.msra.mxu0 %v3177
        %3198 = vmatprep.subr.bf16.mxu0 0
        %3199 = vmatpush1.bf16.msra.mxu0 %v3178
        %3200 = vmatprep.subr.bf16.mxu0 0
        %3201 = vmatpush1.bf16.msra.mxu0 %v3179
        %3202 = vmatprep.subr.bf16.mxu0 0
        %3203 = vmatpush1.bf16.msra.mxu0 %v3180
        %3204 = vmatprep.subr.bf16.mxu0 0
        %3205 = vmatpush1.bf16.msra.mxu0 %v3181
        %3206 = vmatprep.subr.bf16.mxu0 0
        %3207 = vmatpush1.bf16.msra.mxu0 0
        %3208 = vmatprep.subr.bf16.mxu0 0
        %3209 = vmatpush1.bf16.msra.mxu0 0
        %3210 = vmatprep.subr.bf16.mxu0 0
        %3211 = vmatpush1.bf16.msra.mxu0 0
        %3212 = vmatprep.subr.bf16.mxu0 0
        %3213 = vmatpush1.bf16.msra.mxu0 0
        %3214 = vmatprep.subr.bf16.mxu0 0
        %3215 = vmatpush1.bf16.msra.mxu0 0
        %3216 = vmatprep.subr.bf16.mxu0 0
        %3217 = vmatpush1.bf16.msra.mxu0 0
        %3218 = vmatprep.subr.bf16.mxu0 0
        %3219 = vmatpush1.bf16.msra.mxu0 0
        %3220 = vmatprep.subr.bf16.mxu0 0
        %3221 = vmatpush1.bf16.msra.mxu0 0
        %3222 = vmatprep.mubr.bf16.mxu0 0
        %3223 = vmatmul.mubr.bf16.gmra.mrb[0].mxu0 %v3110
        %v3224 = vpop.f32.mrb[0].mxu0
        %v3225 = vadd.f32 0.0, %v3224
        %v3226 = vpop.f32.mrb[0].mxu0
        %v3227 = vpop.f32.mrb[0].mxu0
        %v3228 = vadd.f32 0.0, %v3227
        %v3229 = vpop.f32.mrb[0].mxu0
        %3230 = vmatprep.mubr.bf16.mxu0 0
        %3231 = vmatmul.mubr.bf16.gmra.mrb[0].mxu0 %v3111
        %v3232 = vpop.f32.mrb[0].mxu0
        %v3233 = vadd.f32 0.0, %v3232
        %v3234 = vpop.f32.mrb[0].mxu0
        %v3235 = vpop.f32.mrb[0].mxu0
        %v3236 = vadd.f32 0.0, %v3235
        %v3237 = vpop.f32.mrb[0].mxu0
        %3238 = vmatprep.mubr.bf16.mxu0 0
        %3239 = vmatmul.mubr.bf16.gmra.mrb[0].mxu0 %v3112
        %v3240 = vpop.f32.mrb[0].mxu0
        %v3241 = vadd.f32 0.0, %v3240
        %v3242 = vpop.f32.mrb[0].mxu0
        %v3243 = vpop.f32.mrb[0].mxu0
        %v3244 = vadd.f32 0.0, %v3243
        %v3245 = vpop.f32.mrb[0].mxu0
        %3246 = vmatprep.mubr.bf16.mxu0 0
        %3247 = vmatmul.mubr.bf16.gmra.mrb[0].mxu0 %v3113
        %v3248 = vpop.f32.mrb[0].mxu0
        %v3249 = vadd.f32 0.0, %v3248
        %v3250 = vpop.f32.mrb[0].mxu0
        %v3251 = vpop.f32.mrb[0].mxu0
        %v3252 = vadd.f32 0.0, %v3251
        %v3253 = vpop.f32.mrb[0].mxu0
        %3254 = vmatprep.mubr.bf16.mxu0 0
        %3255 = vmatmul.mubr.bf16.gmra.mrb[0].mxu0 %v3114
        %v3256 = vpop.f32.mrb[0].mxu0
        %v3257 = vadd.f32 0.0, %v3256
        %v3258 = vpop.f32.mrb[0].mxu0
        %v3259 = vpop.f32.mrb[0].mxu0
        %v3260 = vadd.f32 0.0, %v3259
        %v3261 = vpop.f32.mrb[0].mxu0
        %3262 = vmatprep.mubr.bf16.mxu0 0
        %3263 = vmatmul.mubr.bf16.gmra.mrb[0].mxu0 %v3115
        %v3264 = vpop.f32.mrb[0].mxu0
        %v3265 = vadd.f32 0.0, %v3264
        %v3266 = vpop.f32.mrb[0].mxu0
        %v3267 = vpop.f32.mrb[0].mxu0
        %v3268 = vadd.f32 0.0, %v3267
        %v3269 = vpop.f32.mrb[0].mxu0
        %3270 = vmatprep.mubr.bf16.mxu0 0
        %3271 = vmatmul.mubr.bf16.gmra.mrb[0].mxu0 %v3116
        %v3272 = vpop.f32.mrb[0].mxu0
        %v3273 = vadd.f32 0.0, %v3272
        %v3274 = vpop.f32.mrb[0].mxu0
        %v3275 = vpop.f32.mrb[0].mxu0
        %v3276 = vadd.f32 0.0, %v3275
        %v3277 = vpop.f32.mrb[0].mxu0
        %3278 = vmatprep.mubr.bf16.mxu0 0
        %3279 = vmatmul.mubr.bf16.gmra.mrb[0].mxu0 %v3117
        %v3280 = vpop.f32.mrb[0].mxu0
        %v3281 = vadd.f32 0.0, %v3280
        %v3282 = vpop.f32.mrb[0].mxu0
        %v3283 = vpop.f32.mrb[0].mxu0
        %v3284 = vadd.f32 0.0, %v3283
        %v3285 = vpop.f32.mrb[0].mxu0
        %3286 = vmatprep.mubr.bf16.mxu0 0
        %3287 = vmatmul.mubr.bf16.gmra.mrb[0].mxu0 %v3118
        %v3288 = vpop.f32.mrb[0].mxu0
        %v3289 = vadd.f32 0.0, %v3288
        %v3290 = vpop.f32.mrb[0].mxu0
        %v3291 = vpop.f32.mrb[0].mxu0
        %v3292 = vadd.f32 0.0, %v3291
        %v3293 = vpop.f32.mrb[0].mxu0
        %3294 = vmatprep.mubr.bf16.mxu0 0
        %3295 = vmatmul.mubr.bf16.gmra.mrb[0].mxu0 %v3119
        %v3296 = vpop.f32.mrb[0].mxu0
        %v3297 = vadd.f32 0.0, %v3296
        %v3298 = vpop.f32.mrb[0].mxu0
        %v3299 = vpop.f32.mrb[0].mxu0
        %v3300 = vadd.f32 0.0, %v3299
        %v3301 = vpop.f32.mrb[0].mxu0
        %3302 = vmatprep.mubr.bf16.mxu0 0
        %3303 = vmatmul.mubr.bf16.gmra.mrb[0].mxu0 %v3120
        %v3304 = vpop.f32.mrb[0].mxu0
        %v3305 = vadd.f32 0.0, %v3304
        %v3306 = vpop.f32.mrb[0].mxu0
        %v3307 = vpop.f32.mrb[0].mxu0
        %v3308 = vadd.f32 0.0, %v3307
        %v3309 = vpop.f32.mrb[0].mxu0
        %3310 = vmatprep.mubr.bf16.mxu0 0
        %3311 = vmatmul.mubr.bf16.gmra.mrb[0].mxu0 %v3121
        %v3312 = vpop.f32.mrb[0].mxu0
        %v3313 = vadd.f32 0.0, %v3312
        %v3314 = vpop.f32.mrb[0].mxu0
        %v3315 = vpop.f32.mrb[0].mxu0
        %v3316 = vadd.f32 0.0, %v3315
        %v3317 = vpop.f32.mrb[0].mxu0
        %3318 = vmatprep.mubr.bf16.mxu0 0
        %3319 = vmatmul.mubr.bf16.gmra.mrb[0].mxu0 %v3122
        %v3320 = vpop.f32.mrb[0].mxu0
        %v3321 = vadd.f32 0.0, %v3320
        %v3322 = vpop.f32.mrb[0].mxu0
        %v3323 = vpop.f32.mrb[0].mxu0
        %v3324 = vadd.f32 0.0, %v3323
        %v3325 = vpop.f32.mrb[0].mxu0
        %3326 = vmatprep.mubr.bf16.mxu0 0
        %3327 = vmatmul.mubr.bf16.gmra.mrb[0].mxu0 %v3123
        %v3328 = vpop.f32.mrb[0].mxu0
        %v3329 = vadd.f32 0.0, %v3328
        %v3330 = vpop.f32.mrb[0].mxu0
        %v3331 = vpop.f32.mrb[0].mxu0
        %v3332 = vadd.f32 0.0, %v3331
        %v3333 = vpop.f32.mrb[0].mxu0
        %3334 = vmatprep.mubr.bf16.mxu0 0
        %3335 = vmatmul.mubr.bf16.gmra.mrb[0].mxu0 %v3124
        %v3336 = vpop.f32.mrb[0].mxu0
        %v3337 = vadd.f32 0.0, %v3336
        %v3338 = vpop.f32.mrb[0].mxu0
        %v3339 = vpop.f32.mrb[0].mxu0
        %v3340 = vadd.f32 0.0, %v3339
        %v3341 = vpop.f32.mrb[0].mxu0
        %3342 = vmatprep.mubr.bf16.mxu0 0
        %3343 = vmatmul.mubr.bf16.gmra.mrb[0].mxu0 %v3125
        %v3344 = vpop.f32.mrb[0].mxu0
        %v3345 = vadd.f32 0.0, %v3344
        %v3346 = vpop.f32.mrb[0].mxu0
        %v3347 = vpop.f32.mrb[0].mxu0
        %v3348 = vadd.f32 0.0, %v3347
        %v3349 = vpop.f32.mrb[0].mxu0
        %3350 = vdwg.mxu0
        %v3351 = vadd.f32 %v2772, %v3225
        %v3352 = vadd.f32 %v2775, %v3228
        %v3353 = vadd.f32 %v2780, %v3233
        %v3354 = vadd.f32 %v2783, %v3236
        %v3355 = vadd.f32 %v2788, %v3241
        %v3356 = vadd.f32 %v2791, %v3244
        %v3357 = vadd.f32 %v2796, %v3249
        %v3358 = vadd.f32 %v2799, %v3252
        %v3359 = vadd.f32 %v2804, %v3257
        %v3360 = vadd.f32 %v2807, %v3260
        %v3361 = vadd.f32 %v2812, %v3265
        %v3362 = vadd.f32 %v2815, %v3268
        %v3363 = vadd.f32 %v2820, %v3273
        %v3364 = vadd.f32 %v2823, %v3276
        %v3365 = vadd.f32 %v2828, %v3281
        %v3366 = vadd.f32 %v2831, %v3284
        %v3367 = vadd.f32 %v2836, %v3289
        %v3368 = vadd.f32 %v2839, %v3292
        %v3369 = vadd.f32 %v2844, %v3297
        %v3370 = vadd.f32 %v2847, %v3300
        %v3371 = vadd.f32 %v2852, %v3305
        %v3372 = vadd.f32 %v2855, %v3308
        %v3373 = vadd.f32 %v2860, %v3313
        %v3374 = vadd.f32 %v2863, %v3316
        %v3375 = vadd.f32 %v2868, %v3321
        %v3376 = vadd.f32 %v2871, %v3324
        %v3377 = vadd.f32 %v2876, %v3329
        %v3378 = vadd.f32 %v2879, %v3332
        %v3379 = vadd.f32 %v2884, %v3337
        %v3380 = vadd.f32 %v2887, %v3340
        %v3381 = vadd.f32 %v2892, %v3345
        %v3382 = vadd.f32 %v2895, %v3348
        %v3383 = vld [vmem:[%s1391] sm:$0xf]
        %v3384 = vld [vmem:[%s1391 + $0x4] sm:$0xf]
        %v3385 = vld [vmem:[%s1391 + $0xc] sm:$0xf]
        %v3386 = vld [vmem:[%s1391 + $0x10] sm:$0xf]
        %v3387 = vld [vmem:[%s1391 + $0x18] sm:$0xf]
        %v3388 = vld [vmem:[%s1391 + $0x1c] sm:$0xf]
        %v3389 = vld [vmem:[%s1391 + $0x24] sm:$0xf]
        %v3390 = vld [vmem:[%s1391 + $0x28] sm:$0xf]
        %v3391 = vld [vmem:[%s1391 + $0x30] sm:$0xf]
        %v3392 = vld [vmem:[%s1391 + $0x34] sm:$0xf]
        %v3393 = vld [vmem:[%s1391 + $0x3c] sm:$0xf]
        %v3394 = vld [vmem:[%s1391 + $0x40] sm:$0xf]
        %v3395 = vld [vmem:[%s1391 + $0x48] sm:$0xf]
        %v3396 = vld [vmem:[%s1391 + $0x4c] sm:$0xf]
        %v3397 = vld [vmem:[%s1391 + $0x54] sm:$0xf]
        %v3398 = vld [vmem:[%s1391 + $0x58] sm:$0xf]
        %v3399 = vld [vmem:[%s1391 + $0x60] sm:$0xf]
        %v3400 = vld [vmem:[%s1391 + $0x64] sm:$0xf]
        %v3401 = vld [vmem:[%s1391 + $0x6c] sm:$0xf]
        %v3402 = vld [vmem:[%s1391 + $0x70] sm:$0xf]
        %v3403 = vld [vmem:[%s1391 + $0x78] sm:$0xf]
        %v3404 = vld [vmem:[%s1391 + $0x7c] sm:$0xf]
        %v3405 = vld [vmem:[%s1391 + $0x84] sm:$0xf]
        %v3406 = vld [vmem:[%s1391 + $0x88] sm:$0xf]
        %v3407 = vld [vmem:[%s1391 + $0x90] sm:$0xf]
        %v3408 = vld [vmem:[%s1391 + $0x94] sm:$0xf]
        %v3409 = vld [vmem:[%s1391 + $0x9c] sm:$0xf]
        %v3410 = vld [vmem:[%s1391 + $0xa0] sm:$0xf]
        %v3411 = vld [vmem:[%s1391 + $0xa8] sm:$0xf]
        %v3412 = vld [vmem:[%s1391 + $0xac] sm:$0xf]
        %v3413 = vld [vmem:[%s1391 + $0xb4] sm:$0xf]
        %v3414 = vld [vmem:[%s1391 + $0xb8] sm:$0xf]
        %s3415 = scalar_lea.vmem [#allocation8], 192
        %v3416 = vld [vmem:[%s3415] sm:$0xf]
        %v3417 = vld [vmem:[%s3415 + $0x4] sm:$0xf]
        %v3418 = vld [vmem:[%s3415 + $0x8] sm:$0xf]
        %v3419 = vld [vmem:[%s3415 + $0xc] sm:$0xf]
        %v3420 = vld [vmem:[%s3415 + $0x10] sm:$0xf]
        %v3421 = vld [vmem:[%s3415 + $0x14] sm:$0xf]
        %v3422 = vld [vmem:[%s3415 + $0x18] sm:$0xf]
        %v3423 = vld [vmem:[%s3415 + $0x1c] sm:$0xf]
        %v3424 = vld [vmem:[%s3415 + $0x20] sm:$0xf]
        %v3425 = vld [vmem:[%s3415 + $0x24] sm:$0xf]
        %v3426 = vld [vmem:[%s3415 + $0x28] sm:$0xf]
        %v3427 = vld [vmem:[%s3415 + $0x2c] sm:$0xf]
        %v3428 = vld [vmem:[%s3415 + $0x30] sm:$0xf]
        %v3429 = vld [vmem:[%s3415 + $0x34] sm:$0xf]
        %v3430 = vld [vmem:[%s3415 + $0x38] sm:$0xf]
        %v3431 = vld [vmem:[%s3415 + $0x3c] sm:$0xf]
        %v3464 = vunpack.c.l.b16 %v3383
        %v3465 = vunpack.c.l.b16 %v3384
        %v3466 = vunpack.c.l.b16 %v3385
        %v3467 = vunpack.c.l.b16 %v3386
        %v3468 = vunpack.c.l.b16 %v3387
        %v3469 = vunpack.c.l.b16 %v3388
        %v3470 = vunpack.c.l.b16 %v3389
        %v3471 = vunpack.c.l.b16 %v3390
        %v3472 = vunpack.c.l.b16 %v3391
        %v3473 = vunpack.c.l.b16 %v3392
        %v3474 = vunpack.c.l.b16 %v3393
        %v3475 = vunpack.c.l.b16 %v3394
        %v3476 = vunpack.c.l.b16 %v3395
        %v3477 = vunpack.c.l.b16 %v3396
        %v3478 = vunpack.c.l.b16 %v3397
        %v3479 = vunpack.c.l.b16 %v3398
        %v3480 = vunpack.c.l.b16 %v3399
        %v3481 = vunpack.c.l.b16 %v3400
        %v3482 = vunpack.c.l.b16 %v3401
        %v3483 = vunpack.c.l.b16 %v3402
        %v3484 = vunpack.c.l.b16 %v3403
        %v3485 = vunpack.c.l.b16 %v3404
        %v3486 = vunpack.c.l.b16 %v3405
        %v3487 = vunpack.c.l.b16 %v3406
        %v3488 = vunpack.c.l.b16 %v3407
        %v3489 = vunpack.c.l.b16 %v3408
        %v3490 = vunpack.c.l.b16 %v3409
        %v3491 = vunpack.c.l.b16 %v3410
        %v3492 = vunpack.c.l.b16 %v3411
        %v3493 = vunpack.c.l.b16 %v3412
        %v3494 = vunpack.c.l.b16 %v3413
        %v3495 = vunpack.c.l.b16 %v3414
        %v3496 = vpack.c.b16 %v3465, %v3464
        %v3497 = vpack.c.b16 %v3467, %v3466
        %v3498 = vpack.c.b16 %v3469, %v3468
        %v3499 = vpack.c.b16 %v3471, %v3470
        %v3500 = vpack.c.b16 %v3473, %v3472
        %v3501 = vpack.c.b16 %v3475, %v3474
        %v3502 = vpack.c.b16 %v3477, %v3476
        %v3503 = vpack.c.b16 %v3479, %v3478
        %v3504 = vpack.c.b16 %v3481, %v3480
        %v3505 = vpack.c.b16 %v3483, %v3482
        %v3506 = vpack.c.b16 %v3485, %v3484
        %v3507 = vpack.c.b16 %v3487, %v3486
        %v3508 = vpack.c.b16 %v3489, %v3488
        %v3509 = vpack.c.b16 %v3491, %v3490
        %v3510 = vpack.c.b16 %v3493, %v3492
        %v3511 = vpack.c.b16 %v3495, %v3494
        %v3544 = vunpack.c.l.b16 %v3416
        %v3545 = vunpack.c.l.b16 %v3417
        %v3546 = vunpack.c.l.b16 %v3418
        %v3547 = vunpack.c.l.b16 %v3419
        %v3548 = vunpack.c.l.b16 %v3420
        %v3549 = vunpack.c.l.b16 %v3421
        %v3550 = vunpack.c.l.b16 %v3422
        %v3551 = vunpack.c.l.b16 %v3423
        %v3552 = vunpack.c.l.b16 %v3424
        %v3553 = vunpack.c.l.b16 %v3425
        %v3554 = vunpack.c.l.b16 %v3426
        %v3555 = vunpack.c.l.b16 %v3427
        %v3556 = vunpack.c.l.b16 %v3428
        %v3557 = vunpack.c.l.b16 %v3429
        %v3558 = vunpack.c.l.b16 %v3430
        %v3559 = vunpack.c.l.b16 %v3431
        %v3560 = vpack.c.b16 %v3545, %v3544
        %v3561 = vpack.c.b16 %v3547, %v3546
        %v3562 = vpack.c.b16 %v3549, %v3548
        %v3563 = vpack.c.b16 %v3551, %v3550
        %v3564 = vpack.c.b16 %v3553, %v3552
        %v3565 = vpack.c.b16 %v3555, %v3554
        %v3566 = vpack.c.b16 %v3557, %v3556
        %v3567 = vpack.c.b16 %v3559, %v3558
        %3576 = vmatprep.subr.bf16.mxu0 0
        %3577 = vmatpush1.bf16.msra.mxu0 %v3560
        %3578 = vmatprep.subr.bf16.mxu0 0
        %3579 = vmatpush1.bf16.msra.mxu0 %v3561
        %3580 = vmatprep.subr.bf16.mxu0 0
        %3581 = vmatpush1.bf16.msra.mxu0 %v3562
        %3582 = vmatprep.subr.bf16.mxu0 0
        %3583 = vmatpush1.bf16.msra.mxu0 %v3563
        %3584 = vmatprep.subr.bf16.mxu0 0
        %3585 = vmatpush1.bf16.msra.mxu0 %v3564
        %3586 = vmatprep.subr.bf16.mxu0 0
        %3587 = vmatpush1.bf16.msra.mxu0 %v3565
        %3588 = vmatprep.subr.bf16.mxu0 0
        %3589 = vmatpush1.bf16.msra.mxu0 %v3566
        %3590 = vmatprep.subr.bf16.mxu0 0
        %3591 = vmatpush1.bf16.msra.mxu0 %v3567
        %3592 = vmatprep.subr.bf16.mxu0 0
        %3593 = vmatpush1.bf16.msra.mxu0 0
        %3594 = vmatprep.subr.bf16.mxu0 0
        %3595 = vmatpush1.bf16.msra.mxu0 0
        %3596 = vmatprep.subr.bf16.mxu0 0
        %3597 = vmatpush1.bf16.msra.mxu0 0
        %3598 = vmatprep.subr.bf16.mxu0 0
        %3599 = vmatpush1.bf16.msra.mxu0 0
        %3600 = vmatprep.subr.bf16.mxu0 0
        %3601 = vmatpush1.bf16.msra.mxu0 0
        %3602 = vmatprep.subr.bf16.mxu0 0
        %3603 = vmatpush1.bf16.msra.mxu0 0
        %3604 = vmatprep.subr.bf16.mxu0 0
        %3605 = vmatpush1.bf16.msra.mxu0 0
        %3606 = vmatprep.subr.bf16.mxu0 0
        %3607 = vmatpush1.bf16.msra.mxu0 0
        %3608 = vmatprep.mubr.bf16.mxu0 0
        %3609 = vmatmul.mubr.bf16.gmra.mrb[0].mxu0 %v3496
        %v3610 = vpop.f32.mrb[0].mxu0
        %v3611 = vadd.f32 0.0, %v3610
        %v3612 = vpop.f32.mrb[0].mxu0
        %v3613 = vpop.f32.mrb[0].mxu0
        %v3614 = vadd.f32 0.0, %v3613
        %v3615 = vpop.f32.mrb[0].mxu0
        %3616 = vmatprep.mubr.bf16.mxu0 0
        %3617 = vmatmul.mubr.bf16.gmra.mrb[0].mxu0 %v3497
        %v3618 = vpop.f32.mrb[0].mxu0
        %v3619 = vadd.f32 0.0, %v3618
        %v3620 = vpop.f32.mrb[0].mxu0
        %v3621 = vpop.f32.mrb[0].mxu0
        %v3622 = vadd.f32 0.0, %v3621
        %v3623 = vpop.f32.mrb[0].mxu0
        %3624 = vmatprep.mubr.bf16.mxu0 0
        %3625 = vmatmul.mubr.bf16.gmra.mrb[0].mxu0 %v3498
        %v3626 = vpop.f32.mrb[0].mxu0
        %v3627 = vadd.f32 0.0, %v3626
        %v3628 = vpop.f32.mrb[0].mxu0
        %v3629 = vpop.f32.mrb[0].mxu0
        %v3630 = vadd.f32 0.0, %v3629
        %v3631 = vpop.f32.mrb[0].mxu0
        %3632 = vmatprep.mubr.bf16.mxu0 0
        %3633 = vmatmul.mubr.bf16.gmra.mrb[0].mxu0 %v3499
        %v3634 = vpop.f32.mrb[0].mxu0
        %v3635 = vadd.f32 0.0, %v3634
        %v3636 = vpop.f32.mrb[0].mxu0
        %v3637 = vpop.f32.mrb[0].mxu0
        %v3638 = vadd.f32 0.0, %v3637
        %v3639 = vpop.f32.mrb[0].mxu0
        %3640 = vmatprep.mubr.bf16.mxu0 0
        %3641 = vmatmul.mubr.bf16.gmra.mrb[0].mxu0 %v3500
        %v3642 = vpop.f32.mrb[0].mxu0
        %v3643 = vadd.f32 0.0, %v3642
        %v3644 = vpop.f32.mrb[0].mxu0
        %v3645 = vpop.f32.mrb[0].mxu0
        %v3646 = vadd.f32 0.0, %v3645
        %v3647 = vpop.f32.mrb[0].mxu0
        %3648 = vmatprep.mubr.bf16.mxu0 0
        %3649 = vmatmul.mubr.bf16.gmra.mrb[0].mxu0 %v3501
        %v3650 = vpop.f32.mrb[0].mxu0
        %v3651 = vadd.f32 0.0, %v3650
        %v3652 = vpop.f32.mrb[0].mxu0
        %v3653 = vpop.f32.mrb[0].mxu0
        %v3654 = vadd.f32 0.0, %v3653
        %v3655 = vpop.f32.mrb[0].mxu0
        %3656 = vmatprep.mubr.bf16.mxu0 0
        %3657 = vmatmul.mubr.bf16.gmra.mrb[0].mxu0 %v3502
        %v3658 = vpop.f32.mrb[0].mxu0
        %v3659 = vadd.f32 0.0, %v3658
        %v3660 = vpop.f32.mrb[0].mxu0
        %v3661 = vpop.f32.mrb[0].mxu0
        %v3662 = vadd.f32 0.0, %v3661
        %v3663 = vpop.f32.mrb[0].mxu0
        %3664 = vmatprep.mubr.bf16.mxu0 0
        %3665 = vmatmul.mubr.bf16.gmra.mrb[0].mxu0 %v3503
        %v3666 = vpop.f32.mrb[0].mxu0
        %v3667 = vadd.f32 0.0, %v3666
        %v3668 = vpop.f32.mrb[0].mxu0
        %v3669 = vpop.f32.mrb[0].mxu0
        %v3670 = vadd.f32 0.0, %v3669
        %v3671 = vpop.f32.mrb[0].mxu0
        %3672 = vmatprep.mubr.bf16.mxu0 0
        %3673 = vmatmul.mubr.bf16.gmra.mrb[0].mxu0 %v3504
        %v3674 = vpop.f32.mrb[0].mxu0
        %v3675 = vadd.f32 0.0, %v3674
        %v3676 = vpop.f32.mrb[0].mxu0
        %v3677 = vpop.f32.mrb[0].mxu0
        %v3678 = vadd.f32 0.0, %v3677
        %v3679 = vpop.f32.mrb[0].mxu0
        %3680 = vmatprep.mubr.bf16.mxu0 0
        %3681 = vmatmul.mubr.bf16.gmra.mrb[0].mxu0 %v3505
        %v3682 = vpop.f32.mrb[0].mxu0
        %v3683 = vadd.f32 0.0, %v3682
        %v3684 = vpop.f32.mrb[0].mxu0
        %v3685 = vpop.f32.mrb[0].mxu0
        %v3686 = vadd.f32 0.0, %v3685
        %v3687 = vpop.f32.mrb[0].mxu0
        %3688 = vmatprep.mubr.bf16.mxu0 0
        %3689 = vmatmul.mubr.bf16.gmra.mrb[0].mxu0 %v3506
        %v3690 = vpop.f32.mrb[0].mxu0
        %v3691 = vadd.f32 0.0, %v3690
        %v3692 = vpop.f32.mrb[0].mxu0
        %v3693 = vpop.f32.mrb[0].mxu0
        %v3694 = vadd.f32 0.0, %v3693
        %v3695 = vpop.f32.mrb[0].mxu0
        %3696 = vmatprep.mubr.bf16.mxu0 0
        %3697 = vmatmul.mubr.bf16.gmra.mrb[0].mxu0 %v3507
        %v3698 = vpop.f32.mrb[0].mxu0
        %v3699 = vadd.f32 0.0, %v3698
        %v3700 = vpop.f32.mrb[0].mxu0
        %v3701 = vpop.f32.mrb[0].mxu0
        %v3702 = vadd.f32 0.0, %v3701
        %v3703 = vpop.f32.mrb[0].mxu0
        %3704 = vmatprep.mubr.bf16.mxu0 0
        %3705 = vmatmul.mubr.bf16.gmra.mrb[0].mxu0 %v3508
        %v3706 = vpop.f32.mrb[0].mxu0
        %v3707 = vadd.f32 0.0, %v3706
        %v3708 = vpop.f32.mrb[0].mxu0
        %v3709 = vpop.f32.mrb[0].mxu0
        %v3710 = vadd.f32 0.0, %v3709
        %v3711 = vpop.f32.mrb[0].mxu0
        %3712 = vmatprep.mubr.bf16.mxu0 0
        %3713 = vmatmul.mubr.bf16.gmra.mrb[0].mxu0 %v3509
        %v3714 = vpop.f32.mrb[0].mxu0
        %v3715 = vadd.f32 0.0, %v3714
        %v3716 = vpop.f32.mrb[0].mxu0
        %v3717 = vpop.f32.mrb[0].mxu0
        %v3718 = vadd.f32 0.0, %v3717
        %v3719 = vpop.f32.mrb[0].mxu0
        %3720 = vmatprep.mubr.bf16.mxu0 0
        %3721 = vmatmul.mubr.bf16.gmra.mrb[0].mxu0 %v3510
        %v3722 = vpop.f32.mrb[0].mxu0
        %v3723 = vadd.f32 0.0, %v3722
        %v3724 = vpop.f32.mrb[0].mxu0
        %v3725 = vpop.f32.mrb[0].mxu0
        %v3726 = vadd.f32 0.0, %v3725
        %v3727 = vpop.f32.mrb[0].mxu0
        %3728 = vmatprep.mubr.bf16.mxu0 0
        %3729 = vmatmul.mubr.bf16.gmra.mrb[0].mxu0 %v3511
        %v3730 = vpop.f32.mrb[0].mxu0
        %v3731 = vadd.f32 0.0, %v3730
        %v3732 = vpop.f32.mrb[0].mxu0
        %v3733 = vpop.f32.mrb[0].mxu0
        %v3734 = vadd.f32 0.0, %v3733
        %v3735 = vpop.f32.mrb[0].mxu0
        %3736 = vdwg.mxu0
        %v3737 = vadd.f32 %v3351, %v3611
        %v3738 = vadd.f32 %v3352, %v3614
        %v3739 = vadd.f32 %v3353, %v3619
        %v3740 = vadd.f32 %v3354, %v3622
        %v3741 = vadd.f32 %v3355, %v3627
        %v3742 = vadd.f32 %v3356, %v3630
        %v3743 = vadd.f32 %v3357, %v3635
        %v3744 = vadd.f32 %v3358, %v3638
        %v3745 = vadd.f32 %v3359, %v3643
        %v3746 = vadd.f32 %v3360, %v3646
        %v3747 = vadd.f32 %v3361, %v3651
        %v3748 = vadd.f32 %v3362, %v3654
        %v3749 = vadd.f32 %v3363, %v3659
        %v3750 = vadd.f32 %v3364, %v3662
        %v3751 = vadd.f32 %v3365, %v3667
        %v3752 = vadd.f32 %v3366, %v3670
        %v3753 = vadd.f32 %v3367, %v3675
        %v3754 = vadd.f32 %v3368, %v3678
        %v3755 = vadd.f32 %v3369, %v3683
        %v3756 = vadd.f32 %v3370, %v3686
        %v3757 = vadd.f32 %v3371, %v3691
        %v3758 = vadd.f32 %v3372, %v3694
        %v3759 = vadd.f32 %v3373, %v3699
        %v3760 = vadd.f32 %v3374, %v3702
        %v3761 = vadd.f32 %v3375, %v3707
        %v3762 = vadd.f32 %v3376, %v3710
        %v3763 = vadd.f32 %v3377, %v3715
        %v3764 = vadd.f32 %v3378, %v3718
        %v3765 = vadd.f32 %v3379, %v3723
        %v3766 = vadd.f32 %v3380, %v3726
        %v3767 = vadd.f32 %v3381, %v3731
        %v3768 = vadd.f32 %v3382, %v3734
        %v3769 = vld [vmem:[%s1391] sm:$0xf]
        %v3770 = vld [vmem:[%s1391 + $0x4] sm:$0xf]
        %v3771 = vld [vmem:[%s1391 + $0x8] sm:$0x1]
        %v3772 = vld [vmem:[%s1391 + $0xc] sm:$0xf]
        %v3773 = vld [vmem:[%s1391 + $0x10] sm:$0xf]
        %v3774 = vld [vmem:[%s1391 + $0x14] sm:$0x1]
        %v3775 = vld [vmem:[%s1391 + $0x18] sm:$0xf]
        %v3776 = vld [vmem:[%s1391 + $0x1c] sm:$0xf]
        %v3777 = vld [vmem:[%s1391 + $0x20] sm:$0x1]
        %v3778 = vld [vmem:[%s1391 + $0x24] sm:$0xf]
        %v3779 = vld [vmem:[%s1391 + $0x28] sm:$0xf]
        %v3780 = vld [vmem:[%s1391 + $0x2c] sm:$0x1]
        %v3781 = vld [vmem:[%s1391 + $0x30] sm:$0xf]
        %v3782 = vld [vmem:[%s1391 + $0x34] sm:$0xf]
        %v3783 = vld [vmem:[%s1391 + $0x38] sm:$0x1]
        %v3784 = vld [vmem:[%s1391 + $0x3c] sm:$0xf]
        %v3785 = vld [vmem:[%s1391 + $0x40] sm:$0xf]
        %v3786 = vld [vmem:[%s1391 + $0x44] sm:$0x1]
        %v3787 = vld [vmem:[%s1391 + $0x48] sm:$0xf]
        %v3788 = vld [vmem:[%s1391 + $0x4c] sm:$0xf]
        %v3789 = vld [vmem:[%s1391 + $0x50] sm:$0x1]
        %v3790 = vld [vmem:[%s1391 + $0x54] sm:$0xf]
        %v3791 = vld [vmem:[%s1391 + $0x58] sm:$0xf]
        %v3792 = vld [vmem:[%s1391 + $0x5c] sm:$0x1]
        %v3793 = vld [vmem:[%s1391 + $0x60] sm:$0xf]
        %v3794 = vld [vmem:[%s1391 + $0x64] sm:$0xf]
        %v3795 = vld [vmem:[%s1391 + $0x68] sm:$0x1]
        %v3796 = vld [vmem:[%s1391 + $0x6c] sm:$0xf]
        %v3797 = vld [vmem:[%s1391 + $0x70] sm:$0xf]
        %v3798 = vld [vmem:[%s1391 + $0x74] sm:$0x1]
        %v3799 = vld [vmem:[%s1391 + $0x78] sm:$0xf]
        %v3800 = vld [vmem:[%s1391 + $0x7c] sm:$0xf]
        %v3801 = vld [vmem:[%s1391 + $0x80] sm:$0x1]
        %v3802 = vld [vmem:[%s1391 + $0x84] sm:$0xf]
        %v3803 = vld [vmem:[%s1391 + $0x88] sm:$0xf]
        %v3804 = vld [vmem:[%s1391 + $0x8c] sm:$0x1]
        %v3805 = vld [vmem:[%s1391 + $0x90] sm:$0xf]
        %v3806 = vld [vmem:[%s1391 + $0x94] sm:$0xf]
        %v3807 = vld [vmem:[%s1391 + $0x98] sm:$0x1]
        %v3808 = vld [vmem:[%s1391 + $0x9c] sm:$0xf]
        %v3809 = vld [vmem:[%s1391 + $0xa0] sm:$0xf]
        %v3810 = vld [vmem:[%s1391 + $0xa4] sm:$0x1]
        %v3811 = vld [vmem:[%s1391 + $0xa8] sm:$0xf]
        %v3812 = vld [vmem:[%s1391 + $0xac] sm:$0xf]
        %v3813 = vld [vmem:[%s1391 + $0xb0] sm:$0x1]
        %v3814 = vld [vmem:[%s1391 + $0xb4] sm:$0xf]
        %v3815 = vld [vmem:[%s1391 + $0xb8] sm:$0xf]
        %v3816 = vld [vmem:[%s1391 + $0xbc] sm:$0x1]
        %v3818 = vshrl.u32 %v3769, 16
        %v3820 = vrot.slane %v3818, 4
        %v3821 = vshll.u32 %v3769, 16
        %v3823 = vrot.slane %v3821, 5
        %v3824 = vor.u32 %v3820, %v3823
        %v3825 = vrot.slane %v3824, 4
        %v3827 = vshll.u32 %v3770, 16
        %v3829 = vrot.slane %v3827, 5
        %v3830 = vsel %vm1918, %v3825, %v3829
        %v3831 = vshrl.u32 %v3770, 16
        %v3833 = vrot.slane %v3831, 4
        %v3834 = vor.u32 %v3833, %v3829
        %v3835 = vrot.slane %v3834, 4
        %v3837 = vshll.u32 %v3771, 16
        %v3839 = vrot.slane %v3837, 5
        %v3840 = vsel %vm1918, %v3835, %v3839
        %v3842 = vshrl.u32 %v3772, 16
        %v3844 = vrot.slane %v3842, 4
        %v3845 = vshll.u32 %v3772, 16
        %v3847 = vrot.slane %v3845, 5
        %v3848 = vor.u32 %v3844, %v3847
        %v3849 = vrot.slane %v3848, 4
        %v3851 = vshll.u32 %v3773, 16
        %v3853 = vrot.slane %v3851, 5
        %v3854 = vsel %vm1918, %v3849, %v3853
        %v3855 = vshrl.u32 %v3773, 16
        %v3857 = vrot.slane %v3855, 4
        %v3858 = vor.u32 %v3857, %v3853
        %v3859 = vrot.slane %v3858, 4
        %v3861 = vshll.u32 %v3774, 16
        %v3863 = vrot.slane %v3861, 5
        %v3864 = vsel %vm1918, %v3859, %v3863
        %v3866 = vshrl.u32 %v3775, 16
        %v3868 = vrot.slane %v3866, 4
        %v3869 = vshll.u32 %v3775, 16
        %v3871 = vrot.slane %v3869, 5
        %v3872 = vor.u32 %v3868, %v3871
        %v3873 = vrot.slane %v3872, 4
        %v3875 = vshll.u32 %v3776, 16
        %v3877 = vrot.slane %v3875, 5
        %v3878 = vsel %vm1918, %v3873, %v3877
        %v3879 = vshrl.u32 %v3776, 16
        %v3881 = vrot.slane %v3879, 4
        %v3882 = vor.u32 %v3881, %v3877
        %v3883 = vrot.slane %v3882, 4
        %v3885 = vshll.u32 %v3777, 16
        %v3887 = vrot.slane %v3885, 5
        %v3888 = vsel %vm1918, %v3883, %v3887
        %v3890 = vshrl.u32 %v3778, 16
        %v3892 = vrot.slane %v3890, 4
        %v3893 = vshll.u32 %v3778, 16
        %v3895 = vrot.slane %v3893, 5
        %v3896 = vor.u32 %v3892, %v3895
        %v3897 = vrot.slane %v3896, 4
        %v3899 = vshll.u32 %v3779, 16
        %v3901 = vrot.slane %v3899, 5
        %v3902 = vsel %vm1918, %v3897, %v3901
        %v3903 = vshrl.u32 %v3779, 16
        %v3905 = vrot.slane %v3903, 4
        %v3906 = vor.u32 %v3905, %v3901
        %v3907 = vrot.slane %v3906, 4
        %v3909 = vshll.u32 %v3780, 16
        %v3911 = vrot.slane %v3909, 5
        %v3912 = vsel %vm1918, %v3907, %v3911
        %v3914 = vshrl.u32 %v3781, 16
        %v3916 = vrot.slane %v3914, 4
        %v3917 = vshll.u32 %v3781, 16
        %v3919 = vrot.slane %v3917, 5
        %v3920 = vor.u32 %v3916, %v3919
        %v3921 = vrot.slane %v3920, 4
        %v3923 = vshll.u32 %v3782, 16
        %v3925 = vrot.slane %v3923, 5
        %v3926 = vsel %vm1918, %v3921, %v3925
        %v3927 = vshrl.u32 %v3782, 16
        %v3929 = vrot.slane %v3927, 4
        %v3930 = vor.u32 %v3929, %v3925
        %v3931 = vrot.slane %v3930, 4
        %v3933 = vshll.u32 %v3783, 16
        %v3935 = vrot.slane %v3933, 5
        %v3936 = vsel %vm1918, %v3931, %v3935
        %v3938 = vshrl.u32 %v3784, 16
        %v3940 = vrot.slane %v3938, 4
        %v3941 = vshll.u32 %v3784, 16
        %v3943 = vrot.slane %v3941, 5
        %v3944 = vor.u32 %v3940, %v3943
        %v3945 = vrot.slane %v3944, 4
        %v3947 = vshll.u32 %v3785, 16
        %v3949 = vrot.slane %v3947, 5
        %v3950 = vsel %vm1918, %v3945, %v3949
        %v3951 = vshrl.u32 %v3785, 16
        %v3953 = vrot.slane %v3951, 4
        %v3954 = vor.u32 %v3953, %v3949
        %v3955 = vrot.slane %v3954, 4
        %v3957 = vshll.u32 %v3786, 16
        %v3959 = vrot.slane %v3957, 5
        %v3960 = vsel %vm1918, %v3955, %v3959
        %v3962 = vshrl.u32 %v3787, 16
        %v3964 = vrot.slane %v3962, 4
        %v3965 = vshll.u32 %v3787, 16
        %v3967 = vrot.slane %v3965, 5
        %v3968 = vor.u32 %v3964, %v3967
        %v3969 = vrot.slane %v3968, 4
        %v3971 = vshll.u32 %v3788, 16
        %v3973 = vrot.slane %v3971, 5
        %v3974 = vsel %vm1918, %v3969, %v3973
        %v3975 = vshrl.u32 %v3788, 16
        %v3977 = vrot.slane %v3975, 4
        %v3978 = vor.u32 %v3977, %v3973
        %v3979 = vrot.slane %v3978, 4
        %v3981 = vshll.u32 %v3789, 16
        %v3983 = vrot.slane %v3981, 5
        %v3984 = vsel %vm1918, %v3979, %v3983
        %v3986 = vshrl.u32 %v3790, 16
        %v3988 = vrot.slane %v3986, 4
        %v3989 = vshll.u32 %v3790, 16
        %v3991 = vrot.slane %v3989, 5
        %v3992 = vor.u32 %v3988, %v3991
        %v3993 = vrot.slane %v3992, 4
        %v3995 = vshll.u32 %v3791, 16
        %v3997 = vrot.slane %v3995, 5
        %v3998 = vsel %vm1918, %v3993, %v3997
        %v3999 = vshrl.u32 %v3791, 16
        %v4001 = vrot.slane %v3999, 4
        %v4002 = vor.u32 %v4001, %v3997
        %v4003 = vrot.slane %v4002, 4
        %v4005 = vshll.u32 %v3792, 16
        %v4007 = vrot.slane %v4005, 5
        %v4008 = vsel %vm1918, %v4003, %v4007
        %v4010 = vshrl.u32 %v3793, 16
        %v4012 = vrot.slane %v4010, 4
        %v4013 = vshll.u32 %v3793, 16
        %v4015 = vrot.slane %v4013, 5
        %v4016 = vor.u32 %v4012, %v4015
        %v4017 = vrot.slane %v4016, 4
        %v4019 = vshll.u32 %v3794, 16
        %v4021 = vrot.slane %v4019, 5
        %v4022 = vsel %vm1918, %v4017, %v4021
        %v4023 = vshrl.u32 %v3794, 16
        %v4025 = vrot.slane %v4023, 4
        %v4026 = vor.u32 %v4025, %v4021
        %v4027 = vrot.slane %v4026, 4
        %v4029 = vshll.u32 %v3795, 16
        %v4031 = vrot.slane %v4029, 5
        %v4032 = vsel %vm1918, %v4027, %v4031
        %v4034 = vshrl.u32 %v3796, 16
        %v4036 = vrot.slane %v4034, 4
        %v4037 = vshll.u32 %v3796, 16
        %v4039 = vrot.slane %v4037, 5
        %v4040 = vor.u32 %v4036, %v4039
        %v4041 = vrot.slane %v4040, 4
        %v4043 = vshll.u32 %v3797, 16
        %v4045 = vrot.slane %v4043, 5
        %v4046 = vsel %vm1918, %v4041, %v4045
        %v4047 = vshrl.u32 %v3797, 16
        %v4049 = vrot.slane %v4047, 4
        %v4050 = vor.u32 %v4049, %v4045
        %v4051 = vrot.slane %v4050, 4
        %v4053 = vshll.u32 %v3798, 16
        %v4055 = vrot.slane %v4053, 5
        %v4056 = vsel %vm1918, %v4051, %v4055
        %v4058 = vshrl.u32 %v3799, 16
        %v4060 = vrot.slane %v4058, 4
        %v4061 = vshll.u32 %v3799, 16
        %v4063 = vrot.slane %v4061, 5
        %v4064 = vor.u32 %v4060, %v4063
        %v4065 = vrot.slane %v4064, 4
        %v4067 = vshll.u32 %v3800, 16
        %v4069 = vrot.slane %v4067, 5
        %v4070 = vsel %vm1918, %v4065, %v4069
        %v4071 = vshrl.u32 %v3800, 16
        %v4073 = vrot.slane %v4071, 4
        %v4074 = vor.u32 %v4073, %v4069
        %v4075 = vrot.slane %v4074, 4
        %v4077 = vshll.u32 %v3801, 16
        %v4079 = vrot.slane %v4077, 5
        %v4080 = vsel %vm1918, %v4075, %v4079
        %v4082 = vshrl.u32 %v3802, 16
        %v4084 = vrot.slane %v4082, 4
        %v4085 = vshll.u32 %v3802, 16
        %v4087 = vrot.slane %v4085, 5
        %v4088 = vor.u32 %v4084, %v4087
        %v4089 = vrot.slane %v4088, 4
        %v4091 = vshll.u32 %v3803, 16
        %v4093 = vrot.slane %v4091, 5
        %v4094 = vsel %vm1918, %v4089, %v4093
        %v4095 = vshrl.u32 %v3803, 16
        %v4097 = vrot.slane %v4095, 4
        %v4098 = vor.u32 %v4097, %v4093
        %v4099 = vrot.slane %v4098, 4
        %v4101 = vshll.u32 %v3804, 16
        %v4103 = vrot.slane %v4101, 5
        %v4104 = vsel %vm1918, %v4099, %v4103
        %v4106 = vshrl.u32 %v3805, 16
        %v4108 = vrot.slane %v4106, 4
        %v4109 = vshll.u32 %v3805, 16
        %v4111 = vrot.slane %v4109, 5
        %v4112 = vor.u32 %v4108, %v4111
        %v4113 = vrot.slane %v4112, 4
        %v4115 = vshll.u32 %v3806, 16
        %v4117 = vrot.slane %v4115, 5
        %v4118 = vsel %vm1918, %v4113, %v4117
        %v4119 = vshrl.u32 %v3806, 16
        %v4121 = vrot.slane %v4119, 4
        %v4122 = vor.u32 %v4121, %v4117
        %v4123 = vrot.slane %v4122, 4
        %v4125 = vshll.u32 %v3807, 16
        %v4127 = vrot.slane %v4125, 5
        %v4128 = vsel %vm1918, %v4123, %v4127
        %v4130 = vshrl.u32 %v3808, 16
        %v4132 = vrot.slane %v4130, 4
        %v4133 = vshll.u32 %v3808, 16
        %v4135 = vrot.slane %v4133, 5
        %v4136 = vor.u32 %v4132, %v4135
        %v4137 = vrot.slane %v4136, 4
        %v4139 = vshll.u32 %v3809, 16
        %v4141 = vrot.slane %v4139, 5
        %v4142 = vsel %vm1918, %v4137, %v4141
        %v4143 = vshrl.u32 %v3809, 16
        %v4145 = vrot.slane %v4143, 4
        %v4146 = vor.u32 %v4145, %v4141
        %v4147 = vrot.slane %v4146, 4
        %v4149 = vshll.u32 %v3810, 16
        %v4151 = vrot.slane %v4149, 5
        %v4152 = vsel %vm1918, %v4147, %v4151
        %v4154 = vshrl.u32 %v3811, 16
        %v4156 = vrot.slane %v4154, 4
        %v4157 = vshll.u32 %v3811, 16
        %v4159 = vrot.slane %v4157, 5
        %v4160 = vor.u32 %v4156, %v4159
        %v4161 = vrot.slane %v4160, 4
        %v4163 = vshll.u32 %v3812, 16
        %v4165 = vrot.slane %v4163, 5
        %v4166 = vsel %vm1918, %v4161, %v4165
        %v4167 = vshrl.u32 %v3812, 16
        %v4169 = vrot.slane %v4167, 4
        %v4170 = vor.u32 %v4169, %v4165
        %v4171 = vrot.slane %v4170, 4
        %v4173 = vshll.u32 %v3813, 16
        %v4175 = vrot.slane %v4173, 5
        %v4176 = vsel %vm1918, %v4171, %v4175
        %v4178 = vshrl.u32 %v3814, 16
        %v4180 = vrot.slane %v4178, 4
        %v4181 = vshll.u32 %v3814, 16
        %v4183 = vrot.slane %v4181, 5
        %v4184 = vor.u32 %v4180, %v4183
        %v4185 = vrot.slane %v4184, 4
        %v4187 = vshll.u32 %v3815, 16
        %v4189 = vrot.slane %v4187, 5
        %v4190 = vsel %vm1918, %v4185, %v4189
        %v4191 = vshrl.u32 %v3815, 16
        %v4193 = vrot.slane %v4191, 4
        %v4194 = vor.u32 %v4193, %v4189
        %v4195 = vrot.slane %v4194, 4
        %v4197 = vshll.u32 %v3816, 16
        %v4199 = vrot.slane %v4197, 5
        %v4200 = vsel %vm1918, %v4195, %v4199
        %s4201 = scalar_lea.vmem [#allocation8], 256
        %v4202 = vld [vmem:[%s4201] sm:$0xf]
        %v4203 = vld [vmem:[%s4201 + $0x4] sm:$0xf]
        %v4204 = vld [vmem:[%s4201 + $0x8] sm:$0xf]
        %v4205 = vld [vmem:[%s4201 + $0xc] sm:$0xf]
        %v4206 = vld [vmem:[%s4201 + $0x10] sm:$0xf]
        %v4207 = vld [vmem:[%s4201 + $0x14] sm:$0xf]
        %v4208 = vld [vmem:[%s4201 + $0x18] sm:$0xf]
        %v4209 = vld [vmem:[%s4201 + $0x1c] sm:$0xf]
        %v4210 = vld [vmem:[%s4201 + $0x20] sm:$0xf]
        %v4211 = vld [vmem:[%s4201 + $0x24] sm:$0xf]
        %v4212 = vld [vmem:[%s4201 + $0x28] sm:$0xf]
        %v4213 = vld [vmem:[%s4201 + $0x2c] sm:$0xf]
        %v4214 = vld [vmem:[%s4201 + $0x30] sm:$0xf]
        %v4215 = vld [vmem:[%s4201 + $0x34] sm:$0xf]
        %v4216 = vld [vmem:[%s4201 + $0x38] sm:$0xf]
        %v4217 = vld [vmem:[%s4201 + $0x3c] sm:$0xf]
        %v4218 = vunpack.c.l.b16 %v3830
        %v4219 = vunpack.c.l.b16 %v3840
        %v4220 = vunpack.c.l.b16 %v3854
        %v4221 = vunpack.c.l.b16 %v3864
        %v4222 = vunpack.c.l.b16 %v3878
        %v4223 = vunpack.c.l.b16 %v3888
        %v4224 = vunpack.c.l.b16 %v3902
        %v4225 = vunpack.c.l.b16 %v3912
        %v4226 = vunpack.c.l.b16 %v3926
        %v4227 = vunpack.c.l.b16 %v3936
        %v4228 = vunpack.c.l.b16 %v3950
        %v4229 = vunpack.c.l.b16 %v3960
        %v4230 = vunpack.c.l.b16 %v3974
        %v4231 = vunpack.c.l.b16 %v3984
        %v4232 = vunpack.c.l.b16 %v3998
        %v4233 = vunpack.c.l.b16 %v4008
        %v4234 = vunpack.c.l.b16 %v4022
        %v4235 = vunpack.c.l.b16 %v4032
        %v4236 = vunpack.c.l.b16 %v4046
        %v4237 = vunpack.c.l.b16 %v4056
        %v4238 = vunpack.c.l.b16 %v4070
        %v4239 = vunpack.c.l.b16 %v4080
        %v4240 = vunpack.c.l.b16 %v4094
        %v4241 = vunpack.c.l.b16 %v4104
        %v4242 = vunpack.c.l.b16 %v4118
        %v4243 = vunpack.c.l.b16 %v4128
        %v4244 = vunpack.c.l.b16 %v4142
        %v4245 = vunpack.c.l.b16 %v4152
        %v4246 = vunpack.c.l.b16 %v4166
        %v4247 = vunpack.c.l.b16 %v4176
        %v4248 = vunpack.c.l.b16 %v4190
        %v4249 = vunpack.c.l.b16 %v4200
        %v4250 = vpack.c.b16 %v4219, %v4218
        %v4251 = vpack.c.b16 %v4221, %v4220
        %v4252 = vpack.c.b16 %v4223, %v4222
        %v4253 = vpack.c.b16 %v4225, %v4224
        %v4254 = vpack.c.b16 %v4227, %v4226
        %v4255 = vpack.c.b16 %v4229, %v4228
        %v4256 = vpack.c.b16 %v4231, %v4230
        %v4257 = vpack.c.b16 %v4233, %v4232
        %v4258 = vpack.c.b16 %v4235, %v4234
        %v4259 = vpack.c.b16 %v4237, %v4236
        %v4260 = vpack.c.b16 %v4239, %v4238
        %v4261 = vpack.c.b16 %v4241, %v4240
        %v4262 = vpack.c.b16 %v4243, %v4242
        %v4263 = vpack.c.b16 %v4245, %v4244
        %v4264 = vpack.c.b16 %v4247, %v4246
        %v4265 = vpack.c.b16 %v4249, %v4248
        %v4298 = vunpack.c.l.b16 %v4202
        %v4299 = vunpack.c.l.b16 %v4203
        %v4300 = vunpack.c.l.b16 %v4204
        %v4301 = vunpack.c.l.b16 %v4205
        %v4302 = vunpack.c.l.b16 %v4206
        %v4303 = vunpack.c.l.b16 %v4207
        %v4304 = vunpack.c.l.b16 %v4208
        %v4305 = vunpack.c.l.b16 %v4209
        %v4306 = vunpack.c.l.b16 %v4210
        %v4307 = vunpack.c.l.b16 %v4211
        %v4308 = vunpack.c.l.b16 %v4212
        %v4309 = vunpack.c.l.b16 %v4213
        %v4310 = vunpack.c.l.b16 %v4214
        %v4311 = vunpack.c.l.b16 %v4215
        %v4312 = vunpack.c.l.b16 %v4216
        %v4313 = vunpack.c.l.b16 %v4217
        %v4314 = vpack.c.b16 %v4299, %v4298
        %v4315 = vpack.c.b16 %v4301, %v4300
        %v4316 = vpack.c.b16 %v4303, %v4302
        %v4317 = vpack.c.b16 %v4305, %v4304
        %v4318 = vpack.c.b16 %v4307, %v4306
        %v4319 = vpack.c.b16 %v4309, %v4308
        %v4320 = vpack.c.b16 %v4311, %v4310
        %v4321 = vpack.c.b16 %v4313, %v4312
        %4330 = vmatprep.subr.bf16.mxu0 0
        %4331 = vmatpush1.bf16.msra.mxu0 %v4314
        %4332 = vmatprep.subr.bf16.mxu0 0
        %4333 = vmatpush1.bf16.msra.mxu0 %v4315
        %4334 = vmatprep.subr.bf16.mxu0 0
        %4335 = vmatpush1.bf16.msra.mxu0 %v4316
        %4336 = vmatprep.subr.bf16.mxu0 0
        %4337 = vmatpush1.bf16.msra.mxu0 %v4317
        %4338 = vmatprep.subr.bf16.mxu0 0
        %4339 = vmatpush1.bf16.msra.mxu0 %v4318
        %4340 = vmatprep.subr.bf16.mxu0 0
        %4341 = vmatpush1.bf16.msra.mxu0 %v4319
        %4342 = vmatprep.subr.bf16.mxu0 0
        %4343 = vmatpush1.bf16.msra.mxu0 %v4320
        %4344 = vmatprep.subr.bf16.mxu0 0
        %4345 = vmatpush1.bf16.msra.mxu0 %v4321
        %4346 = vmatprep.subr.bf16.mxu0 0
        %4347 = vmatpush1.bf16.msra.mxu0 0
        %4348 = vmatprep.subr.bf16.mxu0 0
        %4349 = vmatpush1.bf16.msra.mxu0 0
        %4350 = vmatprep.subr.bf16.mxu0 0
        %4351 = vmatpush1.bf16.msra.mxu0 0
        %4352 = vmatprep.subr.bf16.mxu0 0
        %4353 = vmatpush1.bf16.msra.mxu0 0
        %4354 = vmatprep.subr.bf16.mxu0 0
        %4355 = vmatpush1.bf16.msra.mxu0 0
        %4356 = vmatprep.subr.bf16.mxu0 0
        %4357 = vmatpush1.bf16.msra.mxu0 0
        %4358 = vmatprep.subr.bf16.mxu0 0
        %4359 = vmatpush1.bf16.msra.mxu0 0
        %4360 = vmatprep.subr.bf16.mxu0 0
        %4361 = vmatpush1.bf16.msra.mxu0 0
        %4362 = vmatprep.mubr.bf16.mxu0 0
        %4363 = vmatmul.mubr.bf16.gmra.mrb[0].mxu0 %v4250
        %v4364 = vpop.f32.mrb[0].mxu0
        %v4365 = vadd.f32 0.0, %v4364
        %v4366 = vpop.f32.mrb[0].mxu0
        %v4367 = vpop.f32.mrb[0].mxu0
        %v4368 = vadd.f32 0.0, %v4367
        %v4369 = vpop.f32.mrb[0].mxu0
        %4370 = vmatprep.mubr.bf16.mxu0 0
        %4371 = vmatmul.mubr.bf16.gmra.mrb[0].mxu0 %v4251
        %v4372 = vpop.f32.mrb[0].mxu0
        %v4373 = vadd.f32 0.0, %v4372
        %v4374 = vpop.f32.mrb[0].mxu0
        %v4375 = vpop.f32.mrb[0].mxu0
        %v4376 = vadd.f32 0.0, %v4375
        %v4377 = vpop.f32.mrb[0].mxu0
        %4378 = vmatprep.mubr.bf16.mxu0 0
        %4379 = vmatmul.mubr.bf16.gmra.mrb[0].mxu0 %v4252
        %v4380 = vpop.f32.mrb[0].mxu0
        %v4381 = vadd.f32 0.0, %v4380
        %v4382 = vpop.f32.mrb[0].mxu0
        %v4383 = vpop.f32.mrb[0].mxu0
        %v4384 = vadd.f32 0.0, %v4383
        %v4385 = vpop.f32.mrb[0].mxu0
        %4386 = vmatprep.mubr.bf16.mxu0 0
        %4387 = vmatmul.mubr.bf16.gmra.mrb[0].mxu0 %v4253
        %v4388 = vpop.f32.mrb[0].mxu0
        %v4389 = vadd.f32 0.0, %v4388
        %v4390 = vpop.f32.mrb[0].mxu0
        %v4391 = vpop.f32.mrb[0].mxu0
        %v4392 = vadd.f32 0.0, %v4391
        %v4393 = vpop.f32.mrb[0].mxu0
        %4394 = vmatprep.mubr.bf16.mxu0 0
        %4395 = vmatmul.mubr.bf16.gmra.mrb[0].mxu0 %v4254
        %v4396 = vpop.f32.mrb[0].mxu0
        %v4397 = vadd.f32 0.0, %v4396
        %v4398 = vpop.f32.mrb[0].mxu0
        %v4399 = vpop.f32.mrb[0].mxu0
        %v4400 = vadd.f32 0.0, %v4399
        %v4401 = vpop.f32.mrb[0].mxu0
        %4402 = vmatprep.mubr.bf16.mxu0 0
        %4403 = vmatmul.mubr.bf16.gmra.mrb[0].mxu0 %v4255
        %v4404 = vpop.f32.mrb[0].mxu0
        %v4405 = vadd.f32 0.0, %v4404
        %v4406 = vpop.f32.mrb[0].mxu0
        %v4407 = vpop.f32.mrb[0].mxu0
        %v4408 = vadd.f32 0.0, %v4407
        %v4409 = vpop.f32.mrb[0].mxu0
        %4410 = vmatprep.mubr.bf16.mxu0 0
        %4411 = vmatmul.mubr.bf16.gmra.mrb[0].mxu0 %v4256
        %v4412 = vpop.f32.mrb[0].mxu0
        %v4413 = vadd.f32 0.0, %v4412
        %v4414 = vpop.f32.mrb[0].mxu0
        %v4415 = vpop.f32.mrb[0].mxu0
        %v4416 = vadd.f32 0.0, %v4415
        %v4417 = vpop.f32.mrb[0].mxu0
        %4418 = vmatprep.mubr.bf16.mxu0 0
        %4419 = vmatmul.mubr.bf16.gmra.mrb[0].mxu0 %v4257
        %v4420 = vpop.f32.mrb[0].mxu0
        %v4421 = vadd.f32 0.0, %v4420
        %v4422 = vpop.f32.mrb[0].mxu0
        %v4423 = vpop.f32.mrb[0].mxu0
        %v4424 = vadd.f32 0.0, %v4423
        %v4425 = vpop.f32.mrb[0].mxu0
        %4426 = vmatprep.mubr.bf16.mxu0 0
        %4427 = vmatmul.mubr.bf16.gmra.mrb[0].mxu0 %v4258
        %v4428 = vpop.f32.mrb[0].mxu0
        %v4429 = vadd.f32 0.0, %v4428
        %v4430 = vpop.f32.mrb[0].mxu0
        %v4431 = vpop.f32.mrb[0].mxu0
        %v4432 = vadd.f32 0.0, %v4431
        %v4433 = vpop.f32.mrb[0].mxu0
        %4434 = vmatprep.mubr.bf16.mxu0 0
        %4435 = vmatmul.mubr.bf16.gmra.mrb[0].mxu0 %v4259
        %v4436 = vpop.f32.mrb[0].mxu0
        %v4437 = vadd.f32 0.0, %v4436
        %v4438 = vpop.f32.mrb[0].mxu0
        %v4439 = vpop.f32.mrb[0].mxu0
        %v4440 = vadd.f32 0.0, %v4439
        %v4441 = vpop.f32.mrb[0].mxu0
        %4442 = vmatprep.mubr.bf16.mxu0 0
        %4443 = vmatmul.mubr.bf16.gmra.mrb[0].mxu0 %v4260
        %v4444 = vpop.f32.mrb[0].mxu0
        %v4445 = vadd.f32 0.0, %v4444
        %v4446 = vpop.f32.mrb[0].mxu0
        %v4447 = vpop.f32.mrb[0].mxu0
        %v4448 = vadd.f32 0.0, %v4447
        %v4449 = vpop.f32.mrb[0].mxu0
        %4450 = vmatprep.mubr.bf16.mxu0 0
        %4451 = vmatmul.mubr.bf16.gmra.mrb[0].mxu0 %v4261
        %v4452 = vpop.f32.mrb[0].mxu0
        %v4453 = vadd.f32 0.0, %v4452
        %v4454 = vpop.f32.mrb[0].mxu0
        %v4455 = vpop.f32.mrb[0].mxu0
        %v4456 = vadd.f32 0.0, %v4455
        %v4457 = vpop.f32.mrb[0].mxu0
        %4458 = vmatprep.mubr.bf16.mxu0 0
        %4459 = vmatmul.mubr.bf16.gmra.mrb[0].mxu0 %v4262
        %v4460 = vpop.f32.mrb[0].mxu0
        %v4461 = vadd.f32 0.0, %v4460
        %v4462 = vpop.f32.mrb[0].mxu0
        %v4463 = vpop.f32.mrb[0].mxu0
        %v4464 = vadd.f32 0.0, %v4463
        %v4465 = vpop.f32.mrb[0].mxu0
        %4466 = vmatprep.mubr.bf16.mxu0 0
        %4467 = vmatmul.mubr.bf16.gmra.mrb[0].mxu0 %v4263
        %v4468 = vpop.f32.mrb[0].mxu0
        %v4469 = vadd.f32 0.0, %v4468
        %v4470 = vpop.f32.mrb[0].mxu0
        %v4471 = vpop.f32.mrb[0].mxu0
        %v4472 = vadd.f32 0.0, %v4471
        %v4473 = vpop.f32.mrb[0].mxu0
        %4474 = vmatprep.mubr.bf16.mxu0 0
        %4475 = vmatmul.mubr.bf16.gmra.mrb[0].mxu0 %v4264
        %v4476 = vpop.f32.mrb[0].mxu0
        %v4477 = vadd.f32 0.0, %v4476
        %v4478 = vpop.f32.mrb[0].mxu0
        %v4479 = vpop.f32.mrb[0].mxu0
        %v4480 = vadd.f32 0.0, %v4479
        %v4481 = vpop.f32.mrb[0].mxu0
        %4482 = vmatprep.mubr.bf16.mxu0 0
        %4483 = vmatmul.mubr.bf16.gmra.mrb[0].mxu0 %v4265
        %v4484 = vpop.f32.mrb[0].mxu0
        %v4485 = vadd.f32 0.0, %v4484
        %v4486 = vpop.f32.mrb[0].mxu0
        %v4487 = vpop.f32.mrb[0].mxu0
        %v4488 = vadd.f32 0.0, %v4487
        %v4489 = vpop.f32.mrb[0].mxu0
        %4490 = vdwg.mxu0
        %v4491 = vadd.f32 %v3737, %v4365
        %v4492 = vadd.f32 %v3738, %v4368
        %v4493 = vadd.f32 %v3739, %v4373
        %v4494 = vadd.f32 %v3740, %v4376
        %v4495 = vadd.f32 %v3741, %v4381
        %v4496 = vadd.f32 %v3742, %v4384
        %v4497 = vadd.f32 %v3743, %v4389
        %v4498 = vadd.f32 %v3744, %v4392
        %v4499 = vadd.f32 %v3745, %v4397
        %v4500 = vadd.f32 %v3746, %v4400
        %v4501 = vadd.f32 %v3747, %v4405
        %v4502 = vadd.f32 %v3748, %v4408
        %v4503 = vadd.f32 %v3749, %v4413
        %v4504 = vadd.f32 %v3750, %v4416
        %v4505 = vadd.f32 %v3751, %v4421
        %v4506 = vadd.f32 %v3752, %v4424
        %v4507 = vadd.f32 %v3753, %v4429
        %v4508 = vadd.f32 %v3754, %v4432
        %v4509 = vadd.f32 %v3755, %v4437
        %v4510 = vadd.f32 %v3756, %v4440
        %v4511 = vadd.f32 %v3757, %v4445
        %v4512 = vadd.f32 %v3758, %v4448
        %v4513 = vadd.f32 %v3759, %v4453
        %v4514 = vadd.f32 %v3760, %v4456
        %v4515 = vadd.f32 %v3761, %v4461
        %v4516 = vadd.f32 %v3762, %v4464
        %v4517 = vadd.f32 %v3763, %v4469
        %v4518 = vadd.f32 %v3764, %v4472
        %v4519 = vadd.f32 %v3765, %v4477
        %v4520 = vadd.f32 %v3766, %v4480
        %v4521 = vadd.f32 %v3767, %v4485
        %v4522 = vadd.f32 %v3768, %v4488
        %v4523 = vld [vmem:[%s1391] sm:$0xe]
        %v4524 = vld [vmem:[%s1391 + $0xc] sm:$0xe]
        %v4525 = vld [vmem:[%s1391 + $0x18] sm:$0xe]
        %v4526 = vld [vmem:[%s1391 + $0x24] sm:$0xe]
        %v4527 = vld [vmem:[%s1391 + $0x30] sm:$0xe]
        %v4528 = vld [vmem:[%s1391 + $0x3c] sm:$0xe]
        %v4529 = vld [vmem:[%s1391 + $0x48] sm:$0xe]
        %v4530 = vld [vmem:[%s1391 + $0x54] sm:$0xe]
        %v4531 = vld [vmem:[%s1391 + $0x60] sm:$0xe]
        %v4532 = vld [vmem:[%s1391 + $0x6c] sm:$0xe]
        %v4533 = vld [vmem:[%s1391 + $0x78] sm:$0xe]
        %v4534 = vld [vmem:[%s1391 + $0x84] sm:$0xe]
        %v4535 = vld [vmem:[%s1391 + $0x90] sm:$0xe]
        %v4536 = vld [vmem:[%s1391 + $0x9c] sm:$0xe]
        %v4537 = vld [vmem:[%s1391 + $0xa8] sm:$0xe]
        %v4538 = vld [vmem:[%s1391 + $0xb4] sm:$0xe]
        %v4587 = vrot.slane %v4523, 5
        %v4588 = vrot.slane %v4587, 4
        %v4589 = vrot.slane %v3770, 5
        %v4590 = vsel %vm2948, %v4588, %v4589
        %v4591 = vrot.slane %v4589, 4
        %v4592 = vrot.slane %v3771, 5
        %v4593 = vsel %vm2948, %v4591, %v4592
        %v4594 = vrot.slane %v4524, 5
        %v4595 = vrot.slane %v4594, 4
        %v4596 = vrot.slane %v3773, 5
        %v4597 = vsel %vm2948, %v4595, %v4596
        %v4598 = vrot.slane %v4596, 4
        %v4599 = vrot.slane %v3774, 5
        %v4600 = vsel %vm2948, %v4598, %v4599
        %v4601 = vrot.slane %v4525, 5
        %v4602 = vrot.slane %v4601, 4
        %v4603 = vrot.slane %v3776, 5
        %v4604 = vsel %vm2948, %v4602, %v4603
        %v4605 = vrot.slane %v4603, 4
        %v4606 = vrot.slane %v3777, 5
        %v4607 = vsel %vm2948, %v4605, %v4606
        %v4608 = vrot.slane %v4526, 5
        %v4609 = vrot.slane %v4608, 4
        %v4610 = vrot.slane %v3779, 5
        %v4611 = vsel %vm2948, %v4609, %v4610
        %v4612 = vrot.slane %v4610, 4
        %v4613 = vrot.slane %v3780, 5
        %v4614 = vsel %vm2948, %v4612, %v4613
        %v4615 = vrot.slane %v4527, 5
        %v4616 = vrot.slane %v4615, 4
        %v4617 = vrot.slane %v3782, 5
        %v4618 = vsel %vm2948, %v4616, %v4617
        %v4619 = vrot.slane %v4617, 4
        %v4620 = vrot.slane %v3783, 5
        %v4621 = vsel %vm2948, %v4619, %v4620
        %v4622 = vrot.slane %v4528, 5
        %v4623 = vrot.slane %v4622, 4
        %v4624 = vrot.slane %v3785, 5
        %v4625 = vsel %vm2948, %v4623, %v4624
        %v4626 = vrot.slane %v4624, 4
        %v4627 = vrot.slane %v3786, 5
        %v4628 = vsel %vm2948, %v4626, %v4627
        %v4629 = vrot.slane %v4529, 5
        %v4630 = vrot.slane %v4629, 4
        %v4631 = vrot.slane %v3788, 5
        %v4632 = vsel %vm2948, %v4630, %v4631
        %v4633 = vrot.slane %v4631, 4
        %v4634 = vrot.slane %v3789, 5
        %v4635 = vsel %vm2948, %v4633, %v4634
        %v4636 = vrot.slane %v4530, 5
        %v4637 = vrot.slane %v4636, 4
        %v4638 = vrot.slane %v3791, 5
        %v4639 = vsel %vm2948, %v4637, %v4638
        %v4640 = vrot.slane %v4638, 4
        %v4641 = vrot.slane %v3792, 5
        %v4642 = vsel %vm2948, %v4640, %v4641
        %v4643 = vrot.slane %v4531, 5
        %v4644 = vrot.slane %v4643, 4
        %v4645 = vrot.slane %v3794, 5
        %v4646 = vsel %vm2948, %v4644, %v4645
        %v4647 = vrot.slane %v4645, 4
        %v4648 = vrot.slane %v3795, 5
        %v4649 = vsel %vm2948, %v4647, %v4648
        %v4650 = vrot.slane %v4532, 5
        %v4651 = vrot.slane %v4650, 4
        %v4652 = vrot.slane %v3797, 5
        %v4653 = vsel %vm2948, %v4651, %v4652
        %v4654 = vrot.slane %v4652, 4
        %v4655 = vrot.slane %v3798, 5
        %v4656 = vsel %vm2948, %v4654, %v4655
        %v4657 = vrot.slane %v4533, 5
        %v4658 = vrot.slane %v4657, 4
        %v4659 = vrot.slane %v3800, 5
        %v4660 = vsel %vm2948, %v4658, %v4659
        %v4661 = vrot.slane %v4659, 4
        %v4662 = vrot.slane %v3801, 5
        %v4663 = vsel %vm2948, %v4661, %v4662
        %v4664 = vrot.slane %v4534, 5
        %v4665 = vrot.slane %v4664, 4
        %v4666 = vrot.slane %v3803, 5
        %v4667 = vsel %vm2948, %v4665, %v4666
        %v4668 = vrot.slane %v4666, 4
        %v4669 = vrot.slane %v3804, 5
        %v4670 = vsel %vm2948, %v4668, %v4669
        %v4671 = vrot.slane %v4535, 5
        %v4672 = vrot.slane %v4671, 4
        %v4673 = vrot.slane %v3806, 5
        %v4674 = vsel %vm2948, %v4672, %v4673
        %v4675 = vrot.slane %v4673, 4
        %v4676 = vrot.slane %v3807, 5
        %v4677 = vsel %vm2948, %v4675, %v4676
        %v4678 = vrot.slane %v4536, 5
        %v4679 = vrot.slane %v4678, 4
        %v4680 = vrot.slane %v3809, 5
        %v4681 = vsel %vm2948, %v4679, %v4680
        %v4682 = vrot.slane %v4680, 4
        %v4683 = vrot.slane %v3810, 5
        %v4684 = vsel %vm2948, %v4682, %v4683
        %v4685 = vrot.slane %v4537, 5
        %v4686 = vrot.slane %v4685, 4
        %v4687 = vrot.slane %v3812, 5
        %v4688 = vsel %vm2948, %v4686, %v4687
        %v4689 = vrot.slane %v4687, 4
        %v4690 = vrot.slane %v3813, 5
        %v4691 = vsel %vm2948, %v4689, %v4690
        %v4692 = vrot.slane %v4538, 5
        %v4693 = vrot.slane %v4692, 4
        %v4694 = vrot.slane %v3815, 5
        %v4695 = vsel %vm2948, %v4693, %v4694
        %v4696 = vrot.slane %v4694, 4
        %v4697 = vrot.slane %v3816, 5
        %v4698 = vsel %vm2948, %v4696, %v4697
        %s4699 = scalar_lea.vmem [#allocation8], 320
        %v4700 = vld [vmem:[%s4699] sm:$0xf]
        %v4701 = vld [vmem:[%s4699 + $0x4] sm:$0xf]
        %v4702 = vld [vmem:[%s4699 + $0x8] sm:$0xf]
        %v4703 = vld [vmem:[%s4699 + $0xc] sm:$0xf]
        %v4704 = vld [vmem:[%s4699 + $0x10] sm:$0xf]
        %v4705 = vld [vmem:[%s4699 + $0x14] sm:$0xf]
        %v4706 = vld [vmem:[%s4699 + $0x18] sm:$0xf]
        %v4707 = vld [vmem:[%s4699 + $0x1c] sm:$0xf]
        %v4708 = vld [vmem:[%s4699 + $0x20] sm:$0xf]
        %v4709 = vld [vmem:[%s4699 + $0x24] sm:$0xf]
        %v4710 = vld [vmem:[%s4699 + $0x28] sm:$0xf]
        %v4711 = vld [vmem:[%s4699 + $0x2c] sm:$0xf]
        %v4712 = vld [vmem:[%s4699 + $0x30] sm:$0xf]
        %v4713 = vld [vmem:[%s4699 + $0x34] sm:$0xf]
        %v4714 = vld [vmem:[%s4699 + $0x38] sm:$0xf]
        %v4715 = vld [vmem:[%s4699 + $0x3c] sm:$0xf]
        %v4716 = vunpack.c.l.b16 %v4590
        %v4717 = vunpack.c.l.b16 %v4593
        %v4718 = vunpack.c.l.b16 %v4597
        %v4719 = vunpack.c.l.b16 %v4600
        %v4720 = vunpack.c.l.b16 %v4604
        %v4721 = vunpack.c.l.b16 %v4607
        %v4722 = vunpack.c.l.b16 %v4611
        %v4723 = vunpack.c.l.b16 %v4614
        %v4724 = vunpack.c.l.b16 %v4618
        %v4725 = vunpack.c.l.b16 %v4621
        %v4726 = vunpack.c.l.b16 %v4625
        %v4727 = vunpack.c.l.b16 %v4628
        %v4728 = vunpack.c.l.b16 %v4632
        %v4729 = vunpack.c.l.b16 %v4635
        %v4730 = vunpack.c.l.b16 %v4639
        %v4731 = vunpack.c.l.b16 %v4642
        %v4732 = vunpack.c.l.b16 %v4646
        %v4733 = vunpack.c.l.b16 %v4649
        %v4734 = vunpack.c.l.b16 %v4653
        %v4735 = vunpack.c.l.b16 %v4656
        %v4736 = vunpack.c.l.b16 %v4660
        %v4737 = vunpack.c.l.b16 %v4663
        %v4738 = vunpack.c.l.b16 %v4667
        %v4739 = vunpack.c.l.b16 %v4670
        %v4740 = vunpack.c.l.b16 %v4674
        %v4741 = vunpack.c.l.b16 %v4677
        %v4742 = vunpack.c.l.b16 %v4681
        %v4743 = vunpack.c.l.b16 %v4684
        %v4744 = vunpack.c.l.b16 %v4688
        %v4745 = vunpack.c.l.b16 %v4691
        %v4746 = vunpack.c.l.b16 %v4695
        %v4747 = vunpack.c.l.b16 %v4698
        %v4748 = vpack.c.b16 %v4717, %v4716
        %v4749 = vpack.c.b16 %v4719, %v4718
        %v4750 = vpack.c.b16 %v4721, %v4720
        %v4751 = vpack.c.b16 %v4723, %v4722
        %v4752 = vpack.c.b16 %v4725, %v4724
        %v4753 = vpack.c.b16 %v4727, %v4726
        %v4754 = vpack.c.b16 %v4729, %v4728
        %v4755 = vpack.c.b16 %v4731, %v4730
        %v4756 = vpack.c.b16 %v4733, %v4732
        %v4757 = vpack.c.b16 %v4735, %v4734
        %v4758 = vpack.c.b16 %v4737, %v4736
        %v4759 = vpack.c.b16 %v4739, %v4738
        %v4760 = vpack.c.b16 %v4741, %v4740
        %v4761 = vpack.c.b16 %v4743, %v4742
        %v4762 = vpack.c.b16 %v4745, %v4744
        %v4763 = vpack.c.b16 %v4747, %v4746
        %v4796 = vunpack.c.l.b16 %v4700
        %v4797 = vunpack.c.l.b16 %v4701
        %v4798 = vunpack.c.l.b16 %v4702
        %v4799 = vunpack.c.l.b16 %v4703
        %v4800 = vunpack.c.l.b16 %v4704
        %v4801 = vunpack.c.l.b16 %v4705
        %v4802 = vunpack.c.l.b16 %v4706
        %v4803 = vunpack.c.l.b16 %v4707
        %v4804 = vunpack.c.l.b16 %v4708
        %v4805 = vunpack.c.l.b16 %v4709
        %v4806 = vunpack.c.l.b16 %v4710
        %v4807 = vunpack.c.l.b16 %v4711
        %v4808 = vunpack.c.l.b16 %v4712
        %v4809 = vunpack.c.l.b16 %v4713
        %v4810 = vunpack.c.l.b16 %v4714
        %v4811 = vunpack.c.l.b16 %v4715
        %v4812 = vpack.c.b16 %v4797, %v4796
        %v4813 = vpack.c.b16 %v4799, %v4798
        %v4814 = vpack.c.b16 %v4801, %v4800
        %v4815 = vpack.c.b16 %v4803, %v4802
        %v4816 = vpack.c.b16 %v4805, %v4804
        %v4817 = vpack.c.b16 %v4807, %v4806
        %v4818 = vpack.c.b16 %v4809, %v4808
        %v4819 = vpack.c.b16 %v4811, %v4810
        %4828 = vmatprep.subr.bf16.mxu0 0
        %4829 = vmatpush1.bf16.msra.mxu0 %v4812
        %4830 = vmatprep.subr.bf16.mxu0 0
        %4831 = vmatpush1.bf16.msra.mxu0 %v4813
        %4832 = vmatprep.subr.bf16.mxu0 0
        %4833 = vmatpush1.bf16.msra.mxu0 %v4814
        %4834 = vmatprep.subr.bf16.mxu0 0
        %4835 = vmatpush1.bf16.msra.mxu0 %v4815
        %4836 = vmatprep.subr.bf16.mxu0 0
        %4837 = vmatpush1.bf16.msra.mxu0 %v4816
        %4838 = vmatprep.subr.bf16.mxu0 0
        %4839 = vmatpush1.bf16.msra.mxu0 %v4817
        %4840 = vmatprep.subr.bf16.mxu0 0
        %4841 = vmatpush1.bf16.msra.mxu0 %v4818
        %4842 = vmatprep.subr.bf16.mxu0 0
        %4843 = vmatpush1.bf16.msra.mxu0 %v4819
        %4844 = vmatprep.subr.bf16.mxu0 0
        %4845 = vmatpush1.bf16.msra.mxu0 0
        %4846 = vmatprep.subr.bf16.mxu0 0
        %4847 = vmatpush1.bf16.msra.mxu0 0
        %4848 = vmatprep.subr.bf16.mxu0 0
        %4849 = vmatpush1.bf16.msra.mxu0 0
        %4850 = vmatprep.subr.bf16.mxu0 0
        %4851 = vmatpush1.bf16.msra.mxu0 0
        %4852 = vmatprep.subr.bf16.mxu0 0
        %4853 = vmatpush1.bf16.msra.mxu0 0
        %4854 = vmatprep.subr.bf16.mxu0 0
        %4855 = vmatpush1.bf16.msra.mxu0 0
        %4856 = vmatprep.subr.bf16.mxu0 0
        %4857 = vmatpush1.bf16.msra.mxu0 0
        %4858 = vmatprep.subr.bf16.mxu0 0
        %4859 = vmatpush1.bf16.msra.mxu0 0
        %4860 = vmatprep.mubr.bf16.mxu0 0
        %4861 = vmatmul.mubr.bf16.gmra.mrb[0].mxu0 %v4748
        %v4862 = vpop.f32.mrb[0].mxu0
        %v4863 = vadd.f32 0.0, %v4862
        %v4864 = vpop.f32.mrb[0].mxu0
        %v4865 = vpop.f32.mrb[0].mxu0
        %v4866 = vadd.f32 0.0, %v4865
        %v4867 = vpop.f32.mrb[0].mxu0
        %4868 = vmatprep.mubr.bf16.mxu0 0
        %4869 = vmatmul.mubr.bf16.gmra.mrb[0].mxu0 %v4749
        %v4870 = vpop.f32.mrb[0].mxu0
        %v4871 = vadd.f32 0.0, %v4870
        %v4872 = vpop.f32.mrb[0].mxu0
        %v4873 = vpop.f32.mrb[0].mxu0
        %v4874 = vadd.f32 0.0, %v4873
        %v4875 = vpop.f32.mrb[0].mxu0
        %4876 = vmatprep.mubr.bf16.mxu0 0
        %4877 = vmatmul.mubr.bf16.gmra.mrb[0].mxu0 %v4750
        %v4878 = vpop.f32.mrb[0].mxu0
        %v4879 = vadd.f32 0.0, %v4878
        %v4880 = vpop.f32.mrb[0].mxu0
        %v4881 = vpop.f32.mrb[0].mxu0
        %v4882 = vadd.f32 0.0, %v4881
        %v4883 = vpop.f32.mrb[0].mxu0
        %4884 = vmatprep.mubr.bf16.mxu0 0
        %4885 = vmatmul.mubr.bf16.gmra.mrb[0].mxu0 %v4751
        %v4886 = vpop.f32.mrb[0].mxu0
        %v4887 = vadd.f32 0.0, %v4886
        %v4888 = vpop.f32.mrb[0].mxu0
        %v4889 = vpop.f32.mrb[0].mxu0
        %v4890 = vadd.f32 0.0, %v4889
        %v4891 = vpop.f32.mrb[0].mxu0
        %4892 = vmatprep.mubr.bf16.mxu0 0
        %4893 = vmatmul.mubr.bf16.gmra.mrb[0].mxu0 %v4752
        %v4894 = vpop.f32.mrb[0].mxu0
        %v4895 = vadd.f32 0.0, %v4894
        %v4896 = vpop.f32.mrb[0].mxu0
        %v4897 = vpop.f32.mrb[0].mxu0
        %v4898 = vadd.f32 0.0, %v4897
        %v4899 = vpop.f32.mrb[0].mxu0
        %4900 = vmatprep.mubr.bf16.mxu0 0
        %4901 = vmatmul.mubr.bf16.gmra.mrb[0].mxu0 %v4753
        %v4902 = vpop.f32.mrb[0].mxu0
        %v4903 = vadd.f32 0.0, %v4902
        %v4904 = vpop.f32.mrb[0].mxu0
        %v4905 = vpop.f32.mrb[0].mxu0
        %v4906 = vadd.f32 0.0, %v4905
        %v4907 = vpop.f32.mrb[0].mxu0
        %4908 = vmatprep.mubr.bf16.mxu0 0
        %4909 = vmatmul.mubr.bf16.gmra.mrb[0].mxu0 %v4754
        %v4910 = vpop.f32.mrb[0].mxu0
        %v4911 = vadd.f32 0.0, %v4910
        %v4912 = vpop.f32.mrb[0].mxu0
        %v4913 = vpop.f32.mrb[0].mxu0
        %v4914 = vadd.f32 0.0, %v4913
        %v4915 = vpop.f32.mrb[0].mxu0
        %4916 = vmatprep.mubr.bf16.mxu0 0
        %4917 = vmatmul.mubr.bf16.gmra.mrb[0].mxu0 %v4755
        %v4918 = vpop.f32.mrb[0].mxu0
        %v4919 = vadd.f32 0.0, %v4918
        %v4920 = vpop.f32.mrb[0].mxu0
        %v4921 = vpop.f32.mrb[0].mxu0
        %v4922 = vadd.f32 0.0, %v4921
        %v4923 = vpop.f32.mrb[0].mxu0
        %4924 = vmatprep.mubr.bf16.mxu0 0
        %4925 = vmatmul.mubr.bf16.gmra.mrb[0].mxu0 %v4756
        %v4926 = vpop.f32.mrb[0].mxu0
        %v4927 = vadd.f32 0.0, %v4926
        %v4928 = vpop.f32.mrb[0].mxu0
        %v4929 = vpop.f32.mrb[0].mxu0
        %v4930 = vadd.f32 0.0, %v4929
        %v4931 = vpop.f32.mrb[0].mxu0
        %4932 = vmatprep.mubr.bf16.mxu0 0
        %4933 = vmatmul.mubr.bf16.gmra.mrb[0].mxu0 %v4757
        %v4934 = vpop.f32.mrb[0].mxu0
        %v4935 = vadd.f32 0.0, %v4934
        %v4936 = vpop.f32.mrb[0].mxu0
        %v4937 = vpop.f32.mrb[0].mxu0
        %v4938 = vadd.f32 0.0, %v4937
        %v4939 = vpop.f32.mrb[0].mxu0
        %4940 = vmatprep.mubr.bf16.mxu0 0
        %4941 = vmatmul.mubr.bf16.gmra.mrb[0].mxu0 %v4758
        %v4942 = vpop.f32.mrb[0].mxu0
        %v4943 = vadd.f32 0.0, %v4942
        %v4944 = vpop.f32.mrb[0].mxu0
        %v4945 = vpop.f32.mrb[0].mxu0
        %v4946 = vadd.f32 0.0, %v4945
        %v4947 = vpop.f32.mrb[0].mxu0
        %4948 = vmatprep.mubr.bf16.mxu0 0
        %4949 = vmatmul.mubr.bf16.gmra.mrb[0].mxu0 %v4759
        %v4950 = vpop.f32.mrb[0].mxu0
        %v4951 = vadd.f32 0.0, %v4950
        %v4952 = vpop.f32.mrb[0].mxu0
        %v4953 = vpop.f32.mrb[0].mxu0
        %v4954 = vadd.f32 0.0, %v4953
        %v4955 = vpop.f32.mrb[0].mxu0
        %4956 = vmatprep.mubr.bf16.mxu0 0
        %4957 = vmatmul.mubr.bf16.gmra.mrb[0].mxu0 %v4760
        %v4958 = vpop.f32.mrb[0].mxu0
        %v4959 = vadd.f32 0.0, %v4958
        %v4960 = vpop.f32.mrb[0].mxu0
        %v4961 = vpop.f32.mrb[0].mxu0
        %v4962 = vadd.f32 0.0, %v4961
        %v4963 = vpop.f32.mrb[0].mxu0
        %4964 = vmatprep.mubr.bf16.mxu0 0
        %4965 = vmatmul.mubr.bf16.gmra.mrb[0].mxu0 %v4761
        %v4966 = vpop.f32.mrb[0].mxu0
        %v4967 = vadd.f32 0.0, %v4966
        %v4968 = vpop.f32.mrb[0].mxu0
        %v4969 = vpop.f32.mrb[0].mxu0
        %v4970 = vadd.f32 0.0, %v4969
        %v4971 = vpop.f32.mrb[0].mxu0
        %4972 = vmatprep.mubr.bf16.mxu0 0
        %4973 = vmatmul.mubr.bf16.gmra.mrb[0].mxu0 %v4762
        %v4974 = vpop.f32.mrb[0].mxu0
        %v4975 = vadd.f32 0.0, %v4974
        %v4976 = vpop.f32.mrb[0].mxu0
        %v4977 = vpop.f32.mrb[0].mxu0
        %v4978 = vadd.f32 0.0, %v4977
        %v4979 = vpop.f32.mrb[0].mxu0
        %4980 = vmatprep.mubr.bf16.mxu0 0
        %4981 = vmatmul.mubr.bf16.gmra.mrb[0].mxu0 %v4763
        %v4982 = vpop.f32.mrb[0].mxu0
        %v4983 = vadd.f32 0.0, %v4982
        %v4984 = vpop.f32.mrb[0].mxu0
        %v4985 = vpop.f32.mrb[0].mxu0
        %v4986 = vadd.f32 0.0, %v4985
        %v4987 = vpop.f32.mrb[0].mxu0
        %4988 = vdwg.mxu0
        %v4989 = vadd.f32 %v4491, %v4863
        %v4990 = vadd.f32 %v4492, %v4866
        %v4991 = vadd.f32 %v4493, %v4871
        %v4992 = vadd.f32 %v4494, %v4874
        %v4993 = vadd.f32 %v4495, %v4879
        %v4994 = vadd.f32 %v4496, %v4882
        %v4995 = vadd.f32 %v4497, %v4887
        %v4996 = vadd.f32 %v4498, %v4890
        %v4997 = vadd.f32 %v4499, %v4895
        %v4998 = vadd.f32 %v4500, %v4898
        %v4999 = vadd.f32 %v4501, %v4903
        %v5000 = vadd.f32 %v4502, %v4906
        %v5001 = vadd.f32 %v4503, %v4911
        %v5002 = vadd.f32 %v4504, %v4914
        %v5003 = vadd.f32 %v4505, %v4919
        %v5004 = vadd.f32 %v4506, %v4922
        %v5005 = vadd.f32 %v4507, %v4927
        %v5006 = vadd.f32 %v4508, %v4930
        %v5007 = vadd.f32 %v4509, %v4935
        %v5008 = vadd.f32 %v4510, %v4938
        %v5009 = vadd.f32 %v4511, %v4943
        %v5010 = vadd.f32 %v4512, %v4946
        %v5011 = vadd.f32 %v4513, %v4951
        %v5012 = vadd.f32 %v4514, %v4954
        %v5013 = vadd.f32 %v4515, %v4959
        %v5014 = vadd.f32 %v4516, %v4962
        %v5015 = vadd.f32 %v4517, %v4967
        %v5016 = vadd.f32 %v4518, %v4970
        %v5017 = vadd.f32 %v4519, %v4975
        %v5018 = vadd.f32 %v4520, %v4978
        %v5019 = vadd.f32 %v4521, %v4983
        %v5020 = vadd.f32 %v4522, %v4986
        %s5021 = scalar_lea.vmem [#allocation2], 24
        %v5022 = vld [vmem:[%s5021] sm:$0xf]
        %v5023 = vld [vmem:[%s5021 + $0x4] sm:$0xf]
        %v5024 = vld [vmem:[%s5021 + $0xc] sm:$0xf]
        %v5025 = vld [vmem:[%s5021 + $0x10] sm:$0xf]
        %v5026 = vld [vmem:[%s5021 + $0x18] sm:$0xf]
        %v5027 = vld [vmem:[%s5021 + $0x1c] sm:$0xf]
        %v5028 = vld [vmem:[%s5021 + $0x24] sm:$0xf]
        %v5029 = vld [vmem:[%s5021 + $0x28] sm:$0xf]
        %v5030 = vld [vmem:[%s5021 + $0x30] sm:$0xf]
        %v5031 = vld [vmem:[%s5021 + $0x34] sm:$0xf]
        %v5032 = vld [vmem:[%s5021 + $0x3c] sm:$0xf]
        %v5033 = vld [vmem:[%s5021 + $0x40] sm:$0xf]
        %v5034 = vld [vmem:[%s5021 + $0x48] sm:$0xf]
        %v5035 = vld [vmem:[%s5021 + $0x4c] sm:$0xf]
        %v5036 = vld [vmem:[%s5021 + $0x54] sm:$0xf]
        %v5037 = vld [vmem:[%s5021 + $0x58] sm:$0xf]
        %v5038 = vld [vmem:[%s5021 + $0x60] sm:$0xf]
        %v5039 = vld [vmem:[%s5021 + $0x64] sm:$0xf]
        %v5040 = vld [vmem:[%s5021 + $0x6c] sm:$0xf]
        %v5041 = vld [vmem:[%s5021 + $0x70] sm:$0xf]
        %v5042 = vld [vmem:[%s5021 + $0x78] sm:$0xf]
        %v5043 = vld [vmem:[%s5021 + $0x7c] sm:$0xf]
        %v5044 = vld [vmem:[%s5021 + $0x84] sm:$0xf]
        %v5045 = vld [vmem:[%s5021 + $0x88] sm:$0xf]
        %v5046 = vld [vmem:[%s5021 + $0x90] sm:$0xf]
        %v5047 = vld [vmem:[%s5021 + $0x94] sm:$0xf]
        %v5048 = vld [vmem:[%s5021 + $0x9c] sm:$0xf]
        %v5049 = vld [vmem:[%s5021 + $0xa0] sm:$0xf]
        %v5050 = vld [vmem:[%s5021 + $0xa8] sm:$0xf]
        %v5051 = vld [vmem:[%s5021 + $0xac] sm:$0xf]
        %v5052 = vld [vmem:[%s5021 + $0xb4] sm:$0xf]
        %v5053 = vld [vmem:[%s5021 + $0xb8] sm:$0xf]
        %s5054 = scalar_lea.vmem [#allocation8], 384
        %v5055 = vld [vmem:[%s5054] sm:$0xf]
        %v5056 = vld [vmem:[%s5054 + $0x4] sm:$0xf]
        %v5057 = vld [vmem:[%s5054 + $0x8] sm:$0xf]
        %v5058 = vld [vmem:[%s5054 + $0xc] sm:$0xf]
        %v5059 = vld [vmem:[%s5054 + $0x10] sm:$0xf]
        %v5060 = vld [vmem:[%s5054 + $0x14] sm:$0xf]
        %v5061 = vld [vmem:[%s5054 + $0x18] sm:$0xf]
        %v5062 = vld [vmem:[%s5054 + $0x1c] sm:$0xf]
        %v5063 = vld [vmem:[%s5054 + $0x20] sm:$0xf]
        %v5064 = vld [vmem:[%s5054 + $0x24] sm:$0xf]
        %v5065 = vld [vmem:[%s5054 + $0x28] sm:$0xf]
        %v5066 = vld [vmem:[%s5054 + $0x2c] sm:$0xf]
        %v5067 = vld [vmem:[%s5054 + $0x30] sm:$0xf]
        %v5068 = vld [vmem:[%s5054 + $0x34] sm:$0xf]
        %v5069 = vld [vmem:[%s5054 + $0x38] sm:$0xf]
        %v5070 = vld [vmem:[%s5054 + $0x3c] sm:$0xf]
        %v5103 = vunpack.c.l.b16 %v5022
        %v5104 = vunpack.c.l.b16 %v5023
        %v5105 = vunpack.c.l.b16 %v5024
        %v5106 = vunpack.c.l.b16 %v5025
        %v5107 = vunpack.c.l.b16 %v5026
        %v5108 = vunpack.c.l.b16 %v5027
        %v5109 = vunpack.c.l.b16 %v5028
        %v5110 = vunpack.c.l.b16 %v5029
        %v5111 = vunpack.c.l.b16 %v5030
        %v5112 = vunpack.c.l.b16 %v5031
        %v5113 = vunpack.c.l.b16 %v5032
        %v5114 = vunpack.c.l.b16 %v5033
        %v5115 = vunpack.c.l.b16 %v5034
        %v5116 = vunpack.c.l.b16 %v5035
        %v5117 = vunpack.c.l.b16 %v5036
        %v5118 = vunpack.c.l.b16 %v5037
        %v5119 = vunpack.c.l.b16 %v5038
        %v5120 = vunpack.c.l.b16 %v5039
        %v5121 = vunpack.c.l.b16 %v5040
        %v5122 = vunpack.c.l.b16 %v5041
        %v5123 = vunpack.c.l.b16 %v5042
        %v5124 = vunpack.c.l.b16 %v5043
        %v5125 = vunpack.c.l.b16 %v5044
        %v5126 = vunpack.c.l.b16 %v5045
        %v5127 = vunpack.c.l.b16 %v5046
        %v5128 = vunpack.c.l.b16 %v5047
        %v5129 = vunpack.c.l.b16 %v5048
        %v5130 = vunpack.c.l.b16 %v5049
        %v5131 = vunpack.c.l.b16 %v5050
        %v5132 = vunpack.c.l.b16 %v5051
        %v5133 = vunpack.c.l.b16 %v5052
        %v5134 = vunpack.c.l.b16 %v5053
        %v5135 = vpack.c.b16 %v5104, %v5103
        %v5136 = vpack.c.b16 %v5106, %v5105
        %v5137 = vpack.c.b16 %v5108, %v5107
        %v5138 = vpack.c.b16 %v5110, %v5109
        %v5139 = vpack.c.b16 %v5112, %v5111
        %v5140 = vpack.c.b16 %v5114, %v5113
        %v5141 = vpack.c.b16 %v5116, %v5115
        %v5142 = vpack.c.b16 %v5118, %v5117
        %v5143 = vpack.c.b16 %v5120, %v5119
        %v5144 = vpack.c.b16 %v5122, %v5121
        %v5145 = vpack.c.b16 %v5124, %v5123
        %v5146 = vpack.c.b16 %v5126, %v5125
        %v5147 = vpack.c.b16 %v5128, %v5127
        %v5148 = vpack.c.b16 %v5130, %v5129
        %v5149 = vpack.c.b16 %v5132, %v5131
        %v5150 = vpack.c.b16 %v5134, %v5133
        %v5183 = vunpack.c.l.b16 %v5055
        %v5184 = vunpack.c.l.b16 %v5056
        %v5185 = vunpack.c.l.b16 %v5057
        %v5186 = vunpack.c.l.b16 %v5058
        %v5187 = vunpack.c.l.b16 %v5059
        %v5188 = vunpack.c.l.b16 %v5060
        %v5189 = vunpack.c.l.b16 %v5061
        %v5190 = vunpack.c.l.b16 %v5062
        %v5191 = vunpack.c.l.b16 %v5063
        %v5192 = vunpack.c.l.b16 %v5064
        %v5193 = vunpack.c.l.b16 %v5065
        %v5194 = vunpack.c.l.b16 %v5066
        %v5195 = vunpack.c.l.b16 %v5067
        %v5196 = vunpack.c.l.b16 %v5068
        %v5197 = vunpack.c.l.b16 %v5069
        %v5198 = vunpack.c.l.b16 %v5070
        %v5199 = vpack.c.b16 %v5184, %v5183
        %v5200 = vpack.c.b16 %v5186, %v5185
        %v5201 = vpack.c.b16 %v5188, %v5187
        %v5202 = vpack.c.b16 %v5190, %v5189
        %v5203 = vpack.c.b16 %v5192, %v5191
        %v5204 = vpack.c.b16 %v5194, %v5193
        %v5205 = vpack.c.b16 %v5196, %v5195
        %v5206 = vpack.c.b16 %v5198, %v5197
        %5215 = vmatprep.subr.bf16.mxu0 0
        %5216 = vmatpush1.bf16.msra.mxu0 %v5199
        %5217 = vmatprep.subr.bf16.mxu0 0
        %5218 = vmatpush1.bf16.msra.mxu0 %v5200
        %5219 = vmatprep.subr.bf16.mxu0 0
        %5220 = vmatpush1.bf16.msra.mxu0 %v5201
        %5221 = vmatprep.subr.bf16.mxu0 0
        %5222 = vmatpush1.bf16.msra.mxu0 %v5202
        %5223 = vmatprep.subr.bf16.mxu0 0
        %5224 = vmatpush1.bf16.msra.mxu0 %v5203
        %5225 = vmatprep.subr.bf16.mxu0 0
        %5226 = vmatpush1.bf16.msra.mxu0 %v5204
        %5227 = vmatprep.subr.bf16.mxu0 0
        %5228 = vmatpush1.bf16.msra.mxu0 %v5205
        %5229 = vmatprep.subr.bf16.mxu0 0
        %5230 = vmatpush1.bf16.msra.mxu0 %v5206
        %5231 = vmatprep.subr.bf16.mxu0 0
        %5232 = vmatpush1.bf16.msra.mxu0 0
        %5233 = vmatprep.subr.bf16.mxu0 0
        %5234 = vmatpush1.bf16.msra.mxu0 0
        %5235 = vmatprep.subr.bf16.mxu0 0
        %5236 = vmatpush1.bf16.msra.mxu0 0
        %5237 = vmatprep.subr.bf16.mxu0 0
        %5238 = vmatpush1.bf16.msra.mxu0 0
        %5239 = vmatprep.subr.bf16.mxu0 0
        %5240 = vmatpush1.bf16.msra.mxu0 0
        %5241 = vmatprep.subr.bf16.mxu0 0
        %5242 = vmatpush1.bf16.msra.mxu0 0
        %5243 = vmatprep.subr.bf16.mxu0 0
        %5244 = vmatpush1.bf16.msra.mxu0 0
        %5245 = vmatprep.subr.bf16.mxu0 0
        %5246 = vmatpush1.bf16.msra.mxu0 0
        %5247 = vmatprep.mubr.bf16.mxu0 0
        %5248 = vmatmul.mubr.bf16.gmra.mrb[0].mxu0 %v5135
        %v5249 = vpop.f32.mrb[0].mxu0
        %v5250 = vadd.f32 0.0, %v5249
        %v5251 = vpop.f32.mrb[0].mxu0
        %v5252 = vpop.f32.mrb[0].mxu0
        %v5253 = vadd.f32 0.0, %v5252
        %v5254 = vpop.f32.mrb[0].mxu0
        %5255 = vmatprep.mubr.bf16.mxu0 0
        %5256 = vmatmul.mubr.bf16.gmra.mrb[0].mxu0 %v5136
        %v5257 = vpop.f32.mrb[0].mxu0
        %v5258 = vadd.f32 0.0, %v5257
        %v5259 = vpop.f32.mrb[0].mxu0
        %v5260 = vpop.f32.mrb[0].mxu0
        %v5261 = vadd.f32 0.0, %v5260
        %v5262 = vpop.f32.mrb[0].mxu0
        %5263 = vmatprep.mubr.bf16.mxu0 0
        %5264 = vmatmul.mubr.bf16.gmra.mrb[0].mxu0 %v5137
        %v5265 = vpop.f32.mrb[0].mxu0
        %v5266 = vadd.f32 0.0, %v5265
        %v5267 = vpop.f32.mrb[0].mxu0
        %v5268 = vpop.f32.mrb[0].mxu0
        %v5269 = vadd.f32 0.0, %v5268
        %v5270 = vpop.f32.mrb[0].mxu0
        %5271 = vmatprep.mubr.bf16.mxu0 0
        %5272 = vmatmul.mubr.bf16.gmra.mrb[0].mxu0 %v5138
        %v5273 = vpop.f32.mrb[0].mxu0
        %v5274 = vadd.f32 0.0, %v5273
        %v5275 = vpop.f32.mrb[0].mxu0
        %v5276 = vpop.f32.mrb[0].mxu0
        %v5277 = vadd.f32 0.0, %v5276
        %v5278 = vpop.f32.mrb[0].mxu0
        %5279 = vmatprep.mubr.bf16.mxu0 0
        %5280 = vmatmul.mubr.bf16.gmra.mrb[0].mxu0 %v5139
        %v5281 = vpop.f32.mrb[0].mxu0
        %v5282 = vadd.f32 0.0, %v5281
        %v5283 = vpop.f32.mrb[0].mxu0
        %v5284 = vpop.f32.mrb[0].mxu0
        %v5285 = vadd.f32 0.0, %v5284
        %v5286 = vpop.f32.mrb[0].mxu0
        %5287 = vmatprep.mubr.bf16.mxu0 0
        %5288 = vmatmul.mubr.bf16.gmra.mrb[0].mxu0 %v5140
        %v5289 = vpop.f32.mrb[0].mxu0
        %v5290 = vadd.f32 0.0, %v5289
        %v5291 = vpop.f32.mrb[0].mxu0
        %v5292 = vpop.f32.mrb[0].mxu0
        %v5293 = vadd.f32 0.0, %v5292
        %v5294 = vpop.f32.mrb[0].mxu0
        %5295 = vmatprep.mubr.bf16.mxu0 0
        %5296 = vmatmul.mubr.bf16.gmra.mrb[0].mxu0 %v5141
        %v5297 = vpop.f32.mrb[0].mxu0
        %v5298 = vadd.f32 0.0, %v5297
        %v5299 = vpop.f32.mrb[0].mxu0
        %v5300 = vpop.f32.mrb[0].mxu0
        %v5301 = vadd.f32 0.0, %v5300
        %v5302 = vpop.f32.mrb[0].mxu0
        %5303 = vmatprep.mubr.bf16.mxu0 0
        %5304 = vmatmul.mubr.bf16.gmra.mrb[0].mxu0 %v5142
        %v5305 = vpop.f32.mrb[0].mxu0
        %v5306 = vadd.f32 0.0, %v5305
        %v5307 = vpop.f32.mrb[0].mxu0
        %v5308 = vpop.f32.mrb[0].mxu0
        %v5309 = vadd.f32 0.0, %v5308
        %v5310 = vpop.f32.mrb[0].mxu0
        %5311 = vmatprep.mubr.bf16.mxu0 0
        %5312 = vmatmul.mubr.bf16.gmra.mrb[0].mxu0 %v5143
        %v5313 = vpop.f32.mrb[0].mxu0
        %v5314 = vadd.f32 0.0, %v5313
        %v5315 = vpop.f32.mrb[0].mxu0
        %v5316 = vpop.f32.mrb[0].mxu0
        %v5317 = vadd.f32 0.0, %v5316
        %v5318 = vpop.f32.mrb[0].mxu0
        %5319 = vmatprep.mubr.bf16.mxu0 0
        %5320 = vmatmul.mubr.bf16.gmra.mrb[0].mxu0 %v5144
        %v5321 = vpop.f32.mrb[0].mxu0
        %v5322 = vadd.f32 0.0, %v5321
        %v5323 = vpop.f32.mrb[0].mxu0
        %v5324 = vpop.f32.mrb[0].mxu0
        %v5325 = vadd.f32 0.0, %v5324
        %v5326 = vpop.f32.mrb[0].mxu0
        %5327 = vmatprep.mubr.bf16.mxu0 0
        %5328 = vmatmul.mubr.bf16.gmra.mrb[0].mxu0 %v5145
        %v5329 = vpop.f32.mrb[0].mxu0
        %v5330 = vadd.f32 0.0, %v5329
        %v5331 = vpop.f32.mrb[0].mxu0
        %v5332 = vpop.f32.mrb[0].mxu0
        %v5333 = vadd.f32 0.0, %v5332
        %v5334 = vpop.f32.mrb[0].mxu0
        %5335 = vmatprep.mubr.bf16.mxu0 0
        %5336 = vmatmul.mubr.bf16.gmra.mrb[0].mxu0 %v5146
        %v5337 = vpop.f32.mrb[0].mxu0
        %v5338 = vadd.f32 0.0, %v5337
        %v5339 = vpop.f32.mrb[0].mxu0
        %v5340 = vpop.f32.mrb[0].mxu0
        %v5341 = vadd.f32 0.0, %v5340
        %v5342 = vpop.f32.mrb[0].mxu0
        %5343 = vmatprep.mubr.bf16.mxu0 0
        %5344 = vmatmul.mubr.bf16.gmra.mrb[0].mxu0 %v5147
        %v5345 = vpop.f32.mrb[0].mxu0
        %v5346 = vadd.f32 0.0, %v5345
        %v5347 = vpop.f32.mrb[0].mxu0
        %v5348 = vpop.f32.mrb[0].mxu0
        %v5349 = vadd.f32 0.0, %v5348
        %v5350 = vpop.f32.mrb[0].mxu0
        %5351 = vmatprep.mubr.bf16.mxu0 0
        %5352 = vmatmul.mubr.bf16.gmra.mrb[0].mxu0 %v5148
        %v5353 = vpop.f32.mrb[0].mxu0
        %v5354 = vadd.f32 0.0, %v5353
        %v5355 = vpop.f32.mrb[0].mxu0
        %v5356 = vpop.f32.mrb[0].mxu0
        %v5357 = vadd.f32 0.0, %v5356
        %v5358 = vpop.f32.mrb[0].mxu0
        %5359 = vmatprep.mubr.bf16.mxu0 0
        %5360 = vmatmul.mubr.bf16.gmra.mrb[0].mxu0 %v5149
        %v5361 = vpop.f32.mrb[0].mxu0
        %v5362 = vadd.f32 0.0, %v5361
        %v5363 = vpop.f32.mrb[0].mxu0
        %v5364 = vpop.f32.mrb[0].mxu0
        %v5365 = vadd.f32 0.0, %v5364
        %v5366 = vpop.f32.mrb[0].mxu0
        %5367 = vmatprep.mubr.bf16.mxu0 0
        %5368 = vmatmul.mubr.bf16.gmra.mrb[0].mxu0 %v5150
        %v5369 = vpop.f32.mrb[0].mxu0
        %v5370 = vadd.f32 0.0, %v5369
        %v5371 = vpop.f32.mrb[0].mxu0
        %v5372 = vpop.f32.mrb[0].mxu0
        %v5373 = vadd.f32 0.0, %v5372
        %v5374 = vpop.f32.mrb[0].mxu0
        %5375 = vdwg.mxu0
        %v5376 = vadd.f32 %v4989, %v5250
        %v5377 = vadd.f32 %v4990, %v5253
        %v5378 = vadd.f32 %v4991, %v5258
        %v5379 = vadd.f32 %v4992, %v5261
        %v5380 = vadd.f32 %v4993, %v5266
        %v5381 = vadd.f32 %v4994, %v5269
        %v5382 = vadd.f32 %v4995, %v5274
        %v5383 = vadd.f32 %v4996, %v5277
        %v5384 = vadd.f32 %v4997, %v5282
        %v5385 = vadd.f32 %v4998, %v5285
        %v5386 = vadd.f32 %v4999, %v5290
        %v5387 = vadd.f32 %v5000, %v5293
        %v5388 = vadd.f32 %v5001, %v5298
        %v5389 = vadd.f32 %v5002, %v5301
        %v5390 = vadd.f32 %v5003, %v5306
        %v5391 = vadd.f32 %v5004, %v5309
        %v5392 = vadd.f32 %v5005, %v5314
        %v5393 = vadd.f32 %v5006, %v5317
        %v5394 = vadd.f32 %v5007, %v5322
        %v5395 = vadd.f32 %v5008, %v5325
        %v5396 = vadd.f32 %v5009, %v5330
        %v5397 = vadd.f32 %v5010, %v5333
        %v5398 = vadd.f32 %v5011, %v5338
        %v5399 = vadd.f32 %v5012, %v5341
        %v5400 = vadd.f32 %v5013, %v5346
        %v5401 = vadd.f32 %v5014, %v5349
        %v5402 = vadd.f32 %v5015, %v5354
        %v5403 = vadd.f32 %v5016, %v5357
        %v5404 = vadd.f32 %v5017, %v5362
        %v5405 = vadd.f32 %v5018, %v5365
        %v5406 = vadd.f32 %v5019, %v5370
        %v5407 = vadd.f32 %v5020, %v5373
        %v5408 = vld [vmem:[%s5021] sm:$0xf]
        %v5409 = vld [vmem:[%s5021 + $0x4] sm:$0xf]
        %v5410 = vld [vmem:[%s5021 + $0x8] sm:$0x1]
        %v5411 = vld [vmem:[%s5021 + $0xc] sm:$0xf]
        %v5412 = vld [vmem:[%s5021 + $0x10] sm:$0xf]
        %v5413 = vld [vmem:[%s5021 + $0x14] sm:$0x1]
        %v5414 = vld [vmem:[%s5021 + $0x18] sm:$0xf]
        %v5415 = vld [vmem:[%s5021 + $0x1c] sm:$0xf]
        %v5416 = vld [vmem:[%s5021 + $0x20] sm:$0x1]
        %v5417 = vld [vmem:[%s5021 + $0x24] sm:$0xf]
        %v5418 = vld [vmem:[%s5021 + $0x28] sm:$0xf]
        %v5419 = vld [vmem:[%s5021 + $0x2c] sm:$0x1]
        %v5420 = vld [vmem:[%s5021 + $0x30] sm:$0xf]
        %v5421 = vld [vmem:[%s5021 + $0x34] sm:$0xf]
        %v5422 = vld [vmem:[%s5021 + $0x38] sm:$0x1]
        %v5423 = vld [vmem:[%s5021 + $0x3c] sm:$0xf]
        %v5424 = vld [vmem:[%s5021 + $0x40] sm:$0xf]
        %v5425 = vld [vmem:[%s5021 + $0x44] sm:$0x1]
        %v5426 = vld [vmem:[%s5021 + $0x48] sm:$0xf]
        %v5427 = vld [vmem:[%s5021 + $0x4c] sm:$0xf]
        %v5428 = vld [vmem:[%s5021 + $0x50] sm:$0x1]
        %v5429 = vld [vmem:[%s5021 + $0x54] sm:$0xf]
        %v5430 = vld [vmem:[%s5021 + $0x58] sm:$0xf]
        %v5431 = vld [vmem:[%s5021 + $0x5c] sm:$0x1]
        %v5432 = vld [vmem:[%s5021 + $0x60] sm:$0xf]
        %v5433 = vld [vmem:[%s5021 + $0x64] sm:$0xf]
        %v5434 = vld [vmem:[%s5021 + $0x68] sm:$0x1]
        %v5435 = vld [vmem:[%s5021 + $0x6c] sm:$0xf]
        %v5436 = vld [vmem:[%s5021 + $0x70] sm:$0xf]
        %v5437 = vld [vmem:[%s5021 + $0x74] sm:$0x1]
        %v5438 = vld [vmem:[%s5021 + $0x78] sm:$0xf]
        %v5439 = vld [vmem:[%s5021 + $0x7c] sm:$0xf]
        %v5440 = vld [vmem:[%s5021 + $0x80] sm:$0x1]
        %v5441 = vld [vmem:[%s5021 + $0x84] sm:$0xf]
        %v5442 = vld [vmem:[%s5021 + $0x88] sm:$0xf]
        %v5443 = vld [vmem:[%s5021 + $0x8c] sm:$0x1]
        %v5444 = vld [vmem:[%s5021 + $0x90] sm:$0xf]
        %v5445 = vld [vmem:[%s5021 + $0x94] sm:$0xf]
        %v5446 = vld [vmem:[%s5021 + $0x98] sm:$0x1]
        %v5447 = vld [vmem:[%s5021 + $0x9c] sm:$0xf]
        %v5448 = vld [vmem:[%s5021 + $0xa0] sm:$0xf]
        %v5449 = vld [vmem:[%s5021 + $0xa4] sm:$0x1]
        %v5450 = vld [vmem:[%s5021 + $0xa8] sm:$0xf]
        %v5451 = vld [vmem:[%s5021 + $0xac] sm:$0xf]
        %v5452 = vld [vmem:[%s5021 + $0xb0] sm:$0x1]
        %v5453 = vld [vmem:[%s5021 + $0xb4] sm:$0xf]
        %v5454 = vld [vmem:[%s5021 + $0xb8] sm:$0xf]
        %v5455 = vld [vmem:[%s5021 + $0xbc] sm:$0x1]
        %v5457 = vshrl.u32 %v5408, 16
        %v5459 = vrot.slane %v5457, 4
        %v5460 = vshll.u32 %v5408, 16
        %v5462 = vrot.slane %v5460, 5
        %v5463 = vor.u32 %v5459, %v5462
        %v5464 = vrot.slane %v5463, 4
        %v5466 = vshll.u32 %v5409, 16
        %v5468 = vrot.slane %v5466, 5
        %v5469 = vsel %vm1918, %v5464, %v5468
        %v5470 = vshrl.u32 %v5409, 16
        %v5472 = vrot.slane %v5470, 4
        %v5473 = vor.u32 %v5472, %v5468
        %v5474 = vrot.slane %v5473, 4
        %v5476 = vshll.u32 %v5410, 16
        %v5478 = vrot.slane %v5476, 5
        %v5479 = vsel %vm1918, %v5474, %v5478
        %v5481 = vshrl.u32 %v5411, 16
        %v5483 = vrot.slane %v5481, 4
        %v5484 = vshll.u32 %v5411, 16
        %v5486 = vrot.slane %v5484, 5
        %v5487 = vor.u32 %v5483, %v5486
        %v5488 = vrot.slane %v5487, 4
        %v5490 = vshll.u32 %v5412, 16
        %v5492 = vrot.slane %v5490, 5
        %v5493 = vsel %vm1918, %v5488, %v5492
        %v5494 = vshrl.u32 %v5412, 16
        %v5496 = vrot.slane %v5494, 4
        %v5497 = vor.u32 %v5496, %v5492
        %v5498 = vrot.slane %v5497, 4
        %v5500 = vshll.u32 %v5413, 16
        %v5502 = vrot.slane %v5500, 5
        %v5503 = vsel %vm1918, %v5498, %v5502
        %v5505 = vshrl.u32 %v5414, 16
        %v5507 = vrot.slane %v5505, 4
        %v5508 = vshll.u32 %v5414, 16
        %v5510 = vrot.slane %v5508, 5
        %v5511 = vor.u32 %v5507, %v5510
        %v5512 = vrot.slane %v5511, 4
        %v5514 = vshll.u32 %v5415, 16
        %v5516 = vrot.slane %v5514, 5
        %v5517 = vsel %vm1918, %v5512, %v5516
        %v5518 = vshrl.u32 %v5415, 16
        %v5520 = vrot.slane %v5518, 4
        %v5521 = vor.u32 %v5520, %v5516
        %v5522 = vrot.slane %v5521, 4
        %v5524 = vshll.u32 %v5416, 16
        %v5526 = vrot.slane %v5524, 5
        %v5527 = vsel %vm1918, %v5522, %v5526
        %v5529 = vshrl.u32 %v5417, 16
        %v5531 = vrot.slane %v5529, 4
        %v5532 = vshll.u32 %v5417, 16
        %v5534 = vrot.slane %v5532, 5
        %v5535 = vor.u32 %v5531, %v5534
        %v5536 = vrot.slane %v5535, 4
        %v5538 = vshll.u32 %v5418, 16
        %v5540 = vrot.slane %v5538, 5
        %v5541 = vsel %vm1918, %v5536, %v5540
        %v5542 = vshrl.u32 %v5418, 16
        %v5544 = vrot.slane %v5542, 4
        %v5545 = vor.u32 %v5544, %v5540
        %v5546 = vrot.slane %v5545, 4
        %v5548 = vshll.u32 %v5419, 16
        %v5550 = vrot.slane %v5548, 5
        %v5551 = vsel %vm1918, %v5546, %v5550
        %v5553 = vshrl.u32 %v5420, 16
        %v5555 = vrot.slane %v5553, 4
        %v5556 = vshll.u32 %v5420, 16
        %v5558 = vrot.slane %v5556, 5
        %v5559 = vor.u32 %v5555, %v5558
        %v5560 = vrot.slane %v5559, 4
        %v5562 = vshll.u32 %v5421, 16
        %v5564 = vrot.slane %v5562, 5
        %v5565 = vsel %vm1918, %v5560, %v5564
        %v5566 = vshrl.u32 %v5421, 16
        %v5568 = vrot.slane %v5566, 4
        %v5569 = vor.u32 %v5568, %v5564
        %v5570 = vrot.slane %v5569, 4
        %v5572 = vshll.u32 %v5422, 16
        %v5574 = vrot.slane %v5572, 5
        %v5575 = vsel %vm1918, %v5570, %v5574
        %v5577 = vshrl.u32 %v5423, 16
        %v5579 = vrot.slane %v5577, 4
        %v5580 = vshll.u32 %v5423, 16
        %v5582 = vrot.slane %v5580, 5
        %v5583 = vor.u32 %v5579, %v5582
        %v5584 = vrot.slane %v5583, 4
        %v5586 = vshll.u32 %v5424, 16
        %v5588 = vrot.slane %v5586, 5
        %v5589 = vsel %vm1918, %v5584, %v5588
        %v5590 = vshrl.u32 %v5424, 16
        %v5592 = vrot.slane %v5590, 4
        %v5593 = vor.u32 %v5592, %v5588
        %v5594 = vrot.slane %v5593, 4
        %v5596 = vshll.u32 %v5425, 16
        %v5598 = vrot.slane %v5596, 5
        %v5599 = vsel %vm1918, %v5594, %v5598
        %v5601 = vshrl.u32 %v5426, 16
        %v5603 = vrot.slane %v5601, 4
        %v5604 = vshll.u32 %v5426, 16
        %v5606 = vrot.slane %v5604, 5
        %v5607 = vor.u32 %v5603, %v5606
        %v5608 = vrot.slane %v5607, 4
        %v5610 = vshll.u32 %v5427, 16
        %v5612 = vrot.slane %v5610, 5
        %v5613 = vsel %vm1918, %v5608, %v5612
        %v5614 = vshrl.u32 %v5427, 16
        %v5616 = vrot.slane %v5614, 4
        %v5617 = vor.u32 %v5616, %v5612
        %v5618 = vrot.slane %v5617, 4
        %v5620 = vshll.u32 %v5428, 16
        %v5622 = vrot.slane %v5620, 5
        %v5623 = vsel %vm1918, %v5618, %v5622
        %v5625 = vshrl.u32 %v5429, 16
        %v5627 = vrot.slane %v5625, 4
        %v5628 = vshll.u32 %v5429, 16
        %v5630 = vrot.slane %v5628, 5
        %v5631 = vor.u32 %v5627, %v5630
        %v5632 = vrot.slane %v5631, 4
        %v5634 = vshll.u32 %v5430, 16
        %v5636 = vrot.slane %v5634, 5
        %v5637 = vsel %vm1918, %v5632, %v5636
        %v5638 = vshrl.u32 %v5430, 16
        %v5640 = vrot.slane %v5638, 4
        %v5641 = vor.u32 %v5640, %v5636
        %v5642 = vrot.slane %v5641, 4
        %v5644 = vshll.u32 %v5431, 16
        %v5646 = vrot.slane %v5644, 5
        %v5647 = vsel %vm1918, %v5642, %v5646
        %v5649 = vshrl.u32 %v5432, 16
        %v5651 = vrot.slane %v5649, 4
        %v5652 = vshll.u32 %v5432, 16
        %v5654 = vrot.slane %v5652, 5
        %v5655 = vor.u32 %v5651, %v5654
        %v5656 = vrot.slane %v5655, 4
        %v5658 = vshll.u32 %v5433, 16
        %v5660 = vrot.slane %v5658, 5
        %v5661 = vsel %vm1918, %v5656, %v5660
        %v5662 = vshrl.u32 %v5433, 16
        %v5664 = vrot.slane %v5662, 4
        %v5665 = vor.u32 %v5664, %v5660
        %v5666 = vrot.slane %v5665, 4
        %v5668 = vshll.u32 %v5434, 16
        %v5670 = vrot.slane %v5668, 5
        %v5671 = vsel %vm1918, %v5666, %v5670
        %v5673 = vshrl.u32 %v5435, 16
        %v5675 = vrot.slane %v5673, 4
        %v5676 = vshll.u32 %v5435, 16
        %v5678 = vrot.slane %v5676, 5
        %v5679 = vor.u32 %v5675, %v5678
        %v5680 = vrot.slane %v5679, 4
        %v5682 = vshll.u32 %v5436, 16
        %v5684 = vrot.slane %v5682, 5
        %v5685 = vsel %vm1918, %v5680, %v5684
        %v5686 = vshrl.u32 %v5436, 16
        %v5688 = vrot.slane %v5686, 4
        %v5689 = vor.u32 %v5688, %v5684
        %v5690 = vrot.slane %v5689, 4
        %v5692 = vshll.u32 %v5437, 16
        %v5694 = vrot.slane %v5692, 5
        %v5695 = vsel %vm1918, %v5690, %v5694
        %v5697 = vshrl.u32 %v5438, 16
        %v5699 = vrot.slane %v5697, 4
        %v5700 = vshll.u32 %v5438, 16
        %v5702 = vrot.slane %v5700, 5
        %v5703 = vor.u32 %v5699, %v5702
        %v5704 = vrot.slane %v5703, 4
        %v5706 = vshll.u32 %v5439, 16
        %v5708 = vrot.slane %v5706, 5
        %v5709 = vsel %vm1918, %v5704, %v5708
        %v5710 = vshrl.u32 %v5439, 16
        %v5712 = vrot.slane %v5710, 4
        %v5713 = vor.u32 %v5712, %v5708
        %v5714 = vrot.slane %v5713, 4
        %v5716 = vshll.u32 %v5440, 16
        %v5718 = vrot.slane %v5716, 5
        %v5719 = vsel %vm1918, %v5714, %v5718
        %v5721 = vshrl.u32 %v5441, 16
        %v5723 = vrot.slane %v5721, 4
        %v5724 = vshll.u32 %v5441, 16
        %v5726 = vrot.slane %v5724, 5
        %v5727 = vor.u32 %v5723, %v5726
        %v5728 = vrot.slane %v5727, 4
        %v5730 = vshll.u32 %v5442, 16
        %v5732 = vrot.slane %v5730, 5
        %v5733 = vsel %vm1918, %v5728, %v5732
        %v5734 = vshrl.u32 %v5442, 16
        %v5736 = vrot.slane %v5734, 4
        %v5737 = vor.u32 %v5736, %v5732
        %v5738 = vrot.slane %v5737, 4
        %v5740 = vshll.u32 %v5443, 16
        %v5742 = vrot.slane %v5740, 5
        %v5743 = vsel %vm1918, %v5738, %v5742
        %v5745 = vshrl.u32 %v5444, 16
        %v5747 = vrot.slane %v5745, 4
        %v5748 = vshll.u32 %v5444, 16
        %v5750 = vrot.slane %v5748, 5
        %v5751 = vor.u32 %v5747, %v5750
        %v5752 = vrot.slane %v5751, 4
        %v5754 = vshll.u32 %v5445, 16
        %v5756 = vrot.slane %v5754, 5
        %v5757 = vsel %vm1918, %v5752, %v5756
        %v5758 = vshrl.u32 %v5445, 16
        %v5760 = vrot.slane %v5758, 4
        %v5761 = vor.u32 %v5760, %v5756
        %v5762 = vrot.slane %v5761, 4
        %v5764 = vshll.u32 %v5446, 16
        %v5766 = vrot.slane %v5764, 5
        %v5767 = vsel %vm1918, %v5762, %v5766
        %v5769 = vshrl.u32 %v5447, 16
        %v5771 = vrot.slane %v5769, 4
        %v5772 = vshll.u32 %v5447, 16
        %v5774 = vrot.slane %v5772, 5
        %v5775 = vor.u32 %v5771, %v5774
        %v5776 = vrot.slane %v5775, 4
        %v5778 = vshll.u32 %v5448, 16
        %v5780 = vrot.slane %v5778, 5
        %v5781 = vsel %vm1918, %v5776, %v5780
        %v5782 = vshrl.u32 %v5448, 16
        %v5784 = vrot.slane %v5782, 4
        %v5785 = vor.u32 %v5784, %v5780
        %v5786 = vrot.slane %v5785, 4
        %v5788 = vshll.u32 %v5449, 16
        %v5790 = vrot.slane %v5788, 5
        %v5791 = vsel %vm1918, %v5786, %v5790
        %v5793 = vshrl.u32 %v5450, 16
        %v5795 = vrot.slane %v5793, 4
        %v5796 = vshll.u32 %v5450, 16
        %v5798 = vrot.slane %v5796, 5
        %v5799 = vor.u32 %v5795, %v5798
        %v5800 = vrot.slane %v5799, 4
        %v5802 = vshll.u32 %v5451, 16
        %v5804 = vrot.slane %v5802, 5
        %v5805 = vsel %vm1918, %v5800, %v5804
        %v5806 = vshrl.u32 %v5451, 16
        %v5808 = vrot.slane %v5806, 4
        %v5809 = vor.u32 %v5808, %v5804
        %v5810 = vrot.slane %v5809, 4
        %v5812 = vshll.u32 %v5452, 16
        %v5814 = vrot.slane %v5812, 5
        %v5815 = vsel %vm1918, %v5810, %v5814
        %v5817 = vshrl.u32 %v5453, 16
        %v5819 = vrot.slane %v5817, 4
        %v5820 = vshll.u32 %v5453, 16
        %v5822 = vrot.slane %v5820, 5
        %v5823 = vor.u32 %v5819, %v5822
        %v5824 = vrot.slane %v5823, 4
        %v5826 = vshll.u32 %v5454, 16
        %v5828 = vrot.slane %v5826, 5
        %v5829 = vsel %vm1918, %v5824, %v5828
        %v5830 = vshrl.u32 %v5454, 16
        %v5832 = vrot.slane %v5830, 4
        %v5833 = vor.u32 %v5832, %v5828
        %v5834 = vrot.slane %v5833, 4
        %v5836 = vshll.u32 %v5455, 16
        %v5838 = vrot.slane %v5836, 5
        %v5839 = vsel %vm1918, %v5834, %v5838
        %s5840 = scalar_lea.vmem [#allocation8], 448
        %v5841 = vld [vmem:[%s5840] sm:$0xf]
        %v5842 = vld [vmem:[%s5840 + $0x4] sm:$0xf]
        %v5843 = vld [vmem:[%s5840 + $0x8] sm:$0xf]
        %v5844 = vld [vmem:[%s5840 + $0xc] sm:$0xf]
        %v5845 = vld [vmem:[%s5840 + $0x10] sm:$0xf]
        %v5846 = vld [vmem:[%s5840 + $0x14] sm:$0xf]
        %v5847 = vld [vmem:[%s5840 + $0x18] sm:$0xf]
        %v5848 = vld [vmem:[%s5840 + $0x1c] sm:$0xf]
        %v5849 = vld [vmem:[%s5840 + $0x20] sm:$0xf]
        %v5850 = vld [vmem:[%s5840 + $0x24] sm:$0xf]
        %v5851 = vld [vmem:[%s5840 + $0x28] sm:$0xf]
        %v5852 = vld [vmem:[%s5840 + $0x2c] sm:$0xf]
        %v5853 = vld [vmem:[%s5840 + $0x30] sm:$0xf]
        %v5854 = vld [vmem:[%s5840 + $0x34] sm:$0xf]
        %v5855 = vld [vmem:[%s5840 + $0x38] sm:$0xf]
        %v5856 = vld [vmem:[%s5840 + $0x3c] sm:$0xf]
        %v5857 = vunpack.c.l.b16 %v5469
        %v5858 = vunpack.c.l.b16 %v5479
        %v5859 = vunpack.c.l.b16 %v5493
        %v5860 = vunpack.c.l.b16 %v5503
        %v5861 = vunpack.c.l.b16 %v5517
        %v5862 = vunpack.c.l.b16 %v5527
        %v5863 = vunpack.c.l.b16 %v5541
        %v5864 = vunpack.c.l.b16 %v5551
        %v5865 = vunpack.c.l.b16 %v5565
        %v5866 = vunpack.c.l.b16 %v5575
        %v5867 = vunpack.c.l.b16 %v5589
        %v5868 = vunpack.c.l.b16 %v5599
        %v5869 = vunpack.c.l.b16 %v5613
        %v5870 = vunpack.c.l.b16 %v5623
        %v5871 = vunpack.c.l.b16 %v5637
        %v5872 = vunpack.c.l.b16 %v5647
        %v5873 = vunpack.c.l.b16 %v5661
        %v5874 = vunpack.c.l.b16 %v5671
        %v5875 = vunpack.c.l.b16 %v5685
        %v5876 = vunpack.c.l.b16 %v5695
        %v5877 = vunpack.c.l.b16 %v5709
        %v5878 = vunpack.c.l.b16 %v5719
        %v5879 = vunpack.c.l.b16 %v5733
        %v5880 = vunpack.c.l.b16 %v5743
        %v5881 = vunpack.c.l.b16 %v5757
        %v5882 = vunpack.c.l.b16 %v5767
        %v5883 = vunpack.c.l.b16 %v5781
        %v5884 = vunpack.c.l.b16 %v5791
        %v5885 = vunpack.c.l.b16 %v5805
        %v5886 = vunpack.c.l.b16 %v5815
        %v5887 = vunpack.c.l.b16 %v5829
        %v5888 = vunpack.c.l.b16 %v5839
        %v5889 = vpack.c.b16 %v5858, %v5857
        %v5890 = vpack.c.b16 %v5860, %v5859
        %v5891 = vpack.c.b16 %v5862, %v5861
        %v5892 = vpack.c.b16 %v5864, %v5863
        %v5893 = vpack.c.b16 %v5866, %v5865
        %v5894 = vpack.c.b16 %v5868, %v5867
        %v5895 = vpack.c.b16 %v5870, %v5869
        %v5896 = vpack.c.b16 %v5872, %v5871
        %v5897 = vpack.c.b16 %v5874, %v5873
        %v5898 = vpack.c.b16 %v5876, %v5875
        %v5899 = vpack.c.b16 %v5878, %v5877
        %v5900 = vpack.c.b16 %v5880, %v5879
        %v5901 = vpack.c.b16 %v5882, %v5881
        %v5902 = vpack.c.b16 %v5884, %v5883
        %v5903 = vpack.c.b16 %v5886, %v5885
        %v5904 = vpack.c.b16 %v5888, %v5887
        %v5937 = vunpack.c.l.b16 %v5841
        %v5938 = vunpack.c.l.b16 %v5842
        %v5939 = vunpack.c.l.b16 %v5843
        %v5940 = vunpack.c.l.b16 %v5844
        %v5941 = vunpack.c.l.b16 %v5845
        %v5942 = vunpack.c.l.b16 %v5846
        %v5943 = vunpack.c.l.b16 %v5847
        %v5944 = vunpack.c.l.b16 %v5848
        %v5945 = vunpack.c.l.b16 %v5849
        %v5946 = vunpack.c.l.b16 %v5850
        %v5947 = vunpack.c.l.b16 %v5851
        %v5948 = vunpack.c.l.b16 %v5852
        %v5949 = vunpack.c.l.b16 %v5853
        %v5950 = vunpack.c.l.b16 %v5854
        %v5951 = vunpack.c.l.b16 %v5855
        %v5952 = vunpack.c.l.b16 %v5856
        %v5953 = vpack.c.b16 %v5938, %v5937
        %v5954 = vpack.c.b16 %v5940, %v5939
        %v5955 = vpack.c.b16 %v5942, %v5941
        %v5956 = vpack.c.b16 %v5944, %v5943
        %v5957 = vpack.c.b16 %v5946, %v5945
        %v5958 = vpack.c.b16 %v5948, %v5947
        %v5959 = vpack.c.b16 %v5950, %v5949
        %v5960 = vpack.c.b16 %v5952, %v5951
        %5969 = vmatprep.subr.bf16.mxu0 0
        %5970 = vmatpush1.bf16.msra.mxu0 %v5953
        %5971 = vmatprep.subr.bf16.mxu0 0
        %5972 = vmatpush1.bf16.msra.mxu0 %v5954
        %5973 = vmatprep.subr.bf16.mxu0 0
        %5974 = vmatpush1.bf16.msra.mxu0 %v5955
        %5975 = vmatprep.subr.bf16.mxu0 0
        %5976 = vmatpush1.bf16.msra.mxu0 %v5956
        %5977 = vmatprep.subr.bf16.mxu0 0
        %5978 = vmatpush1.bf16.msra.mxu0 %v5957
        %5979 = vmatprep.subr.bf16.mxu0 0
        %5980 = vmatpush1.bf16.msra.mxu0 %v5958
        %5981 = vmatprep.subr.bf16.mxu0 0
        %5982 = vmatpush1.bf16.msra.mxu0 %v5959
        %5983 = vmatprep.subr.bf16.mxu0 0
        %5984 = vmatpush1.bf16.msra.mxu0 %v5960
        %5985 = vmatprep.subr.bf16.mxu0 0
        %5986 = vmatpush1.bf16.msra.mxu0 0
        %5987 = vmatprep.subr.bf16.mxu0 0
        %5988 = vmatpush1.bf16.msra.mxu0 0
        %5989 = vmatprep.subr.bf16.mxu0 0
        %5990 = vmatpush1.bf16.msra.mxu0 0
        %5991 = vmatprep.subr.bf16.mxu0 0
        %5992 = vmatpush1.bf16.msra.mxu0 0
        %5993 = vmatprep.subr.bf16.mxu0 0
        %5994 = vmatpush1.bf16.msra.mxu0 0
        %5995 = vmatprep.subr.bf16.mxu0 0
        %5996 = vmatpush1.bf16.msra.mxu0 0
        %5997 = vmatprep.subr.bf16.mxu0 0
        %5998 = vmatpush1.bf16.msra.mxu0 0
        %5999 = vmatprep.subr.bf16.mxu0 0
        %6000 = vmatpush1.bf16.msra.mxu0 0
        %6001 = vmatprep.mubr.bf16.mxu0 0
        %6002 = vmatmul.mubr.bf16.gmra.mrb[0].mxu0 %v5889
        %v6003 = vpop.f32.mrb[0].mxu0
        %v6004 = vadd.f32 0.0, %v6003
        %v6005 = vpop.f32.mrb[0].mxu0
        %v6006 = vpop.f32.mrb[0].mxu0
        %v6007 = vadd.f32 0.0, %v6006
        %v6008 = vpop.f32.mrb[0].mxu0
        %6009 = vmatprep.mubr.bf16.mxu0 0
        %6010 = vmatmul.mubr.bf16.gmra.mrb[0].mxu0 %v5890
        %v6011 = vpop.f32.mrb[0].mxu0
        %v6012 = vadd.f32 0.0, %v6011
        %v6013 = vpop.f32.mrb[0].mxu0
        %v6014 = vpop.f32.mrb[0].mxu0
        %v6015 = vadd.f32 0.0, %v6014
        %v6016 = vpop.f32.mrb[0].mxu0
        %6017 = vmatprep.mubr.bf16.mxu0 0
        %6018 = vmatmul.mubr.bf16.gmra.mrb[0].mxu0 %v5891
        %v6019 = vpop.f32.mrb[0].mxu0
        %v6020 = vadd.f32 0.0, %v6019
        %v6021 = vpop.f32.mrb[0].mxu0
        %v6022 = vpop.f32.mrb[0].mxu0
        %v6023 = vadd.f32 0.0, %v6022
        %v6024 = vpop.f32.mrb[0].mxu0
        %6025 = vmatprep.mubr.bf16.mxu0 0
        %6026 = vmatmul.mubr.bf16.gmra.mrb[0].mxu0 %v5892
        %v6027 = vpop.f32.mrb[0].mxu0
        %v6028 = vadd.f32 0.0, %v6027
        %v6029 = vpop.f32.mrb[0].mxu0
        %v6030 = vpop.f32.mrb[0].mxu0
        %v6031 = vadd.f32 0.0, %v6030
        %v6032 = vpop.f32.mrb[0].mxu0
        %6033 = vmatprep.mubr.bf16.mxu0 0
        %6034 = vmatmul.mubr.bf16.gmra.mrb[0].mxu0 %v5893
        %v6035 = vpop.f32.mrb[0].mxu0
        %v6036 = vadd.f32 0.0, %v6035
        %v6037 = vpop.f32.mrb[0].mxu0
        %v6038 = vpop.f32.mrb[0].mxu0
        %v6039 = vadd.f32 0.0, %v6038
        %v6040 = vpop.f32.mrb[0].mxu0
        %6041 = vmatprep.mubr.bf16.mxu0 0
        %6042 = vmatmul.mubr.bf16.gmra.mrb[0].mxu0 %v5894
        %v6043 = vpop.f32.mrb[0].mxu0
        %v6044 = vadd.f32 0.0, %v6043
        %v6045 = vpop.f32.mrb[0].mxu0
        %v6046 = vpop.f32.mrb[0].mxu0
        %v6047 = vadd.f32 0.0, %v6046
        %v6048 = vpop.f32.mrb[0].mxu0
        %6049 = vmatprep.mubr.bf16.mxu0 0
        %6050 = vmatmul.mubr.bf16.gmra.mrb[0].mxu0 %v5895
        %v6051 = vpop.f32.mrb[0].mxu0
        %v6052 = vadd.f32 0.0, %v6051
        %v6053 = vpop.f32.mrb[0].mxu0
        %v6054 = vpop.f32.mrb[0].mxu0
        %v6055 = vadd.f32 0.0, %v6054
        %v6056 = vpop.f32.mrb[0].mxu0
        %6057 = vmatprep.mubr.bf16.mxu0 0
        %6058 = vmatmul.mubr.bf16.gmra.mrb[0].mxu0 %v5896
        %v6059 = vpop.f32.mrb[0].mxu0
        %v6060 = vadd.f32 0.0, %v6059
        %v6061 = vpop.f32.mrb[0].mxu0
        %v6062 = vpop.f32.mrb[0].mxu0
        %v6063 = vadd.f32 0.0, %v6062
        %v6064 = vpop.f32.mrb[0].mxu0
        %6065 = vmatprep.mubr.bf16.mxu0 0
        %6066 = vmatmul.mubr.bf16.gmra.mrb[0].mxu0 %v5897
        %v6067 = vpop.f32.mrb[0].mxu0
        %v6068 = vadd.f32 0.0, %v6067
        %v6069 = vpop.f32.mrb[0].mxu0
        %v6070 = vpop.f32.mrb[0].mxu0
        %v6071 = vadd.f32 0.0, %v6070
        %v6072 = vpop.f32.mrb[0].mxu0
        %6073 = vmatprep.mubr.bf16.mxu0 0
        %6074 = vmatmul.mubr.bf16.gmra.mrb[0].mxu0 %v5898
        %v6075 = vpop.f32.mrb[0].mxu0
        %v6076 = vadd.f32 0.0, %v6075
        %v6077 = vpop.f32.mrb[0].mxu0
        %v6078 = vpop.f32.mrb[0].mxu0
        %v6079 = vadd.f32 0.0, %v6078
        %v6080 = vpop.f32.mrb[0].mxu0
        %6081 = vmatprep.mubr.bf16.mxu0 0
        %6082 = vmatmul.mubr.bf16.gmra.mrb[0].mxu0 %v5899
        %v6083 = vpop.f32.mrb[0].mxu0
        %v6084 = vadd.f32 0.0, %v6083
        %v6085 = vpop.f32.mrb[0].mxu0
        %v6086 = vpop.f32.mrb[0].mxu0
        %v6087 = vadd.f32 0.0, %v6086
        %v6088 = vpop.f32.mrb[0].mxu0
        %6089 = vmatprep.mubr.bf16.mxu0 0
        %6090 = vmatmul.mubr.bf16.gmra.mrb[0].mxu0 %v5900
        %v6091 = vpop.f32.mrb[0].mxu0
        %v6092 = vadd.f32 0.0, %v6091
        %v6093 = vpop.f32.mrb[0].mxu0
        %v6094 = vpop.f32.mrb[0].mxu0
        %v6095 = vadd.f32 0.0, %v6094
        %v6096 = vpop.f32.mrb[0].mxu0
        %6097 = vmatprep.mubr.bf16.mxu0 0
        %6098 = vmatmul.mubr.bf16.gmra.mrb[0].mxu0 %v5901
        %v6099 = vpop.f32.mrb[0].mxu0
        %v6100 = vadd.f32 0.0, %v6099
        %v6101 = vpop.f32.mrb[0].mxu0
        %v6102 = vpop.f32.mrb[0].mxu0
        %v6103 = vadd.f32 0.0, %v6102
        %v6104 = vpop.f32.mrb[0].mxu0
        %6105 = vmatprep.mubr.bf16.mxu0 0
        %6106 = vmatmul.mubr.bf16.gmra.mrb[0].mxu0 %v5902
        %v6107 = vpop.f32.mrb[0].mxu0
        %v6108 = vadd.f32 0.0, %v6107
        %v6109 = vpop.f32.mrb[0].mxu0
        %v6110 = vpop.f32.mrb[0].mxu0
        %v6111 = vadd.f32 0.0, %v6110
        %v6112 = vpop.f32.mrb[0].mxu0
        %6113 = vmatprep.mubr.bf16.mxu0 0
        %6114 = vmatmul.mubr.bf16.gmra.mrb[0].mxu0 %v5903
        %v6115 = vpop.f32.mrb[0].mxu0
        %v6116 = vadd.f32 0.0, %v6115
        %v6117 = vpop.f32.mrb[0].mxu0
        %v6118 = vpop.f32.mrb[0].mxu0
        %v6119 = vadd.f32 0.0, %v6118
        %v6120 = vpop.f32.mrb[0].mxu0
        %6121 = vmatprep.mubr.bf16.mxu0 0
        %6122 = vmatmul.mubr.bf16.gmra.mrb[0].mxu0 %v5904
        %v6123 = vpop.f32.mrb[0].mxu0
        %v6124 = vadd.f32 0.0, %v6123
        %v6125 = vpop.f32.mrb[0].mxu0
        %v6126 = vpop.f32.mrb[0].mxu0
        %v6127 = vadd.f32 0.0, %v6126
        %v6128 = vpop.f32.mrb[0].mxu0
        %6129 = vdwg.mxu0
        %v6130 = vadd.f32 %v5376, %v6004
        %v6131 = vadd.f32 %v5377, %v6007
        %v6132 = vadd.f32 %v5378, %v6012
        %v6133 = vadd.f32 %v5379, %v6015
        %v6134 = vadd.f32 %v5380, %v6020
        %v6135 = vadd.f32 %v5381, %v6023
        %v6136 = vadd.f32 %v5382, %v6028
        %v6137 = vadd.f32 %v5383, %v6031
        %v6138 = vadd.f32 %v5384, %v6036
        %v6139 = vadd.f32 %v5385, %v6039
        %v6140 = vadd.f32 %v5386, %v6044
        %v6141 = vadd.f32 %v5387, %v6047
        %v6142 = vadd.f32 %v5388, %v6052
        %v6143 = vadd.f32 %v5389, %v6055
        %v6144 = vadd.f32 %v5390, %v6060
        %v6145 = vadd.f32 %v5391, %v6063
        %v6146 = vadd.f32 %v5392, %v6068
        %v6147 = vadd.f32 %v5393, %v6071
        %v6148 = vadd.f32 %v5394, %v6076
        %v6149 = vadd.f32 %v5395, %v6079
        %v6150 = vadd.f32 %v5396, %v6084
        %v6151 = vadd.f32 %v5397, %v6087
        %v6152 = vadd.f32 %v5398, %v6092
        %v6153 = vadd.f32 %v5399, %v6095
        %v6154 = vadd.f32 %v5400, %v6100
        %v6155 = vadd.f32 %v5401, %v6103
        %v6156 = vadd.f32 %v5402, %v6108
        %v6157 = vadd.f32 %v5403, %v6111
        %v6158 = vadd.f32 %v5404, %v6116
        %v6159 = vadd.f32 %v5405, %v6119
        %v6160 = vadd.f32 %v5406, %v6124
        %v6161 = vadd.f32 %v5407, %v6127
        %v6162 = vld [vmem:[%s5021] sm:$0xe]
        %v6163 = vld [vmem:[%s5021 + $0xc] sm:$0xe]
        %v6164 = vld [vmem:[%s5021 + $0x18] sm:$0xe]
        %v6165 = vld [vmem:[%s5021 + $0x24] sm:$0xe]
        %v6166 = vld [vmem:[%s5021 + $0x30] sm:$0xe]
        %v6167 = vld [vmem:[%s5021 + $0x3c] sm:$0xe]
        %v6168 = vld [vmem:[%s5021 + $0x48] sm:$0xe]
        %v6169 = vld [vmem:[%s5021 + $0x54] sm:$0xe]
        %v6170 = vld [vmem:[%s5021 + $0x60] sm:$0xe]
        %v6171 = vld [vmem:[%s5021 + $0x6c] sm:$0xe]
        %v6172 = vld [vmem:[%s5021 + $0x78] sm:$0xe]
        %v6173 = vld [vmem:[%s5021 + $0x84] sm:$0xe]
        %v6174 = vld [vmem:[%s5021 + $0x90] sm:$0xe]
        %v6175 = vld [vmem:[%s5021 + $0x9c] sm:$0xe]
        %v6176 = vld [vmem:[%s5021 + $0xa8] sm:$0xe]
        %v6177 = vld [vmem:[%s5021 + $0xb4] sm:$0xe]
        %v6226 = vrot.slane %v6162, 5
        %v6227 = vrot.slane %v6226, 4
        %v6228 = vrot.slane %v5409, 5
        %v6229 = vsel %vm2948, %v6227, %v6228
        %v6230 = vrot.slane %v6228, 4
        %v6231 = vrot.slane %v5410, 5
        %v6232 = vsel %vm2948, %v6230, %v6231
        %v6233 = vrot.slane %v6163, 5
        %v6234 = vrot.slane %v6233, 4
        %v6235 = vrot.slane %v5412, 5
        %v6236 = vsel %vm2948, %v6234, %v6235
        %v6237 = vrot.slane %v6235, 4
        %v6238 = vrot.slane %v5413, 5
        %v6239 = vsel %vm2948, %v6237, %v6238
        %v6240 = vrot.slane %v6164, 5
        %v6241 = vrot.slane %v6240, 4
        %v6242 = vrot.slane %v5415, 5
        %v6243 = vsel %vm2948, %v6241, %v6242
        %v6244 = vrot.slane %v6242, 4
        %v6245 = vrot.slane %v5416, 5
        %v6246 = vsel %vm2948, %v6244, %v6245
        %v6247 = vrot.slane %v6165, 5
        %v6248 = vrot.slane %v6247, 4
        %v6249 = vrot.slane %v5418, 5
        %v6250 = vsel %vm2948, %v6248, %v6249
        %v6251 = vrot.slane %v6249, 4
        %v6252 = vrot.slane %v5419, 5
        %v6253 = vsel %vm2948, %v6251, %v6252
        %v6254 = vrot.slane %v6166, 5
        %v6255 = vrot.slane %v6254, 4
        %v6256 = vrot.slane %v5421, 5
        %v6257 = vsel %vm2948, %v6255, %v6256
        %v6258 = vrot.slane %v6256, 4
        %v6259 = vrot.slane %v5422, 5
        %v6260 = vsel %vm2948, %v6258, %v6259
        %v6261 = vrot.slane %v6167, 5
        %v6262 = vrot.slane %v6261, 4
        %v6263 = vrot.slane %v5424, 5
        %v6264 = vsel %vm2948, %v6262, %v6263
        %v6265 = vrot.slane %v6263, 4
        %v6266 = vrot.slane %v5425, 5
        %v6267 = vsel %vm2948, %v6265, %v6266
        %v6268 = vrot.slane %v6168, 5
        %v6269 = vrot.slane %v6268, 4
        %v6270 = vrot.slane %v5427, 5
        %v6271 = vsel %vm2948, %v6269, %v6270
        %v6272 = vrot.slane %v6270, 4
        %v6273 = vrot.slane %v5428, 5
        %v6274 = vsel %vm2948, %v6272, %v6273
        %v6275 = vrot.slane %v6169, 5
        %v6276 = vrot.slane %v6275, 4
        %v6277 = vrot.slane %v5430, 5
        %v6278 = vsel %vm2948, %v6276, %v6277
        %v6279 = vrot.slane %v6277, 4
        %v6280 = vrot.slane %v5431, 5
        %v6281 = vsel %vm2948, %v6279, %v6280
        %v6282 = vrot.slane %v6170, 5
        %v6283 = vrot.slane %v6282, 4
        %v6284 = vrot.slane %v5433, 5
        %v6285 = vsel %vm2948, %v6283, %v6284
        %v6286 = vrot.slane %v6284, 4
        %v6287 = vrot.slane %v5434, 5
        %v6288 = vsel %vm2948, %v6286, %v6287
        %v6289 = vrot.slane %v6171, 5
        %v6290 = vrot.slane %v6289, 4
        %v6291 = vrot.slane %v5436, 5
        %v6292 = vsel %vm2948, %v6290, %v6291
        %v6293 = vrot.slane %v6291, 4
        %v6294 = vrot.slane %v5437, 5
        %v6295 = vsel %vm2948, %v6293, %v6294
        %v6296 = vrot.slane %v6172, 5
        %v6297 = vrot.slane %v6296, 4
        %v6298 = vrot.slane %v5439, 5
        %v6299 = vsel %vm2948, %v6297, %v6298
        %v6300 = vrot.slane %v6298, 4
        %v6301 = vrot.slane %v5440, 5
        %v6302 = vsel %vm2948, %v6300, %v6301
        %v6303 = vrot.slane %v6173, 5
        %v6304 = vrot.slane %v6303, 4
        %v6305 = vrot.slane %v5442, 5
        %v6306 = vsel %vm2948, %v6304, %v6305
        %v6307 = vrot.slane %v6305, 4
        %v6308 = vrot.slane %v5443, 5
        %v6309 = vsel %vm2948, %v6307, %v6308
        %v6310 = vrot.slane %v6174, 5
        %v6311 = vrot.slane %v6310, 4
        %v6312 = vrot.slane %v5445, 5
        %v6313 = vsel %vm2948, %v6311, %v6312
        %v6314 = vrot.slane %v6312, 4
        %v6315 = vrot.slane %v5446, 5
        %v6316 = vsel %vm2948, %v6314, %v6315
        %v6317 = vrot.slane %v6175, 5
        %v6318 = vrot.slane %v6317, 4
        %v6319 = vrot.slane %v5448, 5
        %v6320 = vsel %vm2948, %v6318, %v6319
        %v6321 = vrot.slane %v6319, 4
        %v6322 = vrot.slane %v5449, 5
        %v6323 = vsel %vm2948, %v6321, %v6322
        %v6324 = vrot.slane %v6176, 5
        %v6325 = vrot.slane %v6324, 4
        %v6326 = vrot.slane %v5451, 5
        %v6327 = vsel %vm2948, %v6325, %v6326
        %v6328 = vrot.slane %v6326, 4
        %v6329 = vrot.slane %v5452, 5
        %v6330 = vsel %vm2948, %v6328, %v6329
        %v6331 = vrot.slane %v6177, 5
        %v6332 = vrot.slane %v6331, 4
        %v6333 = vrot.slane %v5454, 5
        %v6334 = vsel %vm2948, %v6332, %v6333
        %v6335 = vrot.slane %v6333, 4
        %v6336 = vrot.slane %v5455, 5
        %v6337 = vsel %vm2948, %v6335, %v6336
        %s6338 = scalar_lea.vmem [#allocation8], 512
        %v6339 = vld [vmem:[%s6338] sm:$0xf]
        %v6340 = vld [vmem:[%s6338 + $0x4] sm:$0xf]
        %v6341 = vld [vmem:[%s6338 + $0x8] sm:$0xf]
        %v6342 = vld [vmem:[%s6338 + $0xc] sm:$0xf]
        %v6343 = vld [vmem:[%s6338 + $0x10] sm:$0xf]
        %v6344 = vld [vmem:[%s6338 + $0x14] sm:$0xf]
        %v6345 = vld [vmem:[%s6338 + $0x18] sm:$0xf]
        %v6346 = vld [vmem:[%s6338 + $0x1c] sm:$0xf]
        %v6347 = vld [vmem:[%s6338 + $0x20] sm:$0xf]
        %v6348 = vld [vmem:[%s6338 + $0x24] sm:$0xf]
        %v6349 = vld [vmem:[%s6338 + $0x28] sm:$0xf]
        %v6350 = vld [vmem:[%s6338 + $0x2c] sm:$0xf]
        %v6351 = vld [vmem:[%s6338 + $0x30] sm:$0xf]
        %v6352 = vld [vmem:[%s6338 + $0x34] sm:$0xf]
        %v6353 = vld [vmem:[%s6338 + $0x38] sm:$0xf]
        %v6354 = vld [vmem:[%s6338 + $0x3c] sm:$0xf]
        %v6355 = vunpack.c.l.b16 %v6229
        %v6356 = vunpack.c.l.b16 %v6232
        %v6357 = vunpack.c.l.b16 %v6236
        %v6358 = vunpack.c.l.b16 %v6239
        %v6359 = vunpack.c.l.b16 %v6243
        %v6360 = vunpack.c.l.b16 %v6246
        %v6361 = vunpack.c.l.b16 %v6250
        %v6362 = vunpack.c.l.b16 %v6253
        %v6363 = vunpack.c.l.b16 %v6257
        %v6364 = vunpack.c.l.b16 %v6260
        %v6365 = vunpack.c.l.b16 %v6264
        %v6366 = vunpack.c.l.b16 %v6267
        %v6367 = vunpack.c.l.b16 %v6271
        %v6368 = vunpack.c.l.b16 %v6274
        %v6369 = vunpack.c.l.b16 %v6278
        %v6370 = vunpack.c.l.b16 %v6281
        %v6371 = vunpack.c.l.b16 %v6285
        %v6372 = vunpack.c.l.b16 %v6288
        %v6373 = vunpack.c.l.b16 %v6292
        %v6374 = vunpack.c.l.b16 %v6295
        %v6375 = vunpack.c.l.b16 %v6299
        %v6376 = vunpack.c.l.b16 %v6302
        %v6377 = vunpack.c.l.b16 %v6306
        %v6378 = vunpack.c.l.b16 %v6309
        %v6379 = vunpack.c.l.b16 %v6313
        %v6380 = vunpack.c.l.b16 %v6316
        %v6381 = vunpack.c.l.b16 %v6320
        %v6382 = vunpack.c.l.b16 %v6323
        %v6383 = vunpack.c.l.b16 %v6327
        %v6384 = vunpack.c.l.b16 %v6330
        %v6385 = vunpack.c.l.b16 %v6334
        %v6386 = vunpack.c.l.b16 %v6337
        %v6387 = vpack.c.b16 %v6356, %v6355
        %v6388 = vpack.c.b16 %v6358, %v6357
        %v6389 = vpack.c.b16 %v6360, %v6359
        %v6390 = vpack.c.b16 %v6362, %v6361
        %v6391 = vpack.c.b16 %v6364, %v6363
        %v6392 = vpack.c.b16 %v6366, %v6365
        %v6393 = vpack.c.b16 %v6368, %v6367
        %v6394 = vpack.c.b16 %v6370, %v6369
        %v6395 = vpack.c.b16 %v6372, %v6371
        %v6396 = vpack.c.b16 %v6374, %v6373
        %v6397 = vpack.c.b16 %v6376, %v6375
        %v6398 = vpack.c.b16 %v6378, %v6377
        %v6399 = vpack.c.b16 %v6380, %v6379
        %v6400 = vpack.c.b16 %v6382, %v6381
        %v6401 = vpack.c.b16 %v6384, %v6383
        %v6402 = vpack.c.b16 %v6386, %v6385
        %v6435 = vunpack.c.l.b16 %v6339
        %v6436 = vunpack.c.l.b16 %v6340
        %v6437 = vunpack.c.l.b16 %v6341
        %v6438 = vunpack.c.l.b16 %v6342
        %v6439 = vunpack.c.l.b16 %v6343
        %v6440 = vunpack.c.l.b16 %v6344
        %v6441 = vunpack.c.l.b16 %v6345
        %v6442 = vunpack.c.l.b16 %v6346
        %v6443 = vunpack.c.l.b16 %v6347
        %v6444 = vunpack.c.l.b16 %v6348
        %v6445 = vunpack.c.l.b16 %v6349
        %v6446 = vunpack.c.l.b16 %v6350
        %v6447 = vunpack.c.l.b16 %v6351
        %v6448 = vunpack.c.l.b16 %v6352
        %v6449 = vunpack.c.l.b16 %v6353
        %v6450 = vunpack.c.l.b16 %v6354
        %v6451 = vpack.c.b16 %v6436, %v6435
        %v6452 = vpack.c.b16 %v6438, %v6437
        %v6453 = vpack.c.b16 %v6440, %v6439
        %v6454 = vpack.c.b16 %v6442, %v6441
        %v6455 = vpack.c.b16 %v6444, %v6443
        %v6456 = vpack.c.b16 %v6446, %v6445
        %v6457 = vpack.c.b16 %v6448, %v6447
        %v6458 = vpack.c.b16 %v6450, %v6449
        %6467 = vmatprep.subr.bf16.mxu0 0
        %6468 = vmatpush1.bf16.msra.mxu0 %v6451
        %6469 = vmatprep.subr.bf16.mxu0 0
        %6470 = vmatpush1.bf16.msra.mxu0 %v6452
        %6471 = vmatprep.subr.bf16.mxu0 0
        %6472 = vmatpush1.bf16.msra.mxu0 %v6453
        %6473 = vmatprep.subr.bf16.mxu0 0
        %6474 = vmatpush1.bf16.msra.mxu0 %v6454
        %6475 = vmatprep.subr.bf16.mxu0 0
        %6476 = vmatpush1.bf16.msra.mxu0 %v6455
        %6477 = vmatprep.subr.bf16.mxu0 0
        %6478 = vmatpush1.bf16.msra.mxu0 %v6456
        %6479 = vmatprep.subr.bf16.mxu0 0
        %6480 = vmatpush1.bf16.msra.mxu0 %v6457
        %6481 = vmatprep.subr.bf16.mxu0 0
        %6482 = vmatpush1.bf16.msra.mxu0 %v6458
        %6483 = vmatprep.subr.bf16.mxu0 0
        %6484 = vmatpush1.bf16.msra.mxu0 0
        %6485 = vmatprep.subr.bf16.mxu0 0
        %6486 = vmatpush1.bf16.msra.mxu0 0
        %6487 = vmatprep.subr.bf16.mxu0 0
        %6488 = vmatpush1.bf16.msra.mxu0 0
        %6489 = vmatprep.subr.bf16.mxu0 0
        %6490 = vmatpush1.bf16.msra.mxu0 0
        %6491 = vmatprep.subr.bf16.mxu0 0
        %6492 = vmatpush1.bf16.msra.mxu0 0
        %6493 = vmatprep.subr.bf16.mxu0 0
        %6494 = vmatpush1.bf16.msra.mxu0 0
        %6495 = vmatprep.subr.bf16.mxu0 0
        %6496 = vmatpush1.bf16.msra.mxu0 0
        %6497 = vmatprep.subr.bf16.mxu0 0
        %6498 = vmatpush1.bf16.msra.mxu0 0
        %6499 = vmatprep.mubr.bf16.mxu0 0
        %6500 = vmatmul.mubr.bf16.gmra.mrb[0].mxu0 %v6387
        %v6501 = vpop.f32.mrb[0].mxu0
        %v6502 = vadd.f32 0.0, %v6501
        %v6503 = vpop.f32.mrb[0].mxu0
        %v6504 = vpop.f32.mrb[0].mxu0
        %v6505 = vadd.f32 0.0, %v6504
        %v6506 = vpop.f32.mrb[0].mxu0
        %6507 = vmatprep.mubr.bf16.mxu0 0
        %6508 = vmatmul.mubr.bf16.gmra.mrb[0].mxu0 %v6388
        %v6509 = vpop.f32.mrb[0].mxu0
        %v6510 = vadd.f32 0.0, %v6509
        %v6511 = vpop.f32.mrb[0].mxu0
        %v6512 = vpop.f32.mrb[0].mxu0
        %v6513 = vadd.f32 0.0, %v6512
        %v6514 = vpop.f32.mrb[0].mxu0
        %6515 = vmatprep.mubr.bf16.mxu0 0
        %6516 = vmatmul.mubr.bf16.gmra.mrb[0].mxu0 %v6389
        %v6517 = vpop.f32.mrb[0].mxu0
        %v6518 = vadd.f32 0.0, %v6517
        %v6519 = vpop.f32.mrb[0].mxu0
        %v6520 = vpop.f32.mrb[0].mxu0
        %v6521 = vadd.f32 0.0, %v6520
        %v6522 = vpop.f32.mrb[0].mxu0
        %6523 = vmatprep.mubr.bf16.mxu0 0
        %6524 = vmatmul.mubr.bf16.gmra.mrb[0].mxu0 %v6390
        %v6525 = vpop.f32.mrb[0].mxu0
        %v6526 = vadd.f32 0.0, %v6525
        %v6527 = vpop.f32.mrb[0].mxu0
        %v6528 = vpop.f32.mrb[0].mxu0
        %v6529 = vadd.f32 0.0, %v6528
        %v6530 = vpop.f32.mrb[0].mxu0
        %6531 = vmatprep.mubr.bf16.mxu0 0
        %6532 = vmatmul.mubr.bf16.gmra.mrb[0].mxu0 %v6391
        %v6533 = vpop.f32.mrb[0].mxu0
        %v6534 = vadd.f32 0.0, %v6533
        %v6535 = vpop.f32.mrb[0].mxu0
        %v6536 = vpop.f32.mrb[0].mxu0
        %v6537 = vadd.f32 0.0, %v6536
        %v6538 = vpop.f32.mrb[0].mxu0
        %6539 = vmatprep.mubr.bf16.mxu0 0
        %6540 = vmatmul.mubr.bf16.gmra.mrb[0].mxu0 %v6392
        %v6541 = vpop.f32.mrb[0].mxu0
        %v6542 = vadd.f32 0.0, %v6541
        %v6543 = vpop.f32.mrb[0].mxu0
        %v6544 = vpop.f32.mrb[0].mxu0
        %v6545 = vadd.f32 0.0, %v6544
        %v6546 = vpop.f32.mrb[0].mxu0
        %6547 = vmatprep.mubr.bf16.mxu0 0
        %6548 = vmatmul.mubr.bf16.gmra.mrb[0].mxu0 %v6393
        %v6549 = vpop.f32.mrb[0].mxu0
        %v6550 = vadd.f32 0.0, %v6549
        %v6551 = vpop.f32.mrb[0].mxu0
        %v6552 = vpop.f32.mrb[0].mxu0
        %v6553 = vadd.f32 0.0, %v6552
        %v6554 = vpop.f32.mrb[0].mxu0
        %6555 = vmatprep.mubr.bf16.mxu0 0
        %6556 = vmatmul.mubr.bf16.gmra.mrb[0].mxu0 %v6394
        %v6557 = vpop.f32.mrb[0].mxu0
        %v6558 = vadd.f32 0.0, %v6557
        %v6559 = vpop.f32.mrb[0].mxu0
        %v6560 = vpop.f32.mrb[0].mxu0
        %v6561 = vadd.f32 0.0, %v6560
        %v6562 = vpop.f32.mrb[0].mxu0
        %6563 = vmatprep.mubr.bf16.mxu0 0
        %6564 = vmatmul.mubr.bf16.gmra.mrb[0].mxu0 %v6395
        %v6565 = vpop.f32.mrb[0].mxu0
        %v6566 = vadd.f32 0.0, %v6565
        %v6567 = vpop.f32.mrb[0].mxu0
        %v6568 = vpop.f32.mrb[0].mxu0
        %v6569 = vadd.f32 0.0, %v6568
        %v6570 = vpop.f32.mrb[0].mxu0
        %6571 = vmatprep.mubr.bf16.mxu0 0
        %6572 = vmatmul.mubr.bf16.gmra.mrb[0].mxu0 %v6396
        %v6573 = vpop.f32.mrb[0].mxu0
        %v6574 = vadd.f32 0.0, %v6573
        %v6575 = vpop.f32.mrb[0].mxu0
        %v6576 = vpop.f32.mrb[0].mxu0
        %v6577 = vadd.f32 0.0, %v6576
        %v6578 = vpop.f32.mrb[0].mxu0
        %6579 = vmatprep.mubr.bf16.mxu0 0
        %6580 = vmatmul.mubr.bf16.gmra.mrb[0].mxu0 %v6397
        %v6581 = vpop.f32.mrb[0].mxu0
        %v6582 = vadd.f32 0.0, %v6581
        %v6583 = vpop.f32.mrb[0].mxu0
        %v6584 = vpop.f32.mrb[0].mxu0
        %v6585 = vadd.f32 0.0, %v6584
        %v6586 = vpop.f32.mrb[0].mxu0
        %6587 = vmatprep.mubr.bf16.mxu0 0
        %6588 = vmatmul.mubr.bf16.gmra.mrb[0].mxu0 %v6398
        %v6589 = vpop.f32.mrb[0].mxu0
        %v6590 = vadd.f32 0.0, %v6589
        %v6591 = vpop.f32.mrb[0].mxu0
        %v6592 = vpop.f32.mrb[0].mxu0
        %v6593 = vadd.f32 0.0, %v6592
        %v6594 = vpop.f32.mrb[0].mxu0
        %6595 = vmatprep.mubr.bf16.mxu0 0
        %6596 = vmatmul.mubr.bf16.gmra.mrb[0].mxu0 %v6399
        %v6597 = vpop.f32.mrb[0].mxu0
        %v6598 = vadd.f32 0.0, %v6597
        %v6599 = vpop.f32.mrb[0].mxu0
        %v6600 = vpop.f32.mrb[0].mxu0
        %v6601 = vadd.f32 0.0, %v6600
        %v6602 = vpop.f32.mrb[0].mxu0
        %6603 = vmatprep.mubr.bf16.mxu0 0
        %6604 = vmatmul.mubr.bf16.gmra.mrb[0].mxu0 %v6400
        %v6605 = vpop.f32.mrb[0].mxu0
        %v6606 = vadd.f32 0.0, %v6605
        %v6607 = vpop.f32.mrb[0].mxu0
        %v6608 = vpop.f32.mrb[0].mxu0
        %v6609 = vadd.f32 0.0, %v6608
        %v6610 = vpop.f32.mrb[0].mxu0
        %6611 = vmatprep.mubr.bf16.mxu0 0
        %6612 = vmatmul.mubr.bf16.gmra.mrb[0].mxu0 %v6401
        %v6613 = vpop.f32.mrb[0].mxu0
        %v6614 = vadd.f32 0.0, %v6613
        %v6615 = vpop.f32.mrb[0].mxu0
        %v6616 = vpop.f32.mrb[0].mxu0
        %v6617 = vadd.f32 0.0, %v6616
        %v6618 = vpop.f32.mrb[0].mxu0
        %6619 = vmatprep.mubr.bf16.mxu0 0
        %6620 = vmatmul.mubr.bf16.gmra.mrb[0].mxu0 %v6402
        %v6621 = vpop.f32.mrb[0].mxu0
        %v6622 = vadd.f32 0.0, %v6621
        %v6623 = vpop.f32.mrb[0].mxu0
        %v6624 = vpop.f32.mrb[0].mxu0
        %v6625 = vadd.f32 0.0, %v6624
        %v6626 = vpop.f32.mrb[0].mxu0
        %6627 = vdwg.mxu0
        %v6628 = vadd.f32 %v6130, %v6502
        %v6629 = vadd.f32 %v6131, %v6505
        %v6630 = vadd.f32 %v6132, %v6510
        %v6631 = vadd.f32 %v6133, %v6513
        %v6632 = vadd.f32 %v6134, %v6518
        %v6633 = vadd.f32 %v6135, %v6521
        %v6634 = vadd.f32 %v6136, %v6526
        %v6635 = vadd.f32 %v6137, %v6529
        %v6636 = vadd.f32 %v6138, %v6534
        %v6637 = vadd.f32 %v6139, %v6537
        %v6638 = vadd.f32 %v6140, %v6542
        %v6639 = vadd.f32 %v6141, %v6545
        %v6640 = vadd.f32 %v6142, %v6550
        %v6641 = vadd.f32 %v6143, %v6553
        %v6642 = vadd.f32 %v6144, %v6558
        %v6643 = vadd.f32 %v6145, %v6561
        %v6644 = vadd.f32 %v6146, %v6566
        %v6645 = vadd.f32 %v6147, %v6569
        %v6646 = vadd.f32 %v6148, %v6574
        %v6647 = vadd.f32 %v6149, %v6577
        %v6648 = vadd.f32 %v6150, %v6582
        %v6649 = vadd.f32 %v6151, %v6585
        %v6650 = vadd.f32 %v6152, %v6590
        %v6651 = vadd.f32 %v6153, %v6593
        %v6652 = vadd.f32 %v6154, %v6598
        %v6653 = vadd.f32 %v6155, %v6601
        %v6654 = vadd.f32 %v6156, %v6606
        %v6655 = vadd.f32 %v6157, %v6609
        %v6656 = vadd.f32 %v6158, %v6614
        %v6657 = vadd.f32 %v6159, %v6617
        %v6658 = vadd.f32 %v6160, %v6622
        %v6659 = vadd.f32 %v6161, %v6625
        %v6660 = vld [vmem:[%s4] sm:$0x1]
        %v6662 = vlaneseq
        %v6663 = vshrl.u32 %v6662, 7
        %v6664 = vsub.s32 0, %v6663
        %v6665 = vrot.slane %v6660, %v6664
        %v6667 = vadd.f32 %v6628, %v6665
        %v6668 = vadd.f32 %v6629, %v6665
        %v6669 = vadd.f32 %v6630, %v6665
        %v6670 = vadd.f32 %v6631, %v6665
        %v6671 = vadd.f32 %v6632, %v6665
        %v6672 = vadd.f32 %v6633, %v6665
        %v6673 = vadd.f32 %v6634, %v6665
        %v6674 = vadd.f32 %v6635, %v6665
        %v6675 = vadd.f32 %v6636, %v6665
        %v6676 = vadd.f32 %v6637, %v6665
        %v6677 = vadd.f32 %v6638, %v6665
        %v6678 = vadd.f32 %v6639, %v6665
        %v6679 = vadd.f32 %v6640, %v6665
        %v6680 = vadd.f32 %v6641, %v6665
        %v6681 = vadd.f32 %v6642, %v6665
        %v6682 = vadd.f32 %v6643, %v6665
        %v6683 = vadd.f32 %v6644, %v6665
        %v6684 = vadd.f32 %v6645, %v6665
        %v6685 = vadd.f32 %v6646, %v6665
        %v6686 = vadd.f32 %v6647, %v6665
        %v6687 = vadd.f32 %v6648, %v6665
        %v6688 = vadd.f32 %v6649, %v6665
        %v6689 = vadd.f32 %v6650, %v6665
        %v6690 = vadd.f32 %v6651, %v6665
        %v6691 = vadd.f32 %v6652, %v6665
        %v6692 = vadd.f32 %v6653, %v6665
        %v6693 = vadd.f32 %v6654, %v6665
        %v6694 = vadd.f32 %v6655, %v6665
        %v6695 = vadd.f32 %v6656, %v6665
        %v6696 = vadd.f32 %v6657, %v6665
        %v6697 = vadd.f32 %v6658, %v6665
        %v6698 = vadd.f32 %v6659, %v6665
        %v6699 = vsub.f32 0.0, %v6667
        %v6700 = vsub.f32 0.0, %v6668
        %v6701 = vsub.f32 0.0, %v6669
        %v6702 = vsub.f32 0.0, %v6670
        %v6703 = vsub.f32 0.0, %v6671
        %v6704 = vsub.f32 0.0, %v6672
        %v6705 = vsub.f32 0.0, %v6673
        %v6706 = vsub.f32 0.0, %v6674
        %v6707 = vsub.f32 0.0, %v6675
        %v6708 = vsub.f32 0.0, %v6676
        %v6709 = vsub.f32 0.0, %v6677
        %v6710 = vsub.f32 0.0, %v6678
        %v6711 = vsub.f32 0.0, %v6679
        %v6712 = vsub.f32 0.0, %v6680
        %v6713 = vsub.f32 0.0, %v6681
        %v6714 = vsub.f32 0.0, %v6682
        %v6715 = vsub.f32 0.0, %v6683
        %v6716 = vsub.f32 0.0, %v6684
        %v6717 = vsub.f32 0.0, %v6685
        %v6718 = vsub.f32 0.0, %v6686
        %v6719 = vsub.f32 0.0, %v6687
        %v6720 = vsub.f32 0.0, %v6688
        %v6721 = vsub.f32 0.0, %v6689
        %v6722 = vsub.f32 0.0, %v6690
        %v6723 = vsub.f32 0.0, %v6691
        %v6724 = vsub.f32 0.0, %v6692
        %v6725 = vsub.f32 0.0, %v6693
        %v6726 = vsub.f32 0.0, %v6694
        %v6727 = vsub.f32 0.0, %v6695
        %v6728 = vsub.f32 0.0, %v6696
        %v6729 = vsub.f32 0.0, %v6697
        %v6730 = vsub.f32 0.0, %v6698
        %v6731 = vmul.f32 %v6699, 1.442695
        %v6732 = vpow.pop %v6731
        %v6733 = vmul.f32 %v6700, 1.442695
        %v6734 = vpow.pop %v6733
        %v6735 = vmul.f32 %v6701, 1.442695
        %v6736 = vpow.pop %v6735
        %v6737 = vmul.f32 %v6702, 1.442695
        %v6738 = vpow.pop %v6737
        %v6739 = vmul.f32 %v6703, 1.442695
        %v6740 = vpow.pop %v6739
        %v6741 = vmul.f32 %v6704, 1.442695
        %v6742 = vpow.pop %v6741
        %v6743 = vmul.f32 %v6705, 1.442695
        %v6744 = vpow.pop %v6743
        %v6745 = vmul.f32 %v6706, 1.442695
        %v6746 = vpow.pop %v6745
        %v6747 = vmul.f32 %v6707, 1.442695
        %v6748 = vpow.pop %v6747
        %v6749 = vmul.f32 %v6708, 1.442695
        %v6750 = vpow.pop %v6749
        %v6751 = vmul.f32 %v6709, 1.442695
        %v6752 = vpow.pop %v6751
        %v6753 = vmul.f32 %v6710, 1.442695
        %v6754 = vpow.pop %v6753
        %v6755 = vmul.f32 %v6711, 1.442695
        %v6756 = vpow.pop %v6755
        %v6757 = vmul.f32 %v6712, 1.442695
        %v6758 = vpow.pop %v6757
        %v6759 = vmul.f32 %v6713, 1.442695
        %v6760 = vpow.pop %v6759
        %v6761 = vmul.f32 %v6714, 1.442695
        %v6762 = vpow.pop %v6761
        %v6763 = vmul.f32 %v6715, 1.442695
        %v6764 = vpow.pop %v6763
        %v6765 = vmul.f32 %v6716, 1.442695
        %v6766 = vpow.pop %v6765
        %v6767 = vmul.f32 %v6717, 1.442695
        %v6768 = vpow.pop %v6767
        %v6769 = vmul.f32 %v6718, 1.442695
        %v6770 = vpow.pop %v6769
        %v6771 = vmul.f32 %v6719, 1.442695
        %v6772 = vpow.pop %v6771
        %v6773 = vmul.f32 %v6720, 1.442695
        %v6774 = vpow.pop %v6773
        %v6775 = vmul.f32 %v6721, 1.442695
        %v6776 = vpow.pop %v6775
        %v6777 = vmul.f32 %v6722, 1.442695
        %v6778 = vpow.pop %v6777
        %v6779 = vmul.f32 %v6723, 1.442695
        %v6780 = vpow.pop %v6779
        %v6781 = vmul.f32 %v6724, 1.442695
        %v6782 = vpow.pop %v6781
        %v6783 = vmul.f32 %v6725, 1.442695
        %v6784 = vpow.pop %v6783
        %v6785 = vmul.f32 %v6726, 1.442695
        %v6786 = vpow.pop %v6785
        %v6787 = vmul.f32 %v6727, 1.442695
        %v6788 = vpow.pop %v6787
        %v6789 = vmul.f32 %v6728, 1.442695
        %v6790 = vpow.pop %v6789
        %v6791 = vmul.f32 %v6729, 1.442695
        %v6792 = vpow.pop %v6791
        %v6793 = vmul.f32 %v6730, 1.442695
        %v6794 = vpow.pop %v6793
        %v6795 = vadd.f32 %v6732, 1.0
        %v6796 = vadd.f32 %v6734, 1.0
        %v6797 = vadd.f32 %v6736, 1.0
        %v6798 = vadd.f32 %v6738, 1.0
        %v6799 = vadd.f32 %v6740, 1.0
        %v6800 = vadd.f32 %v6742, 1.0
        %v6801 = vadd.f32 %v6744, 1.0
        %v6802 = vadd.f32 %v6746, 1.0
        %v6803 = vadd.f32 %v6748, 1.0
        %v6804 = vadd.f32 %v6750, 1.0
        %v6805 = vadd.f32 %v6752, 1.0
        %v6806 = vadd.f32 %v6754, 1.0
        %v6807 = vadd.f32 %v6756, 1.0
        %v6808 = vadd.f32 %v6758, 1.0
        %v6809 = vadd.f32 %v6760, 1.0
        %v6810 = vadd.f32 %v6762, 1.0
        %v6811 = vadd.f32 %v6764, 1.0
        %v6812 = vadd.f32 %v6766, 1.0
        %v6813 = vadd.f32 %v6768, 1.0
        %v6814 = vadd.f32 %v6770, 1.0
        %v6815 = vadd.f32 %v6772, 1.0
        %v6816 = vadd.f32 %v6774, 1.0
        %v6817 = vadd.f32 %v6776, 1.0
        %v6818 = vadd.f32 %v6778, 1.0
        %v6819 = vadd.f32 %v6780, 1.0
        %v6820 = vadd.f32 %v6782, 1.0
        %v6821 = vadd.f32 %v6784, 1.0
        %v6822 = vadd.f32 %v6786, 1.0
        %v6823 = vadd.f32 %v6788, 1.0
        %v6824 = vadd.f32 %v6790, 1.0
        %v6825 = vadd.f32 %v6792, 1.0
        %v6826 = vadd.f32 %v6794, 1.0
        %v6827 = vrcp.pop %v6795
        %v6828 = vrcp.pop %v6796
        %v6829 = vrcp.pop %v6797
        %v6830 = vrcp.pop %v6798
        %v6831 = vrcp.pop %v6799
        %v6832 = vrcp.pop %v6800
        %v6833 = vrcp.pop %v6801
        %v6834 = vrcp.pop %v6802
        %v6835 = vrcp.pop %v6803
        %v6836 = vrcp.pop %v6804
        %v6837 = vrcp.pop %v6805
        %v6838 = vrcp.pop %v6806
        %v6839 = vrcp.pop %v6807
        %v6840 = vrcp.pop %v6808
        %v6841 = vrcp.pop %v6809
        %v6842 = vrcp.pop %v6810
        %v6843 = vrcp.pop %v6811
        %v6844 = vrcp.pop %v6812
        %v6845 = vrcp.pop %v6813
        %v6846 = vrcp.pop %v6814
        %v6847 = vrcp.pop %v6815
        %v6848 = vrcp.pop %v6816
        %v6849 = vrcp.pop %v6817
        %v6850 = vrcp.pop %v6818
        %v6851 = vrcp.pop %v6819
        %v6852 = vrcp.pop %v6820
        %v6853 = vrcp.pop %v6821
        %v6854 = vrcp.pop %v6822
        %v6855 = vrcp.pop %v6823
        %v6856 = vrcp.pop %v6824
        %v6857 = vrcp.pop %v6825
        %v6858 = vrcp.pop %v6826
        %v6859 = vmul.f32 %v6667, %v6827
        %v6860 = vmul.f32 %v6668, %v6828
        %v6861 = vmul.f32 %v6669, %v6829
        %v6862 = vmul.f32 %v6670, %v6830
        %v6863 = vmul.f32 %v6671, %v6831
        %v6864 = vmul.f32 %v6672, %v6832
        %v6865 = vmul.f32 %v6673, %v6833
        %v6866 = vmul.f32 %v6674, %v6834
        %v6867 = vmul.f32 %v6675, %v6835
        %v6868 = vmul.f32 %v6676, %v6836
        %v6869 = vmul.f32 %v6677, %v6837
        %v6870 = vmul.f32 %v6678, %v6838
        %v6871 = vmul.f32 %v6679, %v6839
        %v6872 = vmul.f32 %v6680, %v6840
        %v6873 = vmul.f32 %v6681, %v6841
        %v6874 = vmul.f32 %v6682, %v6842
        %v6875 = vmul.f32 %v6683, %v6843
        %v6876 = vmul.f32 %v6684, %v6844
        %v6877 = vmul.f32 %v6685, %v6845
        %v6878 = vmul.f32 %v6686, %v6846
        %v6879 = vmul.f32 %v6687, %v6847
        %v6880 = vmul.f32 %v6688, %v6848
        %v6881 = vmul.f32 %v6689, %v6849
        %v6882 = vmul.f32 %v6690, %v6850
        %v6883 = vmul.f32 %v6691, %v6851
        %v6884 = vmul.f32 %v6692, %v6852
        %v6885 = vmul.f32 %v6693, %v6853
        %v6886 = vmul.f32 %v6694, %v6854
        %v6887 = vmul.f32 %v6695, %v6855
        %v6888 = vmul.f32 %v6696, %v6856
        %v6889 = vmul.f32 %v6697, %v6857
        %v6890 = vmul.f32 %v6698, %v6858
        %v6891 = vld [vmem:[%s420] sm:$0xf]
        %v6892 = vld [vmem:[%s420 + $0x4] sm:$0xf]
        %v6893 = vld [vmem:[%s420 + $0x8] sm:$0xf]
        %v6894 = vld [vmem:[%s420 + $0xc] sm:$0xf]
        %v6895 = vld [vmem:[%s420 + $0x10] sm:$0xf]
        %v6896 = vld [vmem:[%s420 + $0x14] sm:$0xf]
        %v6897 = vld [vmem:[%s420 + $0x18] sm:$0xf]
        %v6898 = vld [vmem:[%s420 + $0x1c] sm:$0xf]
        %v6899 = vld [vmem:[%s420 + $0x20] sm:$0xf]
        %v6900 = vld [vmem:[%s420 + $0x24] sm:$0xf]
        %v6901 = vld [vmem:[%s420 + $0x28] sm:$0xf]
        %v6902 = vld [vmem:[%s420 + $0x2c] sm:$0xf]
        %v6903 = vld [vmem:[%s420 + $0x30] sm:$0xf]
        %v6904 = vld [vmem:[%s420 + $0x34] sm:$0xf]
        %v6905 = vld [vmem:[%s420 + $0x38] sm:$0xf]
        %v6906 = vld [vmem:[%s420 + $0x3c] sm:$0xf]
        %v6907 = vld [vmem:[%s420 + $0x40] sm:$0xf]
        %v6908 = vld [vmem:[%s420 + $0x44] sm:$0xf]
        %v6909 = vld [vmem:[%s420 + $0x48] sm:$0xf]
        %v6910 = vld [vmem:[%s420 + $0x4c] sm:$0xf]
        %v6911 = vld [vmem:[%s420 + $0x50] sm:$0xf]
        %v6912 = vld [vmem:[%s420 + $0x54] sm:$0xf]
        %v6913 = vld [vmem:[%s420 + $0x58] sm:$0xf]
        %v6914 = vld [vmem:[%s420 + $0x5c] sm:$0xf]
        %v6915 = vld [vmem:[%s420 + $0x60] sm:$0xf]
        %v6916 = vld [vmem:[%s420 + $0x64] sm:$0xf]
        %v6917 = vld [vmem:[%s420 + $0x68] sm:$0xf]
        %v6918 = vld [vmem:[%s420 + $0x6c] sm:$0xf]
        %v6919 = vld [vmem:[%s420 + $0x70] sm:$0xf]
        %v6920 = vld [vmem:[%s420 + $0x74] sm:$0xf]
        %v6921 = vld [vmem:[%s420 + $0x78] sm:$0xf]
        %v6922 = vld [vmem:[%s420 + $0x7c] sm:$0xf]
        %v6923 = vunpack.c.l.bf16 %v6891
        %v6924 = vunpack.c.l.bf16 %v6892
        %v6925 = vunpack.c.l.bf16 %v6893
        %v6926 = vunpack.c.l.bf16 %v6894
        %v6927 = vunpack.c.l.bf16 %v6895
        %v6928 = vunpack.c.l.bf16 %v6896
        %v6929 = vunpack.c.l.bf16 %v6897
        %v6930 = vunpack.c.l.bf16 %v6898
        %v6931 = vunpack.c.l.bf16 %v6899
        %v6932 = vunpack.c.l.bf16 %v6900
        %v6933 = vunpack.c.l.bf16 %v6901
        %v6934 = vunpack.c.l.bf16 %v6902
        %v6935 = vunpack.c.l.bf16 %v6903
        %v6936 = vunpack.c.l.bf16 %v6904
        %v6937 = vunpack.c.l.bf16 %v6905
        %v6938 = vunpack.c.l.bf16 %v6906
        %v6939 = vunpack.c.l.bf16 %v6907
        %v6940 = vunpack.c.l.bf16 %v6908
        %v6941 = vunpack.c.l.bf16 %v6909
        %v6942 = vunpack.c.l.bf16 %v6910
        %v6943 = vunpack.c.l.bf16 %v6911
        %v6944 = vunpack.c.l.bf16 %v6912
        %v6945 = vunpack.c.l.bf16 %v6913
        %v6946 = vunpack.c.l.bf16 %v6914
        %v6947 = vunpack.c.l.bf16 %v6915
        %v6948 = vunpack.c.l.bf16 %v6916
        %v6949 = vunpack.c.l.bf16 %v6917
        %v6950 = vunpack.c.l.bf16 %v6918
        %v6951 = vunpack.c.l.bf16 %v6919
        %v6952 = vunpack.c.l.bf16 %v6920
        %v6953 = vunpack.c.l.bf16 %v6921
        %v6954 = vunpack.c.l.bf16 %v6922
        %v6955 = vadd.f32 %v6859, %v6923
        %v6956 = vadd.f32 %v6860, %v6924
        %v6957 = vadd.f32 %v6861, %v6925
        %v6958 = vadd.f32 %v6862, %v6926
        %v6959 = vadd.f32 %v6863, %v6927
        %v6960 = vadd.f32 %v6864, %v6928
        %v6961 = vadd.f32 %v6865, %v6929
        %v6962 = vadd.f32 %v6866, %v6930
        %v6963 = vadd.f32 %v6867, %v6931
        %v6964 = vadd.f32 %v6868, %v6932
        %v6965 = vadd.f32 %v6869, %v6933
        %v6966 = vadd.f32 %v6870, %v6934
        %v6967 = vadd.f32 %v6871, %v6935
        %v6968 = vadd.f32 %v6872, %v6936
        %v6969 = vadd.f32 %v6873, %v6937
        %v6970 = vadd.f32 %v6874, %v6938
        %v6971 = vadd.f32 %v6875, %v6939
        %v6972 = vadd.f32 %v6876, %v6940
        %v6973 = vadd.f32 %v6877, %v6941
        %v6974 = vadd.f32 %v6878, %v6942
        %v6975 = vadd.f32 %v6879, %v6943
        %v6976 = vadd.f32 %v6880, %v6944
        %v6977 = vadd.f32 %v6881, %v6945
        %v6978 = vadd.f32 %v6882, %v6946
        %v6979 = vadd.f32 %v6883, %v6947
        %v6980 = vadd.f32 %v6884, %v6948
        %v6981 = vadd.f32 %v6885, %v6949
        %v6982 = vadd.f32 %v6886, %v6950
        %v6983 = vadd.f32 %v6887, %v6951
        %v6984 = vadd.f32 %v6888, %v6952
        %v6985 = vadd.f32 %v6889, %v6953
        %v6986 = vadd.f32 %v6890, %v6954
        %v6987 = vpack.c.bf16 %v6956, %v6955
        %v6988 = vpack.c.bf16 %v6958, %v6957
        %v6989 = vpack.c.bf16 %v6960, %v6959
        %v6990 = vpack.c.bf16 %v6962, %v6961
        %v6991 = vpack.c.bf16 %v6964, %v6963
        %v6992 = vpack.c.bf16 %v6966, %v6965
        %v6993 = vpack.c.bf16 %v6968, %v6967
        %v6994 = vpack.c.bf16 %v6970, %v6969
        %v6995 = vpack.c.bf16 %v6972, %v6971
        %v6996 = vpack.c.bf16 %v6974, %v6973
        %v6997 = vpack.c.bf16 %v6976, %v6975
        %v6998 = vpack.c.bf16 %v6978, %v6977
        %v6999 = vpack.c.bf16 %v6980, %v6979
        %v7000 = vpack.c.bf16 %v6982, %v6981
        %v7001 = vpack.c.bf16 %v6984, %v6983
        %v7002 = vpack.c.bf16 %v6986, %v6985
        %v7019 = vunpack.c.l.b16 %v6987
        %v7020 = vunpack.c.h.b16 %v6987
        %v7021 = vunpack.c.l.b16 %v6988
        %v7022 = vunpack.c.h.b16 %v6988
        %v7023 = vunpack.c.l.b16 %v6989
        %v7024 = vunpack.c.h.b16 %v6989
        %v7025 = vunpack.c.l.b16 %v6990
        %v7026 = vunpack.c.h.b16 %v6990
        %v7027 = vunpack.c.l.b16 %v6991
        %v7028 = vunpack.c.h.b16 %v6991
        %v7029 = vunpack.c.l.b16 %v6992
        %v7030 = vunpack.c.h.b16 %v6992
        %v7031 = vunpack.c.l.b16 %v6993
        %v7032 = vunpack.c.h.b16 %v6993
        %v7033 = vunpack.c.l.b16 %v6994
        %v7034 = vunpack.c.h.b16 %v6994
        %v7035 = vunpack.c.l.b16 %v6995
        %v7036 = vunpack.c.h.b16 %v6995
        %v7037 = vunpack.c.l.b16 %v6996
        %v7038 = vunpack.c.h.b16 %v6996
        %v7039 = vunpack.c.l.b16 %v6997
        %v7040 = vunpack.c.h.b16 %v6997
        %v7041 = vunpack.c.l.b16 %v6998
        %v7042 = vunpack.c.h.b16 %v6998
        %v7043 = vunpack.c.l.b16 %v6999
        %v7044 = vunpack.c.h.b16 %v6999
        %v7045 = vunpack.c.l.b16 %v7000
        %v7046 = vunpack.c.h.b16 %v7000
        %v7047 = vunpack.c.l.b16 %v7001
        %v7048 = vunpack.c.h.b16 %v7001
        %v7049 = vunpack.c.l.b16 %v7002
        %v7050 = vunpack.c.h.b16 %v7002
        %v7051 = vpack.c.b16 %v7019, %v7019
        %v7052 = vpack.c.b16 %v7020, %v7020
        %v7053 = vpack.c.b16 %v7021, %v7021
        %v7054 = vpack.c.b16 %v7022, %v7022
        %v7055 = vpack.c.b16 %v7023, %v7023
        %v7056 = vpack.c.b16 %v7024, %v7024
        %v7057 = vpack.c.b16 %v7025, %v7025
        %v7058 = vpack.c.b16 %v7026, %v7026
        %v7059 = vpack.c.b16 %v7027, %v7027
        %v7060 = vpack.c.b16 %v7028, %v7028
        %v7061 = vpack.c.b16 %v7029, %v7029
        %v7062 = vpack.c.b16 %v7030, %v7030
        %v7063 = vpack.c.b16 %v7031, %v7031
        %v7064 = vpack.c.b16 %v7032, %v7032
        %v7065 = vpack.c.b16 %v7033, %v7033
        %v7066 = vpack.c.b16 %v7034, %v7034
        %v7067 = vpack.c.b16 %v7035, %v7035
        %v7068 = vpack.c.b16 %v7036, %v7036
        %v7069 = vpack.c.b16 %v7037, %v7037
        %v7070 = vpack.c.b16 %v7038, %v7038
        %v7071 = vpack.c.b16 %v7039, %v7039
        %v7072 = vpack.c.b16 %v7040, %v7040
        %v7073 = vpack.c.b16 %v7041, %v7041
        %v7074 = vpack.c.b16 %v7042, %v7042
        %v7075 = vpack.c.b16 %v7043, %v7043
        %v7076 = vpack.c.b16 %v7044, %v7044
        %v7077 = vpack.c.b16 %v7045, %v7045
        %v7078 = vpack.c.b16 %v7046, %v7046
        %v7079 = vpack.c.b16 %v7047, %v7047
        %v7080 = vpack.c.b16 %v7048, %v7048
        %v7081 = vpack.c.b16 %v7049, %v7049
        %v7082 = vpack.c.b16 %v7050, %v7050
        %7115 = vst [vmem:[%s285] sm:$0xf] %v7051
        %7116 = vst [vmem:[%s285 + $0x4] sm:$0xf] %v7052
        %7117 = vst [vmem:[%s285 + $0x8] sm:$0xf] %v7053
        %7118 = vst [vmem:[%s285 + $0xc] sm:$0xf] %v7054
        %7119 = vst [vmem:[%s285 + $0x10] sm:$0xf] %v7055
        %7120 = vst [vmem:[%s285 + $0x14] sm:$0xf] %v7056
        %7121 = vst [vmem:[%s285 + $0x18] sm:$0xf] %v7057
        %7122 = vst [vmem:[%s285 + $0x1c] sm:$0xf] %v7058
        %7123 = vst [vmem:[%s285 + $0x20] sm:$0xf] %v7059
        %7124 = vst [vmem:[%s285 + $0x24] sm:$0xf] %v7060
        %7125 = vst [vmem:[%s285 + $0x28] sm:$0xf] %v7061
        %7126 = vst [vmem:[%s285 + $0x2c] sm:$0xf] %v7062
        %7127 = vst [vmem:[%s285 + $0x30] sm:$0xf] %v7063
        %7128 = vst [vmem:[%s285 + $0x34] sm:$0xf] %v7064
        %7129 = vst [vmem:[%s285 + $0x38] sm:$0xf] %v7065
        %7130 = vst [vmem:[%s285 + $0x3c] sm:$0xf] %v7066
        %7131 = vst [vmem:[%s285 + $0x40] sm:$0xf] %v7067
        %7132 = vst [vmem:[%s285 + $0x44] sm:$0xf] %v7068
        %7133 = vst [vmem:[%s285 + $0x48] sm:$0xf] %v7069
        %7134 = vst [vmem:[%s285 + $0x4c] sm:$0xf] %v7070
        %7135 = vst [vmem:[%s285 + $0x50] sm:$0xf] %v7071
        %7136 = vst [vmem:[%s285 + $0x54] sm:$0xf] %v7072
        %7137 = vst [vmem:[%s285 + $0x58] sm:$0xf] %v7073
        %7138 = vst [vmem:[%s285 + $0x5c] sm:$0xf] %v7074
        %7139 = vst [vmem:[%s285 + $0x60] sm:$0xf] %v7075
        %7140 = vst [vmem:[%s285 + $0x64] sm:$0xf] %v7076
        %7141 = vst [vmem:[%s285 + $0x68] sm:$0xf] %v7077
        %7142 = vst [vmem:[%s285 + $0x6c] sm:$0xf] %v7078
        %7143 = vst [vmem:[%s285 + $0x70] sm:$0xf] %v7079
        %7144 = vst [vmem:[%s285 + $0x74] sm:$0xf] %v7080
        %7145 = vst [vmem:[%s285 + $0x78] sm:$0xf] %v7081
        %7146 = vst [vmem:[%s285 + $0x7c] sm:$0xf] %v7082
        %s7147 = sand.u32 %s155, 1
        %s7148 = scalar_lea.sflag [#allocation5], %s7147
        %s7149 = sand.u32 %s155, 1
        %s7150 = smul.addr %s7149, 128
        %s7151 = scalar_lea.vmem [#allocation9], %s7150
        // Predicated region
        $region69: #{tpu_custom_call.1} parent=39 // pred_check
          %p7152 = pneg %p165
        $region70: #{tpu_custom_call.1} parent=39 // pred_check_branch
          %7154 = sbr.rel (%p7152) target = $region72
        $region71: #{tpu_custom_call.1} parent=39 // pred_region
          %s7155 = smul.u32 16, %s28
          %s7157 = ssub.s32 2048, 2048
          %7158 = vsyncadd %s7148, %s7157
          %s7159 = smul.addr %s7155, 2
          %s7160 = smul.addr %s27, 32
          %s7161 = sadd.s32 %s7159, %s7160
          %s7162 = smul.addr %s7161, 64
          %s7163 = scalar_lea.hbm %s5, %s7162
          %s7164 = sshll.u32 %s7151, 4
          %s7165 = int_to_ptr.vmem [resolvable:$true] %s7164
          %7170 = dma.vmem_to_hbm [thread:$0]  %s7165, 2048, %s7163, %s7148, 64, 64, 4
        $region72: #{tpu_custom_call.1} parent=39 // pred_fallthru
          _
      $region40: #{tpu_custom_call.1} parent=5 // pred_fallthru
        _
      %p7171 = scmp.le.s32.totalorder 2, %s18
      // Predicated region
      $region73: #{tpu_custom_call.1} parent=5 // pred_check
        %p7172 = pneg %p7171
      $region74: #{tpu_custom_call.1} parent=5 // pred_check_branch
        %7174 = sbr.rel (%p7172) target = $region76
      $region75: #{tpu_custom_call.1} parent=5 // pred_region
        %s7175 = ssub.s32 %s18, 2
        // Predicated region
        $region77: #{tpu_custom_call.1} parent=75 // pred_check
          %p7176 = pneg %p171
        $region78: #{tpu_custom_call.1} parent=75 // pred_check_branch
          %7178 = sbr.rel (%p7176) target = $region80
        $region79: #{tpu_custom_call.1} parent=75 // pred_region
          %s7179 = sand.u32 %s156, 1
          %s7180 = scalar_lea.sflag [#allocation5], %s7179
          %s7181 = sand.u32 %s156, 1
          %s7182 = smul.addr %s7181, 128
          %s7183 = scalar_lea.vmem [#allocation9], %s7182
          %7184 = dma.done %s7180, 2048
        $region80: #{tpu_custom_call.1} parent=75 // pred_fallthru
          _
      $region76: #{tpu_custom_call.1} parent=5 // pred_fallthru
        _
    $region6: #{tpu_custom_call.1} parent=1 // loop_footer
      %s22 = sadd.s32 1, %s18
    $region7: #{tpu_custom_call.1} parent=1 // loop_footer_branch
      %17 = sbr.rel target = $region3
    $region8: #{tpu_custom_call.1} parent=1 // loop_exit
      _
    %7185 = vsyncpa [#allocation4], 1
    %s7186 = scalar_lea.sflag [#allocation4], 1
    %7187 = vsyncpa %s7186, 1
    %7188 = vsyncpa [#allocation7], 1
    %7189 = vsyncpa [#allocation5], 1
    %s7190 = scalar_lea.sflag [#allocation5], 1
    %7191 = vsyncpa %s7190, 1

</llo_original>
